<compile_context>
chip_gen: v7x
topology: tpu7x:2x2x1
jax: 0.10.0
libtpu: 0.0.40
codegen_flags: <defaults>
</compile_context>

<pallas_src>
import numpy as np

import jax
import jax.numpy as jnp
from jax import lax
from jax.experimental import pallas as pl
from jax.experimental.pallas import tpu as pltpu

EPS = 1e-5  # torch.nn.InstanceNorm2d default
_PREC = lax.Precision.HIGHEST


# ----------------------------- in-kernel helpers ----------------------------
def _instnorm_prelu(z, gamma, beta, alpha):
    """InstanceNorm2d(affine) + PReLU on a (P, C) tile (one instance).

    Two-pass statistics (mean, then centered variance) for numerical safety.
    The conv bias is intentionally absent upstream: a per-channel constant is
    removed exactly by the mean subtraction.
    """
    inv_p = 1.0 / z.shape[0]
    mean = jnp.sum(z, axis=0, keepdims=True) * inv_p          # (1, C)
    d = z - mean
    var = jnp.sum(d * d, axis=0, keepdims=True) * inv_p       # (1, C)
    y = d * (gamma * lax.rsqrt(var + EPS)) + beta
    return jnp.where(y >= 0.0, y, alpha * y)


def _make_fused_kernel(P1, K1, P2, C):
    """Fused conv1+IN+PReLU -> conv2+IN+PReLU kernel (one batch element)."""

    def kernel(m1_ref, w1_ref, g2_ref, w2_ref, vec_ref, o_ref):
        vec = vec_ref[...]                                     # (6, C)

        # -------- layer 1: Conv2d(Cin->C, 3x3, s=2, pad=(1,0)) + IN + PReLU --
        # Host-side im2col already produced the (P1, 9*Cin) patch matrix.
        m1 = m1_ref[0]                                         # (P1, K1)
        z1 = jnp.dot(m1, w1_ref[...],
                     preferred_element_type=jnp.float32, precision=_PREC)
        y1 = _instnorm_prelu(z1, vec[0:1], vec[1:2], vec[2:3])  # (P1, C)

        # -------- layer 2: Conv2d(C->C, 3x3, s=2, pad=(1,1)) + IN + PReLU ----
        # Spatial selection per tap t = (i, j) is a constant 0/1 gather matrix
        # G_t (P2, P1); zero rows encode the (1,1) zero padding.  No in-kernel
        # slicing / reshaping / padding is required.
        z2 = jnp.zeros((P2, C), jnp.float32)
        for t in range(9):
            gathered = jnp.dot(g2_ref[t], y1,
                               preferred_element_type=jnp.float32,
                               precision=_PREC)                # (P2, C)
            z2 = z2 + jnp.dot(gathered, w2_ref[t],
                              preferred_element_type=jnp.float32,
                              precision=_PREC)                 # (P2, C)
        y2 = _instnorm_prelu(z2, vec[3:4], vec[4:5], vec[5:6])  # (P2, C)

        o_ref[0] = y2.astype(o_ref.dtype)

    return kernel


# ------------------------------ host-side glue -------------------------------
def _im2col_conv1(x_nhwc, Ho1, Wo1):
    """(B,H,W,Cin) -> (B, Ho1*Wo1, 9*Cin) patches for 3x3/s2, pad=(1,0).

    Column order is (i, j, ci) to match the conv-1 weight matrix layout.
    Pure XLA layout glue on the kernel *input*; negligible cost.
    """
    B = x_nhwc.shape[0]
    xp = jnp.pad(x_nhwc, ((0, 0), (1, 1), (0, 0), (0, 0)))
    taps = []
    for i in range(3):
        for j in range(3):
            taps.append(xp[:, i:i + 2 * Ho1 - 1:2, j:j + 2 * Wo1 - 1:2, :])
    m = jnp.concatenate(taps, axis=-1)                 # (B, Ho1, Wo1, 9*Cin)
    return m.reshape(B, Ho1 * Wo1, -1)


def _conv2_gather_matrices(Ho1, Wo1, Ho2, Wo2):
    """Constant 0/1 gather matrices (9, P2, P1) for 3x3/s2, pad=(1,1).

    G[t, a2*Wo2+b2, a1*Wo1+b1] = 1  iff tap t of output (a2, b2) reads the
    valid (non-padding) layer-1 position (a1, b1).
    """
    g = np.zeros((9, Ho2 * Wo2, Ho1 * Wo1), np.float32)
    for i in range(3):
        for j in range(3):
            t = i * 3 + j
            for a in range(Ho2):
                r = 2 * a + i - 1
                if not (0 <= r < Ho1):
                    continue
                for b in range(Wo2):
                    c = 2 * b + j - 1
                    if 0 <= c < Wo1:
                        g[t, a * Wo2 + b, r * Wo1 + c] = 1.0
    return g


# ------------------------------ full forward --------------------------------
def channel_encoder_sf12(x_nchw, params, mod_fact=2):
    B, Cin, H, W = x_nchw.shape
    C = params["w1"].shape[0]

    Hp, Wp = H + 2, W                                   # conv-1 padding (1, 0)
    Ho1, Wo1 = (Hp - 3) // 2 + 1, (Wp - 3) // 2 + 1
    Ho2, Wo2 = ((Ho1 + 2) - 3) // 2 + 1, ((Wo1 + 2) - 3) // 2 + 1
    P1, P2 = Ho1 * Wo1, Ho2 * Wo2
    K1 = 9 * Cin

    # NCHW -> NHWC (channels on the lane axis), im2col for conv-1.
    x = jnp.transpose(x_nchw, (0, 2, 3, 1)).astype(jnp.float32)
    m1 = _im2col_conv1(x, Ho1, Wo1)                     # (B, P1, K1)

    # weights (Cout, Cin, kh, kw) -> (kh, kw, Cin, Cout); row/tap order (i,j,ci)
    # matches the im2col columns and the gather-matrix tap order.
    w1m = jnp.transpose(params["w1"], (2, 3, 1, 0)).reshape(K1, C)
    w2m = jnp.transpose(params["w2"], (2, 3, 1, 0)).reshape(9, C, C)
    # Conv biases b1/b2 are omitted on purpose: InstanceNorm subtracts the
    # per-(N,C) spatial mean, which removes any per-channel constant exactly.
    vec = jnp.stack([params["g1"], params["be1"], params["a1"],
                     params["g2"], params["be2"], params["a2"]],
                    axis=0).astype(jnp.float32)         # (6, C)

    gath2 = jnp.asarray(_conv2_gather_matrices(Ho1, Wo1, Ho2, Wo2))  # (9,P2,P1)

    kernel = _make_fused_kernel(P1, K1, P2, C)

    cost = pl.CostEstimate(
        flops=2 * B * (P1 * K1 * C + 9 * (P2 * P1 * C + P2 * C * C)),
        transcendentals=2 * B * C,  # rsqrt per channel per layer
        bytes_accessed=4 * (B * P1 * K1 + K1 * C + 9 * P2 * P1 + 9 * C * C
                            + 6 * C + B * P2 * C),
    )

    out = pl.pallas_call(
        kernel,
        out_shape=jax.ShapeDtypeStruct((B, P2, C), jnp.float32),
        grid_spec=pltpu.PrefetchScalarGridSpec(
            num_scalar_prefetch=0,
            grid=(B,),
            in_specs=[
                pl.BlockSpec((1, P1, K1), lambda b: (b, 0, 0)),   # per-batch
                pl.BlockSpec((K1, C), lambda b: (0, 0)),          # constant
                pl.BlockSpec((9, P2, P1), lambda b: (0, 0, 0)),   # constant
                pl.BlockSpec((9, C, C), lambda b: (0, 0, 0)),     # constant
                pl.BlockSpec((6, C), lambda b: (0, 0)),           # constant
            ],
            out_specs=pl.BlockSpec((1, P2, C), lambda b: (b, 0, 0)),
        ),
        compiler_params=pltpu.CompilerParams(
            dimension_semantics=("parallel",)),   # v7x: one batch elem per TC
        cost_estimate=cost,
    )(m1, w1m, gath2, w2m, vec)

    # ----- reshape glue (pure layout, stays in JAX) -----
    y = out.reshape(B, Ho2, Wo2, C)               # NHWC
    xo = jnp.transpose(y, (0, 3, 1, 2))           # back to NCHW
    B_, C_, F, T = xo.shape
    te = T // mod_fact
    xo = xo.reshape(B_, C_, F, te, mod_fact)
    xo = jnp.transpose(xo, (0, 1, 3, 2, 4))
    return xo.reshape(B_, C_ * te, F * mod_fact)


# ------------------------------ reference -----------------------------------
def _ref_block(x_nchw, w, b, g, be, a, pad):
    y = lax.conv_general_dilated(
        x_nchw, w, window_strides=(2, 2),
        padding=((pad[0], pad[0]), (pad[1], pad[1])),
        dimension_numbers=("NCHW", "OIHW", "NCHW"),
        precision=_PREC)
    y = y + b[None, :, None, None]
    mean = y.mean(axis=(2, 3), keepdims=True)
    var = ((y - mean) ** 2).mean(axis=(2, 3), keepdims=True)
    y = (y - mean) / jnp.sqrt(var + EPS)
    y = y * g[None, :, None, None] + be[None, :, None, None]
    return jnp.where(y >= 0, y, a[None, :, None, None] * y)


def channel_encoder_sf12_ref(x_nchw, p, mod_fact=2):
    x = _ref_block(x_nchw, p["w1"], p["b1"], p["g1"], p["be1"], p["a1"], (1, 0))
    x = _ref_block(x, p["w2"], p["b2"], p["g2"], p["be2"], p["a2"], (1, 1))
    B, C, F, T = x.shape
    te = T // mod_fact
    x = x.reshape(B, C, F, te, mod_fact)
    x = jnp.transpose(x, (0, 1, 3, 2, 4))
    return x.reshape(B, C * te, F * mod_fact)


# -------------------------------- params ------------------------------------
def init_params(key, in_channel, channels):
    ks = jax.random.split(key, 8)
    f32 = jnp.float32
    return dict(
        w1=0.1 * jax.random.normal(ks[0], (channels, in_channel, 3, 3), f32),
        b1=0.1 * jax.random.normal(ks[1], (channels,), f32),
        w2=0.1 * jax.random.normal(ks[2], (channels, channels, 3, 3), f32),
        b2=0.1 * jax.random.normal(ks[3], (channels,), f32),
        g1=1.0 + 0.1 * jax.random.normal(ks[4], (channels,), f32),
        be1=0.1 * jax.random.normal(ks[5], (channels,), f32),
        g2=1.0 + 0.1 * jax.random.normal(ks[6], (channels,), f32),
        be2=0.1 * jax.random.normal(ks[7], (channels,), f32),
        a1=jnp.full((channels,), 0.25, f32),   # PReLU default init
        a2=jnp.full((channels,), 0.25, f32),
    )


# --------------------------------- main --------------------------------------
if __name__ == "__main__":
    key = jax.random.PRNGKey(0)
    kx, kp = jax.random.split(key)

    B, in_channel, H, W = 2, 2, 16, 17   # chosen so subsampled_time (=4) is even
    channels = 32

    x = jax.random.normal(kx, (B, in_channel, H, W), jnp.float32)
    params = init_params(kp, in_channel, channels)

    fwd = jax.jit(channel_encoder_sf12)
    out = jax.block_until_ready(fwd(x, params))

    # expected output shape: (B, channels * (T2 // 2), F2 * 2) = (2, 64, 8)
    assert out.shape == (B, channels * 2, 8), out.shape

    ref = jax.block_until_ready(channel_encoder_sf12_ref(x, params))
    np.testing.assert_allclose(np.asarray(out), np.asarray(ref),
                               rtol=1e-3, atol=1e-3)

    print("KERNEL_OK")
</pallas_src>

<mosaic_0001>
module attributes {stable_mosaic.version = 11 : i64} {
  func.func @kernel(%arg0: i32, %arg1: memref<1x64x18xf32, #tpu.memory_space<vmem>>, %arg2: memref<18x32xf32, #tpu.memory_space<vmem>>, %arg3: memref<9x16x64xf32, #tpu.memory_space<vmem>>, %arg4: memref<9x32x32xf32, #tpu.memory_space<vmem>>, %arg5: memref<6x32xf32, #tpu.memory_space<vmem>>, %arg6: memref<1x16x32xf32, #tpu.memory_space<vmem>>) attributes {dimension_semantics = [#tpu.dimension_semantics<parallel>], iteration_bounds = array<i64: 2>, scalar_prefetch = 0 : i64, scratch_operands = 0 : i64, tpu.core_type = #tpu.core_type<tc>, window_params = [{transform_indices = @transform_0, window_bounds = array<i64: 1, 64, 18>}, {pipeline_mode = #tpu.pipeline_mode<synchronous>, transform_indices = @transform_1, window_bounds = array<i64: 18, 32>}, {pipeline_mode = #tpu.pipeline_mode<synchronous>, transform_indices = @transform_2, window_bounds = array<i64: 9, 16, 64>}, {pipeline_mode = #tpu.pipeline_mode<synchronous>, transform_indices = @transform_3, window_bounds = array<i64: 9, 32, 32>}, {pipeline_mode = #tpu.pipeline_mode<synchronous>, transform_indices = @transform_4, window_bounds = array<i64: 6, 32>}, {transform_indices = @transform_5, window_bounds = array<i64: 1, 16, 32>}]} {
    %c0 = arith.constant 0 : index
    %c0_0 = arith.constant 0 : index
    %0 = vector.load %arg5[%c0, %c0_0] : memref<6x32xf32, #tpu.memory_space<vmem>>, vector<6x32xf32>
    %c0_1 = arith.constant 0 : index
    %c0_2 = arith.constant 0 : index
    %c0_3 = arith.constant 0 : index
    %1 = vector.load %arg1[%c0_1, %c0_2, %c0_3] : memref<1x64x18xf32, #tpu.memory_space<vmem>>, vector<1x64x18xf32>
    %2 = vector.shape_cast %1 : vector<1x64x18xf32> to vector<64x18xf32>
    %c0_4 = arith.constant 0 : index
    %c0_5 = arith.constant 0 : index
    %3 = vector.load %arg2[%c0_4, %c0_5] : memref<18x32xf32, #tpu.memory_space<vmem>>, vector<18x32xf32>
    %cst = arith.constant dense<0.000000e+00> : vector<64x32xf32>
    %4 = tpu.matmul %2, %3, %cst {dimension_numbers = #tpu.dot_dimension_numbers<[1], [0], [0], [1], [0, 0, 1, 1], [], []>, precision = #tpu.contract_precision<fp32>} : vector<64x18xf32>, vector<18x32xf32>, vector<64x32xf32> -> vector<64x32xf32>
    %5 = vector.extract_strided_slice %0 {offsets = [0, 0], sizes = [1, 32], strides = [1, 1]} : vector<6x32xf32> to vector<1x32xf32>
    %6 = vector.extract_strided_slice %0 {offsets = [1, 0], sizes = [1, 32], strides = [1, 1]} : vector<6x32xf32> to vector<1x32xf32>
    %7 = vector.extract_strided_slice %0 {offsets = [2, 0], sizes = [1, 32], strides = [1, 1]} : vector<6x32xf32> to vector<1x32xf32>
    %cst_6 = arith.constant dense<0.000000e+00> : vector<32xf32>
    %8 = vector.multi_reduction <add>, %4, %cst_6 [0] : vector<64x32xf32> to vector<32xf32>
    %9 = vector.shape_cast %8 : vector<32xf32> to vector<1x32xf32>
    %cst_7 = arith.constant 1.562500e-02 : f32
    %10 = vector.broadcast %cst_7 : f32 to vector<1x32xf32>
    %11 = arith.mulf %9, %10 : vector<1x32xf32>
    %12 = vector.broadcast %11 : vector<1x32xf32> to vector<64x32xf32>
    %13 = arith.subf %4, %12 : vector<64x32xf32>
    %14 = arith.mulf %13, %13 : vector<64x32xf32>
    %cst_8 = arith.constant dense<0.000000e+00> : vector<32xf32>
    %15 = vector.multi_reduction <add>, %14, %cst_8 [0] : vector<64x32xf32> to vector<32xf32>
    %16 = vector.shape_cast %15 : vector<32xf32> to vector<1x32xf32>
    %cst_9 = arith.constant 1.562500e-02 : f32
    %17 = vector.broadcast %cst_9 : f32 to vector<1x32xf32>
    %18 = arith.mulf %16, %17 : vector<1x32xf32>
    %cst_10 = arith.constant 9.99999974E-6 : f32
    %19 = vector.broadcast %cst_10 : f32 to vector<1x32xf32>
    %20 = arith.addf %18, %19 : vector<1x32xf32>
    %21 = math.rsqrt %20 : vector<1x32xf32>
    %22 = arith.mulf %5, %21 : vector<1x32xf32>
    %23 = vector.broadcast %22 : vector<1x32xf32> to vector<64x32xf32>
    %24 = arith.mulf %13, %23 : vector<64x32xf32>
    %25 = vector.broadcast %6 : vector<1x32xf32> to vector<64x32xf32>
    %26 = arith.addf %24, %25 : vector<64x32xf32>
    %cst_11 = arith.constant 0.000000e+00 : f32
    %27 = vector.broadcast %cst_11 : f32 to vector<64x32xf32>
    %28 = arith.cmpf oge, %26, %27 : vector<64x32xf32>
    %29 = vector.broadcast %7 : vector<1x32xf32> to vector<64x32xf32>
    %30 = arith.mulf %29, %26 : vector<64x32xf32>
    %31 = arith.select %28, %26, %30 : vector<64x32xi1>, vector<64x32xf32>
    %cst_12 = arith.constant 0.000000e+00 : f32
    %32 = vector.broadcast %cst_12 : f32 to vector<16x32xf32>
    %c0_13 = arith.constant 0 : index
    %c0_14 = arith.constant 0 : index
    %c0_15 = arith.constant 0 : index
    %33 = vector.load %arg3[%c0_13, %c0_14, %c0_15] : memref<9x16x64xf32, #tpu.memory_space<vmem>>, vector<1x16x64xf32>
    %34 = vector.shape_cast %33 : vector<1x16x64xf32> to vector<16x64xf32>
    %cst_16 = arith.constant dense<0.000000e+00> : vector<16x32xf32>
    %35 = tpu.matmul %34, %31, %cst_16 {dimension_numbers = #tpu.dot_dimension_numbers<[1], [0], [0], [1], [0, 0, 1, 1], [], []>, precision = #tpu.contract_precision<fp32>} : vector<16x64xf32>, vector<64x32xf32>, vector<16x32xf32> -> vector<16x32xf32>
    %c0_17 = arith.constant 0 : index
    %c0_18 = arith.constant 0 : index
    %c0_19 = arith.constant 0 : index
    %36 = vector.load %arg4[%c0_17, %c0_18, %c0_19] : memref<9x32x32xf32, #tpu.memory_space<vmem>>, vector<1x32x32xf32>
    %37 = vector.shape_cast %36 : vector<1x32x32xf32> to vector<32x32xf32>
    %cst_20 = arith.constant dense<0.000000e+00> : vector<16x32xf32>
    %38 = tpu.matmul %35, %37, %cst_20 {dimension_numbers = #tpu.dot_dimension_numbers<[1], [0], [0], [1], [0, 0, 1, 1], [], []>, precision = #tpu.contract_precision<fp32>} : vector<16x32xf32>, vector<32x32xf32>, vector<16x32xf32> -> vector<16x32xf32>
    %39 = arith.addf %32, %38 : vector<16x32xf32>
    %c1 = arith.constant 1 : index
    %c0_21 = arith.constant 0 : index
    %c0_22 = arith.constant 0 : index
    %40 = vector.load %arg3[%c1, %c0_21, %c0_22] : memref<9x16x64xf32, #tpu.memory_space<vmem>>, vector<1x16x64xf32>
    %41 = vector.shape_cast %40 : vector<1x16x64xf32> to vector<16x64xf32>
    %cst_23 = arith.constant dense<0.000000e+00> : vector<16x32xf32>
    %42 = tpu.matmul %41, %31, %cst_23 {dimension_numbers = #tpu.dot_dimension_numbers<[1], [0], [0], [1], [0, 0, 1, 1], [], []>, precision = #tpu.contract_precision<fp32>} : vector<16x64xf32>, vector<64x32xf32>, vector<16x32xf32> -> vector<16x32xf32>
    %c1_24 = arith.constant 1 : index
    %c0_25 = arith.constant 0 : index
    %c0_26 = arith.constant 0 : index
    %43 = vector.load %arg4[%c1_24, %c0_25, %c0_26] : memref<9x32x32xf32, #tpu.memory_space<vmem>>, vector<1x32x32xf32>
    %44 = vector.shape_cast %43 : vector<1x32x32xf32> to vector<32x32xf32>
    %cst_27 = arith.constant dense<0.000000e+00> : vector<16x32xf32>
    %45 = tpu.matmul %42, %44, %cst_27 {dimension_numbers = #tpu.dot_dimension_numbers<[1], [0], [0], [1], [0, 0, 1, 1], [], []>, precision = #tpu.contract_precision<fp32>} : vector<16x32xf32>, vector<32x32xf32>, vector<16x32xf32> -> vector<16x32xf32>
    %46 = arith.addf %39, %45 : vector<16x32xf32>
    %c2 = arith.constant 2 : index
    %c0_28 = arith.constant 0 : index
    %c0_29 = arith.constant 0 : index
    %47 = vector.load %arg3[%c2, %c0_28, %c0_29] : memref<9x16x64xf32, #tpu.memory_space<vmem>>, vector<1x16x64xf32>
    %48 = vector.shape_cast %47 : vector<1x16x64xf32> to vector<16x64xf32>
    %cst_30 = arith.constant dense<0.000000e+00> : vector<16x32xf32>
    %49 = tpu.matmul %48, %31, %cst_30 {dimension_numbers = #tpu.dot_dimension_numbers<[1], [0], [0], [1], [0, 0, 1, 1], [], []>, precision = #tpu.contract_precision<fp32>} : vector<16x64xf32>, vector<64x32xf32>, vector<16x32xf32> -> vector<16x32xf32>
    %c2_31 = arith.constant 2 : index
    %c0_32 = arith.constant 0 : index
    %c0_33 = arith.constant 0 : index
    %50 = vector.load %arg4[%c2_31, %c0_32, %c0_33] : memref<9x32x32xf32, #tpu.memory_space<vmem>>, vector<1x32x32xf32>
    %51 = vector.shape_cast %50 : vector<1x32x32xf32> to vector<32x32xf32>
    %cst_34 = arith.constant dense<0.000000e+00> : vector<16x32xf32>
    %52 = tpu.matmul %49, %51, %cst_34 {dimension_numbers = #tpu.dot_dimension_numbers<[1], [0], [0], [1], [0, 0, 1, 1], [], []>, precision = #tpu.contract_precision<fp32>} : vector<16x32xf32>, vector<32x32xf32>, vector<16x32xf32> -> vector<16x32xf32>
    %53 = arith.addf %46, %52 : vector<16x32xf32>
    %c3 = arith.constant 3 : index
    %c0_35 = arith.constant 0 : index
    %c0_36 = arith.constant 0 : index
    %54 = vector.load %arg3[%c3, %c0_35, %c0_36] : memref<9x16x64xf32, #tpu.memory_space<vmem>>, vector<1x16x64xf32>
    %55 = vector.shape_cast %54 : vector<1x16x64xf32> to vector<16x64xf32>
    %cst_37 = arith.constant dense<0.000000e+00> : vector<16x32xf32>
    %56 = tpu.matmul %55, %31, %cst_37 {dimension_numbers = #tpu.dot_dimension_numbers<[1], [0], [0], [1], [0, 0, 1, 1], [], []>, precision = #tpu.contract_precision<fp32>} : vector<16x64xf32>, vector<64x32xf32>, vector<16x32xf32> -> vector<16x32xf32>
    %c3_38 = arith.constant 3 : index
    %c0_39 = arith.constant 0 : index
    %c0_40 = arith.constant 0 : index
    %57 = vector.load %arg4[%c3_38, %c0_39, %c0_40] : memref<9x32x32xf32, #tpu.memory_space<vmem>>, vector<1x32x32xf32>
    %58 = vector.shape_cast %57 : vector<1x32x32xf32> to vector<32x32xf32>
    %cst_41 = arith.constant dense<0.000000e+00> : vector<16x32xf32>
    %59 = tpu.matmul %56, %58, %cst_41 {dimension_numbers = #tpu.dot_dimension_numbers<[1], [0], [0], [1], [0, 0, 1, 1], [], []>, precision = #tpu.contract_precision<fp32>} : vector<16x32xf32>, vector<32x32xf32>, vector<16x32xf32> -> vector<16x32xf32>
    %60 = arith.addf %53, %59 : vector<16x32xf32>
    %c4 = arith.constant 4 : index
    %c0_42 = arith.constant 0 : index
    %c0_43 = arith.constant 0 : index
    %61 = vector.load %arg3[%c4, %c0_42, %c0_43] : memref<9x16x64xf32, #tpu.memory_space<vmem>>, vector<1x16x64xf32>
    %62 = vector.shape_cast %61 : vector<1x16x64xf32> to vector<16x64xf32>
    %cst_44 = arith.constant dense<0.000000e+00> : vector<16x32xf32>
    %63 = tpu.matmul %62, %31, %cst_44 {dimension_numbers = #tpu.dot_dimension_numbers<[1], [0], [0], [1], [0, 0, 1, 1], [], []>, precision = #tpu.contract_precision<fp32>} : vector<16x64xf32>, vector<64x32xf32>, vector<16x32xf32> -> vector<16x32xf32>
    %c4_45 = arith.constant 4 : index
    %c0_46 = arith.constant 0 : index
    %c0_47 = arith.constant 0 : index
    %64 = vector.load %arg4[%c4_45, %c0_46, %c0_47] : memref<9x32x32xf32, #tpu.memory_space<vmem>>, vector<1x32x32xf32>
    %65 = vector.shape_cast %64 : vector<1x32x32xf32> to vector<32x32xf32>
    %cst_48 = arith.constant dense<0.000000e+00> : vector<16x32xf32>
    %66 = tpu.matmul %63, %65, %cst_48 {dimension_numbers = #tpu.dot_dimension_numbers<[1], [0], [0], [1], [0, 0, 1, 1], [], []>, precision = #tpu.contract_precision<fp32>} : vector<16x32xf32>, vector<32x32xf32>, vector<16x32xf32> -> vector<16x32xf32>
    %67 = arith.addf %60, %66 : vector<16x32xf32>
    %c5 = arith.constant 5 : index
    %c0_49 = arith.constant 0 : index
    %c0_50 = arith.constant 0 : index
    %68 = vector.load %arg3[%c5, %c0_49, %c0_50] : memref<9x16x64xf32, #tpu.memory_space<vmem>>, vector<1x16x64xf32>
    %69 = vector.shape_cast %68 : vector<1x16x64xf32> to vector<16x64xf32>
    %cst_51 = arith.constant dense<0.000000e+00> : vector<16x32xf32>
    %70 = tpu.matmul %69, %31, %cst_51 {dimension_numbers = #tpu.dot_dimension_numbers<[1], [0], [0], [1], [0, 0, 1, 1], [], []>, precision = #tpu.contract_precision<fp32>} : vector<16x64xf32>, vector<64x32xf32>, vector<16x32xf32> -> vector<16x32xf32>
    %c5_52 = arith.constant 5 : index
    %c0_53 = arith.constant 0 : index
    %c0_54 = arith.constant 0 : index
    %71 = vector.load %arg4[%c5_52, %c0_53, %c0_54] : memref<9x32x32xf32, #tpu.memory_space<vmem>>, vector<1x32x32xf32>
    %72 = vector.shape_cast %71 : vector<1x32x32xf32> to vector<32x32xf32>
    %cst_55 = arith.constant dense<0.000000e+00> : vector<16x32xf32>
    %73 = tpu.matmul %70, %72, %cst_55 {dimension_numbers = #tpu.dot_dimension_numbers<[1], [0], [0], [1], [0, 0, 1, 1], [], []>, precision = #tpu.contract_precision<fp32>} : vector<16x32xf32>, vector<32x32xf32>, vector<16x32xf32> -> vector<16x32xf32>
    %74 = arith.addf %67, %73 : vector<16x32xf32>
    %c6 = arith.constant 6 : index
    %c0_56 = arith.constant 0 : index
    %c0_57 = arith.constant 0 : index
    %75 = vector.load %arg3[%c6, %c0_56, %c0_57] : memref<9x16x64xf32, #tpu.memory_space<vmem>>, vector<1x16x64xf32>
    %76 = vector.shape_cast %75 : vector<1x16x64xf32> to vector<16x64xf32>
    %cst_58 = arith.constant dense<0.000000e+00> : vector<16x32xf32>
    %77 = tpu.matmul %76, %31, %cst_58 {dimension_numbers = #tpu.dot_dimension_numbers<[1], [0], [0], [1], [0, 0, 1, 1], [], []>, precision = #tpu.contract_precision<fp32>} : vector<16x64xf32>, vector<64x32xf32>, vector<16x32xf32> -> vector<16x32xf32>
    %c6_59 = arith.constant 6 : index
    %c0_60 = arith.constant 0 : index
    %c0_61 = arith.constant 0 : index
    %78 = vector.load %arg4[%c6_59, %c0_60, %c0_61] : memref<9x32x32xf32, #tpu.memory_space<vmem>>, vector<1x32x32xf32>
    %79 = vector.shape_cast %78 : vector<1x32x32xf32> to vector<32x32xf32>
    %cst_62 = arith.constant dense<0.000000e+00> : vector<16x32xf32>
    %80 = tpu.matmul %77, %79, %cst_62 {dimension_numbers = #tpu.dot_dimension_numbers<[1], [0], [0], [1], [0, 0, 1, 1], [], []>, precision = #tpu.contract_precision<fp32>} : vector<16x32xf32>, vector<32x32xf32>, vector<16x32xf32> -> vector<16x32xf32>
    %81 = arith.addf %74, %80 : vector<16x32xf32>
    %c7 = arith.constant 7 : index
    %c0_63 = arith.constant 0 : index
    %c0_64 = arith.constant 0 : index
    %82 = vector.load %arg3[%c7, %c0_63, %c0_64] : memref<9x16x64xf32, #tpu.memory_space<vmem>>, vector<1x16x64xf32>
    %83 = vector.shape_cast %82 : vector<1x16x64xf32> to vector<16x64xf32>
    %cst_65 = arith.constant dense<0.000000e+00> : vector<16x32xf32>
    %84 = tpu.matmul %83, %31, %cst_65 {dimension_numbers = #tpu.dot_dimension_numbers<[1], [0], [0], [1], [0, 0, 1, 1], [], []>, precision = #tpu.contract_precision<fp32>} : vector<16x64xf32>, vector<64x32xf32>, vector<16x32xf32> -> vector<16x32xf32>
    %c7_66 = arith.constant 7 : index
    %c0_67 = arith.constant 0 : index
    %c0_68 = arith.constant 0 : index
    %85 = vector.load %arg4[%c7_66, %c0_67, %c0_68] : memref<9x32x32xf32, #tpu.memory_space<vmem>>, vector<1x32x32xf32>
    %86 = vector.shape_cast %85 : vector<1x32x32xf32> to vector<32x32xf32>
    %cst_69 = arith.constant dense<0.000000e+00> : vector<16x32xf32>
    %87 = tpu.matmul %84, %86, %cst_69 {dimension_numbers = #tpu.dot_dimension_numbers<[1], [0], [0], [1], [0, 0, 1, 1], [], []>, precision = #tpu.contract_precision<fp32>} : vector<16x32xf32>, vector<32x32xf32>, vector<16x32xf32> -> vector<16x32xf32>
    %88 = arith.addf %81, %87 : vector<16x32xf32>
    %c8 = arith.constant 8 : index
    %c0_70 = arith.constant 0 : index
    %c0_71 = arith.constant 0 : index
    %89 = vector.load %arg3[%c8, %c0_70, %c0_71] : memref<9x16x64xf32, #tpu.memory_space<vmem>>, vector<1x16x64xf32>
    %90 = vector.shape_cast %89 : vector<1x16x64xf32> to vector<16x64xf32>
    %cst_72 = arith.constant dense<0.000000e+00> : vector<16x32xf32>
    %91 = tpu.matmul %90, %31, %cst_72 {dimension_numbers = #tpu.dot_dimension_numbers<[1], [0], [0], [1], [0, 0, 1, 1], [], []>, precision = #tpu.contract_precision<fp32>} : vector<16x64xf32>, vector<64x32xf32>, vector<16x32xf32> -> vector<16x32xf32>
    %c8_73 = arith.constant 8 : index
    %c0_74 = arith.constant 0 : index
    %c0_75 = arith.constant 0 : index
    %92 = vector.load %arg4[%c8_73, %c0_74, %c0_75] : memref<9x32x32xf32, #tpu.memory_space<vmem>>, vector<1x32x32xf32>
    %93 = vector.shape_cast %92 : vector<1x32x32xf32> to vector<32x32xf32>
    %cst_76 = arith.constant dense<0.000000e+00> : vector<16x32xf32>
    %94 = tpu.matmul %91, %93, %cst_76 {dimension_numbers = #tpu.dot_dimension_numbers<[1], [0], [0], [1], [0, 0, 1, 1], [], []>, precision = #tpu.contract_precision<fp32>} : vector<16x32xf32>, vector<32x32xf32>, vector<16x32xf32> -> vector<16x32xf32>
    %95 = arith.addf %88, %94 : vector<16x32xf32>
    %96 = vector.extract_strided_slice %0 {offsets = [3, 0], sizes = [1, 32], strides = [1, 1]} : vector<6x32xf32> to vector<1x32xf32>
    %97 = vector.extract_strided_slice %0 {offsets = [4, 0], sizes = [1, 32], strides = [1, 1]} : vector<6x32xf32> to vector<1x32xf32>
    %98 = vector.extract_strided_slice %0 {offsets = [5, 0], sizes = [1, 32], strides = [1, 1]} : vector<6x32xf32> to vector<1x32xf32>
    %cst_77 = arith.constant dense<0.000000e+00> : vector<32xf32>
    %99 = vector.multi_reduction <add>, %95, %cst_77 [0] : vector<16x32xf32> to vector<32xf32>
    %100 = vector.shape_cast %99 : vector<32xf32> to vector<1x32xf32>
    %cst_78 = arith.constant 6.250000e-02 : f32
    %101 = vector.broadcast %cst_78 : f32 to vector<1x32xf32>
    %102 = arith.mulf %100, %101 : vector<1x32xf32>
    %103 = vector.broadcast %102 : vector<1x32xf32> to vector<16x32xf32>
    %104 = arith.subf %95, %103 : vector<16x32xf32>
    %105 = arith.mulf %104, %104 : vector<16x32xf32>
    %cst_79 = arith.constant dense<0.000000e+00> : vector<32xf32>
    %106 = vector.multi_reduction <add>, %105, %cst_79 [0] : vector<16x32xf32> to vector<32xf32>
    %107 = vector.shape_cast %106 : vector<32xf32> to vector<1x32xf32>
    %cst_80 = arith.constant 6.250000e-02 : f32
    %108 = vector.broadcast %cst_80 : f32 to vector<1x32xf32>
    %109 = arith.mulf %107, %108 : vector<1x32xf32>
    %cst_81 = arith.constant 9.99999974E-6 : f32
    %110 = vector.broadcast %cst_81 : f32 to vector<1x32xf32>
    %111 = arith.addf %109, %110 : vector<1x32xf32>
    %112 = math.rsqrt %111 : vector<1x32xf32>
    %113 = arith.mulf %96, %112 : vector<1x32xf32>
    %114 = vector.broadcast %113 : vector<1x32xf32> to vector<16x32xf32>
    %115 = arith.mulf %104, %114 : vector<16x32xf32>
    %116 = vector.broadcast %97 : vector<1x32xf32> to vector<16x32xf32>
    %117 = arith.addf %115, %116 : vector<16x32xf32>
    %cst_82 = arith.constant 0.000000e+00 : f32
    %118 = vector.broadcast %cst_82 : f32 to vector<16x32xf32>
    %119 = arith.cmpf oge, %117, %118 : vector<16x32xf32>
    %120 = vector.broadcast %98 : vector<1x32xf32> to vector<16x32xf32>
    %121 = arith.mulf %120, %117 : vector<16x32xf32>
    %122 = arith.select %119, %117, %121 : vector<16x32xi1>, vector<16x32xf32>
    %c0_83 = arith.constant 0 : index
    %c0_84 = arith.constant 0 : index
    %c0_85 = arith.constant 0 : index
    %123 = vector.load %arg6[%c0_83, %c0_84, %c0_85] : memref<1x16x32xf32, #tpu.memory_space<vmem>>, vector<1x16x32xf32>
    %124 = vector.shape_cast %123 : vector<1x16x32xf32> to vector<16x32xf32>
    %125 = vector.shape_cast %122 : vector<16x32xf32> to vector<1x16x32xf32>
    tpu.vector_store %arg6[%c0_83, %c0_84, %c0_85], %125 {strides = array<i32>} : memref<1x16x32xf32, #tpu.memory_space<vmem>>, vector<1x16x32xf32>,
    return
  }
  func.func @transform_0(%arg0: i32) -> (i32, i32, i32) {
    %c0_i32 = arith.constant 0 : i32
    %c0_i32_0 = arith.constant 0 : i32
    %c0_i32_1 = arith.constant 0 : i32
    return %arg0, %c0_i32, %c0_i32_0 : i32, i32, i32
  }
  func.func @transform_1(%arg0: i32) -> (i32, i32) {
    %c0_i32 = arith.constant 0 : i32
    %c0_i32_0 = arith.constant 0 : i32
    %c0_i32_1 = arith.constant 0 : i32
    return %c0_i32, %c0_i32_0 : i32, i32
  }
  func.func @transform_2(%arg0: i32) -> (i32, i32, i32) {
    %c0_i32 = arith.constant 0 : i32
    %c0_i32_0 = arith.constant 0 : i32
    %c0_i32_1 = arith.constant 0 : i32
    %c0_i32_2 = arith.constant 0 : i32
    return %c0_i32, %c0_i32_0, %c0_i32_1 : i32, i32, i32
  }
  func.func @transform_3(%arg0: i32) -> (i32, i32, i32) {
    %c0_i32 = arith.constant 0 : i32
    %c0_i32_0 = arith.constant 0 : i32
    %c0_i32_1 = arith.constant 0 : i32
    %c0_i32_2 = arith.constant 0 : i32
    return %c0_i32, %c0_i32_0, %c0_i32_1 : i32, i32, i32
  }
  func.func @transform_4(%arg0: i32) -> (i32, i32) {
    %c0_i32 = arith.constant 0 : i32
    %c0_i32_0 = arith.constant 0 : i32
    %c0_i32_1 = arith.constant 0 : i32
    return %c0_i32, %c0_i32_0 : i32, i32
  }
  func.func @transform_5(%arg0: i32) -> (i32, i32, i32) {
    %c0_i32 = arith.constant 0 : i32
    %c0_i32_0 = arith.constant 0 : i32
    %c0_i32_1 = arith.constant 0 : i32
    return %arg0, %c0_i32, %c0_i32_0 : i32, i32, i32
  }
}

</mosaic_0001>

<llo_original>
// kernel: channel_encoder_sf12.1
$region0: #{channel_encoder_sf12.1}
  #allocation0 [shape = 'u32[]', space=smem, size = 0x4, offset = 0x4, fixed_abs, tag = 'smem constant byte address 0x4 - core index']
  #allocation1 [shape = 'u32[144,128]{1,0:T(1,128)}', space=vmem, size = 0x12000, scoped, tag = 'internal scratch']
  %s0 = inlined_call_operand.vmem [shape: f32[2,64,18], index: 0, kind: input, shape index: {}]
  %s1 = inlined_call_operand.vmem [shape: f32[18,32], index: 1, kind: input, shape index: {}]
  %s2 = inlined_call_operand.vmem [shape: f32[9,16,64], index: 2, kind: input, shape index: {}]
  %s3 = inlined_call_operand.vmem [shape: f32[9,32,32], index: 3, kind: input, shape index: {}]
  %s4 = inlined_call_operand.vmem [shape: f32[6,32], index: 4, kind: input, shape index: {}]
  %s5 = inlined_call_operand.vmem [shape: f32[2,16,32], index: 5, kind: output, shape index: {}]
  %s6 = sld [smem:[#allocation0]]
  $region53: #{channel_encoder_sf12.1} parent=0
    _
  %s8 = ssub.s32 1, %s6
  %s9 = scalar_select 0, %s8, %s6
  loop: start=0, step=1, limit=4
  $region2: #{channel_encoder_sf12.1} parent=0 // loop_pre_header
    _
  $region3: #{channel_encoder_sf12.1} parent=0 // loop_header
    %s11 = sphi 0, %s15
    %p12 = scmp.ge.s32.totalorder %s11, 4
    %s21 = sphi 0, %s23
    %s24 = sphi 0, %s21
    %s25 = sphi 0, %s24
    %s41 = sphi 0, %s25
    %s45 = sphi 0, %s45
    %s47 = sphi 0, %s45
    %s48 = sphi 0, %s47
    %s62 = sphi 0, %s48
    %s66 = sphi 0, %s66
    %s68 = sphi 0, %s66
    %s69 = sphi 0, %s68
    %s83 = sphi 0, %s69
    %s87 = sphi 0, %s87
    %s89 = sphi 0, %s87
    %s90 = sphi 0, %s89
    %s104 = sphi 0, %s90
    %s108 = sphi 0, %s108
    %s110 = sphi 0, %s108
    %s111 = sphi 0, %s110
    %s125 = sphi 0, %s111
    %s131 = sphi 0, %s133
    %s134 = sphi 0, %s131
    %s135 = sphi 0, %s134
    %s151 = sphi 0, %s135
  $region4: #{channel_encoder_sf12.1} parent=0 // loop_header_branch
    %14 = sbr.rel (%p12) target = $region8
  $region5: #{channel_encoder_sf12.1} parent=0 // loop_body
    %s16 = ssub.s32 %s11, 1
    %s17 = ssub.s32 %s11, 2
    %s18 = sadd.s32 %s11, 1
    %s19 = ssub.s32 %s11, %s18
    %p20 = scmp.eq.s32.totalorder %s19, 0
    %s22 = sadd.s32 %s21, 1
    %s23 = scalar_select %p20, %s21, %s22
    %p26 = pneg %p20
    %p27 = scmp.eq.s32.totalorder %s11, 1
    %p28 = por %p26, %p27
    %p29 = scmp.ne.s32.totalorder %s21, %s24
    %p30 = scmp.eq.s32.totalorder %s11, 0
    %p31 = por %p29, %p30
    %p32 = scmp.ne.s32.totalorder %s21, %s24
    %p33 = scmp.eq.s32.totalorder %s16, 1
    %p34 = por %p32, %p33
    %p35 = scmp.ne.s32.totalorder %s24, %s25
    %p36 = scmp.eq.s32.totalorder %s16, 0
    %p37 = por %p35, %p36
    %p38 = scmp.ne.s32.totalorder %s24, %s25
    %p39 = scmp.eq.s32.totalorder %s17, 1
    %p40 = por %p38, %p39
    %p42 = scmp.ne.s32.totalorder %s25, %s41
    %p43 = scmp.eq.s32.totalorder %s17, 0
    %p44 = por %p42, %p43
    %s46 = sadd.s32 %s45, 1
    %p49 = scmp.eq.s32.totalorder %s11, 1
    %p50 = scmp.ne.s32.totalorder %s45, %s47
    %p51 = scmp.eq.s32.totalorder %s11, 0
    %p52 = por %p50, %p51
    %p53 = scmp.ne.s32.totalorder %s45, %s47
    %p54 = scmp.eq.s32.totalorder %s16, 1
    %p55 = por %p53, %p54
    %p56 = scmp.ne.s32.totalorder %s47, %s48
    %p57 = scmp.eq.s32.totalorder %s16, 0
    %p58 = por %p56, %p57
    %p59 = scmp.ne.s32.totalorder %s47, %s48
    %p60 = scmp.eq.s32.totalorder %s17, 1
    %p61 = por %p59, %p60
    %p63 = scmp.ne.s32.totalorder %s48, %s62
    %p64 = scmp.eq.s32.totalorder %s17, 0
    %p65 = por %p63, %p64
    %s67 = sadd.s32 %s66, 1
    %p70 = scmp.eq.s32.totalorder %s11, 1
    %p71 = scmp.ne.s32.totalorder %s66, %s68
    %p72 = scmp.eq.s32.totalorder %s11, 0
    %p73 = por %p71, %p72
    %p74 = scmp.ne.s32.totalorder %s66, %s68
    %p75 = scmp.eq.s32.totalorder %s16, 1
    %p76 = por %p74, %p75
    %p77 = scmp.ne.s32.totalorder %s68, %s69
    %p78 = scmp.eq.s32.totalorder %s16, 0
    %p79 = por %p77, %p78
    %p80 = scmp.ne.s32.totalorder %s68, %s69
    %p81 = scmp.eq.s32.totalorder %s17, 1
    %p82 = por %p80, %p81
    %p84 = scmp.ne.s32.totalorder %s69, %s83
    %p85 = scmp.eq.s32.totalorder %s17, 0
    %p86 = por %p84, %p85
    %s88 = sadd.s32 %s87, 1
    %p91 = scmp.eq.s32.totalorder %s11, 1
    %p92 = scmp.ne.s32.totalorder %s87, %s89
    %p93 = scmp.eq.s32.totalorder %s11, 0
    %p94 = por %p92, %p93
    %p95 = scmp.ne.s32.totalorder %s87, %s89
    %p96 = scmp.eq.s32.totalorder %s16, 1
    %p97 = por %p95, %p96
    %p98 = scmp.ne.s32.totalorder %s89, %s90
    %p99 = scmp.eq.s32.totalorder %s16, 0
    %p100 = por %p98, %p99
    %p101 = scmp.ne.s32.totalorder %s89, %s90
    %p102 = scmp.eq.s32.totalorder %s17, 1
    %p103 = por %p101, %p102
    %p105 = scmp.ne.s32.totalorder %s90, %s104
    %p106 = scmp.eq.s32.totalorder %s17, 0
    %p107 = por %p105, %p106
    %s109 = sadd.s32 %s108, 1
    %p112 = scmp.eq.s32.totalorder %s11, 1
    %p113 = scmp.ne.s32.totalorder %s108, %s110
    %p114 = scmp.eq.s32.totalorder %s11, 0
    %p115 = por %p113, %p114
    %p116 = scmp.ne.s32.totalorder %s108, %s110
    %p117 = scmp.eq.s32.totalorder %s16, 1
    %p118 = por %p116, %p117
    %p119 = scmp.ne.s32.totalorder %s110, %s111
    %p120 = scmp.eq.s32.totalorder %s16, 0
    %p121 = por %p119, %p120
    %p122 = scmp.ne.s32.totalorder %s110, %s111
    %p123 = scmp.eq.s32.totalorder %s17, 1
    %p124 = por %p122, %p123
    %p126 = scmp.ne.s32.totalorder %s111, %s125
    %p127 = scmp.eq.s32.totalorder %s17, 0
    %p128 = por %p126, %p127
    %s129 = ssub.s32 %s11, %s18
    %p130 = scmp.eq.s32.totalorder %s129, 0
    %s132 = sadd.s32 %s131, 1
    %s133 = scalar_select %p130, %s131, %s132
    %p136 = pneg %p130
    %p137 = scmp.eq.s32.totalorder %s11, 1
    %p138 = por %p136, %p137
    %p139 = scmp.ne.s32.totalorder %s131, %s134
    %p140 = scmp.eq.s32.totalorder %s11, 0
    %p141 = por %p139, %p140
    %p142 = scmp.ne.s32.totalorder %s131, %s134
    %p143 = scmp.eq.s32.totalorder %s16, 1
    %p144 = por %p142, %p143
    %p145 = scmp.ne.s32.totalorder %s134, %s135
    %p146 = scmp.eq.s32.totalorder %s16, 0
    %p147 = por %p145, %p146
    %p148 = scmp.ne.s32.totalorder %s134, %s135
    %p149 = scmp.eq.s32.totalorder %s17, 1
    %p150 = por %p148, %p149
    %p152 = scmp.ne.s32.totalorder %s135, %s151
    %p153 = scmp.eq.s32.totalorder %s17, 0
    %p154 = por %p152, %p153
    %p155 = scmp.le.s32.totalorder 1, %s11
    %p156 = scmp.lt.s32.totalorder %s11, 3
    %p157 = pnand %p155, %p156
    %p158 = pneg %p157
    // Predicated region
    $region9: #{channel_encoder_sf12.1} parent=5 // pred_check
      _
    $region10: #{channel_encoder_sf12.1} parent=5 // pred_check_branch
      %160 = sbr.rel (%p157) target = $region12
    $region11: #{channel_encoder_sf12.1} parent=5 // pred_region
      %s161 = ssub.s32 %s11, 1
      // Predicated region
      $region13: #{channel_encoder_sf12.1} parent=11 // pred_check
        %p162 = pneg %p58
      $region14: #{channel_encoder_sf12.1} parent=11 // pred_check_branch
        %164 = sbr.rel (%p162) target = $region16
      $region15: #{channel_encoder_sf12.1} parent=11 // pred_region
        _
      $region16: #{channel_encoder_sf12.1} parent=11 // pred_fallthru
        _
      // Predicated region
      $region17: #{channel_encoder_sf12.1} parent=11 // pred_check
        %p165 = pneg %p79
      $region18: #{channel_encoder_sf12.1} parent=11 // pred_check_branch
        %167 = sbr.rel (%p165) target = $region20
      $region19: #{channel_encoder_sf12.1} parent=11 // pred_region
        _
      $region20: #{channel_encoder_sf12.1} parent=11 // pred_fallthru
        _
      // Predicated region
      $region21: #{channel_encoder_sf12.1} parent=11 // pred_check
        %p168 = pneg %p100
      $region22: #{channel_encoder_sf12.1} parent=11 // pred_check_branch
        %170 = sbr.rel (%p168) target = $region24
      $region23: #{channel_encoder_sf12.1} parent=11 // pred_region
        _
      $region24: #{channel_encoder_sf12.1} parent=11 // pred_fallthru
        _
      // Predicated region
      $region25: #{channel_encoder_sf12.1} parent=11 // pred_check
        %p171 = pneg %p121
      $region26: #{channel_encoder_sf12.1} parent=11 // pred_check_branch
        %173 = sbr.rel (%p171) target = $region28
      $region27: #{channel_encoder_sf12.1} parent=11 // pred_region
        _
      $region28: #{channel_encoder_sf12.1} parent=11 // pred_fallthru
        _
    $region12: #{channel_encoder_sf12.1} parent=5 // pred_fallthru
      _
    %p174 = scmp.lt.s32.totalorder %s11, 2
    // Predicated region
    $region29: #{channel_encoder_sf12.1} parent=5 // pred_check
      %p175 = pneg %p174
    $region30: #{channel_encoder_sf12.1} parent=5 // pred_check_branch
      %177 = sbr.rel (%p175) target = $region32
    $region31: #{channel_encoder_sf12.1} parent=5 // pred_region
      // Predicated region
      $region33: #{channel_encoder_sf12.1} parent=31 // pred_check
        %p178 = pneg %p31
      $region34: #{channel_encoder_sf12.1} parent=31 // pred_check_branch
        %180 = sbr.rel (%p178) target = $region36
      $region35: #{channel_encoder_sf12.1} parent=31 // pred_region
        %p181 = scmp.lt.s32.totalorder %s11, 1
        %s182 = scalar_select %p181, %s11, 1
        %s183 = smul.addr %s182, 8
        %s184 = smul.addr %s183, 8
        %s185 = scalar_lea.vmem %s0, %s184
      $region36: #{channel_encoder_sf12.1} parent=31 // pred_fallthru
        _
    $region32: #{channel_encoder_sf12.1} parent=5 // pred_fallthru
      _
    %p186 = scmp.le.s32.totalorder 1, %s11
    %p187 = scmp.lt.s32.totalorder %s11, 3
    %p188 = pnand %p186, %p187
    %p189 = pneg %p188
    // Predicated region
    $region37: #{channel_encoder_sf12.1} parent=5 // pred_check
      _
    $region38: #{channel_encoder_sf12.1} parent=5 // pred_check_branch
      %191 = sbr.rel (%p188) target = $region40
    $region39: #{channel_encoder_sf12.1} parent=5 // pred_region
      %s192 = ssub.s32 %s11, 1
      %p193 = scmp.lt.s32.totalorder %s16, 1
      %s194 = scalar_select %p193, %s16, 1
      %s195 = smul.addr %s194, 8
      %s196 = smul.addr %s195, 8
      %s197 = scalar_lea.vmem %s0, %s196
      %p198 = pneg %p37
      %p199 = pneg %p34
      %p200 = pneg %p58
      %p201 = pneg %p55
      %p202 = pneg %p79
      %p203 = pneg %p76
      %p204 = pneg %p100
      %p205 = pneg %p97
      %p206 = pneg %p121
      %p207 = pneg %p118
      %p208 = pneg %p147
      %p209 = pneg %p144
      %p210 = scmp.lt.s32.totalorder %s16, 1
      %s211 = scalar_select %p210, %s16, 1
      %s212 = smul.addr %s211, 2
      %s213 = smul.addr %s212, 8
      %s214 = scalar_lea.vmem %s5, %s213
      %p215 = scmp.lt.s32.totalorder %s16, 1
      %s216 = scalar_select %p215, %s16, 1
      %s217 = smul.addr %s216, 8
      %s218 = smul.addr %s217, 8
      %s219 = scalar_lea.vmem %s0, %s218
      %p220 = scmp.lt.s32.totalorder %s16, 1
      %s221 = scalar_select %p220, %s16, 1
      %s222 = smul.addr %s221, 2
      %s223 = smul.addr %s222, 8
      %s224 = scalar_lea.vmem %s5, %s223
      %v225 = vld [vmem:[%s4] sm:$0x3f]
      %v226 = vld [vmem:[%s219] sm:$0xff]
      %v227 = vld [vmem:[%s219 + $0x8] sm:$0xff]
      %v228 = vld [vmem:[%s219 + $0x10] sm:$0xff]
      %v229 = vld [vmem:[%s219 + $0x18] sm:$0xff]
      %v230 = vld [vmem:[%s219 + $0x20] sm:$0xff]
      %v231 = vld [vmem:[%s219 + $0x28] sm:$0xff]
      %v232 = vld [vmem:[%s219 + $0x30] sm:$0xff]
      %v233 = vld [vmem:[%s219 + $0x38] sm:$0xff]
      %v234 = vld [vmem:[%s1] sm:$0xff]
      %v235 = vld [vmem:[%s1 + $0x8] sm:$0xff]
      %v236 = vld [vmem:[%s1 + $0x10] sm:$0x3]
      %vm237 = vcmask 146432
      %v239 = vsel %vm237, %v226, 0
      %v242 = vsel %vm237, %v227, 0
      %v245 = vsel %vm237, %v228, 0
      %v248 = vsel %vm237, %v229, 0
      %v251 = vsel %vm237, %v230, 0
      %v254 = vsel %vm237, %v231, 0
      %v257 = vsel %vm237, %v232, 0
      %v260 = vsel %vm237, %v233, 0
      %vm262 = vcmask 1041408
      %v264 = vsel %vm262, %v236, 0
      %266 = vmatprep.subr.mxu0 0.0
      %v267 = vand.u32 %v234, 4294901760
      %268 = vmatpush1.msra.mxu0 %v267
      %269 = vmatprep.subr.mxu0 0.0
      %v270 = vand.u32 %v235, 4294901760
      %271 = vmatpush1.msra.mxu0 %v270
      %272 = vmatprep.subr.mxu0 0.0
      %v273 = vand.u32 %v264, 4294901760
      %274 = vmatpush1.msra.mxu0 %v273
      %275 = vmatprep.subr.mxu0 0.0
      %276 = vmatpush1.msra.mxu0 0.0
      %277 = vmatprep.subr.mxu0 0.0
      %278 = vmatpush1.msra.mxu0 0.0
      %279 = vmatprep.subr.mxu0 0.0
      %280 = vmatpush1.msra.mxu0 0.0
      %281 = vmatprep.subr.mxu0 0.0
      %282 = vmatpush1.msra.mxu0 0.0
      %283 = vmatprep.subr.mxu0 0.0
      %284 = vmatpush1.msra.mxu0 0.0
      %285 = vmatprep.subr.mxu0 0.0
      %286 = vmatpush1.msra.mxu0 0.0
      %287 = vmatprep.subr.mxu0 0.0
      %288 = vmatpush1.msra.mxu0 0.0
      %289 = vmatprep.subr.mxu0 0.0
      %290 = vmatpush1.msra.mxu0 0.0
      %291 = vmatprep.subr.mxu0 0.0
      %292 = vmatpush1.msra.mxu0 0.0
      %293 = vmatprep.subr.mxu0 0.0
      %294 = vmatpush1.msra.mxu0 0.0
      %295 = vmatprep.subr.mxu0 0.0
      %296 = vmatpush1.msra.mxu0 0.0
      %297 = vmatprep.subr.mxu0 0.0
      %298 = vmatpush1.msra.mxu0 0.0
      %299 = vmatprep.subr.mxu0 0.0
      %300 = vmatpush1.msra.mxu0 0.0
      %301 = vmatprep.subr.mxu0 0.0
      %302 = vmatpush1.msra.mxu0 0.0
      %303 = vmatprep.subr.mxu0 0.0
      %304 = vmatpush1.msra.mxu0 0.0
      %305 = vmatprep.subr.mxu0 0.0
      %306 = vmatpush1.msra.mxu0 0.0
      %307 = vmatprep.subr.mxu0 0.0
      %308 = vmatpush1.msra.mxu0 0.0
      %309 = vmatprep.subr.mxu0 0.0
      %310 = vmatpush1.msra.mxu0 0.0
      %311 = vmatprep.subr.mxu0 0.0
      %312 = vmatpush1.msra.mxu0 0.0
      %313 = vmatprep.subr.mxu0 0.0
      %314 = vmatpush1.msra.mxu0 0.0
      %315 = vmatprep.subr.mxu0 0.0
      %316 = vmatpush1.msra.mxu0 0.0
      %317 = vmatprep.subr.mxu0 0.0
      %318 = vmatpush1.msra.mxu0 0.0
      %319 = vmatprep.subr.mxu0 0.0
      %320 = vmatpush1.msra.mxu0 0.0
      %321 = vmatprep.subr.mxu0 0.0
      %322 = vmatpush1.msra.mxu0 0.0
      %323 = vmatprep.subr.mxu0 0.0
      %324 = vmatpush1.msra.mxu0 0.0
      %325 = vmatprep.subr.mxu0 0.0
      %326 = vmatpush1.msra.mxu0 0.0
      %327 = vmatprep.subr.mxu0 0.0
      %328 = vmatpush1.msra.mxu0 0.0
      %329 = vmatprep.subr.mxu0 0.0
      %330 = vmatpush1.msra.mxu0 0.0
      %331 = vmatprep.subr.mxu0 0.0
      %332 = vmatpush1.msra.mxu0 0.0
      %333 = vmatprep.mubr.f32.mxu0 0.0
      %v334 = vand.u32 %v239, 4294901760
      %v335 = vsub.f32 %v239, %v334
      %v336 = vand.u32 %v335, 4294901760
      %v337 = vsub.f32 %v335, %v336
      %v338 = vand.u32 %v337, 4294901760
      %339 = vmatmul.mubr.f32.gmra.mrb[0].mxu0 %v338
      %v340 = vpop.f32.mrb[0].mxu0
      %v341 = vadd.f32 0.0, %v340
      %v342 = vpop.f32.mrb[0].mxu0
      %343 = vmatprep.mubr.f32.mxu0 0.0
      %v344 = vand.u32 %v242, 4294901760
      %v345 = vsub.f32 %v242, %v344
      %v346 = vand.u32 %v345, 4294901760
      %v347 = vsub.f32 %v345, %v346
      %v348 = vand.u32 %v347, 4294901760
      %349 = vmatmul.mubr.f32.gmra.mrb[0].mxu0 %v348
      %v350 = vpop.f32.mrb[0].mxu0
      %v351 = vadd.f32 0.0, %v350
      %v352 = vpop.f32.mrb[0].mxu0
      %353 = vmatprep.mubr.f32.mxu0 0.0
      %v354 = vand.u32 %v245, 4294901760
      %v355 = vsub.f32 %v245, %v354
      %v356 = vand.u32 %v355, 4294901760
      %v357 = vsub.f32 %v355, %v356
      %v358 = vand.u32 %v357, 4294901760
      %359 = vmatmul.mubr.f32.gmra.mrb[0].mxu0 %v358
      %v360 = vpop.f32.mrb[0].mxu0
      %v361 = vadd.f32 0.0, %v360
      %v362 = vpop.f32.mrb[0].mxu0
      %363 = vmatprep.mubr.f32.mxu0 0.0
      %v364 = vand.u32 %v248, 4294901760
      %v365 = vsub.f32 %v248, %v364
      %v366 = vand.u32 %v365, 4294901760
      %v367 = vsub.f32 %v365, %v366
      %v368 = vand.u32 %v367, 4294901760
      %369 = vmatmul.mubr.f32.gmra.mrb[0].mxu0 %v368
      %v370 = vpop.f32.mrb[0].mxu0
      %v371 = vadd.f32 0.0, %v370
      %v372 = vpop.f32.mrb[0].mxu0
      %373 = vmatprep.mubr.f32.mxu0 0.0
      %v374 = vand.u32 %v251, 4294901760
      %v375 = vsub.f32 %v251, %v374
      %v376 = vand.u32 %v375, 4294901760
      %v377 = vsub.f32 %v375, %v376
      %v378 = vand.u32 %v377, 4294901760
      %379 = vmatmul.mubr.f32.gmra.mrb[0].mxu0 %v378
      %v380 = vpop.f32.mrb[0].mxu0
      %v381 = vadd.f32 0.0, %v380
      %v382 = vpop.f32.mrb[0].mxu0
      %383 = vmatprep.mubr.f32.mxu0 0.0
      %v384 = vand.u32 %v254, 4294901760
      %v385 = vsub.f32 %v254, %v384
      %v386 = vand.u32 %v385, 4294901760
      %v387 = vsub.f32 %v385, %v386
      %v388 = vand.u32 %v387, 4294901760
      %389 = vmatmul.mubr.f32.gmra.mrb[0].mxu0 %v388
      %v390 = vpop.f32.mrb[0].mxu0
      %v391 = vadd.f32 0.0, %v390
      %v392 = vpop.f32.mrb[0].mxu0
      %393 = vmatprep.mubr.f32.mxu0 0.0
      %v394 = vand.u32 %v257, 4294901760
      %v395 = vsub.f32 %v257, %v394
      %v396 = vand.u32 %v395, 4294901760
      %v397 = vsub.f32 %v395, %v396
      %v398 = vand.u32 %v397, 4294901760
      %399 = vmatmul.mubr.f32.gmra.mrb[0].mxu0 %v398
      %v400 = vpop.f32.mrb[0].mxu0
      %v401 = vadd.f32 0.0, %v400
      %v402 = vpop.f32.mrb[0].mxu0
      %403 = vmatprep.mubr.f32.mxu0 0.0
      %v404 = vand.u32 %v260, 4294901760
      %v405 = vsub.f32 %v260, %v404
      %v406 = vand.u32 %v405, 4294901760
      %v407 = vsub.f32 %v405, %v406
      %v408 = vand.u32 %v407, 4294901760
      %409 = vmatmul.mubr.f32.gmra.mrb[0].mxu0 %v408
      %v410 = vpop.f32.mrb[0].mxu0
      %v411 = vadd.f32 0.0, %v410
      %v412 = vpop.f32.mrb[0].mxu0
      %413 = vdwg.mxu0
      %414 = vmatprep.subr.mxu0 0.0
      %v415 = vand.u32 %v234, 4294901760
      %v416 = vsub.f32 %v234, %v415
      %v417 = vand.u32 %v416, 4294901760
      %v418 = vsub.f32 %v416, %v417
      %v419 = vand.u32 %v418, 4294901760
      %420 = vmatpush1.msra.mxu0 %v419
      %421 = vmatprep.subr.mxu0 0.0
      %v422 = vand.u32 %v235, 4294901760
      %v423 = vsub.f32 %v235, %v422
      %v424 = vand.u32 %v423, 4294901760
      %v425 = vsub.f32 %v423, %v424
      %v426 = vand.u32 %v425, 4294901760
      %427 = vmatpush1.msra.mxu0 %v426
      %428 = vmatprep.subr.mxu0 0.0
      %v429 = vand.u32 %v264, 4294901760
      %v430 = vsub.f32 %v264, %v429
      %v431 = vand.u32 %v430, 4294901760
      %v432 = vsub.f32 %v430, %v431
      %v433 = vand.u32 %v432, 4294901760
      %434 = vmatpush1.msra.mxu0 %v433
      %435 = vmatprep.subr.mxu0 0.0
      %436 = vmatpush1.msra.mxu0 0.0
      %437 = vmatprep.subr.mxu0 0.0
      %438 = vmatpush1.msra.mxu0 0.0
      %439 = vmatprep.subr.mxu0 0.0
      %440 = vmatpush1.msra.mxu0 0.0
      %441 = vmatprep.subr.mxu0 0.0
      %442 = vmatpush1.msra.mxu0 0.0
      %443 = vmatprep.subr.mxu0 0.0
      %444 = vmatpush1.msra.mxu0 0.0
      %445 = vmatprep.subr.mxu0 0.0
      %446 = vmatpush1.msra.mxu0 0.0
      %447 = vmatprep.subr.mxu0 0.0
      %448 = vmatpush1.msra.mxu0 0.0
      %449 = vmatprep.subr.mxu0 0.0
      %450 = vmatpush1.msra.mxu0 0.0
      %451 = vmatprep.subr.mxu0 0.0
      %452 = vmatpush1.msra.mxu0 0.0
      %453 = vmatprep.subr.mxu0 0.0
      %454 = vmatpush1.msra.mxu0 0.0
      %455 = vmatprep.subr.mxu0 0.0
      %456 = vmatpush1.msra.mxu0 0.0
      %457 = vmatprep.subr.mxu0 0.0
      %458 = vmatpush1.msra.mxu0 0.0
      %459 = vmatprep.subr.mxu0 0.0
      %460 = vmatpush1.msra.mxu0 0.0
      %461 = vmatprep.subr.mxu0 0.0
      %462 = vmatpush1.msra.mxu0 0.0
      %463 = vmatprep.subr.mxu0 0.0
      %464 = vmatpush1.msra.mxu0 0.0
      %465 = vmatprep.subr.mxu0 0.0
      %466 = vmatpush1.msra.mxu0 0.0
      %467 = vmatprep.subr.mxu0 0.0
      %468 = vmatpush1.msra.mxu0 0.0
      %469 = vmatprep.subr.mxu0 0.0
      %470 = vmatpush1.msra.mxu0 0.0
      %471 = vmatprep.subr.mxu0 0.0
      %472 = vmatpush1.msra.mxu0 0.0
      %473 = vmatprep.subr.mxu0 0.0
      %474 = vmatpush1.msra.mxu0 0.0
      %475 = vmatprep.subr.mxu0 0.0
      %476 = vmatpush1.msra.mxu0 0.0
      %477 = vmatprep.subr.mxu0 0.0
      %478 = vmatpush1.msra.mxu0 0.0
      %479 = vmatprep.subr.mxu0 0.0
      %480 = vmatpush1.msra.mxu0 0.0
      %481 = vmatprep.subr.mxu0 0.0
      %482 = vmatpush1.msra.mxu0 0.0
      %483 = vmatprep.subr.mxu0 0.0
      %484 = vmatpush1.msra.mxu0 0.0
      %485 = vmatprep.subr.mxu0 0.0
      %486 = vmatpush1.msra.mxu0 0.0
      %487 = vmatprep.subr.mxu0 0.0
      %488 = vmatpush1.msra.mxu0 0.0
      %489 = vmatprep.subr.mxu0 0.0
      %490 = vmatpush1.msra.mxu0 0.0
      %491 = vmatprep.subr.mxu0 0.0
      %492 = vmatpush1.msra.mxu0 0.0
      %493 = vmatprep.mubr.f32.mxu0 0.0
      %v494 = vand.u32 %v239, 4294901760
      %495 = vmatmul.mubr.f32.gmra.mrb[0].mxu0 %v494
      %v496 = vpop.f32.mrb[0].mxu0
      %v497 = vadd.f32 %v341, %v496
      %v498 = vpop.f32.mrb[0].mxu0
      %499 = vmatprep.mubr.f32.mxu0 0.0
      %v500 = vand.u32 %v242, 4294901760
      %501 = vmatmul.mubr.f32.gmra.mrb[0].mxu0 %v500
      %v502 = vpop.f32.mrb[0].mxu0
      %v503 = vadd.f32 %v351, %v502
      %v504 = vpop.f32.mrb[0].mxu0
      %505 = vmatprep.mubr.f32.mxu0 0.0
      %v506 = vand.u32 %v245, 4294901760
      %507 = vmatmul.mubr.f32.gmra.mrb[0].mxu0 %v506
      %v508 = vpop.f32.mrb[0].mxu0
      %v509 = vadd.f32 %v361, %v508
      %v510 = vpop.f32.mrb[0].mxu0
      %511 = vmatprep.mubr.f32.mxu0 0.0
      %v512 = vand.u32 %v248, 4294901760
      %513 = vmatmul.mubr.f32.gmra.mrb[0].mxu0 %v512
      %v514 = vpop.f32.mrb[0].mxu0
      %v515 = vadd.f32 %v371, %v514
      %v516 = vpop.f32.mrb[0].mxu0
      %517 = vmatprep.mubr.f32.mxu0 0.0
      %v518 = vand.u32 %v251, 4294901760
      %519 = vmatmul.mubr.f32.gmra.mrb[0].mxu0 %v518
      %v520 = vpop.f32.mrb[0].mxu0
      %v521 = vadd.f32 %v381, %v520
      %v522 = vpop.f32.mrb[0].mxu0
      %523 = vmatprep.mubr.f32.mxu0 0.0
      %v524 = vand.u32 %v254, 4294901760
      %525 = vmatmul.mubr.f32.gmra.mrb[0].mxu0 %v524
      %v526 = vpop.f32.mrb[0].mxu0
      %v527 = vadd.f32 %v391, %v526
      %v528 = vpop.f32.mrb[0].mxu0
      %529 = vmatprep.mubr.f32.mxu0 0.0
      %v530 = vand.u32 %v257, 4294901760
      %531 = vmatmul.mubr.f32.gmra.mrb[0].mxu0 %v530
      %v532 = vpop.f32.mrb[0].mxu0
      %v533 = vadd.f32 %v401, %v532
      %v534 = vpop.f32.mrb[0].mxu0
      %535 = vmatprep.mubr.f32.mxu0 0.0
      %v536 = vand.u32 %v260, 4294901760
      %537 = vmatmul.mubr.f32.gmra.mrb[0].mxu0 %v536
      %v538 = vpop.f32.mrb[0].mxu0
      %v539 = vadd.f32 %v411, %v538
      %v540 = vpop.f32.mrb[0].mxu0
      %541 = vdwg.mxu0
      %542 = vmatprep.subr.mxu0 0.0
      %v543 = vand.u32 %v234, 4294901760
      %v544 = vsub.f32 %v234, %v543
      %545 = vmatpush1.msra.mxu0 %v544
      %546 = vmatprep.subr.mxu0 0.0
      %v547 = vand.u32 %v235, 4294901760
      %v548 = vsub.f32 %v235, %v547
      %549 = vmatpush1.msra.mxu0 %v548
      %550 = vmatprep.subr.mxu0 0.0
      %v551 = vand.u32 %v264, 4294901760
      %v552 = vsub.f32 %v264, %v551
      %553 = vmatpush1.msra.mxu0 %v552
      %554 = vmatprep.subr.mxu0 0.0
      %555 = vmatpush1.msra.mxu0 0.0
      %556 = vmatprep.subr.mxu0 0.0
      %557 = vmatpush1.msra.mxu0 0.0
      %558 = vmatprep.subr.mxu0 0.0
      %559 = vmatpush1.msra.mxu0 0.0
      %560 = vmatprep.subr.mxu0 0.0
      %561 = vmatpush1.msra.mxu0 0.0
      %562 = vmatprep.subr.mxu0 0.0
      %563 = vmatpush1.msra.mxu0 0.0
      %564 = vmatprep.subr.mxu0 0.0
      %565 = vmatpush1.msra.mxu0 0.0
      %566 = vmatprep.subr.mxu0 0.0
      %567 = vmatpush1.msra.mxu0 0.0
      %568 = vmatprep.subr.mxu0 0.0
      %569 = vmatpush1.msra.mxu0 0.0
      %570 = vmatprep.subr.mxu0 0.0
      %571 = vmatpush1.msra.mxu0 0.0
      %572 = vmatprep.subr.mxu0 0.0
      %573 = vmatpush1.msra.mxu0 0.0
      %574 = vmatprep.subr.mxu0 0.0
      %575 = vmatpush1.msra.mxu0 0.0
      %576 = vmatprep.subr.mxu0 0.0
      %577 = vmatpush1.msra.mxu0 0.0
      %578 = vmatprep.subr.mxu0 0.0
      %579 = vmatpush1.msra.mxu0 0.0
      %580 = vmatprep.subr.mxu0 0.0
      %581 = vmatpush1.msra.mxu0 0.0
      %582 = vmatprep.subr.mxu0 0.0
      %583 = vmatpush1.msra.mxu0 0.0
      %584 = vmatprep.subr.mxu0 0.0
      %585 = vmatpush1.msra.mxu0 0.0
      %586 = vmatprep.subr.mxu0 0.0
      %587 = vmatpush1.msra.mxu0 0.0
      %588 = vmatprep.subr.mxu0 0.0
      %589 = vmatpush1.msra.mxu0 0.0
      %590 = vmatprep.subr.mxu0 0.0
      %591 = vmatpush1.msra.mxu0 0.0
      %592 = vmatprep.subr.mxu0 0.0
      %593 = vmatpush1.msra.mxu0 0.0
      %594 = vmatprep.subr.mxu0 0.0
      %595 = vmatpush1.msra.mxu0 0.0
      %596 = vmatprep.subr.mxu0 0.0
      %597 = vmatpush1.msra.mxu0 0.0
      %598 = vmatprep.subr.mxu0 0.0
      %599 = vmatpush1.msra.mxu0 0.0
      %600 = vmatprep.subr.mxu0 0.0
      %601 = vmatpush1.msra.mxu0 0.0
      %602 = vmatprep.subr.mxu0 0.0
      %603 = vmatpush1.msra.mxu0 0.0
      %604 = vmatprep.subr.mxu0 0.0
      %605 = vmatpush1.msra.mxu0 0.0
      %606 = vmatprep.subr.mxu0 0.0
      %607 = vmatpush1.msra.mxu0 0.0
      %608 = vmatprep.subr.mxu0 0.0
      %609 = vmatpush1.msra.mxu0 0.0
      %610 = vmatprep.subr.mxu0 0.0
      %611 = vmatpush1.msra.mxu0 0.0
      %612 = vmatprep.mubr.f32.mxu0 0.0
      %v613 = vand.u32 %v239, 4294901760
      %v614 = vsub.f32 %v239, %v613
      %615 = vmatmul.mubr.f32.gmra.mrb[0].mxu0 %v614
      %v616 = vpop.f32.mrb[0].mxu0
      %v617 = vadd.f32 %v497, %v616
      %v618 = vpop.f32.mrb[0].mxu0
      %619 = vmatprep.mubr.f32.mxu0 0.0
      %v620 = vand.u32 %v242, 4294901760
      %v621 = vsub.f32 %v242, %v620
      %622 = vmatmul.mubr.f32.gmra.mrb[0].mxu0 %v621
      %v623 = vpop.f32.mrb[0].mxu0
      %v624 = vadd.f32 %v503, %v623
      %v625 = vpop.f32.mrb[0].mxu0
      %626 = vmatprep.mubr.f32.mxu0 0.0
      %v627 = vand.u32 %v245, 4294901760
      %v628 = vsub.f32 %v245, %v627
      %629 = vmatmul.mubr.f32.gmra.mrb[0].mxu0 %v628
      %v630 = vpop.f32.mrb[0].mxu0
      %v631 = vadd.f32 %v509, %v630
      %v632 = vpop.f32.mrb[0].mxu0
      %633 = vmatprep.mubr.f32.mxu0 0.0
      %v634 = vand.u32 %v248, 4294901760
      %v635 = vsub.f32 %v248, %v634
      %636 = vmatmul.mubr.f32.gmra.mrb[0].mxu0 %v635
      %v637 = vpop.f32.mrb[0].mxu0
      %v638 = vadd.f32 %v515, %v637
      %v639 = vpop.f32.mrb[0].mxu0
      %640 = vmatprep.mubr.f32.mxu0 0.0
      %v641 = vand.u32 %v251, 4294901760
      %v642 = vsub.f32 %v251, %v641
      %643 = vmatmul.mubr.f32.gmra.mrb[0].mxu0 %v642
      %v644 = vpop.f32.mrb[0].mxu0
      %v645 = vadd.f32 %v521, %v644
      %v646 = vpop.f32.mrb[0].mxu0
      %647 = vmatprep.mubr.f32.mxu0 0.0
      %v648 = vand.u32 %v254, 4294901760
      %v649 = vsub.f32 %v254, %v648
      %650 = vmatmul.mubr.f32.gmra.mrb[0].mxu0 %v649
      %v651 = vpop.f32.mrb[0].mxu0
      %v652 = vadd.f32 %v527, %v651
      %v653 = vpop.f32.mrb[0].mxu0
      %654 = vmatprep.mubr.f32.mxu0 0.0
      %v655 = vand.u32 %v257, 4294901760
      %v656 = vsub.f32 %v257, %v655
      %657 = vmatmul.mubr.f32.gmra.mrb[0].mxu0 %v656
      %v658 = vpop.f32.mrb[0].mxu0
      %v659 = vadd.f32 %v533, %v658
      %v660 = vpop.f32.mrb[0].mxu0
      %661 = vmatprep.mubr.f32.mxu0 0.0
      %v662 = vand.u32 %v260, 4294901760
      %v663 = vsub.f32 %v260, %v662
      %664 = vmatmul.mubr.f32.gmra.mrb[0].mxu0 %v663
      %v665 = vpop.f32.mrb[0].mxu0
      %v666 = vadd.f32 %v539, %v665
      %v667 = vpop.f32.mrb[0].mxu0
      %668 = vdwg.mxu0
      %669 = vmatprep.subr.mxu0 0.0
      %v670 = vand.u32 %v234, 4294901760
      %671 = vmatpush1.msra.mxu0 %v670
      %672 = vmatprep.subr.mxu0 0.0
      %v673 = vand.u32 %v235, 4294901760
      %674 = vmatpush1.msra.mxu0 %v673
      %675 = vmatprep.subr.mxu0 0.0
      %v676 = vand.u32 %v264, 4294901760
      %677 = vmatpush1.msra.mxu0 %v676
      %678 = vmatprep.subr.mxu0 0.0
      %679 = vmatpush1.msra.mxu0 0.0
      %680 = vmatprep.subr.mxu0 0.0
      %681 = vmatpush1.msra.mxu0 0.0
      %682 = vmatprep.subr.mxu0 0.0
      %683 = vmatpush1.msra.mxu0 0.0
      %684 = vmatprep.subr.mxu0 0.0
      %685 = vmatpush1.msra.mxu0 0.0
      %686 = vmatprep.subr.mxu0 0.0
      %687 = vmatpush1.msra.mxu0 0.0
      %688 = vmatprep.subr.mxu0 0.0
      %689 = vmatpush1.msra.mxu0 0.0
      %690 = vmatprep.subr.mxu0 0.0
      %691 = vmatpush1.msra.mxu0 0.0
      %692 = vmatprep.subr.mxu0 0.0
      %693 = vmatpush1.msra.mxu0 0.0
      %694 = vmatprep.subr.mxu0 0.0
      %695 = vmatpush1.msra.mxu0 0.0
      %696 = vmatprep.subr.mxu0 0.0
      %697 = vmatpush1.msra.mxu0 0.0
      %698 = vmatprep.subr.mxu0 0.0
      %699 = vmatpush1.msra.mxu0 0.0
      %700 = vmatprep.subr.mxu0 0.0
      %701 = vmatpush1.msra.mxu0 0.0
      %702 = vmatprep.subr.mxu0 0.0
      %703 = vmatpush1.msra.mxu0 0.0
      %704 = vmatprep.subr.mxu0 0.0
      %705 = vmatpush1.msra.mxu0 0.0
      %706 = vmatprep.subr.mxu0 0.0
      %707 = vmatpush1.msra.mxu0 0.0
      %708 = vmatprep.subr.mxu0 0.0
      %709 = vmatpush1.msra.mxu0 0.0
      %710 = vmatprep.subr.mxu0 0.0
      %711 = vmatpush1.msra.mxu0 0.0
      %712 = vmatprep.subr.mxu0 0.0
      %713 = vmatpush1.msra.mxu0 0.0
      %714 = vmatprep.subr.mxu0 0.0
      %715 = vmatpush1.msra.mxu0 0.0
      %716 = vmatprep.subr.mxu0 0.0
      %717 = vmatpush1.msra.mxu0 0.0
      %718 = vmatprep.subr.mxu0 0.0
      %719 = vmatpush1.msra.mxu0 0.0
      %720 = vmatprep.subr.mxu0 0.0
      %721 = vmatpush1.msra.mxu0 0.0
      %722 = vmatprep.subr.mxu0 0.0
      %723 = vmatpush1.msra.mxu0 0.0
      %724 = vmatprep.subr.mxu0 0.0
      %725 = vmatpush1.msra.mxu0 0.0
      %726 = vmatprep.subr.mxu0 0.0
      %727 = vmatpush1.msra.mxu0 0.0
      %728 = vmatprep.subr.mxu0 0.0
      %729 = vmatpush1.msra.mxu0 0.0
      %730 = vmatprep.subr.mxu0 0.0
      %731 = vmatpush1.msra.mxu0 0.0
      %732 = vmatprep.subr.mxu0 0.0
      %733 = vmatpush1.msra.mxu0 0.0
      %734 = vmatprep.subr.mxu0 0.0
      %735 = vmatpush1.msra.mxu0 0.0
      %736 = vmatprep.mubr.f32.mxu0 0.0
      %v737 = vand.u32 %v239, 4294901760
      %v738 = vsub.f32 %v239, %v737
      %v739 = vand.u32 %v738, 4294901760
      %740 = vmatmul.mubr.f32.gmra.mrb[0].mxu0 %v739
      %v741 = vpop.f32.mrb[0].mxu0
      %v742 = vadd.f32 %v617, %v741
      %v743 = vpop.f32.mrb[0].mxu0
      %744 = vmatprep.mubr.f32.mxu0 0.0
      %v745 = vand.u32 %v242, 4294901760
      %v746 = vsub.f32 %v242, %v745
      %v747 = vand.u32 %v746, 4294901760
      %748 = vmatmul.mubr.f32.gmra.mrb[0].mxu0 %v747
      %v749 = vpop.f32.mrb[0].mxu0
      %v750 = vadd.f32 %v624, %v749
      %v751 = vpop.f32.mrb[0].mxu0
      %752 = vmatprep.mubr.f32.mxu0 0.0
      %v753 = vand.u32 %v245, 4294901760
      %v754 = vsub.f32 %v245, %v753
      %v755 = vand.u32 %v754, 4294901760
      %756 = vmatmul.mubr.f32.gmra.mrb[0].mxu0 %v755
      %v757 = vpop.f32.mrb[0].mxu0
      %v758 = vadd.f32 %v631, %v757
      %v759 = vpop.f32.mrb[0].mxu0
      %760 = vmatprep.mubr.f32.mxu0 0.0
      %v761 = vand.u32 %v248, 4294901760
      %v762 = vsub.f32 %v248, %v761
      %v763 = vand.u32 %v762, 4294901760
      %764 = vmatmul.mubr.f32.gmra.mrb[0].mxu0 %v763
      %v765 = vpop.f32.mrb[0].mxu0
      %v766 = vadd.f32 %v638, %v765
      %v767 = vpop.f32.mrb[0].mxu0
      %768 = vmatprep.mubr.f32.mxu0 0.0
      %v769 = vand.u32 %v251, 4294901760
      %v770 = vsub.f32 %v251, %v769
      %v771 = vand.u32 %v770, 4294901760
      %772 = vmatmul.mubr.f32.gmra.mrb[0].mxu0 %v771
      %v773 = vpop.f32.mrb[0].mxu0
      %v774 = vadd.f32 %v645, %v773
      %v775 = vpop.f32.mrb[0].mxu0
      %776 = vmatprep.mubr.f32.mxu0 0.0
      %v777 = vand.u32 %v254, 4294901760
      %v778 = vsub.f32 %v254, %v777
      %v779 = vand.u32 %v778, 4294901760
      %780 = vmatmul.mubr.f32.gmra.mrb[0].mxu0 %v779
      %v781 = vpop.f32.mrb[0].mxu0
      %v782 = vadd.f32 %v652, %v781
      %v783 = vpop.f32.mrb[0].mxu0
      %784 = vmatprep.mubr.f32.mxu0 0.0
      %v785 = vand.u32 %v257, 4294901760
      %v786 = vsub.f32 %v257, %v785
      %v787 = vand.u32 %v786, 4294901760
      %788 = vmatmul.mubr.f32.gmra.mrb[0].mxu0 %v787
      %v789 = vpop.f32.mrb[0].mxu0
      %v790 = vadd.f32 %v659, %v789
      %v791 = vpop.f32.mrb[0].mxu0
      %792 = vmatprep.mubr.f32.mxu0 0.0
      %v793 = vand.u32 %v260, 4294901760
      %v794 = vsub.f32 %v260, %v793
      %v795 = vand.u32 %v794, 4294901760
      %796 = vmatmul.mubr.f32.gmra.mrb[0].mxu0 %v795
      %v797 = vpop.f32.mrb[0].mxu0
      %v798 = vadd.f32 %v666, %v797
      %v799 = vpop.f32.mrb[0].mxu0
      %800 = vdwg.mxu0
      %801 = vmatprep.subr.mxu0 0.0
      %v802 = vand.u32 %v234, 4294901760
      %v803 = vsub.f32 %v234, %v802
      %v804 = vand.u32 %v803, 4294901760
      %805 = vmatpush1.msra.mxu0 %v804
      %806 = vmatprep.subr.mxu0 0.0
      %v807 = vand.u32 %v235, 4294901760
      %v808 = vsub.f32 %v235, %v807
      %v809 = vand.u32 %v808, 4294901760
      %810 = vmatpush1.msra.mxu0 %v809
      %811 = vmatprep.subr.mxu0 0.0
      %v812 = vand.u32 %v264, 4294901760
      %v813 = vsub.f32 %v264, %v812
      %v814 = vand.u32 %v813, 4294901760
      %815 = vmatpush1.msra.mxu0 %v814
      %816 = vmatprep.subr.mxu0 0.0
      %817 = vmatpush1.msra.mxu0 0.0
      %818 = vmatprep.subr.mxu0 0.0
      %819 = vmatpush1.msra.mxu0 0.0
      %820 = vmatprep.subr.mxu0 0.0
      %821 = vmatpush1.msra.mxu0 0.0
      %822 = vmatprep.subr.mxu0 0.0
      %823 = vmatpush1.msra.mxu0 0.0
      %824 = vmatprep.subr.mxu0 0.0
      %825 = vmatpush1.msra.mxu0 0.0
      %826 = vmatprep.subr.mxu0 0.0
      %827 = vmatpush1.msra.mxu0 0.0
      %828 = vmatprep.subr.mxu0 0.0
      %829 = vmatpush1.msra.mxu0 0.0
      %830 = vmatprep.subr.mxu0 0.0
      %831 = vmatpush1.msra.mxu0 0.0
      %832 = vmatprep.subr.mxu0 0.0
      %833 = vmatpush1.msra.mxu0 0.0
      %834 = vmatprep.subr.mxu0 0.0
      %835 = vmatpush1.msra.mxu0 0.0
      %836 = vmatprep.subr.mxu0 0.0
      %837 = vmatpush1.msra.mxu0 0.0
      %838 = vmatprep.subr.mxu0 0.0
      %839 = vmatpush1.msra.mxu0 0.0
      %840 = vmatprep.subr.mxu0 0.0
      %841 = vmatpush1.msra.mxu0 0.0
      %842 = vmatprep.subr.mxu0 0.0
      %843 = vmatpush1.msra.mxu0 0.0
      %844 = vmatprep.subr.mxu0 0.0
      %845 = vmatpush1.msra.mxu0 0.0
      %846 = vmatprep.subr.mxu0 0.0
      %847 = vmatpush1.msra.mxu0 0.0
      %848 = vmatprep.subr.mxu0 0.0
      %849 = vmatpush1.msra.mxu0 0.0
      %850 = vmatprep.subr.mxu0 0.0
      %851 = vmatpush1.msra.mxu0 0.0
      %852 = vmatprep.subr.mxu0 0.0
      %853 = vmatpush1.msra.mxu0 0.0
      %854 = vmatprep.subr.mxu0 0.0
      %855 = vmatpush1.msra.mxu0 0.0
      %856 = vmatprep.subr.mxu0 0.0
      %857 = vmatpush1.msra.mxu0 0.0
      %858 = vmatprep.subr.mxu0 0.0
      %859 = vmatpush1.msra.mxu0 0.0
      %860 = vmatprep.subr.mxu0 0.0
      %861 = vmatpush1.msra.mxu0 0.0
      %862 = vmatprep.subr.mxu0 0.0
      %863 = vmatpush1.msra.mxu0 0.0
      %864 = vmatprep.subr.mxu0 0.0
      %865 = vmatpush1.msra.mxu0 0.0
      %866 = vmatprep.subr.mxu0 0.0
      %867 = vmatpush1.msra.mxu0 0.0
      %868 = vmatprep.subr.mxu0 0.0
      %869 = vmatpush1.msra.mxu0 0.0
      %870 = vmatprep.subr.mxu0 0.0
      %871 = vmatpush1.msra.mxu0 0.0
      %872 = vmatprep.subr.mxu0 0.0
      %873 = vmatpush1.msra.mxu0 0.0
      %874 = vmatprep.mubr.f32.mxu0 0.0
      %v875 = vand.u32 %v239, 4294901760
      %876 = vmatmul.mubr.f32.gmra.mrb[0].mxu0 %v875
      %v877 = vpop.f32.mrb[0].mxu0
      %v878 = vadd.f32 %v742, %v877
      %v879 = vpop.f32.mrb[0].mxu0
      %880 = vmatprep.mubr.f32.mxu0 0.0
      %v881 = vand.u32 %v242, 4294901760
      %882 = vmatmul.mubr.f32.gmra.mrb[0].mxu0 %v881
      %v883 = vpop.f32.mrb[0].mxu0
      %v884 = vadd.f32 %v750, %v883
      %v885 = vpop.f32.mrb[0].mxu0
      %886 = vmatprep.mubr.f32.mxu0 0.0
      %v887 = vand.u32 %v245, 4294901760
      %888 = vmatmul.mubr.f32.gmra.mrb[0].mxu0 %v887
      %v889 = vpop.f32.mrb[0].mxu0
      %v890 = vadd.f32 %v758, %v889
      %v891 = vpop.f32.mrb[0].mxu0
      %892 = vmatprep.mubr.f32.mxu0 0.0
      %v893 = vand.u32 %v248, 4294901760
      %894 = vmatmul.mubr.f32.gmra.mrb[0].mxu0 %v893
      %v895 = vpop.f32.mrb[0].mxu0
      %v896 = vadd.f32 %v766, %v895
      %v897 = vpop.f32.mrb[0].mxu0
      %898 = vmatprep.mubr.f32.mxu0 0.0
      %v899 = vand.u32 %v251, 4294901760
      %900 = vmatmul.mubr.f32.gmra.mrb[0].mxu0 %v899
      %v901 = vpop.f32.mrb[0].mxu0
      %v902 = vadd.f32 %v774, %v901
      %v903 = vpop.f32.mrb[0].mxu0
      %904 = vmatprep.mubr.f32.mxu0 0.0
      %v905 = vand.u32 %v254, 4294901760
      %906 = vmatmul.mubr.f32.gmra.mrb[0].mxu0 %v905
      %v907 = vpop.f32.mrb[0].mxu0
      %v908 = vadd.f32 %v782, %v907
      %v909 = vpop.f32.mrb[0].mxu0
      %910 = vmatprep.mubr.f32.mxu0 0.0
      %v911 = vand.u32 %v257, 4294901760
      %912 = vmatmul.mubr.f32.gmra.mrb[0].mxu0 %v911
      %v913 = vpop.f32.mrb[0].mxu0
      %v914 = vadd.f32 %v790, %v913
      %v915 = vpop.f32.mrb[0].mxu0
      %916 = vmatprep.mubr.f32.mxu0 0.0
      %v917 = vand.u32 %v260, 4294901760
      %918 = vmatmul.mubr.f32.gmra.mrb[0].mxu0 %v917
      %v919 = vpop.f32.mrb[0].mxu0
      %v920 = vadd.f32 %v798, %v919
      %v921 = vpop.f32.mrb[0].mxu0
      %922 = vdwg.mxu0
      %923 = vmatprep.subr.mxu0 0.0
      %v924 = vand.u32 %v234, 4294901760
      %925 = vmatpush1.msra.mxu0 %v924
      %926 = vmatprep.subr.mxu0 0.0
      %v927 = vand.u32 %v235, 4294901760
      %928 = vmatpush1.msra.mxu0 %v927
      %929 = vmatprep.subr.mxu0 0.0
      %v930 = vand.u32 %v264, 4294901760
      %931 = vmatpush1.msra.mxu0 %v930
      %932 = vmatprep.subr.mxu0 0.0
      %933 = vmatpush1.msra.mxu0 0.0
      %934 = vmatprep.subr.mxu0 0.0
      %935 = vmatpush1.msra.mxu0 0.0
      %936 = vmatprep.subr.mxu0 0.0
      %937 = vmatpush1.msra.mxu0 0.0
      %938 = vmatprep.subr.mxu0 0.0
      %939 = vmatpush1.msra.mxu0 0.0
      %940 = vmatprep.subr.mxu0 0.0
      %941 = vmatpush1.msra.mxu0 0.0
      %942 = vmatprep.subr.mxu0 0.0
      %943 = vmatpush1.msra.mxu0 0.0
      %944 = vmatprep.subr.mxu0 0.0
      %945 = vmatpush1.msra.mxu0 0.0
      %946 = vmatprep.subr.mxu0 0.0
      %947 = vmatpush1.msra.mxu0 0.0
      %948 = vmatprep.subr.mxu0 0.0
      %949 = vmatpush1.msra.mxu0 0.0
      %950 = vmatprep.subr.mxu0 0.0
      %951 = vmatpush1.msra.mxu0 0.0
      %952 = vmatprep.subr.mxu0 0.0
      %953 = vmatpush1.msra.mxu0 0.0
      %954 = vmatprep.subr.mxu0 0.0
      %955 = vmatpush1.msra.mxu0 0.0
      %956 = vmatprep.subr.mxu0 0.0
      %957 = vmatpush1.msra.mxu0 0.0
      %958 = vmatprep.subr.mxu0 0.0
      %959 = vmatpush1.msra.mxu0 0.0
      %960 = vmatprep.subr.mxu0 0.0
      %961 = vmatpush1.msra.mxu0 0.0
      %962 = vmatprep.subr.mxu0 0.0
      %963 = vmatpush1.msra.mxu0 0.0
      %964 = vmatprep.subr.mxu0 0.0
      %965 = vmatpush1.msra.mxu0 0.0
      %966 = vmatprep.subr.mxu0 0.0
      %967 = vmatpush1.msra.mxu0 0.0
      %968 = vmatprep.subr.mxu0 0.0
      %969 = vmatpush1.msra.mxu0 0.0
      %970 = vmatprep.subr.mxu0 0.0
      %971 = vmatpush1.msra.mxu0 0.0
      %972 = vmatprep.subr.mxu0 0.0
      %973 = vmatpush1.msra.mxu0 0.0
      %974 = vmatprep.subr.mxu0 0.0
      %975 = vmatpush1.msra.mxu0 0.0
      %976 = vmatprep.subr.mxu0 0.0
      %977 = vmatpush1.msra.mxu0 0.0
      %978 = vmatprep.subr.mxu0 0.0
      %979 = vmatpush1.msra.mxu0 0.0
      %980 = vmatprep.subr.mxu0 0.0
      %981 = vmatpush1.msra.mxu0 0.0
      %982 = vmatprep.subr.mxu0 0.0
      %983 = vmatpush1.msra.mxu0 0.0
      %984 = vmatprep.subr.mxu0 0.0
      %985 = vmatpush1.msra.mxu0 0.0
      %986 = vmatprep.subr.mxu0 0.0
      %987 = vmatpush1.msra.mxu0 0.0
      %988 = vmatprep.subr.mxu0 0.0
      %989 = vmatpush1.msra.mxu0 0.0
      %990 = vmatprep.mubr.f32.mxu0 0.0
      %v991 = vand.u32 %v239, 4294901760
      %992 = vmatmul.mubr.f32.gmra.mrb[0].mxu0 %v991
      %v993 = vpop.f32.mrb[0].mxu0
      %v994 = vadd.f32 %v878, %v993
      %v995 = vpop.f32.mrb[0].mxu0
      %996 = vmatprep.mubr.f32.mxu0 0.0
      %v997 = vand.u32 %v242, 4294901760
      %998 = vmatmul.mubr.f32.gmra.mrb[0].mxu0 %v997
      %v999 = vpop.f32.mrb[0].mxu0
      %v1000 = vadd.f32 %v884, %v999
      %v1001 = vpop.f32.mrb[0].mxu0
      %1002 = vmatprep.mubr.f32.mxu0 0.0
      %v1003 = vand.u32 %v245, 4294901760
      %1004 = vmatmul.mubr.f32.gmra.mrb[0].mxu0 %v1003
      %v1005 = vpop.f32.mrb[0].mxu0
      %v1006 = vadd.f32 %v890, %v1005
      %v1007 = vpop.f32.mrb[0].mxu0
      %1008 = vmatprep.mubr.f32.mxu0 0.0
      %v1009 = vand.u32 %v248, 4294901760
      %1010 = vmatmul.mubr.f32.gmra.mrb[0].mxu0 %v1009
      %v1011 = vpop.f32.mrb[0].mxu0
      %v1012 = vadd.f32 %v896, %v1011
      %v1013 = vpop.f32.mrb[0].mxu0
      %1014 = vmatprep.mubr.f32.mxu0 0.0
      %v1015 = vand.u32 %v251, 4294901760
      %1016 = vmatmul.mubr.f32.gmra.mrb[0].mxu0 %v1015
      %v1017 = vpop.f32.mrb[0].mxu0
      %v1018 = vadd.f32 %v902, %v1017
      %v1019 = vpop.f32.mrb[0].mxu0
      %1020 = vmatprep.mubr.f32.mxu0 0.0
      %v1021 = vand.u32 %v254, 4294901760
      %1022 = vmatmul.mubr.f32.gmra.mrb[0].mxu0 %v1021
      %v1023 = vpop.f32.mrb[0].mxu0
      %v1024 = vadd.f32 %v908, %v1023
      %v1025 = vpop.f32.mrb[0].mxu0
      %1026 = vmatprep.mubr.f32.mxu0 0.0
      %v1027 = vand.u32 %v257, 4294901760
      %1028 = vmatmul.mubr.f32.gmra.mrb[0].mxu0 %v1027
      %v1029 = vpop.f32.mrb[0].mxu0
      %v1030 = vadd.f32 %v914, %v1029
      %v1031 = vpop.f32.mrb[0].mxu0
      %1032 = vmatprep.mubr.f32.mxu0 0.0
      %v1033 = vand.u32 %v260, 4294901760
      %1034 = vmatmul.mubr.f32.gmra.mrb[0].mxu0 %v1033
      %v1035 = vpop.f32.mrb[0].mxu0
      %v1036 = vadd.f32 %v920, %v1035
      %v1037 = vpop.f32.mrb[0].mxu0
      %1038 = vdwg.mxu0
      %vm1039 = vcmask 261120
      %v1040 = vsel %vm1039, %v994, 0.0
      %v1041 = vsel %vm1039, %v1000, 0.0
      %v1042 = vadd.f32 %v1040, %v1041
      %v1043 = vsel %vm1039, %v1006, 0.0
      %v1044 = vadd.f32 %v1042, %v1043
      %v1045 = vsel %vm1039, %v1012, 0.0
      %v1046 = vadd.f32 %v1044, %v1045
      %v1047 = vsel %vm1039, %v1018, 0.0
      %v1048 = vadd.f32 %v1046, %v1047
      %v1049 = vsel %vm1039, %v1024, 0.0
      %v1050 = vadd.f32 %v1048, %v1049
      %v1051 = vsel %vm1039, %v1030, 0.0
      %v1052 = vadd.f32 %v1050, %v1051
      %v1053 = vsel %vm1039, %v1036, 0.0
      %v1054 = vadd.f32 %v1052, %v1053
      %v1055 = vrot.slane %v1054, 4
      %v1056 = vadd.f32 %v1054, %v1055
      %v1057 = vrot.slane %v1056, 2
      %v1058 = vadd.f32 %v1056, %v1057
      %v1059 = vrot.slane %v1058, 1
      %v1060 = vadd.f32 %v1058, %v1059
      %v1061 = vmul.f32 %v1060, 0.015625
      %v1062 = vsub.f32 %v994, %v1061
      %v1063 = vsub.f32 %v1000, %v1061
      %v1064 = vsub.f32 %v1006, %v1061
      %v1065 = vsub.f32 %v1012, %v1061
      %v1066 = vsub.f32 %v1018, %v1061
      %v1067 = vsub.f32 %v1024, %v1061
      %v1068 = vsub.f32 %v1030, %v1061
      %v1069 = vsub.f32 %v1036, %v1061
      %v1070 = vmul.f32 %v1062, %v1062
      %v1071 = vmul.f32 %v1063, %v1063
      %v1072 = vmul.f32 %v1064, %v1064
      %v1073 = vmul.f32 %v1065, %v1065
      %v1074 = vmul.f32 %v1066, %v1066
      %v1075 = vmul.f32 %v1067, %v1067
      %v1076 = vmul.f32 %v1068, %v1068
      %v1077 = vmul.f32 %v1069, %v1069
      %v1078 = vsel %vm1039, %v1070, 0.0
      %v1079 = vsel %vm1039, %v1071, 0.0
      %v1080 = vadd.f32 %v1078, %v1079
      %v1081 = vsel %vm1039, %v1072, 0.0
      %v1082 = vadd.f32 %v1080, %v1081
      %v1083 = vsel %vm1039, %v1073, 0.0
      %v1084 = vadd.f32 %v1082, %v1083
      %v1085 = vsel %vm1039, %v1074, 0.0
      %v1086 = vadd.f32 %v1084, %v1085
      %v1087 = vsel %vm1039, %v1075, 0.0
      %v1088 = vadd.f32 %v1086, %v1087
      %v1089 = vsel %vm1039, %v1076, 0.0
      %v1090 = vadd.f32 %v1088, %v1089
      %v1091 = vsel %vm1039, %v1077, 0.0
      %v1092 = vadd.f32 %v1090, %v1091
      %v1093 = vrot.slane %v1092, 4
      %v1094 = vadd.f32 %v1092, %v1093
      %v1095 = vrot.slane %v1094, 2
      %v1096 = vadd.f32 %v1094, %v1095
      %v1097 = vrot.slane %v1096, 1
      %v1098 = vadd.f32 %v1096, %v1097
      %v1099 = vmul.f32 %v1098, 0.015625
      %v1100 = vadd.f32 %v1099, 1e-05
      %v1101 = vrsqrt.pop %v1100
      %v1102 = vmul.f32 %v225, %v1101
      %v1103 = vlaneseq
      %v1104 = vshrl.u32 %v1103, 7
      %v1105 = vsub.s32 0, %v1104
      %v1106 = vrot.slane %v1102, %v1105
      %v1107 = vmul.f32 %v1062, %v1106
      %v1108 = vmul.f32 %v1063, %v1106
      %v1109 = vmul.f32 %v1064, %v1106
      %v1110 = vmul.f32 %v1065, %v1106
      %v1111 = vmul.f32 %v1066, %v1106
      %v1112 = vmul.f32 %v1067, %v1106
      %v1113 = vmul.f32 %v1068, %v1106
      %v1114 = vmul.f32 %v1069, %v1106
      %v1115 = vlaneseq
      %v1116 = vshrl.u32 %v1115, 7
      %v1117 = vsub.s32 1, %v1116
      %v1118 = vrot.slane %v225, %v1117
      %v1119 = vadd.f32 %v1107, %v1118
      %v1120 = vadd.f32 %v1108, %v1118
      %v1121 = vadd.f32 %v1109, %v1118
      %v1122 = vadd.f32 %v1110, %v1118
      %v1123 = vadd.f32 %v1111, %v1118
      %v1124 = vadd.f32 %v1112, %v1118
      %v1125 = vadd.f32 %v1113, %v1118
      %v1126 = vadd.f32 %v1114, %v1118
      %vm1127 = vcmp.ge.f32.partialorder %v1119, 0.0
      %vm1128 = vcmp.ge.f32.partialorder %v1120, 0.0
      %vm1129 = vcmp.ge.f32.partialorder %v1121, 0.0
      %vm1130 = vcmp.ge.f32.partialorder %v1122, 0.0
      %vm1131 = vcmp.ge.f32.partialorder %v1123, 0.0
      %vm1132 = vcmp.ge.f32.partialorder %v1124, 0.0
      %vm1133 = vcmp.ge.f32.partialorder %v1125, 0.0
      %vm1134 = vcmp.ge.f32.partialorder %v1126, 0.0
      %v1135 = vlaneseq
      %v1136 = vshrl.u32 %v1135, 7
      %v1137 = vsub.s32 2, %v1136
      %v1138 = vrot.slane %v225, %v1137
      %v1139 = vmul.f32 %v1138, %v1119
      %v1140 = vmul.f32 %v1138, %v1120
      %v1141 = vmul.f32 %v1138, %v1121
      %v1142 = vmul.f32 %v1138, %v1122
      %v1143 = vmul.f32 %v1138, %v1123
      %v1144 = vmul.f32 %v1138, %v1124
      %v1145 = vmul.f32 %v1138, %v1125
      %v1146 = vmul.f32 %v1138, %v1126
      %v1147 = vsel %vm1127, %v1119, %v1139
      %v1148 = vsel %vm1128, %v1120, %v1140
      %v1149 = vsel %vm1129, %v1121, %v1141
      %v1150 = vsel %vm1130, %v1122, %v1142
      %v1151 = vsel %vm1131, %v1123, %v1143
      %v1152 = vsel %vm1132, %v1124, %v1144
      %v1153 = vsel %vm1133, %v1125, %v1145
      %v1154 = vsel %vm1134, %v1126, %v1146
      %v1155 = vld [vmem:[%s2] sm:$0xff]
      %v1156 = vld [vmem:[%s2 + $0x8] sm:$0xff]
      %vm1157 = vcmask 523264
      %v1159 = vsel %vm1157, %v1155, 0
      %v1162 = vsel %vm1157, %v1156, 0
      %1164 = vmatprep.subr.mxu0 0.0
      %v1165 = vand.u32 %v1147, 4294901760
      %1166 = vmatpush1.msra.mxu0 %v1165
      %1167 = vmatprep.subr.mxu0 0.0
      %v1168 = vand.u32 %v1148, 4294901760
      %1169 = vmatpush1.msra.mxu0 %v1168
      %1170 = vmatprep.subr.mxu0 0.0
      %v1171 = vand.u32 %v1149, 4294901760
      %1172 = vmatpush1.msra.mxu0 %v1171
      %1173 = vmatprep.subr.mxu0 0.0
      %v1174 = vand.u32 %v1150, 4294901760
      %1175 = vmatpush1.msra.mxu0 %v1174
      %1176 = vmatprep.subr.mxu0 0.0
      %v1177 = vand.u32 %v1151, 4294901760
      %1178 = vmatpush1.msra.mxu0 %v1177
      %1179 = vmatprep.subr.mxu0 0.0
      %v1180 = vand.u32 %v1152, 4294901760
      %1181 = vmatpush1.msra.mxu0 %v1180
      %1182 = vmatprep.subr.mxu0 0.0
      %v1183 = vand.u32 %v1153, 4294901760
      %1184 = vmatpush1.msra.mxu0 %v1183
      %1185 = vmatprep.subr.mxu0 0.0
      %v1186 = vand.u32 %v1154, 4294901760
      %1187 = vmatpush1.msra.mxu0 %v1186
      %1188 = vmatprep.subr.mxu0 0.0
      %1189 = vmatpush1.msra.mxu0 0.0
      %1190 = vmatprep.subr.mxu0 0.0
      %1191 = vmatpush1.msra.mxu0 0.0
      %1192 = vmatprep.subr.mxu0 0.0
      %1193 = vmatpush1.msra.mxu0 0.0
      %1194 = vmatprep.subr.mxu0 0.0
      %1195 = vmatpush1.msra.mxu0 0.0
      %1196 = vmatprep.subr.mxu0 0.0
      %1197 = vmatpush1.msra.mxu0 0.0
      %1198 = vmatprep.subr.mxu0 0.0
      %1199 = vmatpush1.msra.mxu0 0.0
      %1200 = vmatprep.subr.mxu0 0.0
      %1201 = vmatpush1.msra.mxu0 0.0
      %1202 = vmatprep.subr.mxu0 0.0
      %1203 = vmatpush1.msra.mxu0 0.0
      %1204 = vmatprep.subr.mxu0 0.0
      %1205 = vmatpush1.msra.mxu0 0.0
      %1206 = vmatprep.subr.mxu0 0.0
      %1207 = vmatpush1.msra.mxu0 0.0
      %1208 = vmatprep.subr.mxu0 0.0
      %1209 = vmatpush1.msra.mxu0 0.0
      %1210 = vmatprep.subr.mxu0 0.0
      %1211 = vmatpush1.msra.mxu0 0.0
      %1212 = vmatprep.subr.mxu0 0.0
      %1213 = vmatpush1.msra.mxu0 0.0
      %1214 = vmatprep.subr.mxu0 0.0
      %1215 = vmatpush1.msra.mxu0 0.0
      %1216 = vmatprep.subr.mxu0 0.0
      %1217 = vmatpush1.msra.mxu0 0.0
      %1218 = vmatprep.subr.mxu0 0.0
      %1219 = vmatpush1.msra.mxu0 0.0
      %1220 = vmatprep.subr.mxu0 0.0
      %1221 = vmatpush1.msra.mxu0 0.0
      %1222 = vmatprep.subr.mxu0 0.0
      %1223 = vmatpush1.msra.mxu0 0.0
      %1224 = vmatprep.subr.mxu0 0.0
      %1225 = vmatpush1.msra.mxu0 0.0
      %1226 = vmatprep.subr.mxu0 0.0
      %1227 = vmatpush1.msra.mxu0 0.0
      %1228 = vmatprep.subr.mxu0 0.0
      %1229 = vmatpush1.msra.mxu0 0.0
      %1230 = vmatprep.subr.mxu0 0.0
      %1231 = vmatpush1.msra.mxu0 0.0
      %1232 = vmatprep.subr.mxu0 0.0
      %1233 = vmatpush1.msra.mxu0 0.0
      %1234 = vmatprep.subr.mxu0 0.0
      %1235 = vmatpush1.msra.mxu0 0.0
      %1236 = vmatprep.mubr.f32.mxu0 0.0
      %v1237 = vand.u32 %v1159, 4294901760
      %v1238 = vsub.f32 %v1159, %v1237
      %v1239 = vand.u32 %v1238, 4294901760
      %v1240 = vsub.f32 %v1238, %v1239
      %v1241 = vand.u32 %v1240, 4294901760
      %1242 = vmatmul.mubr.f32.gmra.mrb[0].mxu0 %v1241
      %v1243 = vpop.f32.mrb[0].mxu0
      %v1244 = vadd.f32 0.0, %v1243
      %v1245 = vpop.f32.mrb[0].mxu0
      %1246 = vmatprep.mubr.f32.mxu0 0.0
      %v1247 = vand.u32 %v1162, 4294901760
      %v1248 = vsub.f32 %v1162, %v1247
      %v1249 = vand.u32 %v1248, 4294901760
      %v1250 = vsub.f32 %v1248, %v1249
      %v1251 = vand.u32 %v1250, 4294901760
      %1252 = vmatmul.mubr.f32.gmra.mrb[0].mxu0 %v1251
      %v1253 = vpop.f32.mrb[0].mxu0
      %v1254 = vadd.f32 0.0, %v1253
      %v1255 = vpop.f32.mrb[0].mxu0
      %1256 = vdwg.mxu0
      %1257 = vmatprep.subr.mxu0 0.0
      %v1258 = vand.u32 %v1147, 4294901760
      %v1259 = vsub.f32 %v1147, %v1258
      %v1260 = vand.u32 %v1259, 4294901760
      %v1261 = vsub.f32 %v1259, %v1260
      %v1262 = vand.u32 %v1261, 4294901760
      %1263 = vmatpush1.msra.mxu0 %v1262
      %1264 = vmatprep.subr.mxu0 0.0
      %v1265 = vand.u32 %v1148, 4294901760
      %v1266 = vsub.f32 %v1148, %v1265
      %v1267 = vand.u32 %v1266, 4294901760
      %v1268 = vsub.f32 %v1266, %v1267
      %v1269 = vand.u32 %v1268, 4294901760
      %1270 = vmatpush1.msra.mxu0 %v1269
      %1271 = vmatprep.subr.mxu0 0.0
      %v1272 = vand.u32 %v1149, 4294901760
      %v1273 = vsub.f32 %v1149, %v1272
      %v1274 = vand.u32 %v1273, 4294901760
      %v1275 = vsub.f32 %v1273, %v1274
      %v1276 = vand.u32 %v1275, 4294901760
      %1277 = vmatpush1.msra.mxu0 %v1276
      %1278 = vmatprep.subr.mxu0 0.0
      %v1279 = vand.u32 %v1150, 4294901760
      %v1280 = vsub.f32 %v1150, %v1279
      %v1281 = vand.u32 %v1280, 4294901760
      %v1282 = vsub.f32 %v1280, %v1281
      %v1283 = vand.u32 %v1282, 4294901760
      %1284 = vmatpush1.msra.mxu0 %v1283
      %1285 = vmatprep.subr.mxu0 0.0
      %v1286 = vand.u32 %v1151, 4294901760
      %v1287 = vsub.f32 %v1151, %v1286
      %v1288 = vand.u32 %v1287, 4294901760
      %v1289 = vsub.f32 %v1287, %v1288
      %v1290 = vand.u32 %v1289, 4294901760
      %1291 = vmatpush1.msra.mxu0 %v1290
      %1292 = vmatprep.subr.mxu0 0.0
      %v1293 = vand.u32 %v1152, 4294901760
      %v1294 = vsub.f32 %v1152, %v1293
      %v1295 = vand.u32 %v1294, 4294901760
      %v1296 = vsub.f32 %v1294, %v1295
      %v1297 = vand.u32 %v1296, 4294901760
      %1298 = vmatpush1.msra.mxu0 %v1297
      %1299 = vmatprep.subr.mxu0 0.0
      %v1300 = vand.u32 %v1153, 4294901760
      %v1301 = vsub.f32 %v1153, %v1300
      %v1302 = vand.u32 %v1301, 4294901760
      %v1303 = vsub.f32 %v1301, %v1302
      %v1304 = vand.u32 %v1303, 4294901760
      %1305 = vmatpush1.msra.mxu0 %v1304
      %1306 = vmatprep.subr.mxu0 0.0
      %v1307 = vand.u32 %v1154, 4294901760
      %v1308 = vsub.f32 %v1154, %v1307
      %v1309 = vand.u32 %v1308, 4294901760
      %v1310 = vsub.f32 %v1308, %v1309
      %v1311 = vand.u32 %v1310, 4294901760
      %1312 = vmatpush1.msra.mxu0 %v1311
      %1313 = vmatprep.subr.mxu0 0.0
      %1314 = vmatpush1.msra.mxu0 0.0
      %1315 = vmatprep.subr.mxu0 0.0
      %1316 = vmatpush1.msra.mxu0 0.0
      %1317 = vmatprep.subr.mxu0 0.0
      %1318 = vmatpush1.msra.mxu0 0.0
      %1319 = vmatprep.subr.mxu0 0.0
      %1320 = vmatpush1.msra.mxu0 0.0
      %1321 = vmatprep.subr.mxu0 0.0
      %1322 = vmatpush1.msra.mxu0 0.0
      %1323 = vmatprep.subr.mxu0 0.0
      %1324 = vmatpush1.msra.mxu0 0.0
      %1325 = vmatprep.subr.mxu0 0.0
      %1326 = vmatpush1.msra.mxu0 0.0
      %1327 = vmatprep.subr.mxu0 0.0
      %1328 = vmatpush1.msra.mxu0 0.0
      %1329 = vmatprep.subr.mxu0 0.0
      %1330 = vmatpush1.msra.mxu0 0.0
      %1331 = vmatprep.subr.mxu0 0.0
      %1332 = vmatpush1.msra.mxu0 0.0
      %1333 = vmatprep.subr.mxu0 0.0
      %1334 = vmatpush1.msra.mxu0 0.0
      %1335 = vmatprep.subr.mxu0 0.0
      %1336 = vmatpush1.msra.mxu0 0.0
      %1337 = vmatprep.subr.mxu0 0.0
      %1338 = vmatpush1.msra.mxu0 0.0
      %1339 = vmatprep.subr.mxu0 0.0
      %1340 = vmatpush1.msra.mxu0 0.0
      %1341 = vmatprep.subr.mxu0 0.0
      %1342 = vmatpush1.msra.mxu0 0.0
      %1343 = vmatprep.subr.mxu0 0.0
      %1344 = vmatpush1.msra.mxu0 0.0
      %1345 = vmatprep.subr.mxu0 0.0
      %1346 = vmatpush1.msra.mxu0 0.0
      %1347 = vmatprep.subr.mxu0 0.0
      %1348 = vmatpush1.msra.mxu0 0.0
      %1349 = vmatprep.subr.mxu0 0.0
      %1350 = vmatpush1.msra.mxu0 0.0
      %1351 = vmatprep.subr.mxu0 0.0
      %1352 = vmatpush1.msra.mxu0 0.0
      %1353 = vmatprep.subr.mxu0 0.0
      %1354 = vmatpush1.msra.mxu0 0.0
      %1355 = vmatprep.subr.mxu0 0.0
      %1356 = vmatpush1.msra.mxu0 0.0
      %1357 = vmatprep.subr.mxu0 0.0
      %1358 = vmatpush1.msra.mxu0 0.0
      %1359 = vmatprep.subr.mxu0 0.0
      %1360 = vmatpush1.msra.mxu0 0.0
      %1361 = vmatprep.mubr.f32.mxu0 0.0
      %v1362 = vand.u32 %v1159, 4294901760
      %1363 = vmatmul.mubr.f32.gmra.mrb[0].mxu0 %v1362
      %v1364 = vpop.f32.mrb[0].mxu0
      %v1365 = vadd.f32 %v1244, %v1364
      %v1366 = vpop.f32.mrb[0].mxu0
      %1367 = vmatprep.mubr.f32.mxu0 0.0
      %v1368 = vand.u32 %v1162, 4294901760
      %1369 = vmatmul.mubr.f32.gmra.mrb[0].mxu0 %v1368
      %v1370 = vpop.f32.mrb[0].mxu0
      %v1371 = vadd.f32 %v1254, %v1370
      %v1372 = vpop.f32.mrb[0].mxu0
      %1373 = vdwg.mxu0
      %1374 = vmatprep.subr.mxu0 0.0
      %v1375 = vand.u32 %v1147, 4294901760
      %v1376 = vsub.f32 %v1147, %v1375
      %1377 = vmatpush1.msra.mxu0 %v1376
      %1378 = vmatprep.subr.mxu0 0.0
      %v1379 = vand.u32 %v1148, 4294901760
      %v1380 = vsub.f32 %v1148, %v1379
      %1381 = vmatpush1.msra.mxu0 %v1380
      %1382 = vmatprep.subr.mxu0 0.0
      %v1383 = vand.u32 %v1149, 4294901760
      %v1384 = vsub.f32 %v1149, %v1383
      %1385 = vmatpush1.msra.mxu0 %v1384
      %1386 = vmatprep.subr.mxu0 0.0
      %v1387 = vand.u32 %v1150, 4294901760
      %v1388 = vsub.f32 %v1150, %v1387
      %1389 = vmatpush1.msra.mxu0 %v1388
      %1390 = vmatprep.subr.mxu0 0.0
      %v1391 = vand.u32 %v1151, 4294901760
      %v1392 = vsub.f32 %v1151, %v1391
      %1393 = vmatpush1.msra.mxu0 %v1392
      %1394 = vmatprep.subr.mxu0 0.0
      %v1395 = vand.u32 %v1152, 4294901760
      %v1396 = vsub.f32 %v1152, %v1395
      %1397 = vmatpush1.msra.mxu0 %v1396
      %1398 = vmatprep.subr.mxu0 0.0
      %v1399 = vand.u32 %v1153, 4294901760
      %v1400 = vsub.f32 %v1153, %v1399
      %1401 = vmatpush1.msra.mxu0 %v1400
      %1402 = vmatprep.subr.mxu0 0.0
      %v1403 = vand.u32 %v1154, 4294901760
      %v1404 = vsub.f32 %v1154, %v1403
      %1405 = vmatpush1.msra.mxu0 %v1404
      %1406 = vmatprep.subr.mxu0 0.0
      %1407 = vmatpush1.msra.mxu0 0.0
      %1408 = vmatprep.subr.mxu0 0.0
      %1409 = vmatpush1.msra.mxu0 0.0
      %1410 = vmatprep.subr.mxu0 0.0
      %1411 = vmatpush1.msra.mxu0 0.0
      %1412 = vmatprep.subr.mxu0 0.0
      %1413 = vmatpush1.msra.mxu0 0.0
      %1414 = vmatprep.subr.mxu0 0.0
      %1415 = vmatpush1.msra.mxu0 0.0
      %1416 = vmatprep.subr.mxu0 0.0
      %1417 = vmatpush1.msra.mxu0 0.0
      %1418 = vmatprep.subr.mxu0 0.0
      %1419 = vmatpush1.msra.mxu0 0.0
      %1420 = vmatprep.subr.mxu0 0.0
      %1421 = vmatpush1.msra.mxu0 0.0
      %1422 = vmatprep.subr.mxu0 0.0
      %1423 = vmatpush1.msra.mxu0 0.0
      %1424 = vmatprep.subr.mxu0 0.0
      %1425 = vmatpush1.msra.mxu0 0.0
      %1426 = vmatprep.subr.mxu0 0.0
      %1427 = vmatpush1.msra.mxu0 0.0
      %1428 = vmatprep.subr.mxu0 0.0
      %1429 = vmatpush1.msra.mxu0 0.0
      %1430 = vmatprep.subr.mxu0 0.0
      %1431 = vmatpush1.msra.mxu0 0.0
      %1432 = vmatprep.subr.mxu0 0.0
      %1433 = vmatpush1.msra.mxu0 0.0
      %1434 = vmatprep.subr.mxu0 0.0
      %1435 = vmatpush1.msra.mxu0 0.0
      %1436 = vmatprep.subr.mxu0 0.0
      %1437 = vmatpush1.msra.mxu0 0.0
      %1438 = vmatprep.subr.mxu0 0.0
      %1439 = vmatpush1.msra.mxu0 0.0
      %1440 = vmatprep.subr.mxu0 0.0
      %1441 = vmatpush1.msra.mxu0 0.0
      %1442 = vmatprep.subr.mxu0 0.0
      %1443 = vmatpush1.msra.mxu0 0.0
      %1444 = vmatprep.subr.mxu0 0.0
      %1445 = vmatpush1.msra.mxu0 0.0
      %1446 = vmatprep.subr.mxu0 0.0
      %1447 = vmatpush1.msra.mxu0 0.0
      %1448 = vmatprep.subr.mxu0 0.0
      %1449 = vmatpush1.msra.mxu0 0.0
      %1450 = vmatprep.subr.mxu0 0.0
      %1451 = vmatpush1.msra.mxu0 0.0
      %1452 = vmatprep.subr.mxu0 0.0
      %1453 = vmatpush1.msra.mxu0 0.0
      %1454 = vmatprep.mubr.f32.mxu0 0.0
      %v1455 = vand.u32 %v1159, 4294901760
      %v1456 = vsub.f32 %v1159, %v1455
      %1457 = vmatmul.mubr.f32.gmra.mrb[0].mxu0 %v1456
      %v1458 = vpop.f32.mrb[0].mxu0
      %v1459 = vadd.f32 %v1365, %v1458
      %v1460 = vpop.f32.mrb[0].mxu0
      %1461 = vmatprep.mubr.f32.mxu0 0.0
      %v1462 = vand.u32 %v1162, 4294901760
      %v1463 = vsub.f32 %v1162, %v1462
      %1464 = vmatmul.mubr.f32.gmra.mrb[0].mxu0 %v1463
      %v1465 = vpop.f32.mrb[0].mxu0
      %v1466 = vadd.f32 %v1371, %v1465
      %v1467 = vpop.f32.mrb[0].mxu0
      %1468 = vdwg.mxu0
      %1469 = vmatprep.subr.mxu0 0.0
      %v1470 = vand.u32 %v1147, 4294901760
      %1471 = vmatpush1.msra.mxu0 %v1470
      %1472 = vmatprep.subr.mxu0 0.0
      %v1473 = vand.u32 %v1148, 4294901760
      %1474 = vmatpush1.msra.mxu0 %v1473
      %1475 = vmatprep.subr.mxu0 0.0
      %v1476 = vand.u32 %v1149, 4294901760
      %1477 = vmatpush1.msra.mxu0 %v1476
      %1478 = vmatprep.subr.mxu0 0.0
      %v1479 = vand.u32 %v1150, 4294901760
      %1480 = vmatpush1.msra.mxu0 %v1479
      %1481 = vmatprep.subr.mxu0 0.0
      %v1482 = vand.u32 %v1151, 4294901760
      %1483 = vmatpush1.msra.mxu0 %v1482
      %1484 = vmatprep.subr.mxu0 0.0
      %v1485 = vand.u32 %v1152, 4294901760
      %1486 = vmatpush1.msra.mxu0 %v1485
      %1487 = vmatprep.subr.mxu0 0.0
      %v1488 = vand.u32 %v1153, 4294901760
      %1489 = vmatpush1.msra.mxu0 %v1488
      %1490 = vmatprep.subr.mxu0 0.0
      %v1491 = vand.u32 %v1154, 4294901760
      %1492 = vmatpush1.msra.mxu0 %v1491
      %1493 = vmatprep.subr.mxu0 0.0
      %1494 = vmatpush1.msra.mxu0 0.0
      %1495 = vmatprep.subr.mxu0 0.0
      %1496 = vmatpush1.msra.mxu0 0.0
      %1497 = vmatprep.subr.mxu0 0.0
      %1498 = vmatpush1.msra.mxu0 0.0
      %1499 = vmatprep.subr.mxu0 0.0
      %1500 = vmatpush1.msra.mxu0 0.0
      %1501 = vmatprep.subr.mxu0 0.0
      %1502 = vmatpush1.msra.mxu0 0.0
      %1503 = vmatprep.subr.mxu0 0.0
      %1504 = vmatpush1.msra.mxu0 0.0
      %1505 = vmatprep.subr.mxu0 0.0
      %1506 = vmatpush1.msra.mxu0 0.0
      %1507 = vmatprep.subr.mxu0 0.0
      %1508 = vmatpush1.msra.mxu0 0.0
      %1509 = vmatprep.subr.mxu0 0.0
      %1510 = vmatpush1.msra.mxu0 0.0
      %1511 = vmatprep.subr.mxu0 0.0
      %1512 = vmatpush1.msra.mxu0 0.0
      %1513 = vmatprep.subr.mxu0 0.0
      %1514 = vmatpush1.msra.mxu0 0.0
      %1515 = vmatprep.subr.mxu0 0.0
      %1516 = vmatpush1.msra.mxu0 0.0
      %1517 = vmatprep.subr.mxu0 0.0
      %1518 = vmatpush1.msra.mxu0 0.0
      %1519 = vmatprep.subr.mxu0 0.0
      %1520 = vmatpush1.msra.mxu0 0.0
      %1521 = vmatprep.subr.mxu0 0.0
      %1522 = vmatpush1.msra.mxu0 0.0
      %1523 = vmatprep.subr.mxu0 0.0
      %1524 = vmatpush1.msra.mxu0 0.0
      %1525 = vmatprep.subr.mxu0 0.0
      %1526 = vmatpush1.msra.mxu0 0.0
      %1527 = vmatprep.subr.mxu0 0.0
      %1528 = vmatpush1.msra.mxu0 0.0
      %1529 = vmatprep.subr.mxu0 0.0
      %1530 = vmatpush1.msra.mxu0 0.0
      %1531 = vmatprep.subr.mxu0 0.0
      %1532 = vmatpush1.msra.mxu0 0.0
      %1533 = vmatprep.subr.mxu0 0.0
      %1534 = vmatpush1.msra.mxu0 0.0
      %1535 = vmatprep.subr.mxu0 0.0
      %1536 = vmatpush1.msra.mxu0 0.0
      %1537 = vmatprep.subr.mxu0 0.0
      %1538 = vmatpush1.msra.mxu0 0.0
      %1539 = vmatprep.subr.mxu0 0.0
      %1540 = vmatpush1.msra.mxu0 0.0
      %1541 = vmatprep.mubr.f32.mxu0 0.0
      %v1542 = vand.u32 %v1159, 4294901760
      %v1543 = vsub.f32 %v1159, %v1542
      %v1544 = vand.u32 %v1543, 4294901760
      %1545 = vmatmul.mubr.f32.gmra.mrb[0].mxu0 %v1544
      %v1546 = vpop.f32.mrb[0].mxu0
      %v1547 = vadd.f32 %v1459, %v1546
      %v1548 = vpop.f32.mrb[0].mxu0
      %1549 = vmatprep.mubr.f32.mxu0 0.0
      %v1550 = vand.u32 %v1162, 4294901760
      %v1551 = vsub.f32 %v1162, %v1550
      %v1552 = vand.u32 %v1551, 4294901760
      %1553 = vmatmul.mubr.f32.gmra.mrb[0].mxu0 %v1552
      %v1554 = vpop.f32.mrb[0].mxu0
      %v1555 = vadd.f32 %v1466, %v1554
      %v1556 = vpop.f32.mrb[0].mxu0
      %1557 = vdwg.mxu0
      %1558 = vmatprep.subr.mxu0 0.0
      %v1559 = vand.u32 %v1147, 4294901760
      %v1560 = vsub.f32 %v1147, %v1559
      %v1561 = vand.u32 %v1560, 4294901760
      %1562 = vmatpush1.msra.mxu0 %v1561
      %1563 = vmatprep.subr.mxu0 0.0
      %v1564 = vand.u32 %v1148, 4294901760
      %v1565 = vsub.f32 %v1148, %v1564
      %v1566 = vand.u32 %v1565, 4294901760
      %1567 = vmatpush1.msra.mxu0 %v1566
      %1568 = vmatprep.subr.mxu0 0.0
      %v1569 = vand.u32 %v1149, 4294901760
      %v1570 = vsub.f32 %v1149, %v1569
      %v1571 = vand.u32 %v1570, 4294901760
      %1572 = vmatpush1.msra.mxu0 %v1571
      %1573 = vmatprep.subr.mxu0 0.0
      %v1574 = vand.u32 %v1150, 4294901760
      %v1575 = vsub.f32 %v1150, %v1574
      %v1576 = vand.u32 %v1575, 4294901760
      %1577 = vmatpush1.msra.mxu0 %v1576
      %1578 = vmatprep.subr.mxu0 0.0
      %v1579 = vand.u32 %v1151, 4294901760
      %v1580 = vsub.f32 %v1151, %v1579
      %v1581 = vand.u32 %v1580, 4294901760
      %1582 = vmatpush1.msra.mxu0 %v1581
      %1583 = vmatprep.subr.mxu0 0.0
      %v1584 = vand.u32 %v1152, 4294901760
      %v1585 = vsub.f32 %v1152, %v1584
      %v1586 = vand.u32 %v1585, 4294901760
      %1587 = vmatpush1.msra.mxu0 %v1586
      %1588 = vmatprep.subr.mxu0 0.0
      %v1589 = vand.u32 %v1153, 4294901760
      %v1590 = vsub.f32 %v1153, %v1589
      %v1591 = vand.u32 %v1590, 4294901760
      %1592 = vmatpush1.msra.mxu0 %v1591
      %1593 = vmatprep.subr.mxu0 0.0
      %v1594 = vand.u32 %v1154, 4294901760
      %v1595 = vsub.f32 %v1154, %v1594
      %v1596 = vand.u32 %v1595, 4294901760
      %1597 = vmatpush1.msra.mxu0 %v1596
      %1598 = vmatprep.subr.mxu0 0.0
      %1599 = vmatpush1.msra.mxu0 0.0
      %1600 = vmatprep.subr.mxu0 0.0
      %1601 = vmatpush1.msra.mxu0 0.0
      %1602 = vmatprep.subr.mxu0 0.0
      %1603 = vmatpush1.msra.mxu0 0.0
      %1604 = vmatprep.subr.mxu0 0.0
      %1605 = vmatpush1.msra.mxu0 0.0
      %1606 = vmatprep.subr.mxu0 0.0
      %1607 = vmatpush1.msra.mxu0 0.0
      %1608 = vmatprep.subr.mxu0 0.0
      %1609 = vmatpush1.msra.mxu0 0.0
      %1610 = vmatprep.subr.mxu0 0.0
      %1611 = vmatpush1.msra.mxu0 0.0
      %1612 = vmatprep.subr.mxu0 0.0
      %1613 = vmatpush1.msra.mxu0 0.0
      %1614 = vmatprep.subr.mxu0 0.0
      %1615 = vmatpush1.msra.mxu0 0.0
      %1616 = vmatprep.subr.mxu0 0.0
      %1617 = vmatpush1.msra.mxu0 0.0
      %1618 = vmatprep.subr.mxu0 0.0
      %1619 = vmatpush1.msra.mxu0 0.0
      %1620 = vmatprep.subr.mxu0 0.0
      %1621 = vmatpush1.msra.mxu0 0.0
      %1622 = vmatprep.subr.mxu0 0.0
      %1623 = vmatpush1.msra.mxu0 0.0
      %1624 = vmatprep.subr.mxu0 0.0
      %1625 = vmatpush1.msra.mxu0 0.0
      %1626 = vmatprep.subr.mxu0 0.0
      %1627 = vmatpush1.msra.mxu0 0.0
      %1628 = vmatprep.subr.mxu0 0.0
      %1629 = vmatpush1.msra.mxu0 0.0
      %1630 = vmatprep.subr.mxu0 0.0
      %1631 = vmatpush1.msra.mxu0 0.0
      %1632 = vmatprep.subr.mxu0 0.0
      %1633 = vmatpush1.msra.mxu0 0.0
      %1634 = vmatprep.subr.mxu0 0.0
      %1635 = vmatpush1.msra.mxu0 0.0
      %1636 = vmatprep.subr.mxu0 0.0
      %1637 = vmatpush1.msra.mxu0 0.0
      %1638 = vmatprep.subr.mxu0 0.0
      %1639 = vmatpush1.msra.mxu0 0.0
      %1640 = vmatprep.subr.mxu0 0.0
      %1641 = vmatpush1.msra.mxu0 0.0
      %1642 = vmatprep.subr.mxu0 0.0
      %1643 = vmatpush1.msra.mxu0 0.0
      %1644 = vmatprep.subr.mxu0 0.0
      %1645 = vmatpush1.msra.mxu0 0.0
      %1646 = vmatprep.mubr.f32.mxu0 0.0
      %v1647 = vand.u32 %v1159, 4294901760
      %1648 = vmatmul.mubr.f32.gmra.mrb[0].mxu0 %v1647
      %v1649 = vpop.f32.mrb[0].mxu0
      %v1650 = vadd.f32 %v1547, %v1649
      %v1651 = vpop.f32.mrb[0].mxu0
      %1652 = vmatprep.mubr.f32.mxu0 0.0
      %v1653 = vand.u32 %v1162, 4294901760
      %1654 = vmatmul.mubr.f32.gmra.mrb[0].mxu0 %v1653
      %v1655 = vpop.f32.mrb[0].mxu0
      %v1656 = vadd.f32 %v1555, %v1655
      %v1657 = vpop.f32.mrb[0].mxu0
      %1658 = vdwg.mxu0
      %1659 = vmatprep.subr.mxu0 0.0
      %v1660 = vand.u32 %v1147, 4294901760
      %1661 = vmatpush1.msra.mxu0 %v1660
      %1662 = vmatprep.subr.mxu0 0.0
      %v1663 = vand.u32 %v1148, 4294901760
      %1664 = vmatpush1.msra.mxu0 %v1663
      %1665 = vmatprep.subr.mxu0 0.0
      %v1666 = vand.u32 %v1149, 4294901760
      %1667 = vmatpush1.msra.mxu0 %v1666
      %1668 = vmatprep.subr.mxu0 0.0
      %v1669 = vand.u32 %v1150, 4294901760
      %1670 = vmatpush1.msra.mxu0 %v1669
      %1671 = vmatprep.subr.mxu0 0.0
      %v1672 = vand.u32 %v1151, 4294901760
      %1673 = vmatpush1.msra.mxu0 %v1672
      %1674 = vmatprep.subr.mxu0 0.0
      %v1675 = vand.u32 %v1152, 4294901760
      %1676 = vmatpush1.msra.mxu0 %v1675
      %1677 = vmatprep.subr.mxu0 0.0
      %v1678 = vand.u32 %v1153, 4294901760
      %1679 = vmatpush1.msra.mxu0 %v1678
      %1680 = vmatprep.subr.mxu0 0.0
      %v1681 = vand.u32 %v1154, 4294901760
      %1682 = vmatpush1.msra.mxu0 %v1681
      %1683 = vmatprep.subr.mxu0 0.0
      %1684 = vmatpush1.msra.mxu0 0.0
      %1685 = vmatprep.subr.mxu0 0.0
      %1686 = vmatpush1.msra.mxu0 0.0
      %1687 = vmatprep.subr.mxu0 0.0
      %1688 = vmatpush1.msra.mxu0 0.0
      %1689 = vmatprep.subr.mxu0 0.0
      %1690 = vmatpush1.msra.mxu0 0.0
      %1691 = vmatprep.subr.mxu0 0.0
      %1692 = vmatpush1.msra.mxu0 0.0
      %1693 = vmatprep.subr.mxu0 0.0
      %1694 = vmatpush1.msra.mxu0 0.0
      %1695 = vmatprep.subr.mxu0 0.0
      %1696 = vmatpush1.msra.mxu0 0.0
      %1697 = vmatprep.subr.mxu0 0.0
      %1698 = vmatpush1.msra.mxu0 0.0
      %1699 = vmatprep.subr.mxu0 0.0
      %1700 = vmatpush1.msra.mxu0 0.0
      %1701 = vmatprep.subr.mxu0 0.0
      %1702 = vmatpush1.msra.mxu0 0.0
      %1703 = vmatprep.subr.mxu0 0.0
      %1704 = vmatpush1.msra.mxu0 0.0
      %1705 = vmatprep.subr.mxu0 0.0
      %1706 = vmatpush1.msra.mxu0 0.0
      %1707 = vmatprep.subr.mxu0 0.0
      %1708 = vmatpush1.msra.mxu0 0.0
      %1709 = vmatprep.subr.mxu0 0.0
      %1710 = vmatpush1.msra.mxu0 0.0
      %1711 = vmatprep.subr.mxu0 0.0
      %1712 = vmatpush1.msra.mxu0 0.0
      %1713 = vmatprep.subr.mxu0 0.0
      %1714 = vmatpush1.msra.mxu0 0.0
      %1715 = vmatprep.subr.mxu0 0.0
      %1716 = vmatpush1.msra.mxu0 0.0
      %1717 = vmatprep.subr.mxu0 0.0
      %1718 = vmatpush1.msra.mxu0 0.0
      %1719 = vmatprep.subr.mxu0 0.0
      %1720 = vmatpush1.msra.mxu0 0.0
      %1721 = vmatprep.subr.mxu0 0.0
      %1722 = vmatpush1.msra.mxu0 0.0
      %1723 = vmatprep.subr.mxu0 0.0
      %1724 = vmatpush1.msra.mxu0 0.0
      %1725 = vmatprep.subr.mxu0 0.0
      %1726 = vmatpush1.msra.mxu0 0.0
      %1727 = vmatprep.subr.mxu0 0.0
      %1728 = vmatpush1.msra.mxu0 0.0
      %1729 = vmatprep.subr.mxu0 0.0
      %1730 = vmatpush1.msra.mxu0 0.0
      %1731 = vmatprep.mubr.f32.mxu0 0.0
      %v1732 = vand.u32 %v1159, 4294901760
      %1733 = vmatmul.mubr.f32.gmra.mrb[0].mxu0 %v1732
      %v1734 = vpop.f32.mrb[0].mxu0
      %v1735 = vadd.f32 %v1650, %v1734
      %v1736 = vpop.f32.mrb[0].mxu0
      %1737 = vmatprep.mubr.f32.mxu0 0.0
      %v1738 = vand.u32 %v1162, 4294901760
      %1739 = vmatmul.mubr.f32.gmra.mrb[0].mxu0 %v1738
      %v1740 = vpop.f32.mrb[0].mxu0
      %v1741 = vadd.f32 %v1656, %v1740
      %v1742 = vpop.f32.mrb[0].mxu0
      %1743 = vdwg.mxu0
      %v1744 = vld [vmem:[%s3] sm:$0xff]
      %v1745 = vld [vmem:[%s3 + $0x8] sm:$0xff]
      %v1746 = vld [vmem:[%s3 + $0x10] sm:$0xff]
      %v1747 = vld [vmem:[%s3 + $0x18] sm:$0xff]
      %s1748 = scalar_lea.vmem %s2, 16
      %v1749 = vld [vmem:[%s1748] sm:$0xff]
      %v1750 = vld [vmem:[%s1748 + $0x8] sm:$0xff]
      %v1752 = vsel %vm1157, %v1749, 0
      %v1755 = vsel %vm1157, %v1750, 0
      %1757 = vmatprep.subr.mxu0 0.0
      %v1758 = vand.u32 %v1147, 4294901760
      %1759 = vmatpush1.msra.mxu0 %v1758
      %1760 = vmatprep.subr.mxu0 0.0
      %v1761 = vand.u32 %v1148, 4294901760
      %1762 = vmatpush1.msra.mxu0 %v1761
      %1763 = vmatprep.subr.mxu0 0.0
      %v1764 = vand.u32 %v1149, 4294901760
      %1765 = vmatpush1.msra.mxu0 %v1764
      %1766 = vmatprep.subr.mxu0 0.0
      %v1767 = vand.u32 %v1150, 4294901760
      %1768 = vmatpush1.msra.mxu0 %v1767
      %1769 = vmatprep.subr.mxu0 0.0
      %v1770 = vand.u32 %v1151, 4294901760
      %1771 = vmatpush1.msra.mxu0 %v1770
      %1772 = vmatprep.subr.mxu0 0.0
      %v1773 = vand.u32 %v1152, 4294901760
      %1774 = vmatpush1.msra.mxu0 %v1773
      %1775 = vmatprep.subr.mxu0 0.0
      %v1776 = vand.u32 %v1153, 4294901760
      %1777 = vmatpush1.msra.mxu0 %v1776
      %1778 = vmatprep.subr.mxu0 0.0
      %v1779 = vand.u32 %v1154, 4294901760
      %1780 = vmatpush1.msra.mxu0 %v1779
      %1781 = vmatprep.subr.mxu0 0.0
      %1782 = vmatpush1.msra.mxu0 0.0
      %1783 = vmatprep.subr.mxu0 0.0
      %1784 = vmatpush1.msra.mxu0 0.0
      %1785 = vmatprep.subr.mxu0 0.0
      %1786 = vmatpush1.msra.mxu0 0.0
      %1787 = vmatprep.subr.mxu0 0.0
      %1788 = vmatpush1.msra.mxu0 0.0
      %1789 = vmatprep.subr.mxu0 0.0
      %1790 = vmatpush1.msra.mxu0 0.0
      %1791 = vmatprep.subr.mxu0 0.0
      %1792 = vmatpush1.msra.mxu0 0.0
      %1793 = vmatprep.subr.mxu0 0.0
      %1794 = vmatpush1.msra.mxu0 0.0
      %1795 = vmatprep.subr.mxu0 0.0
      %1796 = vmatpush1.msra.mxu0 0.0
      %1797 = vmatprep.subr.mxu0 0.0
      %1798 = vmatpush1.msra.mxu0 0.0
      %1799 = vmatprep.subr.mxu0 0.0
      %1800 = vmatpush1.msra.mxu0 0.0
      %1801 = vmatprep.subr.mxu0 0.0
      %1802 = vmatpush1.msra.mxu0 0.0
      %1803 = vmatprep.subr.mxu0 0.0
      %1804 = vmatpush1.msra.mxu0 0.0
      %1805 = vmatprep.subr.mxu0 0.0
      %1806 = vmatpush1.msra.mxu0 0.0
      %1807 = vmatprep.subr.mxu0 0.0
      %1808 = vmatpush1.msra.mxu0 0.0
      %1809 = vmatprep.subr.mxu0 0.0
      %1810 = vmatpush1.msra.mxu0 0.0
      %1811 = vmatprep.subr.mxu0 0.0
      %1812 = vmatpush1.msra.mxu0 0.0
      %1813 = vmatprep.subr.mxu0 0.0
      %1814 = vmatpush1.msra.mxu0 0.0
      %1815 = vmatprep.subr.mxu0 0.0
      %1816 = vmatpush1.msra.mxu0 0.0
      %1817 = vmatprep.subr.mxu0 0.0
      %1818 = vmatpush1.msra.mxu0 0.0
      %1819 = vmatprep.subr.mxu0 0.0
      %1820 = vmatpush1.msra.mxu0 0.0
      %1821 = vmatprep.subr.mxu0 0.0
      %1822 = vmatpush1.msra.mxu0 0.0
      %1823 = vmatprep.subr.mxu0 0.0
      %1824 = vmatpush1.msra.mxu0 0.0
      %1825 = vmatprep.subr.mxu0 0.0
      %1826 = vmatpush1.msra.mxu0 0.0
      %1827 = vmatprep.subr.mxu0 0.0
      %1828 = vmatpush1.msra.mxu0 0.0
      %1829 = vmatprep.mubr.f32.mxu0 0.0
      %v1830 = vand.u32 %v1752, 4294901760
      %v1831 = vsub.f32 %v1752, %v1830
      %v1832 = vand.u32 %v1831, 4294901760
      %v1833 = vsub.f32 %v1831, %v1832
      %v1834 = vand.u32 %v1833, 4294901760
      %1835 = vmatmul.mubr.f32.gmra.mrb[0].mxu0 %v1834
      %v1836 = vpop.f32.mrb[0].mxu0
      %v1837 = vadd.f32 0.0, %v1836
      %v1838 = vpop.f32.mrb[0].mxu0
      %1839 = vmatprep.mubr.f32.mxu0 0.0
      %v1840 = vand.u32 %v1755, 4294901760
      %v1841 = vsub.f32 %v1755, %v1840
      %v1842 = vand.u32 %v1841, 4294901760
      %v1843 = vsub.f32 %v1841, %v1842
      %v1844 = vand.u32 %v1843, 4294901760
      %1845 = vmatmul.mubr.f32.gmra.mrb[0].mxu0 %v1844
      %v1846 = vpop.f32.mrb[0].mxu0
      %v1847 = vadd.f32 0.0, %v1846
      %v1848 = vpop.f32.mrb[0].mxu0
      %1849 = vdwg.mxu0
      %1850 = vmatprep.subr.mxu0 0.0
      %v1851 = vand.u32 %v1147, 4294901760
      %v1852 = vsub.f32 %v1147, %v1851
      %v1853 = vand.u32 %v1852, 4294901760
      %v1854 = vsub.f32 %v1852, %v1853
      %v1855 = vand.u32 %v1854, 4294901760
      %1856 = vmatpush1.msra.mxu0 %v1855
      %1857 = vmatprep.subr.mxu0 0.0
      %v1858 = vand.u32 %v1148, 4294901760
      %v1859 = vsub.f32 %v1148, %v1858
      %v1860 = vand.u32 %v1859, 4294901760
      %v1861 = vsub.f32 %v1859, %v1860
      %v1862 = vand.u32 %v1861, 4294901760
      %1863 = vmatpush1.msra.mxu0 %v1862
      %1864 = vmatprep.subr.mxu0 0.0
      %v1865 = vand.u32 %v1149, 4294901760
      %v1866 = vsub.f32 %v1149, %v1865
      %v1867 = vand.u32 %v1866, 4294901760
      %v1868 = vsub.f32 %v1866, %v1867
      %v1869 = vand.u32 %v1868, 4294901760
      %1870 = vmatpush1.msra.mxu0 %v1869
      %1871 = vmatprep.subr.mxu0 0.0
      %v1872 = vand.u32 %v1150, 4294901760
      %v1873 = vsub.f32 %v1150, %v1872
      %v1874 = vand.u32 %v1873, 4294901760
      %v1875 = vsub.f32 %v1873, %v1874
      %v1876 = vand.u32 %v1875, 4294901760
      %1877 = vmatpush1.msra.mxu0 %v1876
      %1878 = vmatprep.subr.mxu0 0.0
      %v1879 = vand.u32 %v1151, 4294901760
      %v1880 = vsub.f32 %v1151, %v1879
      %v1881 = vand.u32 %v1880, 4294901760
      %v1882 = vsub.f32 %v1880, %v1881
      %v1883 = vand.u32 %v1882, 4294901760
      %1884 = vmatpush1.msra.mxu0 %v1883
      %1885 = vmatprep.subr.mxu0 0.0
      %v1886 = vand.u32 %v1152, 4294901760
      %v1887 = vsub.f32 %v1152, %v1886
      %v1888 = vand.u32 %v1887, 4294901760
      %v1889 = vsub.f32 %v1887, %v1888
      %v1890 = vand.u32 %v1889, 4294901760
      %1891 = vmatpush1.msra.mxu0 %v1890
      %1892 = vmatprep.subr.mxu0 0.0
      %v1893 = vand.u32 %v1153, 4294901760
      %v1894 = vsub.f32 %v1153, %v1893
      %v1895 = vand.u32 %v1894, 4294901760
      %v1896 = vsub.f32 %v1894, %v1895
      %v1897 = vand.u32 %v1896, 4294901760
      %1898 = vmatpush1.msra.mxu0 %v1897
      %1899 = vmatprep.subr.mxu0 0.0
      %v1900 = vand.u32 %v1154, 4294901760
      %v1901 = vsub.f32 %v1154, %v1900
      %v1902 = vand.u32 %v1901, 4294901760
      %v1903 = vsub.f32 %v1901, %v1902
      %v1904 = vand.u32 %v1903, 4294901760
      %1905 = vmatpush1.msra.mxu0 %v1904
      %1906 = vmatprep.subr.mxu0 0.0
      %1907 = vmatpush1.msra.mxu0 0.0
      %1908 = vmatprep.subr.mxu0 0.0
      %1909 = vmatpush1.msra.mxu0 0.0
      %1910 = vmatprep.subr.mxu0 0.0
      %1911 = vmatpush1.msra.mxu0 0.0
      %1912 = vmatprep.subr.mxu0 0.0
      %1913 = vmatpush1.msra.mxu0 0.0
      %1914 = vmatprep.subr.mxu0 0.0
      %1915 = vmatpush1.msra.mxu0 0.0
      %1916 = vmatprep.subr.mxu0 0.0
      %1917 = vmatpush1.msra.mxu0 0.0
      %1918 = vmatprep.subr.mxu0 0.0
      %1919 = vmatpush1.msra.mxu0 0.0
      %1920 = vmatprep.subr.mxu0 0.0
      %1921 = vmatpush1.msra.mxu0 0.0
      %1922 = vmatprep.subr.mxu0 0.0
      %1923 = vmatpush1.msra.mxu0 0.0
      %1924 = vmatprep.subr.mxu0 0.0
      %1925 = vmatpush1.msra.mxu0 0.0
      %1926 = vmatprep.subr.mxu0 0.0
      %1927 = vmatpush1.msra.mxu0 0.0
      %1928 = vmatprep.subr.mxu0 0.0
      %1929 = vmatpush1.msra.mxu0 0.0
      %1930 = vmatprep.subr.mxu0 0.0
      %1931 = vmatpush1.msra.mxu0 0.0
      %1932 = vmatprep.subr.mxu0 0.0
      %1933 = vmatpush1.msra.mxu0 0.0
      %1934 = vmatprep.subr.mxu0 0.0
      %1935 = vmatpush1.msra.mxu0 0.0
      %1936 = vmatprep.subr.mxu0 0.0
      %1937 = vmatpush1.msra.mxu0 0.0
      %1938 = vmatprep.subr.mxu0 0.0
      %1939 = vmatpush1.msra.mxu0 0.0
      %1940 = vmatprep.subr.mxu0 0.0
      %1941 = vmatpush1.msra.mxu0 0.0
      %1942 = vmatprep.subr.mxu0 0.0
      %1943 = vmatpush1.msra.mxu0 0.0
      %1944 = vmatprep.subr.mxu0 0.0
      %1945 = vmatpush1.msra.mxu0 0.0
      %1946 = vmatprep.subr.mxu0 0.0
      %1947 = vmatpush1.msra.mxu0 0.0
      %1948 = vmatprep.subr.mxu0 0.0
      %1949 = vmatpush1.msra.mxu0 0.0
      %1950 = vmatprep.subr.mxu0 0.0
      %1951 = vmatpush1.msra.mxu0 0.0
      %1952 = vmatprep.subr.mxu0 0.0
      %1953 = vmatpush1.msra.mxu0 0.0
      %1954 = vmatprep.mubr.f32.mxu0 0.0
      %v1955 = vand.u32 %v1752, 4294901760
      %1956 = vmatmul.mubr.f32.gmra.mrb[0].mxu0 %v1955
      %v1957 = vpop.f32.mrb[0].mxu0
      %v1958 = vadd.f32 %v1837, %v1957
      %v1959 = vpop.f32.mrb[0].mxu0
      %1960 = vmatprep.mubr.f32.mxu0 0.0
      %v1961 = vand.u32 %v1755, 4294901760
      %1962 = vmatmul.mubr.f32.gmra.mrb[0].mxu0 %v1961
      %v1963 = vpop.f32.mrb[0].mxu0
      %v1964 = vadd.f32 %v1847, %v1963
      %v1965 = vpop.f32.mrb[0].mxu0
      %1966 = vdwg.mxu0
      %1967 = vmatprep.subr.mxu0 0.0
      %v1968 = vand.u32 %v1147, 4294901760
      %v1969 = vsub.f32 %v1147, %v1968
      %1970 = vmatpush1.msra.mxu0 %v1969
      %1971 = vmatprep.subr.mxu0 0.0
      %v1972 = vand.u32 %v1148, 4294901760
      %v1973 = vsub.f32 %v1148, %v1972
      %1974 = vmatpush1.msra.mxu0 %v1973
      %1975 = vmatprep.subr.mxu0 0.0
      %v1976 = vand.u32 %v1149, 4294901760
      %v1977 = vsub.f32 %v1149, %v1976
      %1978 = vmatpush1.msra.mxu0 %v1977
      %1979 = vmatprep.subr.mxu0 0.0
      %v1980 = vand.u32 %v1150, 4294901760
      %v1981 = vsub.f32 %v1150, %v1980
      %1982 = vmatpush1.msra.mxu0 %v1981
      %1983 = vmatprep.subr.mxu0 0.0
      %v1984 = vand.u32 %v1151, 4294901760
      %v1985 = vsub.f32 %v1151, %v1984
      %1986 = vmatpush1.msra.mxu0 %v1985
      %1987 = vmatprep.subr.mxu0 0.0
      %v1988 = vand.u32 %v1152, 4294901760
      %v1989 = vsub.f32 %v1152, %v1988
      %1990 = vmatpush1.msra.mxu0 %v1989
      %1991 = vmatprep.subr.mxu0 0.0
      %v1992 = vand.u32 %v1153, 4294901760
      %v1993 = vsub.f32 %v1153, %v1992
      %1994 = vmatpush1.msra.mxu0 %v1993
      %1995 = vmatprep.subr.mxu0 0.0
      %v1996 = vand.u32 %v1154, 4294901760
      %v1997 = vsub.f32 %v1154, %v1996
      %1998 = vmatpush1.msra.mxu0 %v1997
      %1999 = vmatprep.subr.mxu0 0.0
      %2000 = vmatpush1.msra.mxu0 0.0
      %2001 = vmatprep.subr.mxu0 0.0
      %2002 = vmatpush1.msra.mxu0 0.0
      %2003 = vmatprep.subr.mxu0 0.0
      %2004 = vmatpush1.msra.mxu0 0.0
      %2005 = vmatprep.subr.mxu0 0.0
      %2006 = vmatpush1.msra.mxu0 0.0
      %2007 = vmatprep.subr.mxu0 0.0
      %2008 = vmatpush1.msra.mxu0 0.0
      %2009 = vmatprep.subr.mxu0 0.0
      %2010 = vmatpush1.msra.mxu0 0.0
      %2011 = vmatprep.subr.mxu0 0.0
      %2012 = vmatpush1.msra.mxu0 0.0
      %2013 = vmatprep.subr.mxu0 0.0
      %2014 = vmatpush1.msra.mxu0 0.0
      %2015 = vmatprep.subr.mxu0 0.0
      %2016 = vmatpush1.msra.mxu0 0.0
      %2017 = vmatprep.subr.mxu0 0.0
      %2018 = vmatpush1.msra.mxu0 0.0
      %2019 = vmatprep.subr.mxu0 0.0
      %2020 = vmatpush1.msra.mxu0 0.0
      %2021 = vmatprep.subr.mxu0 0.0
      %2022 = vmatpush1.msra.mxu0 0.0
      %2023 = vmatprep.subr.mxu0 0.0
      %2024 = vmatpush1.msra.mxu0 0.0
      %2025 = vmatprep.subr.mxu0 0.0
      %2026 = vmatpush1.msra.mxu0 0.0
      %2027 = vmatprep.subr.mxu0 0.0
      %2028 = vmatpush1.msra.mxu0 0.0
      %2029 = vmatprep.subr.mxu0 0.0
      %2030 = vmatpush1.msra.mxu0 0.0
      %2031 = vmatprep.subr.mxu0 0.0
      %2032 = vmatpush1.msra.mxu0 0.0
      %2033 = vmatprep.subr.mxu0 0.0
      %2034 = vmatpush1.msra.mxu0 0.0
      %2035 = vmatprep.subr.mxu0 0.0
      %2036 = vmatpush1.msra.mxu0 0.0
      %2037 = vmatprep.subr.mxu0 0.0
      %2038 = vmatpush1.msra.mxu0 0.0
      %2039 = vmatprep.subr.mxu0 0.0
      %2040 = vmatpush1.msra.mxu0 0.0
      %2041 = vmatprep.subr.mxu0 0.0
      %2042 = vmatpush1.msra.mxu0 0.0
      %2043 = vmatprep.subr.mxu0 0.0
      %2044 = vmatpush1.msra.mxu0 0.0
      %2045 = vmatprep.subr.mxu0 0.0
      %2046 = vmatpush1.msra.mxu0 0.0
      %2047 = vmatprep.mubr.f32.mxu0 0.0
      %v2048 = vand.u32 %v1752, 4294901760
      %v2049 = vsub.f32 %v1752, %v2048
      %2050 = vmatmul.mubr.f32.gmra.mrb[0].mxu0 %v2049
      %v2051 = vpop.f32.mrb[0].mxu0
      %v2052 = vadd.f32 %v1958, %v2051
      %v2053 = vpop.f32.mrb[0].mxu0
      %2054 = vmatprep.mubr.f32.mxu0 0.0
      %v2055 = vand.u32 %v1755, 4294901760
      %v2056 = vsub.f32 %v1755, %v2055
      %2057 = vmatmul.mubr.f32.gmra.mrb[0].mxu0 %v2056
      %v2058 = vpop.f32.mrb[0].mxu0
      %v2059 = vadd.f32 %v1964, %v2058
      %v2060 = vpop.f32.mrb[0].mxu0
      %2061 = vdwg.mxu0
      %2062 = vmatprep.subr.mxu0 0.0
      %v2063 = vand.u32 %v1147, 4294901760
      %2064 = vmatpush1.msra.mxu0 %v2063
      %2065 = vmatprep.subr.mxu0 0.0
      %v2066 = vand.u32 %v1148, 4294901760
      %2067 = vmatpush1.msra.mxu0 %v2066
      %2068 = vmatprep.subr.mxu0 0.0
      %v2069 = vand.u32 %v1149, 4294901760
      %2070 = vmatpush1.msra.mxu0 %v2069
      %2071 = vmatprep.subr.mxu0 0.0
      %v2072 = vand.u32 %v1150, 4294901760
      %2073 = vmatpush1.msra.mxu0 %v2072
      %2074 = vmatprep.subr.mxu0 0.0
      %v2075 = vand.u32 %v1151, 4294901760
      %2076 = vmatpush1.msra.mxu0 %v2075
      %2077 = vmatprep.subr.mxu0 0.0
      %v2078 = vand.u32 %v1152, 4294901760
      %2079 = vmatpush1.msra.mxu0 %v2078
      %2080 = vmatprep.subr.mxu0 0.0
      %v2081 = vand.u32 %v1153, 4294901760
      %2082 = vmatpush1.msra.mxu0 %v2081
      %2083 = vmatprep.subr.mxu0 0.0
      %v2084 = vand.u32 %v1154, 4294901760
      %2085 = vmatpush1.msra.mxu0 %v2084
      %2086 = vmatprep.subr.mxu0 0.0
      %2087 = vmatpush1.msra.mxu0 0.0
      %2088 = vmatprep.subr.mxu0 0.0
      %2089 = vmatpush1.msra.mxu0 0.0
      %2090 = vmatprep.subr.mxu0 0.0
      %2091 = vmatpush1.msra.mxu0 0.0
      %2092 = vmatprep.subr.mxu0 0.0
      %2093 = vmatpush1.msra.mxu0 0.0
      %2094 = vmatprep.subr.mxu0 0.0
      %2095 = vmatpush1.msra.mxu0 0.0
      %2096 = vmatprep.subr.mxu0 0.0
      %2097 = vmatpush1.msra.mxu0 0.0
      %2098 = vmatprep.subr.mxu0 0.0
      %2099 = vmatpush1.msra.mxu0 0.0
      %2100 = vmatprep.subr.mxu0 0.0
      %2101 = vmatpush1.msra.mxu0 0.0
      %2102 = vmatprep.subr.mxu0 0.0
      %2103 = vmatpush1.msra.mxu0 0.0
      %2104 = vmatprep.subr.mxu0 0.0
      %2105 = vmatpush1.msra.mxu0 0.0
      %2106 = vmatprep.subr.mxu0 0.0
      %2107 = vmatpush1.msra.mxu0 0.0
      %2108 = vmatprep.subr.mxu0 0.0
      %2109 = vmatpush1.msra.mxu0 0.0
      %2110 = vmatprep.subr.mxu0 0.0
      %2111 = vmatpush1.msra.mxu0 0.0
      %2112 = vmatprep.subr.mxu0 0.0
      %2113 = vmatpush1.msra.mxu0 0.0
      %2114 = vmatprep.subr.mxu0 0.0
      %2115 = vmatpush1.msra.mxu0 0.0
      %2116 = vmatprep.subr.mxu0 0.0
      %2117 = vmatpush1.msra.mxu0 0.0
      %2118 = vmatprep.subr.mxu0 0.0
      %2119 = vmatpush1.msra.mxu0 0.0
      %2120 = vmatprep.subr.mxu0 0.0
      %2121 = vmatpush1.msra.mxu0 0.0
      %2122 = vmatprep.subr.mxu0 0.0
      %2123 = vmatpush1.msra.mxu0 0.0
      %2124 = vmatprep.subr.mxu0 0.0
      %2125 = vmatpush1.msra.mxu0 0.0
      %2126 = vmatprep.subr.mxu0 0.0
      %2127 = vmatpush1.msra.mxu0 0.0
      %2128 = vmatprep.subr.mxu0 0.0
      %2129 = vmatpush1.msra.mxu0 0.0
      %2130 = vmatprep.subr.mxu0 0.0
      %2131 = vmatpush1.msra.mxu0 0.0
      %2132 = vmatprep.subr.mxu0 0.0
      %2133 = vmatpush1.msra.mxu0 0.0
      %2134 = vmatprep.mubr.f32.mxu0 0.0
      %v2135 = vand.u32 %v1752, 4294901760
      %v2136 = vsub.f32 %v1752, %v2135
      %v2137 = vand.u32 %v2136, 4294901760
      %2138 = vmatmul.mubr.f32.gmra.mrb[0].mxu0 %v2137
      %v2139 = vpop.f32.mrb[0].mxu0
      %v2140 = vadd.f32 %v2052, %v2139
      %v2141 = vpop.f32.mrb[0].mxu0
      %2142 = vmatprep.mubr.f32.mxu0 0.0
      %v2143 = vand.u32 %v1755, 4294901760
      %v2144 = vsub.f32 %v1755, %v2143
      %v2145 = vand.u32 %v2144, 4294901760
      %2146 = vmatmul.mubr.f32.gmra.mrb[0].mxu0 %v2145
      %v2147 = vpop.f32.mrb[0].mxu0
      %v2148 = vadd.f32 %v2059, %v2147
      %v2149 = vpop.f32.mrb[0].mxu0
      %2150 = vdwg.mxu0
      %2151 = vmatprep.subr.mxu0 0.0
      %v2152 = vand.u32 %v1147, 4294901760
      %v2153 = vsub.f32 %v1147, %v2152
      %v2154 = vand.u32 %v2153, 4294901760
      %2155 = vmatpush1.msra.mxu0 %v2154
      %2156 = vmatprep.subr.mxu0 0.0
      %v2157 = vand.u32 %v1148, 4294901760
      %v2158 = vsub.f32 %v1148, %v2157
      %v2159 = vand.u32 %v2158, 4294901760
      %2160 = vmatpush1.msra.mxu0 %v2159
      %2161 = vmatprep.subr.mxu0 0.0
      %v2162 = vand.u32 %v1149, 4294901760
      %v2163 = vsub.f32 %v1149, %v2162
      %v2164 = vand.u32 %v2163, 4294901760
      %2165 = vmatpush1.msra.mxu0 %v2164
      %2166 = vmatprep.subr.mxu0 0.0
      %v2167 = vand.u32 %v1150, 4294901760
      %v2168 = vsub.f32 %v1150, %v2167
      %v2169 = vand.u32 %v2168, 4294901760
      %2170 = vmatpush1.msra.mxu0 %v2169
      %2171 = vmatprep.subr.mxu0 0.0
      %v2172 = vand.u32 %v1151, 4294901760
      %v2173 = vsub.f32 %v1151, %v2172
      %v2174 = vand.u32 %v2173, 4294901760
      %2175 = vmatpush1.msra.mxu0 %v2174
      %2176 = vmatprep.subr.mxu0 0.0
      %v2177 = vand.u32 %v1152, 4294901760
      %v2178 = vsub.f32 %v1152, %v2177
      %v2179 = vand.u32 %v2178, 4294901760
      %2180 = vmatpush1.msra.mxu0 %v2179
      %2181 = vmatprep.subr.mxu0 0.0
      %v2182 = vand.u32 %v1153, 4294901760
      %v2183 = vsub.f32 %v1153, %v2182
      %v2184 = vand.u32 %v2183, 4294901760
      %2185 = vmatpush1.msra.mxu0 %v2184
      %2186 = vmatprep.subr.mxu0 0.0
      %v2187 = vand.u32 %v1154, 4294901760
      %v2188 = vsub.f32 %v1154, %v2187
      %v2189 = vand.u32 %v2188, 4294901760
      %2190 = vmatpush1.msra.mxu0 %v2189
      %2191 = vmatprep.subr.mxu0 0.0
      %2192 = vmatpush1.msra.mxu0 0.0
      %2193 = vmatprep.subr.mxu0 0.0
      %2194 = vmatpush1.msra.mxu0 0.0
      %2195 = vmatprep.subr.mxu0 0.0
      %2196 = vmatpush1.msra.mxu0 0.0
      %2197 = vmatprep.subr.mxu0 0.0
      %2198 = vmatpush1.msra.mxu0 0.0
      %2199 = vmatprep.subr.mxu0 0.0
      %2200 = vmatpush1.msra.mxu0 0.0
      %2201 = vmatprep.subr.mxu0 0.0
      %2202 = vmatpush1.msra.mxu0 0.0
      %2203 = vmatprep.subr.mxu0 0.0
      %2204 = vmatpush1.msra.mxu0 0.0
      %2205 = vmatprep.subr.mxu0 0.0
      %2206 = vmatpush1.msra.mxu0 0.0
      %2207 = vmatprep.subr.mxu0 0.0
      %2208 = vmatpush1.msra.mxu0 0.0
      %2209 = vmatprep.subr.mxu0 0.0
      %2210 = vmatpush1.msra.mxu0 0.0
      %2211 = vmatprep.subr.mxu0 0.0
      %2212 = vmatpush1.msra.mxu0 0.0
      %2213 = vmatprep.subr.mxu0 0.0
      %2214 = vmatpush1.msra.mxu0 0.0
      %2215 = vmatprep.subr.mxu0 0.0
      %2216 = vmatpush1.msra.mxu0 0.0
      %2217 = vmatprep.subr.mxu0 0.0
      %2218 = vmatpush1.msra.mxu0 0.0
      %2219 = vmatprep.subr.mxu0 0.0
      %2220 = vmatpush1.msra.mxu0 0.0
      %2221 = vmatprep.subr.mxu0 0.0
      %2222 = vmatpush1.msra.mxu0 0.0
      %2223 = vmatprep.subr.mxu0 0.0
      %2224 = vmatpush1.msra.mxu0 0.0
      %2225 = vmatprep.subr.mxu0 0.0
      %2226 = vmatpush1.msra.mxu0 0.0
      %2227 = vmatprep.subr.mxu0 0.0
      %2228 = vmatpush1.msra.mxu0 0.0
      %2229 = vmatprep.subr.mxu0 0.0
      %2230 = vmatpush1.msra.mxu0 0.0
      %2231 = vmatprep.subr.mxu0 0.0
      %2232 = vmatpush1.msra.mxu0 0.0
      %2233 = vmatprep.subr.mxu0 0.0
      %2234 = vmatpush1.msra.mxu0 0.0
      %2235 = vmatprep.subr.mxu0 0.0
      %2236 = vmatpush1.msra.mxu0 0.0
      %2237 = vmatprep.subr.mxu0 0.0
      %2238 = vmatpush1.msra.mxu0 0.0
      %2239 = vmatprep.mubr.f32.mxu0 0.0
      %v2240 = vand.u32 %v1752, 4294901760
      %2241 = vmatmul.mubr.f32.gmra.mrb[0].mxu0 %v2240
      %v2242 = vpop.f32.mrb[0].mxu0
      %v2243 = vadd.f32 %v2140, %v2242
      %v2244 = vpop.f32.mrb[0].mxu0
      %2245 = vmatprep.mubr.f32.mxu0 0.0
      %v2246 = vand.u32 %v1755, 4294901760
      %2247 = vmatmul.mubr.f32.gmra.mrb[0].mxu0 %v2246
      %v2248 = vpop.f32.mrb[0].mxu0
      %v2249 = vadd.f32 %v2148, %v2248
      %v2250 = vpop.f32.mrb[0].mxu0
      %2251 = vdwg.mxu0
      %2252 = vmatprep.subr.mxu0 0.0
      %v2253 = vand.u32 %v1147, 4294901760
      %2254 = vmatpush1.msra.mxu0 %v2253
      %2255 = vmatprep.subr.mxu0 0.0
      %v2256 = vand.u32 %v1148, 4294901760
      %2257 = vmatpush1.msra.mxu0 %v2256
      %2258 = vmatprep.subr.mxu0 0.0
      %v2259 = vand.u32 %v1149, 4294901760
      %2260 = vmatpush1.msra.mxu0 %v2259
      %2261 = vmatprep.subr.mxu0 0.0
      %v2262 = vand.u32 %v1150, 4294901760
      %2263 = vmatpush1.msra.mxu0 %v2262
      %2264 = vmatprep.subr.mxu0 0.0
      %v2265 = vand.u32 %v1151, 4294901760
      %2266 = vmatpush1.msra.mxu0 %v2265
      %2267 = vmatprep.subr.mxu0 0.0
      %v2268 = vand.u32 %v1152, 4294901760
      %2269 = vmatpush1.msra.mxu0 %v2268
      %2270 = vmatprep.subr.mxu0 0.0
      %v2271 = vand.u32 %v1153, 4294901760
      %2272 = vmatpush1.msra.mxu0 %v2271
      %2273 = vmatprep.subr.mxu0 0.0
      %v2274 = vand.u32 %v1154, 4294901760
      %2275 = vmatpush1.msra.mxu0 %v2274
      %2276 = vmatprep.subr.mxu0 0.0
      %2277 = vmatpush1.msra.mxu0 0.0
      %2278 = vmatprep.subr.mxu0 0.0
      %2279 = vmatpush1.msra.mxu0 0.0
      %2280 = vmatprep.subr.mxu0 0.0
      %2281 = vmatpush1.msra.mxu0 0.0
      %2282 = vmatprep.subr.mxu0 0.0
      %2283 = vmatpush1.msra.mxu0 0.0
      %2284 = vmatprep.subr.mxu0 0.0
      %2285 = vmatpush1.msra.mxu0 0.0
      %2286 = vmatprep.subr.mxu0 0.0
      %2287 = vmatpush1.msra.mxu0 0.0
      %2288 = vmatprep.subr.mxu0 0.0
      %2289 = vmatpush1.msra.mxu0 0.0
      %2290 = vmatprep.subr.mxu0 0.0
      %2291 = vmatpush1.msra.mxu0 0.0
      %2292 = vmatprep.subr.mxu0 0.0
      %2293 = vmatpush1.msra.mxu0 0.0
      %2294 = vmatprep.subr.mxu0 0.0
      %2295 = vmatpush1.msra.mxu0 0.0
      %2296 = vmatprep.subr.mxu0 0.0
      %2297 = vmatpush1.msra.mxu0 0.0
      %2298 = vmatprep.subr.mxu0 0.0
      %2299 = vmatpush1.msra.mxu0 0.0
      %2300 = vmatprep.subr.mxu0 0.0
      %2301 = vmatpush1.msra.mxu0 0.0
      %2302 = vmatprep.subr.mxu0 0.0
      %2303 = vmatpush1.msra.mxu0 0.0
      %2304 = vmatprep.subr.mxu0 0.0
      %2305 = vmatpush1.msra.mxu0 0.0
      %2306 = vmatprep.subr.mxu0 0.0
      %2307 = vmatpush1.msra.mxu0 0.0
      %2308 = vmatprep.subr.mxu0 0.0
      %2309 = vmatpush1.msra.mxu0 0.0
      %2310 = vmatprep.subr.mxu0 0.0
      %2311 = vmatpush1.msra.mxu0 0.0
      %2312 = vmatprep.subr.mxu0 0.0
      %2313 = vmatpush1.msra.mxu0 0.0
      %2314 = vmatprep.subr.mxu0 0.0
      %2315 = vmatpush1.msra.mxu0 0.0
      %2316 = vmatprep.subr.mxu0 0.0
      %2317 = vmatpush1.msra.mxu0 0.0
      %2318 = vmatprep.subr.mxu0 0.0
      %2319 = vmatpush1.msra.mxu0 0.0
      %2320 = vmatprep.subr.mxu0 0.0
      %2321 = vmatpush1.msra.mxu0 0.0
      %2322 = vmatprep.subr.mxu0 0.0
      %2323 = vmatpush1.msra.mxu0 0.0
      %2324 = vmatprep.mubr.f32.mxu0 0.0
      %v2325 = vand.u32 %v1752, 4294901760
      %2326 = vmatmul.mubr.f32.gmra.mrb[0].mxu0 %v2325
      %v2327 = vpop.f32.mrb[0].mxu0
      %v2328 = vadd.f32 %v2243, %v2327
      %v2329 = vpop.f32.mrb[0].mxu0
      %2330 = vmatprep.mubr.f32.mxu0 0.0
      %v2331 = vand.u32 %v1755, 4294901760
      %2332 = vmatmul.mubr.f32.gmra.mrb[0].mxu0 %v2331
      %v2333 = vpop.f32.mrb[0].mxu0
      %v2334 = vadd.f32 %v2249, %v2333
      %v2335 = vpop.f32.mrb[0].mxu0
      %2336 = vdwg.mxu0
      %s2337 = scalar_lea.vmem %s3, 32
      %v2338 = vld [vmem:[%s2337] sm:$0xff]
      %v2339 = vld [vmem:[%s2337 + $0x8] sm:$0xff]
      %v2340 = vld [vmem:[%s2337 + $0x10] sm:$0xff]
      %v2341 = vld [vmem:[%s2337 + $0x18] sm:$0xff]
      %v2343 = vsel %vm1039, %v2328, 0
      %v2346 = vsel %vm1039, %v2334, 0
      %2348 = vmatprep.subr.mxu0 0.0
      %v2349 = vand.u32 %v2338, 4294901760
      %2350 = vmatpush1.msra.mxu0 %v2349
      %2351 = vmatprep.subr.mxu0 0.0
      %v2352 = vand.u32 %v2339, 4294901760
      %2353 = vmatpush1.msra.mxu0 %v2352
      %2354 = vmatprep.subr.mxu0 0.0
      %v2355 = vand.u32 %v2340, 4294901760
      %2356 = vmatpush1.msra.mxu0 %v2355
      %2357 = vmatprep.subr.mxu0 0.0
      %v2358 = vand.u32 %v2341, 4294901760
      %2359 = vmatpush1.msra.mxu0 %v2358
      %2360 = vmatprep.subr.mxu0 0.0
      %2361 = vmatpush1.msra.mxu0 0.0
      %2362 = vmatprep.subr.mxu0 0.0
      %2363 = vmatpush1.msra.mxu0 0.0
      %2364 = vmatprep.subr.mxu0 0.0
      %2365 = vmatpush1.msra.mxu0 0.0
      %2366 = vmatprep.subr.mxu0 0.0
      %2367 = vmatpush1.msra.mxu0 0.0
      %2368 = vmatprep.subr.mxu0 0.0
      %2369 = vmatpush1.msra.mxu0 0.0
      %2370 = vmatprep.subr.mxu0 0.0
      %2371 = vmatpush1.msra.mxu0 0.0
      %2372 = vmatprep.subr.mxu0 0.0
      %2373 = vmatpush1.msra.mxu0 0.0
      %2374 = vmatprep.subr.mxu0 0.0
      %2375 = vmatpush1.msra.mxu0 0.0
      %2376 = vmatprep.subr.mxu0 0.0
      %2377 = vmatpush1.msra.mxu0 0.0
      %2378 = vmatprep.subr.mxu0 0.0
      %2379 = vmatpush1.msra.mxu0 0.0
      %2380 = vmatprep.subr.mxu0 0.0
      %2381 = vmatpush1.msra.mxu0 0.0
      %2382 = vmatprep.subr.mxu0 0.0
      %2383 = vmatpush1.msra.mxu0 0.0
      %2384 = vmatprep.subr.mxu0 0.0
      %2385 = vmatpush1.msra.mxu0 0.0
      %2386 = vmatprep.subr.mxu0 0.0
      %2387 = vmatpush1.msra.mxu0 0.0
      %2388 = vmatprep.subr.mxu0 0.0
      %2389 = vmatpush1.msra.mxu0 0.0
      %2390 = vmatprep.subr.mxu0 0.0
      %2391 = vmatpush1.msra.mxu0 0.0
      %2392 = vmatprep.subr.mxu0 0.0
      %2393 = vmatpush1.msra.mxu0 0.0
      %2394 = vmatprep.subr.mxu0 0.0
      %2395 = vmatpush1.msra.mxu0 0.0
      %2396 = vmatprep.subr.mxu0 0.0
      %2397 = vmatpush1.msra.mxu0 0.0
      %2398 = vmatprep.subr.mxu0 0.0
      %2399 = vmatpush1.msra.mxu0 0.0
      %2400 = vmatprep.subr.mxu0 0.0
      %2401 = vmatpush1.msra.mxu0 0.0
      %2402 = vmatprep.subr.mxu0 0.0
      %2403 = vmatpush1.msra.mxu0 0.0
      %2404 = vmatprep.subr.mxu0 0.0
      %2405 = vmatpush1.msra.mxu0 0.0
      %2406 = vmatprep.subr.mxu0 0.0
      %2407 = vmatpush1.msra.mxu0 0.0
      %2408 = vmatprep.subr.mxu0 0.0
      %2409 = vmatpush1.msra.mxu0 0.0
      %2410 = vmatprep.subr.mxu0 0.0
      %2411 = vmatpush1.msra.mxu0 0.0
      %2412 = vmatprep.subr.mxu0 0.0
      %2413 = vmatpush1.msra.mxu0 0.0
      %2414 = vmatprep.subr.mxu0 0.0
      %2415 = vmatpush1.msra.mxu0 0.0
      %2416 = vmatprep.mubr.f32.mxu0 0.0
      %v2417 = vand.u32 %v2343, 4294901760
      %v2418 = vsub.f32 %v2343, %v2417
      %v2419 = vand.u32 %v2418, 4294901760
      %v2420 = vsub.f32 %v2418, %v2419
      %v2421 = vand.u32 %v2420, 4294901760
      %2422 = vmatmul.mubr.f32.gmra.mrb[0].mxu0 %v2421
      %v2423 = vpop.f32.mrb[0].mxu0
      %v2424 = vadd.f32 0.0, %v2423
      %v2425 = vpop.f32.mrb[0].mxu0
      %2426 = vmatprep.mubr.f32.mxu0 0.0
      %v2427 = vand.u32 %v2346, 4294901760
      %v2428 = vsub.f32 %v2346, %v2427
      %v2429 = vand.u32 %v2428, 4294901760
      %v2430 = vsub.f32 %v2428, %v2429
      %v2431 = vand.u32 %v2430, 4294901760
      %2432 = vmatmul.mubr.f32.gmra.mrb[0].mxu0 %v2431
      %v2433 = vpop.f32.mrb[0].mxu0
      %v2434 = vadd.f32 0.0, %v2433
      %v2435 = vpop.f32.mrb[0].mxu0
      %2436 = vdwg.mxu0
      %2437 = vmatprep.subr.mxu0 0.0
      %v2438 = vand.u32 %v2338, 4294901760
      %v2439 = vsub.f32 %v2338, %v2438
      %v2440 = vand.u32 %v2439, 4294901760
      %v2441 = vsub.f32 %v2439, %v2440
      %v2442 = vand.u32 %v2441, 4294901760
      %2443 = vmatpush1.msra.mxu0 %v2442
      %2444 = vmatprep.subr.mxu0 0.0
      %v2445 = vand.u32 %v2339, 4294901760
      %v2446 = vsub.f32 %v2339, %v2445
      %v2447 = vand.u32 %v2446, 4294901760
      %v2448 = vsub.f32 %v2446, %v2447
      %v2449 = vand.u32 %v2448, 4294901760
      %2450 = vmatpush1.msra.mxu0 %v2449
      %2451 = vmatprep.subr.mxu0 0.0
      %v2452 = vand.u32 %v2340, 4294901760
      %v2453 = vsub.f32 %v2340, %v2452
      %v2454 = vand.u32 %v2453, 4294901760
      %v2455 = vsub.f32 %v2453, %v2454
      %v2456 = vand.u32 %v2455, 4294901760
      %2457 = vmatpush1.msra.mxu0 %v2456
      %2458 = vmatprep.subr.mxu0 0.0
      %v2459 = vand.u32 %v2341, 4294901760
      %v2460 = vsub.f32 %v2341, %v2459
      %v2461 = vand.u32 %v2460, 4294901760
      %v2462 = vsub.f32 %v2460, %v2461
      %v2463 = vand.u32 %v2462, 4294901760
      %2464 = vmatpush1.msra.mxu0 %v2463
      %2465 = vmatprep.subr.mxu0 0.0
      %2466 = vmatpush1.msra.mxu0 0.0
      %2467 = vmatprep.subr.mxu0 0.0
      %2468 = vmatpush1.msra.mxu0 0.0
      %2469 = vmatprep.subr.mxu0 0.0
      %2470 = vmatpush1.msra.mxu0 0.0
      %2471 = vmatprep.subr.mxu0 0.0
      %2472 = vmatpush1.msra.mxu0 0.0
      %2473 = vmatprep.subr.mxu0 0.0
      %2474 = vmatpush1.msra.mxu0 0.0
      %2475 = vmatprep.subr.mxu0 0.0
      %2476 = vmatpush1.msra.mxu0 0.0
      %2477 = vmatprep.subr.mxu0 0.0
      %2478 = vmatpush1.msra.mxu0 0.0
      %2479 = vmatprep.subr.mxu0 0.0
      %2480 = vmatpush1.msra.mxu0 0.0
      %2481 = vmatprep.subr.mxu0 0.0
      %2482 = vmatpush1.msra.mxu0 0.0
      %2483 = vmatprep.subr.mxu0 0.0
      %2484 = vmatpush1.msra.mxu0 0.0
      %2485 = vmatprep.subr.mxu0 0.0
      %2486 = vmatpush1.msra.mxu0 0.0
      %2487 = vmatprep.subr.mxu0 0.0
      %2488 = vmatpush1.msra.mxu0 0.0
      %2489 = vmatprep.subr.mxu0 0.0
      %2490 = vmatpush1.msra.mxu0 0.0
      %2491 = vmatprep.subr.mxu0 0.0
      %2492 = vmatpush1.msra.mxu0 0.0
      %2493 = vmatprep.subr.mxu0 0.0
      %2494 = vmatpush1.msra.mxu0 0.0
      %2495 = vmatprep.subr.mxu0 0.0
      %2496 = vmatpush1.msra.mxu0 0.0
      %2497 = vmatprep.subr.mxu0 0.0
      %2498 = vmatpush1.msra.mxu0 0.0
      %2499 = vmatprep.subr.mxu0 0.0
      %2500 = vmatpush1.msra.mxu0 0.0
      %2501 = vmatprep.subr.mxu0 0.0
      %2502 = vmatpush1.msra.mxu0 0.0
      %2503 = vmatprep.subr.mxu0 0.0
      %2504 = vmatpush1.msra.mxu0 0.0
      %2505 = vmatprep.subr.mxu0 0.0
      %2506 = vmatpush1.msra.mxu0 0.0
      %2507 = vmatprep.subr.mxu0 0.0
      %2508 = vmatpush1.msra.mxu0 0.0
      %2509 = vmatprep.subr.mxu0 0.0
      %2510 = vmatpush1.msra.mxu0 0.0
      %2511 = vmatprep.subr.mxu0 0.0
      %2512 = vmatpush1.msra.mxu0 0.0
      %2513 = vmatprep.subr.mxu0 0.0
      %2514 = vmatpush1.msra.mxu0 0.0
      %2515 = vmatprep.subr.mxu0 0.0
      %2516 = vmatpush1.msra.mxu0 0.0
      %2517 = vmatprep.subr.mxu0 0.0
      %2518 = vmatpush1.msra.mxu0 0.0
      %2519 = vmatprep.subr.mxu0 0.0
      %2520 = vmatpush1.msra.mxu0 0.0
      %2521 = vmatprep.mubr.f32.mxu0 0.0
      %v2522 = vand.u32 %v2343, 4294901760
      %2523 = vmatmul.mubr.f32.gmra.mrb[0].mxu0 %v2522
      %v2524 = vpop.f32.mrb[0].mxu0
      %v2525 = vadd.f32 %v2424, %v2524
      %v2526 = vpop.f32.mrb[0].mxu0
      %2527 = vmatprep.mubr.f32.mxu0 0.0
      %v2528 = vand.u32 %v2346, 4294901760
      %2529 = vmatmul.mubr.f32.gmra.mrb[0].mxu0 %v2528
      %v2530 = vpop.f32.mrb[0].mxu0
      %v2531 = vadd.f32 %v2434, %v2530
      %v2532 = vpop.f32.mrb[0].mxu0
      %2533 = vdwg.mxu0
      %2534 = vmatprep.subr.mxu0 0.0
      %v2535 = vand.u32 %v2338, 4294901760
      %v2536 = vsub.f32 %v2338, %v2535
      %2537 = vmatpush1.msra.mxu0 %v2536
      %2538 = vmatprep.subr.mxu0 0.0
      %v2539 = vand.u32 %v2339, 4294901760
      %v2540 = vsub.f32 %v2339, %v2539
      %2541 = vmatpush1.msra.mxu0 %v2540
      %2542 = vmatprep.subr.mxu0 0.0
      %v2543 = vand.u32 %v2340, 4294901760
      %v2544 = vsub.f32 %v2340, %v2543
      %2545 = vmatpush1.msra.mxu0 %v2544
      %2546 = vmatprep.subr.mxu0 0.0
      %v2547 = vand.u32 %v2341, 4294901760
      %v2548 = vsub.f32 %v2341, %v2547
      %2549 = vmatpush1.msra.mxu0 %v2548
      %2550 = vmatprep.subr.mxu0 0.0
      %2551 = vmatpush1.msra.mxu0 0.0
      %2552 = vmatprep.subr.mxu0 0.0
      %2553 = vmatpush1.msra.mxu0 0.0
      %2554 = vmatprep.subr.mxu0 0.0
      %2555 = vmatpush1.msra.mxu0 0.0
      %2556 = vmatprep.subr.mxu0 0.0
      %2557 = vmatpush1.msra.mxu0 0.0
      %2558 = vmatprep.subr.mxu0 0.0
      %2559 = vmatpush1.msra.mxu0 0.0
      %2560 = vmatprep.subr.mxu0 0.0
      %2561 = vmatpush1.msra.mxu0 0.0
      %2562 = vmatprep.subr.mxu0 0.0
      %2563 = vmatpush1.msra.mxu0 0.0
      %2564 = vmatprep.subr.mxu0 0.0
      %2565 = vmatpush1.msra.mxu0 0.0
      %2566 = vmatprep.subr.mxu0 0.0
      %2567 = vmatpush1.msra.mxu0 0.0
      %2568 = vmatprep.subr.mxu0 0.0
      %2569 = vmatpush1.msra.mxu0 0.0
      %2570 = vmatprep.subr.mxu0 0.0
      %2571 = vmatpush1.msra.mxu0 0.0
      %2572 = vmatprep.subr.mxu0 0.0
      %2573 = vmatpush1.msra.mxu0 0.0
      %2574 = vmatprep.subr.mxu0 0.0
      %2575 = vmatpush1.msra.mxu0 0.0
      %2576 = vmatprep.subr.mxu0 0.0
      %2577 = vmatpush1.msra.mxu0 0.0
      %2578 = vmatprep.subr.mxu0 0.0
      %2579 = vmatpush1.msra.mxu0 0.0
      %2580 = vmatprep.subr.mxu0 0.0
      %2581 = vmatpush1.msra.mxu0 0.0
      %2582 = vmatprep.subr.mxu0 0.0
      %2583 = vmatpush1.msra.mxu0 0.0
      %2584 = vmatprep.subr.mxu0 0.0
      %2585 = vmatpush1.msra.mxu0 0.0
      %2586 = vmatprep.subr.mxu0 0.0
      %2587 = vmatpush1.msra.mxu0 0.0
      %2588 = vmatprep.subr.mxu0 0.0
      %2589 = vmatpush1.msra.mxu0 0.0
      %2590 = vmatprep.subr.mxu0 0.0
      %2591 = vmatpush1.msra.mxu0 0.0
      %2592 = vmatprep.subr.mxu0 0.0
      %2593 = vmatpush1.msra.mxu0 0.0
      %2594 = vmatprep.subr.mxu0 0.0
      %2595 = vmatpush1.msra.mxu0 0.0
      %2596 = vmatprep.subr.mxu0 0.0
      %2597 = vmatpush1.msra.mxu0 0.0
      %2598 = vmatprep.subr.mxu0 0.0
      %2599 = vmatpush1.msra.mxu0 0.0
      %2600 = vmatprep.subr.mxu0 0.0
      %2601 = vmatpush1.msra.mxu0 0.0
      %2602 = vmatprep.subr.mxu0 0.0
      %2603 = vmatpush1.msra.mxu0 0.0
      %2604 = vmatprep.subr.mxu0 0.0
      %2605 = vmatpush1.msra.mxu0 0.0
      %2606 = vmatprep.mubr.f32.mxu0 0.0
      %v2607 = vand.u32 %v2343, 4294901760
      %v2608 = vsub.f32 %v2343, %v2607
      %2609 = vmatmul.mubr.f32.gmra.mrb[0].mxu0 %v2608
      %v2610 = vpop.f32.mrb[0].mxu0
      %v2611 = vadd.f32 %v2525, %v2610
      %v2612 = vpop.f32.mrb[0].mxu0
      %2613 = vmatprep.mubr.f32.mxu0 0.0
      %v2614 = vand.u32 %v2346, 4294901760
      %v2615 = vsub.f32 %v2346, %v2614
      %2616 = vmatmul.mubr.f32.gmra.mrb[0].mxu0 %v2615
      %v2617 = vpop.f32.mrb[0].mxu0
      %v2618 = vadd.f32 %v2531, %v2617
      %v2619 = vpop.f32.mrb[0].mxu0
      %2620 = vdwg.mxu0
      %2621 = vmatprep.subr.mxu0 0.0
      %v2622 = vand.u32 %v2338, 4294901760
      %2623 = vmatpush1.msra.mxu0 %v2622
      %2624 = vmatprep.subr.mxu0 0.0
      %v2625 = vand.u32 %v2339, 4294901760
      %2626 = vmatpush1.msra.mxu0 %v2625
      %2627 = vmatprep.subr.mxu0 0.0
      %v2628 = vand.u32 %v2340, 4294901760
      %2629 = vmatpush1.msra.mxu0 %v2628
      %2630 = vmatprep.subr.mxu0 0.0
      %v2631 = vand.u32 %v2341, 4294901760
      %2632 = vmatpush1.msra.mxu0 %v2631
      %2633 = vmatprep.subr.mxu0 0.0
      %2634 = vmatpush1.msra.mxu0 0.0
      %2635 = vmatprep.subr.mxu0 0.0
      %2636 = vmatpush1.msra.mxu0 0.0
      %2637 = vmatprep.subr.mxu0 0.0
      %2638 = vmatpush1.msra.mxu0 0.0
      %2639 = vmatprep.subr.mxu0 0.0
      %2640 = vmatpush1.msra.mxu0 0.0
      %2641 = vmatprep.subr.mxu0 0.0
      %2642 = vmatpush1.msra.mxu0 0.0
      %2643 = vmatprep.subr.mxu0 0.0
      %2644 = vmatpush1.msra.mxu0 0.0
      %2645 = vmatprep.subr.mxu0 0.0
      %2646 = vmatpush1.msra.mxu0 0.0
      %2647 = vmatprep.subr.mxu0 0.0
      %2648 = vmatpush1.msra.mxu0 0.0
      %2649 = vmatprep.subr.mxu0 0.0
      %2650 = vmatpush1.msra.mxu0 0.0
      %2651 = vmatprep.subr.mxu0 0.0
      %2652 = vmatpush1.msra.mxu0 0.0
      %2653 = vmatprep.subr.mxu0 0.0
      %2654 = vmatpush1.msra.mxu0 0.0
      %2655 = vmatprep.subr.mxu0 0.0
      %2656 = vmatpush1.msra.mxu0 0.0
      %2657 = vmatprep.subr.mxu0 0.0
      %2658 = vmatpush1.msra.mxu0 0.0
      %2659 = vmatprep.subr.mxu0 0.0
      %2660 = vmatpush1.msra.mxu0 0.0
      %2661 = vmatprep.subr.mxu0 0.0
      %2662 = vmatpush1.msra.mxu0 0.0
      %2663 = vmatprep.subr.mxu0 0.0
      %2664 = vmatpush1.msra.mxu0 0.0
      %2665 = vmatprep.subr.mxu0 0.0
      %2666 = vmatpush1.msra.mxu0 0.0
      %2667 = vmatprep.subr.mxu0 0.0
      %2668 = vmatpush1.msra.mxu0 0.0
      %2669 = vmatprep.subr.mxu0 0.0
      %2670 = vmatpush1.msra.mxu0 0.0
      %2671 = vmatprep.subr.mxu0 0.0
      %2672 = vmatpush1.msra.mxu0 0.0
      %2673 = vmatprep.subr.mxu0 0.0
      %2674 = vmatpush1.msra.mxu0 0.0
      %2675 = vmatprep.subr.mxu0 0.0
      %2676 = vmatpush1.msra.mxu0 0.0
      %2677 = vmatprep.subr.mxu0 0.0
      %2678 = vmatpush1.msra.mxu0 0.0
      %2679 = vmatprep.subr.mxu0 0.0
      %2680 = vmatpush1.msra.mxu0 0.0
      %2681 = vmatprep.subr.mxu0 0.0
      %2682 = vmatpush1.msra.mxu0 0.0
      %2683 = vmatprep.subr.mxu0 0.0
      %2684 = vmatpush1.msra.mxu0 0.0
      %2685 = vmatprep.subr.mxu0 0.0
      %2686 = vmatpush1.msra.mxu0 0.0
      %2687 = vmatprep.subr.mxu0 0.0
      %2688 = vmatpush1.msra.mxu0 0.0
      %2689 = vmatprep.mubr.f32.mxu0 0.0
      %v2690 = vand.u32 %v2343, 4294901760
      %v2691 = vsub.f32 %v2343, %v2690
      %v2692 = vand.u32 %v2691, 4294901760
      %2693 = vmatmul.mubr.f32.gmra.mrb[0].mxu0 %v2692
      %v2694 = vpop.f32.mrb[0].mxu0
      %v2695 = vadd.f32 %v2611, %v2694
      %v2696 = vpop.f32.mrb[0].mxu0
      %2697 = vmatprep.mubr.f32.mxu0 0.0
      %v2698 = vand.u32 %v2346, 4294901760
      %v2699 = vsub.f32 %v2346, %v2698
      %v2700 = vand.u32 %v2699, 4294901760
      %2701 = vmatmul.mubr.f32.gmra.mrb[0].mxu0 %v2700
      %v2702 = vpop.f32.mrb[0].mxu0
      %v2703 = vadd.f32 %v2618, %v2702
      %v2704 = vpop.f32.mrb[0].mxu0
      %2705 = vdwg.mxu0
      %2706 = vmatprep.subr.mxu0 0.0
      %v2707 = vand.u32 %v2338, 4294901760
      %v2708 = vsub.f32 %v2338, %v2707
      %v2709 = vand.u32 %v2708, 4294901760
      %2710 = vmatpush1.msra.mxu0 %v2709
      %2711 = vmatprep.subr.mxu0 0.0
      %v2712 = vand.u32 %v2339, 4294901760
      %v2713 = vsub.f32 %v2339, %v2712
      %v2714 = vand.u32 %v2713, 4294901760
      %2715 = vmatpush1.msra.mxu0 %v2714
      %2716 = vmatprep.subr.mxu0 0.0
      %v2717 = vand.u32 %v2340, 4294901760
      %v2718 = vsub.f32 %v2340, %v2717
      %v2719 = vand.u32 %v2718, 4294901760
      %2720 = vmatpush1.msra.mxu0 %v2719
      %2721 = vmatprep.subr.mxu0 0.0
      %v2722 = vand.u32 %v2341, 4294901760
      %v2723 = vsub.f32 %v2341, %v2722
      %v2724 = vand.u32 %v2723, 4294901760
      %2725 = vmatpush1.msra.mxu0 %v2724
      %2726 = vmatprep.subr.mxu0 0.0
      %2727 = vmatpush1.msra.mxu0 0.0
      %2728 = vmatprep.subr.mxu0 0.0
      %2729 = vmatpush1.msra.mxu0 0.0
      %2730 = vmatprep.subr.mxu0 0.0
      %2731 = vmatpush1.msra.mxu0 0.0
      %2732 = vmatprep.subr.mxu0 0.0
      %2733 = vmatpush1.msra.mxu0 0.0
      %2734 = vmatprep.subr.mxu0 0.0
      %2735 = vmatpush1.msra.mxu0 0.0
      %2736 = vmatprep.subr.mxu0 0.0
      %2737 = vmatpush1.msra.mxu0 0.0
      %2738 = vmatprep.subr.mxu0 0.0
      %2739 = vmatpush1.msra.mxu0 0.0
      %2740 = vmatprep.subr.mxu0 0.0
      %2741 = vmatpush1.msra.mxu0 0.0
      %2742 = vmatprep.subr.mxu0 0.0
      %2743 = vmatpush1.msra.mxu0 0.0
      %2744 = vmatprep.subr.mxu0 0.0
      %2745 = vmatpush1.msra.mxu0 0.0
      %2746 = vmatprep.subr.mxu0 0.0
      %2747 = vmatpush1.msra.mxu0 0.0
      %2748 = vmatprep.subr.mxu0 0.0
      %2749 = vmatpush1.msra.mxu0 0.0
      %2750 = vmatprep.subr.mxu0 0.0
      %2751 = vmatpush1.msra.mxu0 0.0
      %2752 = vmatprep.subr.mxu0 0.0
      %2753 = vmatpush1.msra.mxu0 0.0
      %2754 = vmatprep.subr.mxu0 0.0
      %2755 = vmatpush1.msra.mxu0 0.0
      %2756 = vmatprep.subr.mxu0 0.0
      %2757 = vmatpush1.msra.mxu0 0.0
      %2758 = vmatprep.subr.mxu0 0.0
      %2759 = vmatpush1.msra.mxu0 0.0
      %2760 = vmatprep.subr.mxu0 0.0
      %2761 = vmatpush1.msra.mxu0 0.0
      %2762 = vmatprep.subr.mxu0 0.0
      %2763 = vmatpush1.msra.mxu0 0.0
      %2764 = vmatprep.subr.mxu0 0.0
      %2765 = vmatpush1.msra.mxu0 0.0
      %2766 = vmatprep.subr.mxu0 0.0
      %2767 = vmatpush1.msra.mxu0 0.0
      %2768 = vmatprep.subr.mxu0 0.0
      %2769 = vmatpush1.msra.mxu0 0.0
      %2770 = vmatprep.subr.mxu0 0.0
      %2771 = vmatpush1.msra.mxu0 0.0
      %2772 = vmatprep.subr.mxu0 0.0
      %2773 = vmatpush1.msra.mxu0 0.0
      %2774 = vmatprep.subr.mxu0 0.0
      %2775 = vmatpush1.msra.mxu0 0.0
      %2776 = vmatprep.subr.mxu0 0.0
      %2777 = vmatpush1.msra.mxu0 0.0
      %2778 = vmatprep.subr.mxu0 0.0
      %2779 = vmatpush1.msra.mxu0 0.0
      %2780 = vmatprep.subr.mxu0 0.0
      %2781 = vmatpush1.msra.mxu0 0.0
      %2782 = vmatprep.mubr.f32.mxu0 0.0
      %v2783 = vand.u32 %v2343, 4294901760
      %2784 = vmatmul.mubr.f32.gmra.mrb[0].mxu0 %v2783
      %v2785 = vpop.f32.mrb[0].mxu0
      %v2786 = vadd.f32 %v2695, %v2785
      %v2787 = vpop.f32.mrb[0].mxu0
      %2788 = vmatprep.mubr.f32.mxu0 0.0
      %v2789 = vand.u32 %v2346, 4294901760
      %2790 = vmatmul.mubr.f32.gmra.mrb[0].mxu0 %v2789
      %v2791 = vpop.f32.mrb[0].mxu0
      %v2792 = vadd.f32 %v2703, %v2791
      %v2793 = vpop.f32.mrb[0].mxu0
      %2794 = vdwg.mxu0
      %2795 = vmatprep.subr.mxu0 0.0
      %v2796 = vand.u32 %v2338, 4294901760
      %2797 = vmatpush1.msra.mxu0 %v2796
      %2798 = vmatprep.subr.mxu0 0.0
      %v2799 = vand.u32 %v2339, 4294901760
      %2800 = vmatpush1.msra.mxu0 %v2799
      %2801 = vmatprep.subr.mxu0 0.0
      %v2802 = vand.u32 %v2340, 4294901760
      %2803 = vmatpush1.msra.mxu0 %v2802
      %2804 = vmatprep.subr.mxu0 0.0
      %v2805 = vand.u32 %v2341, 4294901760
      %2806 = vmatpush1.msra.mxu0 %v2805
      %2807 = vmatprep.subr.mxu0 0.0
      %2808 = vmatpush1.msra.mxu0 0.0
      %2809 = vmatprep.subr.mxu0 0.0
      %2810 = vmatpush1.msra.mxu0 0.0
      %2811 = vmatprep.subr.mxu0 0.0
      %2812 = vmatpush1.msra.mxu0 0.0
      %2813 = vmatprep.subr.mxu0 0.0
      %2814 = vmatpush1.msra.mxu0 0.0
      %2815 = vmatprep.subr.mxu0 0.0
      %2816 = vmatpush1.msra.mxu0 0.0
      %2817 = vmatprep.subr.mxu0 0.0
      %2818 = vmatpush1.msra.mxu0 0.0
      %2819 = vmatprep.subr.mxu0 0.0
      %2820 = vmatpush1.msra.mxu0 0.0
      %2821 = vmatprep.subr.mxu0 0.0
      %2822 = vmatpush1.msra.mxu0 0.0
      %2823 = vmatprep.subr.mxu0 0.0
      %2824 = vmatpush1.msra.mxu0 0.0
      %2825 = vmatprep.subr.mxu0 0.0
      %2826 = vmatpush1.msra.mxu0 0.0
      %2827 = vmatprep.subr.mxu0 0.0
      %2828 = vmatpush1.msra.mxu0 0.0
      %2829 = vmatprep.subr.mxu0 0.0
      %2830 = vmatpush1.msra.mxu0 0.0
      %2831 = vmatprep.subr.mxu0 0.0
      %2832 = vmatpush1.msra.mxu0 0.0
      %2833 = vmatprep.subr.mxu0 0.0
      %2834 = vmatpush1.msra.mxu0 0.0
      %2835 = vmatprep.subr.mxu0 0.0
      %2836 = vmatpush1.msra.mxu0 0.0
      %2837 = vmatprep.subr.mxu0 0.0
      %2838 = vmatpush1.msra.mxu0 0.0
      %2839 = vmatprep.subr.mxu0 0.0
      %2840 = vmatpush1.msra.mxu0 0.0
      %2841 = vmatprep.subr.mxu0 0.0
      %2842 = vmatpush1.msra.mxu0 0.0
      %2843 = vmatprep.subr.mxu0 0.0
      %2844 = vmatpush1.msra.mxu0 0.0
      %2845 = vmatprep.subr.mxu0 0.0
      %2846 = vmatpush1.msra.mxu0 0.0
      %2847 = vmatprep.subr.mxu0 0.0
      %2848 = vmatpush1.msra.mxu0 0.0
      %2849 = vmatprep.subr.mxu0 0.0
      %2850 = vmatpush1.msra.mxu0 0.0
      %2851 = vmatprep.subr.mxu0 0.0
      %2852 = vmatpush1.msra.mxu0 0.0
      %2853 = vmatprep.subr.mxu0 0.0
      %2854 = vmatpush1.msra.mxu0 0.0
      %2855 = vmatprep.subr.mxu0 0.0
      %2856 = vmatpush1.msra.mxu0 0.0
      %2857 = vmatprep.subr.mxu0 0.0
      %2858 = vmatpush1.msra.mxu0 0.0
      %2859 = vmatprep.subr.mxu0 0.0
      %2860 = vmatpush1.msra.mxu0 0.0
      %2861 = vmatprep.subr.mxu0 0.0
      %2862 = vmatpush1.msra.mxu0 0.0
      %2863 = vmatprep.mubr.f32.mxu0 0.0
      %v2864 = vand.u32 %v2343, 4294901760
      %2865 = vmatmul.mubr.f32.gmra.mrb[0].mxu0 %v2864
      %v2866 = vpop.f32.mrb[0].mxu0
      %v2867 = vadd.f32 %v2786, %v2866
      %v2868 = vpop.f32.mrb[0].mxu0
      %2869 = vmatprep.mubr.f32.mxu0 0.0
      %v2870 = vand.u32 %v2346, 4294901760
      %2871 = vmatmul.mubr.f32.gmra.mrb[0].mxu0 %v2870
      %v2872 = vpop.f32.mrb[0].mxu0
      %v2873 = vadd.f32 %v2792, %v2872
      %v2874 = vpop.f32.mrb[0].mxu0
      %2875 = vdwg.mxu0
      %v2877 = vsel %vm1039, %v1735, 0
      %v2880 = vsel %vm1039, %v1741, 0
      %2882 = vmatprep.subr.mxu0 0.0
      %v2883 = vand.u32 %v1744, 4294901760
      %2884 = vmatpush1.msra.mxu0 %v2883
      %2885 = vmatprep.subr.mxu0 0.0
      %v2886 = vand.u32 %v1745, 4294901760
      %2887 = vmatpush1.msra.mxu0 %v2886
      %2888 = vmatprep.subr.mxu0 0.0
      %v2889 = vand.u32 %v1746, 4294901760
      %2890 = vmatpush1.msra.mxu0 %v2889
      %2891 = vmatprep.subr.mxu0 0.0
      %v2892 = vand.u32 %v1747, 4294901760
      %2893 = vmatpush1.msra.mxu0 %v2892
      %2894 = vmatprep.subr.mxu0 0.0
      %2895 = vmatpush1.msra.mxu0 0.0
      %2896 = vmatprep.subr.mxu0 0.0
      %2897 = vmatpush1.msra.mxu0 0.0
      %2898 = vmatprep.subr.mxu0 0.0
      %2899 = vmatpush1.msra.mxu0 0.0
      %2900 = vmatprep.subr.mxu0 0.0
      %2901 = vmatpush1.msra.mxu0 0.0
      %2902 = vmatprep.subr.mxu0 0.0
      %2903 = vmatpush1.msra.mxu0 0.0
      %2904 = vmatprep.subr.mxu0 0.0
      %2905 = vmatpush1.msra.mxu0 0.0
      %2906 = vmatprep.subr.mxu0 0.0
      %2907 = vmatpush1.msra.mxu0 0.0
      %2908 = vmatprep.subr.mxu0 0.0
      %2909 = vmatpush1.msra.mxu0 0.0
      %2910 = vmatprep.subr.mxu0 0.0
      %2911 = vmatpush1.msra.mxu0 0.0
      %2912 = vmatprep.subr.mxu0 0.0
      %2913 = vmatpush1.msra.mxu0 0.0
      %2914 = vmatprep.subr.mxu0 0.0
      %2915 = vmatpush1.msra.mxu0 0.0
      %2916 = vmatprep.subr.mxu0 0.0
      %2917 = vmatpush1.msra.mxu0 0.0
      %2918 = vmatprep.subr.mxu0 0.0
      %2919 = vmatpush1.msra.mxu0 0.0
      %2920 = vmatprep.subr.mxu0 0.0
      %2921 = vmatpush1.msra.mxu0 0.0
      %2922 = vmatprep.subr.mxu0 0.0
      %2923 = vmatpush1.msra.mxu0 0.0
      %2924 = vmatprep.subr.mxu0 0.0
      %2925 = vmatpush1.msra.mxu0 0.0
      %2926 = vmatprep.subr.mxu0 0.0
      %2927 = vmatpush1.msra.mxu0 0.0
      %2928 = vmatprep.subr.mxu0 0.0
      %2929 = vmatpush1.msra.mxu0 0.0
      %2930 = vmatprep.subr.mxu0 0.0
      %2931 = vmatpush1.msra.mxu0 0.0
      %2932 = vmatprep.subr.mxu0 0.0
      %2933 = vmatpush1.msra.mxu0 0.0
      %2934 = vmatprep.subr.mxu0 0.0
      %2935 = vmatpush1.msra.mxu0 0.0
      %2936 = vmatprep.subr.mxu0 0.0
      %2937 = vmatpush1.msra.mxu0 0.0
      %2938 = vmatprep.subr.mxu0 0.0
      %2939 = vmatpush1.msra.mxu0 0.0
      %2940 = vmatprep.subr.mxu0 0.0
      %2941 = vmatpush1.msra.mxu0 0.0
      %2942 = vmatprep.subr.mxu0 0.0
      %2943 = vmatpush1.msra.mxu0 0.0
      %2944 = vmatprep.subr.mxu0 0.0
      %2945 = vmatpush1.msra.mxu0 0.0
      %2946 = vmatprep.subr.mxu0 0.0
      %2947 = vmatpush1.msra.mxu0 0.0
      %2948 = vmatprep.subr.mxu0 0.0
      %2949 = vmatpush1.msra.mxu0 0.0
      %2950 = vmatprep.mubr.f32.mxu0 0.0
      %v2951 = vand.u32 %v2877, 4294901760
      %v2952 = vsub.f32 %v2877, %v2951
      %v2953 = vand.u32 %v2952, 4294901760
      %v2954 = vsub.f32 %v2952, %v2953
      %v2955 = vand.u32 %v2954, 4294901760
      %2956 = vmatmul.mubr.f32.gmra.mrb[0].mxu0 %v2955
      %v2957 = vpop.f32.mrb[0].mxu0
      %v2958 = vadd.f32 %v2867, %v2957
      %v2959 = vpop.f32.mrb[0].mxu0
      %2960 = vmatprep.mubr.f32.mxu0 0.0
      %v2961 = vand.u32 %v2880, 4294901760
      %v2962 = vsub.f32 %v2880, %v2961
      %v2963 = vand.u32 %v2962, 4294901760
      %v2964 = vsub.f32 %v2962, %v2963
      %v2965 = vand.u32 %v2964, 4294901760
      %2966 = vmatmul.mubr.f32.gmra.mrb[0].mxu0 %v2965
      %v2967 = vpop.f32.mrb[0].mxu0
      %v2968 = vadd.f32 %v2873, %v2967
      %v2969 = vpop.f32.mrb[0].mxu0
      %2970 = vdwg.mxu0
      %2971 = vmatprep.subr.mxu0 0.0
      %v2972 = vand.u32 %v1744, 4294901760
      %v2973 = vsub.f32 %v1744, %v2972
      %v2974 = vand.u32 %v2973, 4294901760
      %v2975 = vsub.f32 %v2973, %v2974
      %v2976 = vand.u32 %v2975, 4294901760
      %2977 = vmatpush1.msra.mxu0 %v2976
      %2978 = vmatprep.subr.mxu0 0.0
      %v2979 = vand.u32 %v1745, 4294901760
      %v2980 = vsub.f32 %v1745, %v2979
      %v2981 = vand.u32 %v2980, 4294901760
      %v2982 = vsub.f32 %v2980, %v2981
      %v2983 = vand.u32 %v2982, 4294901760
      %2984 = vmatpush1.msra.mxu0 %v2983
      %2985 = vmatprep.subr.mxu0 0.0
      %v2986 = vand.u32 %v1746, 4294901760
      %v2987 = vsub.f32 %v1746, %v2986
      %v2988 = vand.u32 %v2987, 4294901760
      %v2989 = vsub.f32 %v2987, %v2988
      %v2990 = vand.u32 %v2989, 4294901760
      %2991 = vmatpush1.msra.mxu0 %v2990
      %2992 = vmatprep.subr.mxu0 0.0
      %v2993 = vand.u32 %v1747, 4294901760
      %v2994 = vsub.f32 %v1747, %v2993
      %v2995 = vand.u32 %v2994, 4294901760
      %v2996 = vsub.f32 %v2994, %v2995
      %v2997 = vand.u32 %v2996, 4294901760
      %2998 = vmatpush1.msra.mxu0 %v2997
      %2999 = vmatprep.subr.mxu0 0.0
      %3000 = vmatpush1.msra.mxu0 0.0
      %3001 = vmatprep.subr.mxu0 0.0
      %3002 = vmatpush1.msra.mxu0 0.0
      %3003 = vmatprep.subr.mxu0 0.0
      %3004 = vmatpush1.msra.mxu0 0.0
      %3005 = vmatprep.subr.mxu0 0.0
      %3006 = vmatpush1.msra.mxu0 0.0
      %3007 = vmatprep.subr.mxu0 0.0
      %3008 = vmatpush1.msra.mxu0 0.0
      %3009 = vmatprep.subr.mxu0 0.0
      %3010 = vmatpush1.msra.mxu0 0.0
      %3011 = vmatprep.subr.mxu0 0.0
      %3012 = vmatpush1.msra.mxu0 0.0
      %3013 = vmatprep.subr.mxu0 0.0
      %3014 = vmatpush1.msra.mxu0 0.0
      %3015 = vmatprep.subr.mxu0 0.0
      %3016 = vmatpush1.msra.mxu0 0.0
      %3017 = vmatprep.subr.mxu0 0.0
      %3018 = vmatpush1.msra.mxu0 0.0
      %3019 = vmatprep.subr.mxu0 0.0
      %3020 = vmatpush1.msra.mxu0 0.0
      %3021 = vmatprep.subr.mxu0 0.0
      %3022 = vmatpush1.msra.mxu0 0.0
      %3023 = vmatprep.subr.mxu0 0.0
      %3024 = vmatpush1.msra.mxu0 0.0
      %3025 = vmatprep.subr.mxu0 0.0
      %3026 = vmatpush1.msra.mxu0 0.0
      %3027 = vmatprep.subr.mxu0 0.0
      %3028 = vmatpush1.msra.mxu0 0.0
      %3029 = vmatprep.subr.mxu0 0.0
      %3030 = vmatpush1.msra.mxu0 0.0
      %3031 = vmatprep.subr.mxu0 0.0
      %3032 = vmatpush1.msra.mxu0 0.0
      %3033 = vmatprep.subr.mxu0 0.0
      %3034 = vmatpush1.msra.mxu0 0.0
      %3035 = vmatprep.subr.mxu0 0.0
      %3036 = vmatpush1.msra.mxu0 0.0
      %3037 = vmatprep.subr.mxu0 0.0
      %3038 = vmatpush1.msra.mxu0 0.0
      %3039 = vmatprep.subr.mxu0 0.0
      %3040 = vmatpush1.msra.mxu0 0.0
      %3041 = vmatprep.subr.mxu0 0.0
      %3042 = vmatpush1.msra.mxu0 0.0
      %3043 = vmatprep.subr.mxu0 0.0
      %3044 = vmatpush1.msra.mxu0 0.0
      %3045 = vmatprep.subr.mxu0 0.0
      %3046 = vmatpush1.msra.mxu0 0.0
      %3047 = vmatprep.subr.mxu0 0.0
      %3048 = vmatpush1.msra.mxu0 0.0
      %3049 = vmatprep.subr.mxu0 0.0
      %3050 = vmatpush1.msra.mxu0 0.0
      %3051 = vmatprep.subr.mxu0 0.0
      %3052 = vmatpush1.msra.mxu0 0.0
      %3053 = vmatprep.subr.mxu0 0.0
      %3054 = vmatpush1.msra.mxu0 0.0
      %3055 = vmatprep.mubr.f32.mxu0 0.0
      %v3056 = vand.u32 %v2877, 4294901760
      %3057 = vmatmul.mubr.f32.gmra.mrb[0].mxu0 %v3056
      %v3058 = vpop.f32.mrb[0].mxu0
      %v3059 = vadd.f32 %v2958, %v3058
      %v3060 = vpop.f32.mrb[0].mxu0
      %3061 = vmatprep.mubr.f32.mxu0 0.0
      %v3062 = vand.u32 %v2880, 4294901760
      %3063 = vmatmul.mubr.f32.gmra.mrb[0].mxu0 %v3062
      %v3064 = vpop.f32.mrb[0].mxu0
      %v3065 = vadd.f32 %v2968, %v3064
      %v3066 = vpop.f32.mrb[0].mxu0
      %3067 = vdwg.mxu0
      %3068 = vmatprep.subr.mxu0 0.0
      %v3069 = vand.u32 %v1744, 4294901760
      %v3070 = vsub.f32 %v1744, %v3069
      %3071 = vmatpush1.msra.mxu0 %v3070
      %3072 = vmatprep.subr.mxu0 0.0
      %v3073 = vand.u32 %v1745, 4294901760
      %v3074 = vsub.f32 %v1745, %v3073
      %3075 = vmatpush1.msra.mxu0 %v3074
      %3076 = vmatprep.subr.mxu0 0.0
      %v3077 = vand.u32 %v1746, 4294901760
      %v3078 = vsub.f32 %v1746, %v3077
      %3079 = vmatpush1.msra.mxu0 %v3078
      %3080 = vmatprep.subr.mxu0 0.0
      %v3081 = vand.u32 %v1747, 4294901760
      %v3082 = vsub.f32 %v1747, %v3081
      %3083 = vmatpush1.msra.mxu0 %v3082
      %3084 = vmatprep.subr.mxu0 0.0
      %3085 = vmatpush1.msra.mxu0 0.0
      %3086 = vmatprep.subr.mxu0 0.0
      %3087 = vmatpush1.msra.mxu0 0.0
      %3088 = vmatprep.subr.mxu0 0.0
      %3089 = vmatpush1.msra.mxu0 0.0
      %3090 = vmatprep.subr.mxu0 0.0
      %3091 = vmatpush1.msra.mxu0 0.0
      %3092 = vmatprep.subr.mxu0 0.0
      %3093 = vmatpush1.msra.mxu0 0.0
      %3094 = vmatprep.subr.mxu0 0.0
      %3095 = vmatpush1.msra.mxu0 0.0
      %3096 = vmatprep.subr.mxu0 0.0
      %3097 = vmatpush1.msra.mxu0 0.0
      %3098 = vmatprep.subr.mxu0 0.0
      %3099 = vmatpush1.msra.mxu0 0.0
      %3100 = vmatprep.subr.mxu0 0.0
      %3101 = vmatpush1.msra.mxu0 0.0
      %3102 = vmatprep.subr.mxu0 0.0
      %3103 = vmatpush1.msra.mxu0 0.0
      %3104 = vmatprep.subr.mxu0 0.0
      %3105 = vmatpush1.msra.mxu0 0.0
      %3106 = vmatprep.subr.mxu0 0.0
      %3107 = vmatpush1.msra.mxu0 0.0
      %3108 = vmatprep.subr.mxu0 0.0
      %3109 = vmatpush1.msra.mxu0 0.0
      %3110 = vmatprep.subr.mxu0 0.0
      %3111 = vmatpush1.msra.mxu0 0.0
      %3112 = vmatprep.subr.mxu0 0.0
      %3113 = vmatpush1.msra.mxu0 0.0
      %3114 = vmatprep.subr.mxu0 0.0
      %3115 = vmatpush1.msra.mxu0 0.0
      %3116 = vmatprep.subr.mxu0 0.0
      %3117 = vmatpush1.msra.mxu0 0.0
      %3118 = vmatprep.subr.mxu0 0.0
      %3119 = vmatpush1.msra.mxu0 0.0
      %3120 = vmatprep.subr.mxu0 0.0
      %3121 = vmatpush1.msra.mxu0 0.0
      %3122 = vmatprep.subr.mxu0 0.0
      %3123 = vmatpush1.msra.mxu0 0.0
      %3124 = vmatprep.subr.mxu0 0.0
      %3125 = vmatpush1.msra.mxu0 0.0
      %3126 = vmatprep.subr.mxu0 0.0
      %3127 = vmatpush1.msra.mxu0 0.0
      %3128 = vmatprep.subr.mxu0 0.0
      %3129 = vmatpush1.msra.mxu0 0.0
      %3130 = vmatprep.subr.mxu0 0.0
      %3131 = vmatpush1.msra.mxu0 0.0
      %3132 = vmatprep.subr.mxu0 0.0
      %3133 = vmatpush1.msra.mxu0 0.0
      %3134 = vmatprep.subr.mxu0 0.0
      %3135 = vmatpush1.msra.mxu0 0.0
      %3136 = vmatprep.subr.mxu0 0.0
      %3137 = vmatpush1.msra.mxu0 0.0
      %3138 = vmatprep.subr.mxu0 0.0
      %3139 = vmatpush1.msra.mxu0 0.0
      %3140 = vmatprep.mubr.f32.mxu0 0.0
      %v3141 = vand.u32 %v2877, 4294901760
      %v3142 = vsub.f32 %v2877, %v3141
      %3143 = vmatmul.mubr.f32.gmra.mrb[0].mxu0 %v3142
      %v3144 = vpop.f32.mrb[0].mxu0
      %v3145 = vadd.f32 %v3059, %v3144
      %v3146 = vpop.f32.mrb[0].mxu0
      %3147 = vmatprep.mubr.f32.mxu0 0.0
      %v3148 = vand.u32 %v2880, 4294901760
      %v3149 = vsub.f32 %v2880, %v3148
      %3150 = vmatmul.mubr.f32.gmra.mrb[0].mxu0 %v3149
      %v3151 = vpop.f32.mrb[0].mxu0
      %v3152 = vadd.f32 %v3065, %v3151
      %v3153 = vpop.f32.mrb[0].mxu0
      %3154 = vdwg.mxu0
      %3155 = vmatprep.subr.mxu0 0.0
      %v3156 = vand.u32 %v1744, 4294901760
      %3157 = vmatpush1.msra.mxu0 %v3156
      %3158 = vmatprep.subr.mxu0 0.0
      %v3159 = vand.u32 %v1745, 4294901760
      %3160 = vmatpush1.msra.mxu0 %v3159
      %3161 = vmatprep.subr.mxu0 0.0
      %v3162 = vand.u32 %v1746, 4294901760
      %3163 = vmatpush1.msra.mxu0 %v3162
      %3164 = vmatprep.subr.mxu0 0.0
      %v3165 = vand.u32 %v1747, 4294901760
      %3166 = vmatpush1.msra.mxu0 %v3165
      %3167 = vmatprep.subr.mxu0 0.0
      %3168 = vmatpush1.msra.mxu0 0.0
      %3169 = vmatprep.subr.mxu0 0.0
      %3170 = vmatpush1.msra.mxu0 0.0
      %3171 = vmatprep.subr.mxu0 0.0
      %3172 = vmatpush1.msra.mxu0 0.0
      %3173 = vmatprep.subr.mxu0 0.0
      %3174 = vmatpush1.msra.mxu0 0.0
      %3175 = vmatprep.subr.mxu0 0.0
      %3176 = vmatpush1.msra.mxu0 0.0
      %3177 = vmatprep.subr.mxu0 0.0
      %3178 = vmatpush1.msra.mxu0 0.0
      %3179 = vmatprep.subr.mxu0 0.0
      %3180 = vmatpush1.msra.mxu0 0.0
      %3181 = vmatprep.subr.mxu0 0.0
      %3182 = vmatpush1.msra.mxu0 0.0
      %3183 = vmatprep.subr.mxu0 0.0
      %3184 = vmatpush1.msra.mxu0 0.0
      %3185 = vmatprep.subr.mxu0 0.0
      %3186 = vmatpush1.msra.mxu0 0.0
      %3187 = vmatprep.subr.mxu0 0.0
      %3188 = vmatpush1.msra.mxu0 0.0
      %3189 = vmatprep.subr.mxu0 0.0
      %3190 = vmatpush1.msra.mxu0 0.0
      %3191 = vmatprep.subr.mxu0 0.0
      %3192 = vmatpush1.msra.mxu0 0.0
      %3193 = vmatprep.subr.mxu0 0.0
      %3194 = vmatpush1.msra.mxu0 0.0
      %3195 = vmatprep.subr.mxu0 0.0
      %3196 = vmatpush1.msra.mxu0 0.0
      %3197 = vmatprep.subr.mxu0 0.0
      %3198 = vmatpush1.msra.mxu0 0.0
      %3199 = vmatprep.subr.mxu0 0.0
      %3200 = vmatpush1.msra.mxu0 0.0
      %3201 = vmatprep.subr.mxu0 0.0
      %3202 = vmatpush1.msra.mxu0 0.0
      %3203 = vmatprep.subr.mxu0 0.0
      %3204 = vmatpush1.msra.mxu0 0.0
      %3205 = vmatprep.subr.mxu0 0.0
      %3206 = vmatpush1.msra.mxu0 0.0
      %3207 = vmatprep.subr.mxu0 0.0
      %3208 = vmatpush1.msra.mxu0 0.0
      %3209 = vmatprep.subr.mxu0 0.0
      %3210 = vmatpush1.msra.mxu0 0.0
      %3211 = vmatprep.subr.mxu0 0.0
      %3212 = vmatpush1.msra.mxu0 0.0
      %3213 = vmatprep.subr.mxu0 0.0
      %3214 = vmatpush1.msra.mxu0 0.0
      %3215 = vmatprep.subr.mxu0 0.0
      %3216 = vmatpush1.msra.mxu0 0.0
      %3217 = vmatprep.subr.mxu0 0.0
      %3218 = vmatpush1.msra.mxu0 0.0
      %3219 = vmatprep.subr.mxu0 0.0
      %3220 = vmatpush1.msra.mxu0 0.0
      %3221 = vmatprep.subr.mxu0 0.0
      %3222 = vmatpush1.msra.mxu0 0.0
      %3223 = vmatprep.mubr.f32.mxu0 0.0
      %v3224 = vand.u32 %v2877, 4294901760
      %v3225 = vsub.f32 %v2877, %v3224
      %v3226 = vand.u32 %v3225, 4294901760
      %3227 = vmatmul.mubr.f32.gmra.mrb[0].mxu0 %v3226
      %v3228 = vpop.f32.mrb[0].mxu0
      %v3229 = vadd.f32 %v3145, %v3228
      %v3230 = vpop.f32.mrb[0].mxu0
      %3231 = vmatprep.mubr.f32.mxu0 0.0
      %v3232 = vand.u32 %v2880, 4294901760
      %v3233 = vsub.f32 %v2880, %v3232
      %v3234 = vand.u32 %v3233, 4294901760
      %3235 = vmatmul.mubr.f32.gmra.mrb[0].mxu0 %v3234
      %v3236 = vpop.f32.mrb[0].mxu0
      %v3237 = vadd.f32 %v3152, %v3236
      %v3238 = vpop.f32.mrb[0].mxu0
      %3239 = vdwg.mxu0
      %3240 = vmatprep.subr.mxu0 0.0
      %v3241 = vand.u32 %v1744, 4294901760
      %v3242 = vsub.f32 %v1744, %v3241
      %v3243 = vand.u32 %v3242, 4294901760
      %3244 = vmatpush1.msra.mxu0 %v3243
      %3245 = vmatprep.subr.mxu0 0.0
      %v3246 = vand.u32 %v1745, 4294901760
      %v3247 = vsub.f32 %v1745, %v3246
      %v3248 = vand.u32 %v3247, 4294901760
      %3249 = vmatpush1.msra.mxu0 %v3248
      %3250 = vmatprep.subr.mxu0 0.0
      %v3251 = vand.u32 %v1746, 4294901760
      %v3252 = vsub.f32 %v1746, %v3251
      %v3253 = vand.u32 %v3252, 4294901760
      %3254 = vmatpush1.msra.mxu0 %v3253
      %3255 = vmatprep.subr.mxu0 0.0
      %v3256 = vand.u32 %v1747, 4294901760
      %v3257 = vsub.f32 %v1747, %v3256
      %v3258 = vand.u32 %v3257, 4294901760
      %3259 = vmatpush1.msra.mxu0 %v3258
      %3260 = vmatprep.subr.mxu0 0.0
      %3261 = vmatpush1.msra.mxu0 0.0
      %3262 = vmatprep.subr.mxu0 0.0
      %3263 = vmatpush1.msra.mxu0 0.0
      %3264 = vmatprep.subr.mxu0 0.0
      %3265 = vmatpush1.msra.mxu0 0.0
      %3266 = vmatprep.subr.mxu0 0.0
      %3267 = vmatpush1.msra.mxu0 0.0
      %3268 = vmatprep.subr.mxu0 0.0
      %3269 = vmatpush1.msra.mxu0 0.0
      %3270 = vmatprep.subr.mxu0 0.0
      %3271 = vmatpush1.msra.mxu0 0.0
      %3272 = vmatprep.subr.mxu0 0.0
      %3273 = vmatpush1.msra.mxu0 0.0
      %3274 = vmatprep.subr.mxu0 0.0
      %3275 = vmatpush1.msra.mxu0 0.0
      %3276 = vmatprep.subr.mxu0 0.0
      %3277 = vmatpush1.msra.mxu0 0.0
      %3278 = vmatprep.subr.mxu0 0.0
      %3279 = vmatpush1.msra.mxu0 0.0
      %3280 = vmatprep.subr.mxu0 0.0
      %3281 = vmatpush1.msra.mxu0 0.0
      %3282 = vmatprep.subr.mxu0 0.0
      %3283 = vmatpush1.msra.mxu0 0.0
      %3284 = vmatprep.subr.mxu0 0.0
      %3285 = vmatpush1.msra.mxu0 0.0
      %3286 = vmatprep.subr.mxu0 0.0
      %3287 = vmatpush1.msra.mxu0 0.0
      %3288 = vmatprep.subr.mxu0 0.0
      %3289 = vmatpush1.msra.mxu0 0.0
      %3290 = vmatprep.subr.mxu0 0.0
      %3291 = vmatpush1.msra.mxu0 0.0
      %3292 = vmatprep.subr.mxu0 0.0
      %3293 = vmatpush1.msra.mxu0 0.0
      %3294 = vmatprep.subr.mxu0 0.0
      %3295 = vmatpush1.msra.mxu0 0.0
      %3296 = vmatprep.subr.mxu0 0.0
      %3297 = vmatpush1.msra.mxu0 0.0
      %3298 = vmatprep.subr.mxu0 0.0
      %3299 = vmatpush1.msra.mxu0 0.0
      %3300 = vmatprep.subr.mxu0 0.0
      %3301 = vmatpush1.msra.mxu0 0.0
      %3302 = vmatprep.subr.mxu0 0.0
      %3303 = vmatpush1.msra.mxu0 0.0
      %3304 = vmatprep.subr.mxu0 0.0
      %3305 = vmatpush1.msra.mxu0 0.0
      %3306 = vmatprep.subr.mxu0 0.0
      %3307 = vmatpush1.msra.mxu0 0.0
      %3308 = vmatprep.subr.mxu0 0.0
      %3309 = vmatpush1.msra.mxu0 0.0
      %3310 = vmatprep.subr.mxu0 0.0
      %3311 = vmatpush1.msra.mxu0 0.0
      %3312 = vmatprep.subr.mxu0 0.0
      %3313 = vmatpush1.msra.mxu0 0.0
      %3314 = vmatprep.subr.mxu0 0.0
      %3315 = vmatpush1.msra.mxu0 0.0
      %3316 = vmatprep.mubr.f32.mxu0 0.0
      %v3317 = vand.u32 %v2877, 4294901760
      %3318 = vmatmul.mubr.f32.gmra.mrb[0].mxu0 %v3317
      %v3319 = vpop.f32.mrb[0].mxu0
      %v3320 = vadd.f32 %v3229, %v3319
      %v3321 = vpop.f32.mrb[0].mxu0
      %3322 = vmatprep.mubr.f32.mxu0 0.0
      %v3323 = vand.u32 %v2880, 4294901760
      %3324 = vmatmul.mubr.f32.gmra.mrb[0].mxu0 %v3323
      %v3325 = vpop.f32.mrb[0].mxu0
      %v3326 = vadd.f32 %v3237, %v3325
      %v3327 = vpop.f32.mrb[0].mxu0
      %3328 = vdwg.mxu0
      %3329 = vmatprep.subr.mxu0 0.0
      %v3330 = vand.u32 %v1744, 4294901760
      %3331 = vmatpush1.msra.mxu0 %v3330
      %3332 = vmatprep.subr.mxu0 0.0
      %v3333 = vand.u32 %v1745, 4294901760
      %3334 = vmatpush1.msra.mxu0 %v3333
      %3335 = vmatprep.subr.mxu0 0.0
      %v3336 = vand.u32 %v1746, 4294901760
      %3337 = vmatpush1.msra.mxu0 %v3336
      %3338 = vmatprep.subr.mxu0 0.0
      %v3339 = vand.u32 %v1747, 4294901760
      %3340 = vmatpush1.msra.mxu0 %v3339
      %3341 = vmatprep.subr.mxu0 0.0
      %3342 = vmatpush1.msra.mxu0 0.0
      %3343 = vmatprep.subr.mxu0 0.0
      %3344 = vmatpush1.msra.mxu0 0.0
      %3345 = vmatprep.subr.mxu0 0.0
      %3346 = vmatpush1.msra.mxu0 0.0
      %3347 = vmatprep.subr.mxu0 0.0
      %3348 = vmatpush1.msra.mxu0 0.0
      %3349 = vmatprep.subr.mxu0 0.0
      %3350 = vmatpush1.msra.mxu0 0.0
      %3351 = vmatprep.subr.mxu0 0.0
      %3352 = vmatpush1.msra.mxu0 0.0
      %3353 = vmatprep.subr.mxu0 0.0
      %3354 = vmatpush1.msra.mxu0 0.0
      %3355 = vmatprep.subr.mxu0 0.0
      %3356 = vmatpush1.msra.mxu0 0.0
      %3357 = vmatprep.subr.mxu0 0.0
      %3358 = vmatpush1.msra.mxu0 0.0
      %3359 = vmatprep.subr.mxu0 0.0
      %3360 = vmatpush1.msra.mxu0 0.0
      %3361 = vmatprep.subr.mxu0 0.0
      %3362 = vmatpush1.msra.mxu0 0.0
      %3363 = vmatprep.subr.mxu0 0.0
      %3364 = vmatpush1.msra.mxu0 0.0
      %3365 = vmatprep.subr.mxu0 0.0
      %3366 = vmatpush1.msra.mxu0 0.0
      %3367 = vmatprep.subr.mxu0 0.0
      %3368 = vmatpush1.msra.mxu0 0.0
      %3369 = vmatprep.subr.mxu0 0.0
      %3370 = vmatpush1.msra.mxu0 0.0
      %3371 = vmatprep.subr.mxu0 0.0
      %3372 = vmatpush1.msra.mxu0 0.0
      %3373 = vmatprep.subr.mxu0 0.0
      %3374 = vmatpush1.msra.mxu0 0.0
      %3375 = vmatprep.subr.mxu0 0.0
      %3376 = vmatpush1.msra.mxu0 0.0
      %3377 = vmatprep.subr.mxu0 0.0
      %3378 = vmatpush1.msra.mxu0 0.0
      %3379 = vmatprep.subr.mxu0 0.0
      %3380 = vmatpush1.msra.mxu0 0.0
      %3381 = vmatprep.subr.mxu0 0.0
      %3382 = vmatpush1.msra.mxu0 0.0
      %3383 = vmatprep.subr.mxu0 0.0
      %3384 = vmatpush1.msra.mxu0 0.0
      %3385 = vmatprep.subr.mxu0 0.0
      %3386 = vmatpush1.msra.mxu0 0.0
      %3387 = vmatprep.subr.mxu0 0.0
      %3388 = vmatpush1.msra.mxu0 0.0
      %3389 = vmatprep.subr.mxu0 0.0
      %3390 = vmatpush1.msra.mxu0 0.0
      %3391 = vmatprep.subr.mxu0 0.0
      %3392 = vmatpush1.msra.mxu0 0.0
      %3393 = vmatprep.subr.mxu0 0.0
      %3394 = vmatpush1.msra.mxu0 0.0
      %3395 = vmatprep.subr.mxu0 0.0
      %3396 = vmatpush1.msra.mxu0 0.0
      %3397 = vmatprep.mubr.f32.mxu0 0.0
      %v3398 = vand.u32 %v2877, 4294901760
      %3399 = vmatmul.mubr.f32.gmra.mrb[0].mxu0 %v3398
      %v3400 = vpop.f32.mrb[0].mxu0
      %v3401 = vadd.f32 %v3320, %v3400
      %v3402 = vpop.f32.mrb[0].mxu0
      %3403 = vmatprep.mubr.f32.mxu0 0.0
      %v3404 = vand.u32 %v2880, 4294901760
      %3405 = vmatmul.mubr.f32.gmra.mrb[0].mxu0 %v3404
      %v3406 = vpop.f32.mrb[0].mxu0
      %v3407 = vadd.f32 %v3326, %v3406
      %v3408 = vpop.f32.mrb[0].mxu0
      %3409 = vdwg.mxu0
      %s3410 = scalar_lea.vmem %s2, 32
      %v3411 = vld [vmem:[%s3410] sm:$0xff]
      %v3412 = vld [vmem:[%s3410 + $0x8] sm:$0xff]
      %v3414 = vsel %vm1157, %v3411, 0
      %v3417 = vsel %vm1157, %v3412, 0
      %3419 = vmatprep.subr.mxu0 0.0
      %v3420 = vand.u32 %v1147, 4294901760
      %3421 = vmatpush1.msra.mxu0 %v3420
      %3422 = vmatprep.subr.mxu0 0.0
      %v3423 = vand.u32 %v1148, 4294901760
      %3424 = vmatpush1.msra.mxu0 %v3423
      %3425 = vmatprep.subr.mxu0 0.0
      %v3426 = vand.u32 %v1149, 4294901760
      %3427 = vmatpush1.msra.mxu0 %v3426
      %3428 = vmatprep.subr.mxu0 0.0
      %v3429 = vand.u32 %v1150, 4294901760
      %3430 = vmatpush1.msra.mxu0 %v3429
      %3431 = vmatprep.subr.mxu0 0.0
      %v3432 = vand.u32 %v1151, 4294901760
      %3433 = vmatpush1.msra.mxu0 %v3432
      %3434 = vmatprep.subr.mxu0 0.0
      %v3435 = vand.u32 %v1152, 4294901760
      %3436 = vmatpush1.msra.mxu0 %v3435
      %3437 = vmatprep.subr.mxu0 0.0
      %v3438 = vand.u32 %v1153, 4294901760
      %3439 = vmatpush1.msra.mxu0 %v3438
      %3440 = vmatprep.subr.mxu0 0.0
      %v3441 = vand.u32 %v1154, 4294901760
      %3442 = vmatpush1.msra.mxu0 %v3441
      %3443 = vmatprep.subr.mxu0 0.0
      %3444 = vmatpush1.msra.mxu0 0.0
      %3445 = vmatprep.subr.mxu0 0.0
      %3446 = vmatpush1.msra.mxu0 0.0
      %3447 = vmatprep.subr.mxu0 0.0
      %3448 = vmatpush1.msra.mxu0 0.0
      %3449 = vmatprep.subr.mxu0 0.0
      %3450 = vmatpush1.msra.mxu0 0.0
      %3451 = vmatprep.subr.mxu0 0.0
      %3452 = vmatpush1.msra.mxu0 0.0
      %3453 = vmatprep.subr.mxu0 0.0
      %3454 = vmatpush1.msra.mxu0 0.0
      %3455 = vmatprep.subr.mxu0 0.0
      %3456 = vmatpush1.msra.mxu0 0.0
      %3457 = vmatprep.subr.mxu0 0.0
      %3458 = vmatpush1.msra.mxu0 0.0
      %3459 = vmatprep.subr.mxu0 0.0
      %3460 = vmatpush1.msra.mxu0 0.0
      %3461 = vmatprep.subr.mxu0 0.0
      %3462 = vmatpush1.msra.mxu0 0.0
      %3463 = vmatprep.subr.mxu0 0.0
      %3464 = vmatpush1.msra.mxu0 0.0
      %3465 = vmatprep.subr.mxu0 0.0
      %3466 = vmatpush1.msra.mxu0 0.0
      %3467 = vmatprep.subr.mxu0 0.0
      %3468 = vmatpush1.msra.mxu0 0.0
      %3469 = vmatprep.subr.mxu0 0.0
      %3470 = vmatpush1.msra.mxu0 0.0
      %3471 = vmatprep.subr.mxu0 0.0
      %3472 = vmatpush1.msra.mxu0 0.0
      %3473 = vmatprep.subr.mxu0 0.0
      %3474 = vmatpush1.msra.mxu0 0.0
      %3475 = vmatprep.subr.mxu0 0.0
      %3476 = vmatpush1.msra.mxu0 0.0
      %3477 = vmatprep.subr.mxu0 0.0
      %3478 = vmatpush1.msra.mxu0 0.0
      %3479 = vmatprep.subr.mxu0 0.0
      %3480 = vmatpush1.msra.mxu0 0.0
      %3481 = vmatprep.subr.mxu0 0.0
      %3482 = vmatpush1.msra.mxu0 0.0
      %3483 = vmatprep.subr.mxu0 0.0
      %3484 = vmatpush1.msra.mxu0 0.0
      %3485 = vmatprep.subr.mxu0 0.0
      %3486 = vmatpush1.msra.mxu0 0.0
      %3487 = vmatprep.subr.mxu0 0.0
      %3488 = vmatpush1.msra.mxu0 0.0
      %3489 = vmatprep.subr.mxu0 0.0
      %3490 = vmatpush1.msra.mxu0 0.0
      %3491 = vmatprep.mubr.f32.mxu0 0.0
      %v3492 = vand.u32 %v3414, 4294901760
      %v3493 = vsub.f32 %v3414, %v3492
      %v3494 = vand.u32 %v3493, 4294901760
      %v3495 = vsub.f32 %v3493, %v3494
      %v3496 = vand.u32 %v3495, 4294901760
      %3497 = vmatmul.mubr.f32.gmra.mrb[0].mxu0 %v3496
      %v3498 = vpop.f32.mrb[0].mxu0
      %v3499 = vadd.f32 0.0, %v3498
      %v3500 = vpop.f32.mrb[0].mxu0
      %3501 = vmatprep.mubr.f32.mxu0 0.0
      %v3502 = vand.u32 %v3417, 4294901760
      %v3503 = vsub.f32 %v3417, %v3502
      %v3504 = vand.u32 %v3503, 4294901760
      %v3505 = vsub.f32 %v3503, %v3504
      %v3506 = vand.u32 %v3505, 4294901760
      %3507 = vmatmul.mubr.f32.gmra.mrb[0].mxu0 %v3506
      %v3508 = vpop.f32.mrb[0].mxu0
      %v3509 = vadd.f32 0.0, %v3508
      %v3510 = vpop.f32.mrb[0].mxu0
      %3511 = vdwg.mxu0
      %3512 = vmatprep.subr.mxu0 0.0
      %v3513 = vand.u32 %v1147, 4294901760
      %v3514 = vsub.f32 %v1147, %v3513
      %v3515 = vand.u32 %v3514, 4294901760
      %v3516 = vsub.f32 %v3514, %v3515
      %v3517 = vand.u32 %v3516, 4294901760
      %3518 = vmatpush1.msra.mxu0 %v3517
      %3519 = vmatprep.subr.mxu0 0.0
      %v3520 = vand.u32 %v1148, 4294901760
      %v3521 = vsub.f32 %v1148, %v3520
      %v3522 = vand.u32 %v3521, 4294901760
      %v3523 = vsub.f32 %v3521, %v3522
      %v3524 = vand.u32 %v3523, 4294901760
      %3525 = vmatpush1.msra.mxu0 %v3524
      %3526 = vmatprep.subr.mxu0 0.0
      %v3527 = vand.u32 %v1149, 4294901760
      %v3528 = vsub.f32 %v1149, %v3527
      %v3529 = vand.u32 %v3528, 4294901760
      %v3530 = vsub.f32 %v3528, %v3529
      %v3531 = vand.u32 %v3530, 4294901760
      %3532 = vmatpush1.msra.mxu0 %v3531
      %3533 = vmatprep.subr.mxu0 0.0
      %v3534 = vand.u32 %v1150, 4294901760
      %v3535 = vsub.f32 %v1150, %v3534
      %v3536 = vand.u32 %v3535, 4294901760
      %v3537 = vsub.f32 %v3535, %v3536
      %v3538 = vand.u32 %v3537, 4294901760
      %3539 = vmatpush1.msra.mxu0 %v3538
      %3540 = vmatprep.subr.mxu0 0.0
      %v3541 = vand.u32 %v1151, 4294901760
      %v3542 = vsub.f32 %v1151, %v3541
      %v3543 = vand.u32 %v3542, 4294901760
      %v3544 = vsub.f32 %v3542, %v3543
      %v3545 = vand.u32 %v3544, 4294901760
      %3546 = vmatpush1.msra.mxu0 %v3545
      %3547 = vmatprep.subr.mxu0 0.0
      %v3548 = vand.u32 %v1152, 4294901760
      %v3549 = vsub.f32 %v1152, %v3548
      %v3550 = vand.u32 %v3549, 4294901760
      %v3551 = vsub.f32 %v3549, %v3550
      %v3552 = vand.u32 %v3551, 4294901760
      %3553 = vmatpush1.msra.mxu0 %v3552
      %3554 = vmatprep.subr.mxu0 0.0
      %v3555 = vand.u32 %v1153, 4294901760
      %v3556 = vsub.f32 %v1153, %v3555
      %v3557 = vand.u32 %v3556, 4294901760
      %v3558 = vsub.f32 %v3556, %v3557
      %v3559 = vand.u32 %v3558, 4294901760
      %3560 = vmatpush1.msra.mxu0 %v3559
      %3561 = vmatprep.subr.mxu0 0.0
      %v3562 = vand.u32 %v1154, 4294901760
      %v3563 = vsub.f32 %v1154, %v3562
      %v3564 = vand.u32 %v3563, 4294901760
      %v3565 = vsub.f32 %v3563, %v3564
      %v3566 = vand.u32 %v3565, 4294901760
      %3567 = vmatpush1.msra.mxu0 %v3566
      %3568 = vmatprep.subr.mxu0 0.0
      %3569 = vmatpush1.msra.mxu0 0.0
      %3570 = vmatprep.subr.mxu0 0.0
      %3571 = vmatpush1.msra.mxu0 0.0
      %3572 = vmatprep.subr.mxu0 0.0
      %3573 = vmatpush1.msra.mxu0 0.0
      %3574 = vmatprep.subr.mxu0 0.0
      %3575 = vmatpush1.msra.mxu0 0.0
      %3576 = vmatprep.subr.mxu0 0.0
      %3577 = vmatpush1.msra.mxu0 0.0
      %3578 = vmatprep.subr.mxu0 0.0
      %3579 = vmatpush1.msra.mxu0 0.0
      %3580 = vmatprep.subr.mxu0 0.0
      %3581 = vmatpush1.msra.mxu0 0.0
      %3582 = vmatprep.subr.mxu0 0.0
      %3583 = vmatpush1.msra.mxu0 0.0
      %3584 = vmatprep.subr.mxu0 0.0
      %3585 = vmatpush1.msra.mxu0 0.0
      %3586 = vmatprep.subr.mxu0 0.0
      %3587 = vmatpush1.msra.mxu0 0.0
      %3588 = vmatprep.subr.mxu0 0.0
      %3589 = vmatpush1.msra.mxu0 0.0
      %3590 = vmatprep.subr.mxu0 0.0
      %3591 = vmatpush1.msra.mxu0 0.0
      %3592 = vmatprep.subr.mxu0 0.0
      %3593 = vmatpush1.msra.mxu0 0.0
      %3594 = vmatprep.subr.mxu0 0.0
      %3595 = vmatpush1.msra.mxu0 0.0
      %3596 = vmatprep.subr.mxu0 0.0
      %3597 = vmatpush1.msra.mxu0 0.0
      %3598 = vmatprep.subr.mxu0 0.0
      %3599 = vmatpush1.msra.mxu0 0.0
      %3600 = vmatprep.subr.mxu0 0.0
      %3601 = vmatpush1.msra.mxu0 0.0
      %3602 = vmatprep.subr.mxu0 0.0
      %3603 = vmatpush1.msra.mxu0 0.0
      %3604 = vmatprep.subr.mxu0 0.0
      %3605 = vmatpush1.msra.mxu0 0.0
      %3606 = vmatprep.subr.mxu0 0.0
      %3607 = vmatpush1.msra.mxu0 0.0
      %3608 = vmatprep.subr.mxu0 0.0
      %3609 = vmatpush1.msra.mxu0 0.0
      %3610 = vmatprep.subr.mxu0 0.0
      %3611 = vmatpush1.msra.mxu0 0.0
      %3612 = vmatprep.subr.mxu0 0.0
      %3613 = vmatpush1.msra.mxu0 0.0
      %3614 = vmatprep.subr.mxu0 0.0
      %3615 = vmatpush1.msra.mxu0 0.0
      %3616 = vmatprep.mubr.f32.mxu0 0.0
      %v3617 = vand.u32 %v3414, 4294901760
      %3618 = vmatmul.mubr.f32.gmra.mrb[0].mxu0 %v3617
      %v3619 = vpop.f32.mrb[0].mxu0
      %v3620 = vadd.f32 %v3499, %v3619
      %v3621 = vpop.f32.mrb[0].mxu0
      %3622 = vmatprep.mubr.f32.mxu0 0.0
      %v3623 = vand.u32 %v3417, 4294901760
      %3624 = vmatmul.mubr.f32.gmra.mrb[0].mxu0 %v3623
      %v3625 = vpop.f32.mrb[0].mxu0
      %v3626 = vadd.f32 %v3509, %v3625
      %v3627 = vpop.f32.mrb[0].mxu0
      %3628 = vdwg.mxu0
      %3629 = vmatprep.subr.mxu0 0.0
      %v3630 = vand.u32 %v1147, 4294901760
      %v3631 = vsub.f32 %v1147, %v3630
      %3632 = vmatpush1.msra.mxu0 %v3631
      %3633 = vmatprep.subr.mxu0 0.0
      %v3634 = vand.u32 %v1148, 4294901760
      %v3635 = vsub.f32 %v1148, %v3634
      %3636 = vmatpush1.msra.mxu0 %v3635
      %3637 = vmatprep.subr.mxu0 0.0
      %v3638 = vand.u32 %v1149, 4294901760
      %v3639 = vsub.f32 %v1149, %v3638
      %3640 = vmatpush1.msra.mxu0 %v3639
      %3641 = vmatprep.subr.mxu0 0.0
      %v3642 = vand.u32 %v1150, 4294901760
      %v3643 = vsub.f32 %v1150, %v3642
      %3644 = vmatpush1.msra.mxu0 %v3643
      %3645 = vmatprep.subr.mxu0 0.0
      %v3646 = vand.u32 %v1151, 4294901760
      %v3647 = vsub.f32 %v1151, %v3646
      %3648 = vmatpush1.msra.mxu0 %v3647
      %3649 = vmatprep.subr.mxu0 0.0
      %v3650 = vand.u32 %v1152, 4294901760
      %v3651 = vsub.f32 %v1152, %v3650
      %3652 = vmatpush1.msra.mxu0 %v3651
      %3653 = vmatprep.subr.mxu0 0.0
      %v3654 = vand.u32 %v1153, 4294901760
      %v3655 = vsub.f32 %v1153, %v3654
      %3656 = vmatpush1.msra.mxu0 %v3655
      %3657 = vmatprep.subr.mxu0 0.0
      %v3658 = vand.u32 %v1154, 4294901760
      %v3659 = vsub.f32 %v1154, %v3658
      %3660 = vmatpush1.msra.mxu0 %v3659
      %3661 = vmatprep.subr.mxu0 0.0
      %3662 = vmatpush1.msra.mxu0 0.0
      %3663 = vmatprep.subr.mxu0 0.0
      %3664 = vmatpush1.msra.mxu0 0.0
      %3665 = vmatprep.subr.mxu0 0.0
      %3666 = vmatpush1.msra.mxu0 0.0
      %3667 = vmatprep.subr.mxu0 0.0
      %3668 = vmatpush1.msra.mxu0 0.0
      %3669 = vmatprep.subr.mxu0 0.0
      %3670 = vmatpush1.msra.mxu0 0.0
      %3671 = vmatprep.subr.mxu0 0.0
      %3672 = vmatpush1.msra.mxu0 0.0
      %3673 = vmatprep.subr.mxu0 0.0
      %3674 = vmatpush1.msra.mxu0 0.0
      %3675 = vmatprep.subr.mxu0 0.0
      %3676 = vmatpush1.msra.mxu0 0.0
      %3677 = vmatprep.subr.mxu0 0.0
      %3678 = vmatpush1.msra.mxu0 0.0
      %3679 = vmatprep.subr.mxu0 0.0
      %3680 = vmatpush1.msra.mxu0 0.0
      %3681 = vmatprep.subr.mxu0 0.0
      %3682 = vmatpush1.msra.mxu0 0.0
      %3683 = vmatprep.subr.mxu0 0.0
      %3684 = vmatpush1.msra.mxu0 0.0
      %3685 = vmatprep.subr.mxu0 0.0
      %3686 = vmatpush1.msra.mxu0 0.0
      %3687 = vmatprep.subr.mxu0 0.0
      %3688 = vmatpush1.msra.mxu0 0.0
      %3689 = vmatprep.subr.mxu0 0.0
      %3690 = vmatpush1.msra.mxu0 0.0
      %3691 = vmatprep.subr.mxu0 0.0
      %3692 = vmatpush1.msra.mxu0 0.0
      %3693 = vmatprep.subr.mxu0 0.0
      %3694 = vmatpush1.msra.mxu0 0.0
      %3695 = vmatprep.subr.mxu0 0.0
      %3696 = vmatpush1.msra.mxu0 0.0
      %3697 = vmatprep.subr.mxu0 0.0
      %3698 = vmatpush1.msra.mxu0 0.0
      %3699 = vmatprep.subr.mxu0 0.0
      %3700 = vmatpush1.msra.mxu0 0.0
      %3701 = vmatprep.subr.mxu0 0.0
      %3702 = vmatpush1.msra.mxu0 0.0
      %3703 = vmatprep.subr.mxu0 0.0
      %3704 = vmatpush1.msra.mxu0 0.0
      %3705 = vmatprep.subr.mxu0 0.0
      %3706 = vmatpush1.msra.mxu0 0.0
      %3707 = vmatprep.subr.mxu0 0.0
      %3708 = vmatpush1.msra.mxu0 0.0
      %3709 = vmatprep.mubr.f32.mxu0 0.0
      %v3710 = vand.u32 %v3414, 4294901760
      %v3711 = vsub.f32 %v3414, %v3710
      %3712 = vmatmul.mubr.f32.gmra.mrb[0].mxu0 %v3711
      %v3713 = vpop.f32.mrb[0].mxu0
      %v3714 = vadd.f32 %v3620, %v3713
      %v3715 = vpop.f32.mrb[0].mxu0
      %3716 = vmatprep.mubr.f32.mxu0 0.0
      %v3717 = vand.u32 %v3417, 4294901760
      %v3718 = vsub.f32 %v3417, %v3717
      %3719 = vmatmul.mubr.f32.gmra.mrb[0].mxu0 %v3718
      %v3720 = vpop.f32.mrb[0].mxu0
      %v3721 = vadd.f32 %v3626, %v3720
      %v3722 = vpop.f32.mrb[0].mxu0
      %3723 = vdwg.mxu0
      %3724 = vmatprep.subr.mxu0 0.0
      %v3725 = vand.u32 %v1147, 4294901760
      %3726 = vmatpush1.msra.mxu0 %v3725
      %3727 = vmatprep.subr.mxu0 0.0
      %v3728 = vand.u32 %v1148, 4294901760
      %3729 = vmatpush1.msra.mxu0 %v3728
      %3730 = vmatprep.subr.mxu0 0.0
      %v3731 = vand.u32 %v1149, 4294901760
      %3732 = vmatpush1.msra.mxu0 %v3731
      %3733 = vmatprep.subr.mxu0 0.0
      %v3734 = vand.u32 %v1150, 4294901760
      %3735 = vmatpush1.msra.mxu0 %v3734
      %3736 = vmatprep.subr.mxu0 0.0
      %v3737 = vand.u32 %v1151, 4294901760
      %3738 = vmatpush1.msra.mxu0 %v3737
      %3739 = vmatprep.subr.mxu0 0.0
      %v3740 = vand.u32 %v1152, 4294901760
      %3741 = vmatpush1.msra.mxu0 %v3740
      %3742 = vmatprep.subr.mxu0 0.0
      %v3743 = vand.u32 %v1153, 4294901760
      %3744 = vmatpush1.msra.mxu0 %v3743
      %3745 = vmatprep.subr.mxu0 0.0
      %v3746 = vand.u32 %v1154, 4294901760
      %3747 = vmatpush1.msra.mxu0 %v3746
      %3748 = vmatprep.subr.mxu0 0.0
      %3749 = vmatpush1.msra.mxu0 0.0
      %3750 = vmatprep.subr.mxu0 0.0
      %3751 = vmatpush1.msra.mxu0 0.0
      %3752 = vmatprep.subr.mxu0 0.0
      %3753 = vmatpush1.msra.mxu0 0.0
      %3754 = vmatprep.subr.mxu0 0.0
      %3755 = vmatpush1.msra.mxu0 0.0
      %3756 = vmatprep.subr.mxu0 0.0
      %3757 = vmatpush1.msra.mxu0 0.0
      %3758 = vmatprep.subr.mxu0 0.0
      %3759 = vmatpush1.msra.mxu0 0.0
      %3760 = vmatprep.subr.mxu0 0.0
      %3761 = vmatpush1.msra.mxu0 0.0
      %3762 = vmatprep.subr.mxu0 0.0
      %3763 = vmatpush1.msra.mxu0 0.0
      %3764 = vmatprep.subr.mxu0 0.0
      %3765 = vmatpush1.msra.mxu0 0.0
      %3766 = vmatprep.subr.mxu0 0.0
      %3767 = vmatpush1.msra.mxu0 0.0
      %3768 = vmatprep.subr.mxu0 0.0
      %3769 = vmatpush1.msra.mxu0 0.0
      %3770 = vmatprep.subr.mxu0 0.0
      %3771 = vmatpush1.msra.mxu0 0.0
      %3772 = vmatprep.subr.mxu0 0.0
      %3773 = vmatpush1.msra.mxu0 0.0
      %3774 = vmatprep.subr.mxu0 0.0
      %3775 = vmatpush1.msra.mxu0 0.0
      %3776 = vmatprep.subr.mxu0 0.0
      %3777 = vmatpush1.msra.mxu0 0.0
      %3778 = vmatprep.subr.mxu0 0.0
      %3779 = vmatpush1.msra.mxu0 0.0
      %3780 = vmatprep.subr.mxu0 0.0
      %3781 = vmatpush1.msra.mxu0 0.0
      %3782 = vmatprep.subr.mxu0 0.0
      %3783 = vmatpush1.msra.mxu0 0.0
      %3784 = vmatprep.subr.mxu0 0.0
      %3785 = vmatpush1.msra.mxu0 0.0
      %3786 = vmatprep.subr.mxu0 0.0
      %3787 = vmatpush1.msra.mxu0 0.0
      %3788 = vmatprep.subr.mxu0 0.0
      %3789 = vmatpush1.msra.mxu0 0.0
      %3790 = vmatprep.subr.mxu0 0.0
      %3791 = vmatpush1.msra.mxu0 0.0
      %3792 = vmatprep.subr.mxu0 0.0
      %3793 = vmatpush1.msra.mxu0 0.0
      %3794 = vmatprep.subr.mxu0 0.0
      %3795 = vmatpush1.msra.mxu0 0.0
      %3796 = vmatprep.mubr.f32.mxu0 0.0
      %v3797 = vand.u32 %v3414, 4294901760
      %v3798 = vsub.f32 %v3414, %v3797
      %v3799 = vand.u32 %v3798, 4294901760
      %3800 = vmatmul.mubr.f32.gmra.mrb[0].mxu0 %v3799
      %v3801 = vpop.f32.mrb[0].mxu0
      %v3802 = vadd.f32 %v3714, %v3801
      %v3803 = vpop.f32.mrb[0].mxu0
      %3804 = vmatprep.mubr.f32.mxu0 0.0
      %v3805 = vand.u32 %v3417, 4294901760
      %v3806 = vsub.f32 %v3417, %v3805
      %v3807 = vand.u32 %v3806, 4294901760
      %3808 = vmatmul.mubr.f32.gmra.mrb[0].mxu0 %v3807
      %v3809 = vpop.f32.mrb[0].mxu0
      %v3810 = vadd.f32 %v3721, %v3809
      %v3811 = vpop.f32.mrb[0].mxu0
      %3812 = vdwg.mxu0
      %3813 = vmatprep.subr.mxu0 0.0
      %v3814 = vand.u32 %v1147, 4294901760
      %v3815 = vsub.f32 %v1147, %v3814
      %v3816 = vand.u32 %v3815, 4294901760
      %3817 = vmatpush1.msra.mxu0 %v3816
      %3818 = vmatprep.subr.mxu0 0.0
      %v3819 = vand.u32 %v1148, 4294901760
      %v3820 = vsub.f32 %v1148, %v3819
      %v3821 = vand.u32 %v3820, 4294901760
      %3822 = vmatpush1.msra.mxu0 %v3821
      %3823 = vmatprep.subr.mxu0 0.0
      %v3824 = vand.u32 %v1149, 4294901760
      %v3825 = vsub.f32 %v1149, %v3824
      %v3826 = vand.u32 %v3825, 4294901760
      %3827 = vmatpush1.msra.mxu0 %v3826
      %3828 = vmatprep.subr.mxu0 0.0
      %v3829 = vand.u32 %v1150, 4294901760
      %v3830 = vsub.f32 %v1150, %v3829
      %v3831 = vand.u32 %v3830, 4294901760
      %3832 = vmatpush1.msra.mxu0 %v3831
      %3833 = vmatprep.subr.mxu0 0.0
      %v3834 = vand.u32 %v1151, 4294901760
      %v3835 = vsub.f32 %v1151, %v3834
      %v3836 = vand.u32 %v3835, 4294901760
      %3837 = vmatpush1.msra.mxu0 %v3836
      %3838 = vmatprep.subr.mxu0 0.0
      %v3839 = vand.u32 %v1152, 4294901760
      %v3840 = vsub.f32 %v1152, %v3839
      %v3841 = vand.u32 %v3840, 4294901760
      %3842 = vmatpush1.msra.mxu0 %v3841
      %3843 = vmatprep.subr.mxu0 0.0
      %v3844 = vand.u32 %v1153, 4294901760
      %v3845 = vsub.f32 %v1153, %v3844
      %v3846 = vand.u32 %v3845, 4294901760
      %3847 = vmatpush1.msra.mxu0 %v3846
      %3848 = vmatprep.subr.mxu0 0.0
      %v3849 = vand.u32 %v1154, 4294901760
      %v3850 = vsub.f32 %v1154, %v3849
      %v3851 = vand.u32 %v3850, 4294901760
      %3852 = vmatpush1.msra.mxu0 %v3851
      %3853 = vmatprep.subr.mxu0 0.0
      %3854 = vmatpush1.msra.mxu0 0.0
      %3855 = vmatprep.subr.mxu0 0.0
      %3856 = vmatpush1.msra.mxu0 0.0
      %3857 = vmatprep.subr.mxu0 0.0
      %3858 = vmatpush1.msra.mxu0 0.0
      %3859 = vmatprep.subr.mxu0 0.0
      %3860 = vmatpush1.msra.mxu0 0.0
      %3861 = vmatprep.subr.mxu0 0.0
      %3862 = vmatpush1.msra.mxu0 0.0
      %3863 = vmatprep.subr.mxu0 0.0
      %3864 = vmatpush1.msra.mxu0 0.0
      %3865 = vmatprep.subr.mxu0 0.0
      %3866 = vmatpush1.msra.mxu0 0.0
      %3867 = vmatprep.subr.mxu0 0.0
      %3868 = vmatpush1.msra.mxu0 0.0
      %3869 = vmatprep.subr.mxu0 0.0
      %3870 = vmatpush1.msra.mxu0 0.0
      %3871 = vmatprep.subr.mxu0 0.0
      %3872 = vmatpush1.msra.mxu0 0.0
      %3873 = vmatprep.subr.mxu0 0.0
      %3874 = vmatpush1.msra.mxu0 0.0
      %3875 = vmatprep.subr.mxu0 0.0
      %3876 = vmatpush1.msra.mxu0 0.0
      %3877 = vmatprep.subr.mxu0 0.0
      %3878 = vmatpush1.msra.mxu0 0.0
      %3879 = vmatprep.subr.mxu0 0.0
      %3880 = vmatpush1.msra.mxu0 0.0
      %3881 = vmatprep.subr.mxu0 0.0
      %3882 = vmatpush1.msra.mxu0 0.0
      %3883 = vmatprep.subr.mxu0 0.0
      %3884 = vmatpush1.msra.mxu0 0.0
      %3885 = vmatprep.subr.mxu0 0.0
      %3886 = vmatpush1.msra.mxu0 0.0
      %3887 = vmatprep.subr.mxu0 0.0
      %3888 = vmatpush1.msra.mxu0 0.0
      %3889 = vmatprep.subr.mxu0 0.0
      %3890 = vmatpush1.msra.mxu0 0.0
      %3891 = vmatprep.subr.mxu0 0.0
      %3892 = vmatpush1.msra.mxu0 0.0
      %3893 = vmatprep.subr.mxu0 0.0
      %3894 = vmatpush1.msra.mxu0 0.0
      %3895 = vmatprep.subr.mxu0 0.0
      %3896 = vmatpush1.msra.mxu0 0.0
      %3897 = vmatprep.subr.mxu0 0.0
      %3898 = vmatpush1.msra.mxu0 0.0
      %3899 = vmatprep.subr.mxu0 0.0
      %3900 = vmatpush1.msra.mxu0 0.0
      %3901 = vmatprep.mubr.f32.mxu0 0.0
      %v3902 = vand.u32 %v3414, 4294901760
      %3903 = vmatmul.mubr.f32.gmra.mrb[0].mxu0 %v3902
      %v3904 = vpop.f32.mrb[0].mxu0
      %v3905 = vadd.f32 %v3802, %v3904
      %v3906 = vpop.f32.mrb[0].mxu0
      %3907 = vmatprep.mubr.f32.mxu0 0.0
      %v3908 = vand.u32 %v3417, 4294901760
      %3909 = vmatmul.mubr.f32.gmra.mrb[0].mxu0 %v3908
      %v3910 = vpop.f32.mrb[0].mxu0
      %v3911 = vadd.f32 %v3810, %v3910
      %v3912 = vpop.f32.mrb[0].mxu0
      %3913 = vdwg.mxu0
      %3914 = vmatprep.subr.mxu0 0.0
      %v3915 = vand.u32 %v1147, 4294901760
      %3916 = vmatpush1.msra.mxu0 %v3915
      %3917 = vmatprep.subr.mxu0 0.0
      %v3918 = vand.u32 %v1148, 4294901760
      %3919 = vmatpush1.msra.mxu0 %v3918
      %3920 = vmatprep.subr.mxu0 0.0
      %v3921 = vand.u32 %v1149, 4294901760
      %3922 = vmatpush1.msra.mxu0 %v3921
      %3923 = vmatprep.subr.mxu0 0.0
      %v3924 = vand.u32 %v1150, 4294901760
      %3925 = vmatpush1.msra.mxu0 %v3924
      %3926 = vmatprep.subr.mxu0 0.0
      %v3927 = vand.u32 %v1151, 4294901760
      %3928 = vmatpush1.msra.mxu0 %v3927
      %3929 = vmatprep.subr.mxu0 0.0
      %v3930 = vand.u32 %v1152, 4294901760
      %3931 = vmatpush1.msra.mxu0 %v3930
      %3932 = vmatprep.subr.mxu0 0.0
      %v3933 = vand.u32 %v1153, 4294901760
      %3934 = vmatpush1.msra.mxu0 %v3933
      %3935 = vmatprep.subr.mxu0 0.0
      %v3936 = vand.u32 %v1154, 4294901760
      %3937 = vmatpush1.msra.mxu0 %v3936
      %3938 = vmatprep.subr.mxu0 0.0
      %3939 = vmatpush1.msra.mxu0 0.0
      %3940 = vmatprep.subr.mxu0 0.0
      %3941 = vmatpush1.msra.mxu0 0.0
      %3942 = vmatprep.subr.mxu0 0.0
      %3943 = vmatpush1.msra.mxu0 0.0
      %3944 = vmatprep.subr.mxu0 0.0
      %3945 = vmatpush1.msra.mxu0 0.0
      %3946 = vmatprep.subr.mxu0 0.0
      %3947 = vmatpush1.msra.mxu0 0.0
      %3948 = vmatprep.subr.mxu0 0.0
      %3949 = vmatpush1.msra.mxu0 0.0
      %3950 = vmatprep.subr.mxu0 0.0
      %3951 = vmatpush1.msra.mxu0 0.0
      %3952 = vmatprep.subr.mxu0 0.0
      %3953 = vmatpush1.msra.mxu0 0.0
      %3954 = vmatprep.subr.mxu0 0.0
      %3955 = vmatpush1.msra.mxu0 0.0
      %3956 = vmatprep.subr.mxu0 0.0
      %3957 = vmatpush1.msra.mxu0 0.0
      %3958 = vmatprep.subr.mxu0 0.0
      %3959 = vmatpush1.msra.mxu0 0.0
      %3960 = vmatprep.subr.mxu0 0.0
      %3961 = vmatpush1.msra.mxu0 0.0
      %3962 = vmatprep.subr.mxu0 0.0
      %3963 = vmatpush1.msra.mxu0 0.0
      %3964 = vmatprep.subr.mxu0 0.0
      %3965 = vmatpush1.msra.mxu0 0.0
      %3966 = vmatprep.subr.mxu0 0.0
      %3967 = vmatpush1.msra.mxu0 0.0
      %3968 = vmatprep.subr.mxu0 0.0
      %3969 = vmatpush1.msra.mxu0 0.0
      %3970 = vmatprep.subr.mxu0 0.0
      %3971 = vmatpush1.msra.mxu0 0.0
      %3972 = vmatprep.subr.mxu0 0.0
      %3973 = vmatpush1.msra.mxu0 0.0
      %3974 = vmatprep.subr.mxu0 0.0
      %3975 = vmatpush1.msra.mxu0 0.0
      %3976 = vmatprep.subr.mxu0 0.0
      %3977 = vmatpush1.msra.mxu0 0.0
      %3978 = vmatprep.subr.mxu0 0.0
      %3979 = vmatpush1.msra.mxu0 0.0
      %3980 = vmatprep.subr.mxu0 0.0
      %3981 = vmatpush1.msra.mxu0 0.0
      %3982 = vmatprep.subr.mxu0 0.0
      %3983 = vmatpush1.msra.mxu0 0.0
      %3984 = vmatprep.subr.mxu0 0.0
      %3985 = vmatpush1.msra.mxu0 0.0
      %3986 = vmatprep.mubr.f32.mxu0 0.0
      %v3987 = vand.u32 %v3414, 4294901760
      %3988 = vmatmul.mubr.f32.gmra.mrb[0].mxu0 %v3987
      %v3989 = vpop.f32.mrb[0].mxu0
      %v3990 = vadd.f32 %v3905, %v3989
      %v3991 = vpop.f32.mrb[0].mxu0
      %3992 = vmatprep.mubr.f32.mxu0 0.0
      %v3993 = vand.u32 %v3417, 4294901760
      %3994 = vmatmul.mubr.f32.gmra.mrb[0].mxu0 %v3993
      %v3995 = vpop.f32.mrb[0].mxu0
      %v3996 = vadd.f32 %v3911, %v3995
      %v3997 = vpop.f32.mrb[0].mxu0
      %3998 = vdwg.mxu0
      %s3999 = scalar_lea.vmem %s3, 64
      %v4000 = vld [vmem:[%s3999] sm:$0xff]
      %v4001 = vld [vmem:[%s3999 + $0x8] sm:$0xff]
      %v4002 = vld [vmem:[%s3999 + $0x10] sm:$0xff]
      %v4003 = vld [vmem:[%s3999 + $0x18] sm:$0xff]
      %v4005 = vsel %vm1039, %v3990, 0
      %v4008 = vsel %vm1039, %v3996, 0
      %4010 = vmatprep.subr.mxu0 0.0
      %v4011 = vand.u32 %v4000, 4294901760
      %4012 = vmatpush1.msra.mxu0 %v4011
      %4013 = vmatprep.subr.mxu0 0.0
      %v4014 = vand.u32 %v4001, 4294901760
      %4015 = vmatpush1.msra.mxu0 %v4014
      %4016 = vmatprep.subr.mxu0 0.0
      %v4017 = vand.u32 %v4002, 4294901760
      %4018 = vmatpush1.msra.mxu0 %v4017
      %4019 = vmatprep.subr.mxu0 0.0
      %v4020 = vand.u32 %v4003, 4294901760
      %4021 = vmatpush1.msra.mxu0 %v4020
      %4022 = vmatprep.subr.mxu0 0.0
      %4023 = vmatpush1.msra.mxu0 0.0
      %4024 = vmatprep.subr.mxu0 0.0
      %4025 = vmatpush1.msra.mxu0 0.0
      %4026 = vmatprep.subr.mxu0 0.0
      %4027 = vmatpush1.msra.mxu0 0.0
      %4028 = vmatprep.subr.mxu0 0.0
      %4029 = vmatpush1.msra.mxu0 0.0
      %4030 = vmatprep.subr.mxu0 0.0
      %4031 = vmatpush1.msra.mxu0 0.0
      %4032 = vmatprep.subr.mxu0 0.0
      %4033 = vmatpush1.msra.mxu0 0.0
      %4034 = vmatprep.subr.mxu0 0.0
      %4035 = vmatpush1.msra.mxu0 0.0
      %4036 = vmatprep.subr.mxu0 0.0
      %4037 = vmatpush1.msra.mxu0 0.0
      %4038 = vmatprep.subr.mxu0 0.0
      %4039 = vmatpush1.msra.mxu0 0.0
      %4040 = vmatprep.subr.mxu0 0.0
      %4041 = vmatpush1.msra.mxu0 0.0
      %4042 = vmatprep.subr.mxu0 0.0
      %4043 = vmatpush1.msra.mxu0 0.0
      %4044 = vmatprep.subr.mxu0 0.0
      %4045 = vmatpush1.msra.mxu0 0.0
      %4046 = vmatprep.subr.mxu0 0.0
      %4047 = vmatpush1.msra.mxu0 0.0
      %4048 = vmatprep.subr.mxu0 0.0
      %4049 = vmatpush1.msra.mxu0 0.0
      %4050 = vmatprep.subr.mxu0 0.0
      %4051 = vmatpush1.msra.mxu0 0.0
      %4052 = vmatprep.subr.mxu0 0.0
      %4053 = vmatpush1.msra.mxu0 0.0
      %4054 = vmatprep.subr.mxu0 0.0
      %4055 = vmatpush1.msra.mxu0 0.0
      %4056 = vmatprep.subr.mxu0 0.0
      %4057 = vmatpush1.msra.mxu0 0.0
      %4058 = vmatprep.subr.mxu0 0.0
      %4059 = vmatpush1.msra.mxu0 0.0
      %4060 = vmatprep.subr.mxu0 0.0
      %4061 = vmatpush1.msra.mxu0 0.0
      %4062 = vmatprep.subr.mxu0 0.0
      %4063 = vmatpush1.msra.mxu0 0.0
      %4064 = vmatprep.subr.mxu0 0.0
      %4065 = vmatpush1.msra.mxu0 0.0
      %4066 = vmatprep.subr.mxu0 0.0
      %4067 = vmatpush1.msra.mxu0 0.0
      %4068 = vmatprep.subr.mxu0 0.0
      %4069 = vmatpush1.msra.mxu0 0.0
      %4070 = vmatprep.subr.mxu0 0.0
      %4071 = vmatpush1.msra.mxu0 0.0
      %4072 = vmatprep.subr.mxu0 0.0
      %4073 = vmatpush1.msra.mxu0 0.0
      %4074 = vmatprep.subr.mxu0 0.0
      %4075 = vmatpush1.msra.mxu0 0.0
      %4076 = vmatprep.subr.mxu0 0.0
      %4077 = vmatpush1.msra.mxu0 0.0
      %4078 = vmatprep.mubr.f32.mxu0 0.0
      %v4079 = vand.u32 %v4005, 4294901760
      %v4080 = vsub.f32 %v4005, %v4079
      %v4081 = vand.u32 %v4080, 4294901760
      %v4082 = vsub.f32 %v4080, %v4081
      %v4083 = vand.u32 %v4082, 4294901760
      %4084 = vmatmul.mubr.f32.gmra.mrb[0].mxu0 %v4083
      %v4085 = vpop.f32.mrb[0].mxu0
      %v4086 = vadd.f32 0.0, %v4085
      %v4087 = vpop.f32.mrb[0].mxu0
      %4088 = vmatprep.mubr.f32.mxu0 0.0
      %v4089 = vand.u32 %v4008, 4294901760
      %v4090 = vsub.f32 %v4008, %v4089
      %v4091 = vand.u32 %v4090, 4294901760
      %v4092 = vsub.f32 %v4090, %v4091
      %v4093 = vand.u32 %v4092, 4294901760
      %4094 = vmatmul.mubr.f32.gmra.mrb[0].mxu0 %v4093
      %v4095 = vpop.f32.mrb[0].mxu0
      %v4096 = vadd.f32 0.0, %v4095
      %v4097 = vpop.f32.mrb[0].mxu0
      %4098 = vdwg.mxu0
      %4099 = vmatprep.subr.mxu0 0.0
      %v4100 = vand.u32 %v4000, 4294901760
      %v4101 = vsub.f32 %v4000, %v4100
      %v4102 = vand.u32 %v4101, 4294901760
      %v4103 = vsub.f32 %v4101, %v4102
      %v4104 = vand.u32 %v4103, 4294901760
      %4105 = vmatpush1.msra.mxu0 %v4104
      %4106 = vmatprep.subr.mxu0 0.0
      %v4107 = vand.u32 %v4001, 4294901760
      %v4108 = vsub.f32 %v4001, %v4107
      %v4109 = vand.u32 %v4108, 4294901760
      %v4110 = vsub.f32 %v4108, %v4109
      %v4111 = vand.u32 %v4110, 4294901760
      %4112 = vmatpush1.msra.mxu0 %v4111
      %4113 = vmatprep.subr.mxu0 0.0
      %v4114 = vand.u32 %v4002, 4294901760
      %v4115 = vsub.f32 %v4002, %v4114
      %v4116 = vand.u32 %v4115, 4294901760
      %v4117 = vsub.f32 %v4115, %v4116
      %v4118 = vand.u32 %v4117, 4294901760
      %4119 = vmatpush1.msra.mxu0 %v4118
      %4120 = vmatprep.subr.mxu0 0.0
      %v4121 = vand.u32 %v4003, 4294901760
      %v4122 = vsub.f32 %v4003, %v4121
      %v4123 = vand.u32 %v4122, 4294901760
      %v4124 = vsub.f32 %v4122, %v4123
      %v4125 = vand.u32 %v4124, 4294901760
      %4126 = vmatpush1.msra.mxu0 %v4125
      %4127 = vmatprep.subr.mxu0 0.0
      %4128 = vmatpush1.msra.mxu0 0.0
      %4129 = vmatprep.subr.mxu0 0.0
      %4130 = vmatpush1.msra.mxu0 0.0
      %4131 = vmatprep.subr.mxu0 0.0
      %4132 = vmatpush1.msra.mxu0 0.0
      %4133 = vmatprep.subr.mxu0 0.0
      %4134 = vmatpush1.msra.mxu0 0.0
      %4135 = vmatprep.subr.mxu0 0.0
      %4136 = vmatpush1.msra.mxu0 0.0
      %4137 = vmatprep.subr.mxu0 0.0
      %4138 = vmatpush1.msra.mxu0 0.0
      %4139 = vmatprep.subr.mxu0 0.0
      %4140 = vmatpush1.msra.mxu0 0.0
      %4141 = vmatprep.subr.mxu0 0.0
      %4142 = vmatpush1.msra.mxu0 0.0
      %4143 = vmatprep.subr.mxu0 0.0
      %4144 = vmatpush1.msra.mxu0 0.0
      %4145 = vmatprep.subr.mxu0 0.0
      %4146 = vmatpush1.msra.mxu0 0.0
      %4147 = vmatprep.subr.mxu0 0.0
      %4148 = vmatpush1.msra.mxu0 0.0
      %4149 = vmatprep.subr.mxu0 0.0
      %4150 = vmatpush1.msra.mxu0 0.0
      %4151 = vmatprep.subr.mxu0 0.0
      %4152 = vmatpush1.msra.mxu0 0.0
      %4153 = vmatprep.subr.mxu0 0.0
      %4154 = vmatpush1.msra.mxu0 0.0
      %4155 = vmatprep.subr.mxu0 0.0
      %4156 = vmatpush1.msra.mxu0 0.0
      %4157 = vmatprep.subr.mxu0 0.0
      %4158 = vmatpush1.msra.mxu0 0.0
      %4159 = vmatprep.subr.mxu0 0.0
      %4160 = vmatpush1.msra.mxu0 0.0
      %4161 = vmatprep.subr.mxu0 0.0
      %4162 = vmatpush1.msra.mxu0 0.0
      %4163 = vmatprep.subr.mxu0 0.0
      %4164 = vmatpush1.msra.mxu0 0.0
      %4165 = vmatprep.subr.mxu0 0.0
      %4166 = vmatpush1.msra.mxu0 0.0
      %4167 = vmatprep.subr.mxu0 0.0
      %4168 = vmatpush1.msra.mxu0 0.0
      %4169 = vmatprep.subr.mxu0 0.0
      %4170 = vmatpush1.msra.mxu0 0.0
      %4171 = vmatprep.subr.mxu0 0.0
      %4172 = vmatpush1.msra.mxu0 0.0
      %4173 = vmatprep.subr.mxu0 0.0
      %4174 = vmatpush1.msra.mxu0 0.0
      %4175 = vmatprep.subr.mxu0 0.0
      %4176 = vmatpush1.msra.mxu0 0.0
      %4177 = vmatprep.subr.mxu0 0.0
      %4178 = vmatpush1.msra.mxu0 0.0
      %4179 = vmatprep.subr.mxu0 0.0
      %4180 = vmatpush1.msra.mxu0 0.0
      %4181 = vmatprep.subr.mxu0 0.0
      %4182 = vmatpush1.msra.mxu0 0.0
      %4183 = vmatprep.mubr.f32.mxu0 0.0
      %v4184 = vand.u32 %v4005, 4294901760
      %4185 = vmatmul.mubr.f32.gmra.mrb[0].mxu0 %v4184
      %v4186 = vpop.f32.mrb[0].mxu0
      %v4187 = vadd.f32 %v4086, %v4186
      %v4188 = vpop.f32.mrb[0].mxu0
      %4189 = vmatprep.mubr.f32.mxu0 0.0
      %v4190 = vand.u32 %v4008, 4294901760
      %4191 = vmatmul.mubr.f32.gmra.mrb[0].mxu0 %v4190
      %v4192 = vpop.f32.mrb[0].mxu0
      %v4193 = vadd.f32 %v4096, %v4192
      %v4194 = vpop.f32.mrb[0].mxu0
      %4195 = vdwg.mxu0
      %4196 = vmatprep.subr.mxu0 0.0
      %v4197 = vand.u32 %v4000, 4294901760
      %v4198 = vsub.f32 %v4000, %v4197
      %4199 = vmatpush1.msra.mxu0 %v4198
      %4200 = vmatprep.subr.mxu0 0.0
      %v4201 = vand.u32 %v4001, 4294901760
      %v4202 = vsub.f32 %v4001, %v4201
      %4203 = vmatpush1.msra.mxu0 %v4202
      %4204 = vmatprep.subr.mxu0 0.0
      %v4205 = vand.u32 %v4002, 4294901760
      %v4206 = vsub.f32 %v4002, %v4205
      %4207 = vmatpush1.msra.mxu0 %v4206
      %4208 = vmatprep.subr.mxu0 0.0
      %v4209 = vand.u32 %v4003, 4294901760
      %v4210 = vsub.f32 %v4003, %v4209
      %4211 = vmatpush1.msra.mxu0 %v4210
      %4212 = vmatprep.subr.mxu0 0.0
      %4213 = vmatpush1.msra.mxu0 0.0
      %4214 = vmatprep.subr.mxu0 0.0
      %4215 = vmatpush1.msra.mxu0 0.0
      %4216 = vmatprep.subr.mxu0 0.0
      %4217 = vmatpush1.msra.mxu0 0.0
      %4218 = vmatprep.subr.mxu0 0.0
      %4219 = vmatpush1.msra.mxu0 0.0
      %4220 = vmatprep.subr.mxu0 0.0
      %4221 = vmatpush1.msra.mxu0 0.0
      %4222 = vmatprep.subr.mxu0 0.0
      %4223 = vmatpush1.msra.mxu0 0.0
      %4224 = vmatprep.subr.mxu0 0.0
      %4225 = vmatpush1.msra.mxu0 0.0
      %4226 = vmatprep.subr.mxu0 0.0
      %4227 = vmatpush1.msra.mxu0 0.0
      %4228 = vmatprep.subr.mxu0 0.0
      %4229 = vmatpush1.msra.mxu0 0.0
      %4230 = vmatprep.subr.mxu0 0.0
      %4231 = vmatpush1.msra.mxu0 0.0
      %4232 = vmatprep.subr.mxu0 0.0
      %4233 = vmatpush1.msra.mxu0 0.0
      %4234 = vmatprep.subr.mxu0 0.0
      %4235 = vmatpush1.msra.mxu0 0.0
      %4236 = vmatprep.subr.mxu0 0.0
      %4237 = vmatpush1.msra.mxu0 0.0
      %4238 = vmatprep.subr.mxu0 0.0
      %4239 = vmatpush1.msra.mxu0 0.0
      %4240 = vmatprep.subr.mxu0 0.0
      %4241 = vmatpush1.msra.mxu0 0.0
      %4242 = vmatprep.subr.mxu0 0.0
      %4243 = vmatpush1.msra.mxu0 0.0
      %4244 = vmatprep.subr.mxu0 0.0
      %4245 = vmatpush1.msra.mxu0 0.0
      %4246 = vmatprep.subr.mxu0 0.0
      %4247 = vmatpush1.msra.mxu0 0.0
      %4248 = vmatprep.subr.mxu0 0.0
      %4249 = vmatpush1.msra.mxu0 0.0
      %4250 = vmatprep.subr.mxu0 0.0
      %4251 = vmatpush1.msra.mxu0 0.0
      %4252 = vmatprep.subr.mxu0 0.0
      %4253 = vmatpush1.msra.mxu0 0.0
      %4254 = vmatprep.subr.mxu0 0.0
      %4255 = vmatpush1.msra.mxu0 0.0
      %4256 = vmatprep.subr.mxu0 0.0
      %4257 = vmatpush1.msra.mxu0 0.0
      %4258 = vmatprep.subr.mxu0 0.0
      %4259 = vmatpush1.msra.mxu0 0.0
      %4260 = vmatprep.subr.mxu0 0.0
      %4261 = vmatpush1.msra.mxu0 0.0
      %4262 = vmatprep.subr.mxu0 0.0
      %4263 = vmatpush1.msra.mxu0 0.0
      %4264 = vmatprep.subr.mxu0 0.0
      %4265 = vmatpush1.msra.mxu0 0.0
      %4266 = vmatprep.subr.mxu0 0.0
      %4267 = vmatpush1.msra.mxu0 0.0
      %4268 = vmatprep.mubr.f32.mxu0 0.0
      %v4269 = vand.u32 %v4005, 4294901760
      %v4270 = vsub.f32 %v4005, %v4269
      %4271 = vmatmul.mubr.f32.gmra.mrb[0].mxu0 %v4270
      %v4272 = vpop.f32.mrb[0].mxu0
      %v4273 = vadd.f32 %v4187, %v4272
      %v4274 = vpop.f32.mrb[0].mxu0
      %4275 = vmatprep.mubr.f32.mxu0 0.0
      %v4276 = vand.u32 %v4008, 4294901760
      %v4277 = vsub.f32 %v4008, %v4276
      %4278 = vmatmul.mubr.f32.gmra.mrb[0].mxu0 %v4277
      %v4279 = vpop.f32.mrb[0].mxu0
      %v4280 = vadd.f32 %v4193, %v4279
      %v4281 = vpop.f32.mrb[0].mxu0
      %4282 = vdwg.mxu0
      %4283 = vmatprep.subr.mxu0 0.0
      %v4284 = vand.u32 %v4000, 4294901760
      %4285 = vmatpush1.msra.mxu0 %v4284
      %4286 = vmatprep.subr.mxu0 0.0
      %v4287 = vand.u32 %v4001, 4294901760
      %4288 = vmatpush1.msra.mxu0 %v4287
      %4289 = vmatprep.subr.mxu0 0.0
      %v4290 = vand.u32 %v4002, 4294901760
      %4291 = vmatpush1.msra.mxu0 %v4290
      %4292 = vmatprep.subr.mxu0 0.0
      %v4293 = vand.u32 %v4003, 4294901760
      %4294 = vmatpush1.msra.mxu0 %v4293
      %4295 = vmatprep.subr.mxu0 0.0
      %4296 = vmatpush1.msra.mxu0 0.0
      %4297 = vmatprep.subr.mxu0 0.0
      %4298 = vmatpush1.msra.mxu0 0.0
      %4299 = vmatprep.subr.mxu0 0.0
      %4300 = vmatpush1.msra.mxu0 0.0
      %4301 = vmatprep.subr.mxu0 0.0
      %4302 = vmatpush1.msra.mxu0 0.0
      %4303 = vmatprep.subr.mxu0 0.0
      %4304 = vmatpush1.msra.mxu0 0.0
      %4305 = vmatprep.subr.mxu0 0.0
      %4306 = vmatpush1.msra.mxu0 0.0
      %4307 = vmatprep.subr.mxu0 0.0
      %4308 = vmatpush1.msra.mxu0 0.0
      %4309 = vmatprep.subr.mxu0 0.0
      %4310 = vmatpush1.msra.mxu0 0.0
      %4311 = vmatprep.subr.mxu0 0.0
      %4312 = vmatpush1.msra.mxu0 0.0
      %4313 = vmatprep.subr.mxu0 0.0
      %4314 = vmatpush1.msra.mxu0 0.0
      %4315 = vmatprep.subr.mxu0 0.0
      %4316 = vmatpush1.msra.mxu0 0.0
      %4317 = vmatprep.subr.mxu0 0.0
      %4318 = vmatpush1.msra.mxu0 0.0
      %4319 = vmatprep.subr.mxu0 0.0
      %4320 = vmatpush1.msra.mxu0 0.0
      %4321 = vmatprep.subr.mxu0 0.0
      %4322 = vmatpush1.msra.mxu0 0.0
      %4323 = vmatprep.subr.mxu0 0.0
      %4324 = vmatpush1.msra.mxu0 0.0
      %4325 = vmatprep.subr.mxu0 0.0
      %4326 = vmatpush1.msra.mxu0 0.0
      %4327 = vmatprep.subr.mxu0 0.0
      %4328 = vmatpush1.msra.mxu0 0.0
      %4329 = vmatprep.subr.mxu0 0.0
      %4330 = vmatpush1.msra.mxu0 0.0
      %4331 = vmatprep.subr.mxu0 0.0
      %4332 = vmatpush1.msra.mxu0 0.0
      %4333 = vmatprep.subr.mxu0 0.0
      %4334 = vmatpush1.msra.mxu0 0.0
      %4335 = vmatprep.subr.mxu0 0.0
      %4336 = vmatpush1.msra.mxu0 0.0
      %4337 = vmatprep.subr.mxu0 0.0
      %4338 = vmatpush1.msra.mxu0 0.0
      %4339 = vmatprep.subr.mxu0 0.0
      %4340 = vmatpush1.msra.mxu0 0.0
      %4341 = vmatprep.subr.mxu0 0.0
      %4342 = vmatpush1.msra.mxu0 0.0
      %4343 = vmatprep.subr.mxu0 0.0
      %4344 = vmatpush1.msra.mxu0 0.0
      %4345 = vmatprep.subr.mxu0 0.0
      %4346 = vmatpush1.msra.mxu0 0.0
      %4347 = vmatprep.subr.mxu0 0.0
      %4348 = vmatpush1.msra.mxu0 0.0
      %4349 = vmatprep.subr.mxu0 0.0
      %4350 = vmatpush1.msra.mxu0 0.0
      %4351 = vmatprep.mubr.f32.mxu0 0.0
      %v4352 = vand.u32 %v4005, 4294901760
      %v4353 = vsub.f32 %v4005, %v4352
      %v4354 = vand.u32 %v4353, 4294901760
      %4355 = vmatmul.mubr.f32.gmra.mrb[0].mxu0 %v4354
      %v4356 = vpop.f32.mrb[0].mxu0
      %v4357 = vadd.f32 %v4273, %v4356
      %v4358 = vpop.f32.mrb[0].mxu0
      %4359 = vmatprep.mubr.f32.mxu0 0.0
      %v4360 = vand.u32 %v4008, 4294901760
      %v4361 = vsub.f32 %v4008, %v4360
      %v4362 = vand.u32 %v4361, 4294901760
      %4363 = vmatmul.mubr.f32.gmra.mrb[0].mxu0 %v4362
      %v4364 = vpop.f32.mrb[0].mxu0
      %v4365 = vadd.f32 %v4280, %v4364
      %v4366 = vpop.f32.mrb[0].mxu0
      %4367 = vdwg.mxu0
      %4368 = vmatprep.subr.mxu0 0.0
      %v4369 = vand.u32 %v4000, 4294901760
      %v4370 = vsub.f32 %v4000, %v4369
      %v4371 = vand.u32 %v4370, 4294901760
      %4372 = vmatpush1.msra.mxu0 %v4371
      %4373 = vmatprep.subr.mxu0 0.0
      %v4374 = vand.u32 %v4001, 4294901760
      %v4375 = vsub.f32 %v4001, %v4374
      %v4376 = vand.u32 %v4375, 4294901760
      %4377 = vmatpush1.msra.mxu0 %v4376
      %4378 = vmatprep.subr.mxu0 0.0
      %v4379 = vand.u32 %v4002, 4294901760
      %v4380 = vsub.f32 %v4002, %v4379
      %v4381 = vand.u32 %v4380, 4294901760
      %4382 = vmatpush1.msra.mxu0 %v4381
      %4383 = vmatprep.subr.mxu0 0.0
      %v4384 = vand.u32 %v4003, 4294901760
      %v4385 = vsub.f32 %v4003, %v4384
      %v4386 = vand.u32 %v4385, 4294901760
      %4387 = vmatpush1.msra.mxu0 %v4386
      %4388 = vmatprep.subr.mxu0 0.0
      %4389 = vmatpush1.msra.mxu0 0.0
      %4390 = vmatprep.subr.mxu0 0.0
      %4391 = vmatpush1.msra.mxu0 0.0
      %4392 = vmatprep.subr.mxu0 0.0
      %4393 = vmatpush1.msra.mxu0 0.0
      %4394 = vmatprep.subr.mxu0 0.0
      %4395 = vmatpush1.msra.mxu0 0.0
      %4396 = vmatprep.subr.mxu0 0.0
      %4397 = vmatpush1.msra.mxu0 0.0
      %4398 = vmatprep.subr.mxu0 0.0
      %4399 = vmatpush1.msra.mxu0 0.0
      %4400 = vmatprep.subr.mxu0 0.0
      %4401 = vmatpush1.msra.mxu0 0.0
      %4402 = vmatprep.subr.mxu0 0.0
      %4403 = vmatpush1.msra.mxu0 0.0
      %4404 = vmatprep.subr.mxu0 0.0
      %4405 = vmatpush1.msra.mxu0 0.0
      %4406 = vmatprep.subr.mxu0 0.0
      %4407 = vmatpush1.msra.mxu0 0.0
      %4408 = vmatprep.subr.mxu0 0.0
      %4409 = vmatpush1.msra.mxu0 0.0
      %4410 = vmatprep.subr.mxu0 0.0
      %4411 = vmatpush1.msra.mxu0 0.0
      %4412 = vmatprep.subr.mxu0 0.0
      %4413 = vmatpush1.msra.mxu0 0.0
      %4414 = vmatprep.subr.mxu0 0.0
      %4415 = vmatpush1.msra.mxu0 0.0
      %4416 = vmatprep.subr.mxu0 0.0
      %4417 = vmatpush1.msra.mxu0 0.0
      %4418 = vmatprep.subr.mxu0 0.0
      %4419 = vmatpush1.msra.mxu0 0.0
      %4420 = vmatprep.subr.mxu0 0.0
      %4421 = vmatpush1.msra.mxu0 0.0
      %4422 = vmatprep.subr.mxu0 0.0
      %4423 = vmatpush1.msra.mxu0 0.0
      %4424 = vmatprep.subr.mxu0 0.0
      %4425 = vmatpush1.msra.mxu0 0.0
      %4426 = vmatprep.subr.mxu0 0.0
      %4427 = vmatpush1.msra.mxu0 0.0
      %4428 = vmatprep.subr.mxu0 0.0
      %4429 = vmatpush1.msra.mxu0 0.0
      %4430 = vmatprep.subr.mxu0 0.0
      %4431 = vmatpush1.msra.mxu0 0.0
      %4432 = vmatprep.subr.mxu0 0.0
      %4433 = vmatpush1.msra.mxu0 0.0
      %4434 = vmatprep.subr.mxu0 0.0
      %4435 = vmatpush1.msra.mxu0 0.0
      %4436 = vmatprep.subr.mxu0 0.0
      %4437 = vmatpush1.msra.mxu0 0.0
      %4438 = vmatprep.subr.mxu0 0.0
      %4439 = vmatpush1.msra.mxu0 0.0
      %4440 = vmatprep.subr.mxu0 0.0
      %4441 = vmatpush1.msra.mxu0 0.0
      %4442 = vmatprep.subr.mxu0 0.0
      %4443 = vmatpush1.msra.mxu0 0.0
      %4444 = vmatprep.mubr.f32.mxu0 0.0
      %v4445 = vand.u32 %v4005, 4294901760
      %4446 = vmatmul.mubr.f32.gmra.mrb[0].mxu0 %v4445
      %v4447 = vpop.f32.mrb[0].mxu0
      %v4448 = vadd.f32 %v4357, %v4447
      %v4449 = vpop.f32.mrb[0].mxu0
      %4450 = vmatprep.mubr.f32.mxu0 0.0
      %v4451 = vand.u32 %v4008, 4294901760
      %4452 = vmatmul.mubr.f32.gmra.mrb[0].mxu0 %v4451
      %v4453 = vpop.f32.mrb[0].mxu0
      %v4454 = vadd.f32 %v4365, %v4453
      %v4455 = vpop.f32.mrb[0].mxu0
      %4456 = vdwg.mxu0
      %4457 = vmatprep.subr.mxu0 0.0
      %v4458 = vand.u32 %v4000, 4294901760
      %4459 = vmatpush1.msra.mxu0 %v4458
      %4460 = vmatprep.subr.mxu0 0.0
      %v4461 = vand.u32 %v4001, 4294901760
      %4462 = vmatpush1.msra.mxu0 %v4461
      %4463 = vmatprep.subr.mxu0 0.0
      %v4464 = vand.u32 %v4002, 4294901760
      %4465 = vmatpush1.msra.mxu0 %v4464
      %4466 = vmatprep.subr.mxu0 0.0
      %v4467 = vand.u32 %v4003, 4294901760
      %4468 = vmatpush1.msra.mxu0 %v4467
      %4469 = vmatprep.subr.mxu0 0.0
      %4470 = vmatpush1.msra.mxu0 0.0
      %4471 = vmatprep.subr.mxu0 0.0
      %4472 = vmatpush1.msra.mxu0 0.0
      %4473 = vmatprep.subr.mxu0 0.0
      %4474 = vmatpush1.msra.mxu0 0.0
      %4475 = vmatprep.subr.mxu0 0.0
      %4476 = vmatpush1.msra.mxu0 0.0
      %4477 = vmatprep.subr.mxu0 0.0
      %4478 = vmatpush1.msra.mxu0 0.0
      %4479 = vmatprep.subr.mxu0 0.0
      %4480 = vmatpush1.msra.mxu0 0.0
      %4481 = vmatprep.subr.mxu0 0.0
      %4482 = vmatpush1.msra.mxu0 0.0
      %4483 = vmatprep.subr.mxu0 0.0
      %4484 = vmatpush1.msra.mxu0 0.0
      %4485 = vmatprep.subr.mxu0 0.0
      %4486 = vmatpush1.msra.mxu0 0.0
      %4487 = vmatprep.subr.mxu0 0.0
      %4488 = vmatpush1.msra.mxu0 0.0
      %4489 = vmatprep.subr.mxu0 0.0
      %4490 = vmatpush1.msra.mxu0 0.0
      %4491 = vmatprep.subr.mxu0 0.0
      %4492 = vmatpush1.msra.mxu0 0.0
      %4493 = vmatprep.subr.mxu0 0.0
      %4494 = vmatpush1.msra.mxu0 0.0
      %4495 = vmatprep.subr.mxu0 0.0
      %4496 = vmatpush1.msra.mxu0 0.0
      %4497 = vmatprep.subr.mxu0 0.0
      %4498 = vmatpush1.msra.mxu0 0.0
      %4499 = vmatprep.subr.mxu0 0.0
      %4500 = vmatpush1.msra.mxu0 0.0
      %4501 = vmatprep.subr.mxu0 0.0
      %4502 = vmatpush1.msra.mxu0 0.0
      %4503 = vmatprep.subr.mxu0 0.0
      %4504 = vmatpush1.msra.mxu0 0.0
      %4505 = vmatprep.subr.mxu0 0.0
      %4506 = vmatpush1.msra.mxu0 0.0
      %4507 = vmatprep.subr.mxu0 0.0
      %4508 = vmatpush1.msra.mxu0 0.0
      %4509 = vmatprep.subr.mxu0 0.0
      %4510 = vmatpush1.msra.mxu0 0.0
      %4511 = vmatprep.subr.mxu0 0.0
      %4512 = vmatpush1.msra.mxu0 0.0
      %4513 = vmatprep.subr.mxu0 0.0
      %4514 = vmatpush1.msra.mxu0 0.0
      %4515 = vmatprep.subr.mxu0 0.0
      %4516 = vmatpush1.msra.mxu0 0.0
      %4517 = vmatprep.subr.mxu0 0.0
      %4518 = vmatpush1.msra.mxu0 0.0
      %4519 = vmatprep.subr.mxu0 0.0
      %4520 = vmatpush1.msra.mxu0 0.0
      %4521 = vmatprep.subr.mxu0 0.0
      %4522 = vmatpush1.msra.mxu0 0.0
      %4523 = vmatprep.subr.mxu0 0.0
      %4524 = vmatpush1.msra.mxu0 0.0
      %4525 = vmatprep.mubr.f32.mxu0 0.0
      %v4526 = vand.u32 %v4005, 4294901760
      %4527 = vmatmul.mubr.f32.gmra.mrb[0].mxu0 %v4526
      %v4528 = vpop.f32.mrb[0].mxu0
      %v4529 = vadd.f32 %v4448, %v4528
      %v4530 = vpop.f32.mrb[0].mxu0
      %4531 = vmatprep.mubr.f32.mxu0 0.0
      %v4532 = vand.u32 %v4008, 4294901760
      %4533 = vmatmul.mubr.f32.gmra.mrb[0].mxu0 %v4532
      %v4534 = vpop.f32.mrb[0].mxu0
      %v4535 = vadd.f32 %v4454, %v4534
      %v4536 = vpop.f32.mrb[0].mxu0
      %4537 = vdwg.mxu0
      %v4538 = vadd.f32 %v3401, %v4529
      %v4539 = vadd.f32 %v3407, %v4535
      %s4540 = scalar_lea.vmem %s2, 48
      %v4541 = vld [vmem:[%s4540] sm:$0xff]
      %v4542 = vld [vmem:[%s4540 + $0x8] sm:$0xff]
      %v4544 = vsel %vm1157, %v4541, 0
      %v4547 = vsel %vm1157, %v4542, 0
      %4549 = vmatprep.subr.mxu0 0.0
      %v4550 = vand.u32 %v1147, 4294901760
      %4551 = vmatpush1.msra.mxu0 %v4550
      %4552 = vmatprep.subr.mxu0 0.0
      %v4553 = vand.u32 %v1148, 4294901760
      %4554 = vmatpush1.msra.mxu0 %v4553
      %4555 = vmatprep.subr.mxu0 0.0
      %v4556 = vand.u32 %v1149, 4294901760
      %4557 = vmatpush1.msra.mxu0 %v4556
      %4558 = vmatprep.subr.mxu0 0.0
      %v4559 = vand.u32 %v1150, 4294901760
      %4560 = vmatpush1.msra.mxu0 %v4559
      %4561 = vmatprep.subr.mxu0 0.0
      %v4562 = vand.u32 %v1151, 4294901760
      %4563 = vmatpush1.msra.mxu0 %v4562
      %4564 = vmatprep.subr.mxu0 0.0
      %v4565 = vand.u32 %v1152, 4294901760
      %4566 = vmatpush1.msra.mxu0 %v4565
      %4567 = vmatprep.subr.mxu0 0.0
      %v4568 = vand.u32 %v1153, 4294901760
      %4569 = vmatpush1.msra.mxu0 %v4568
      %4570 = vmatprep.subr.mxu0 0.0
      %v4571 = vand.u32 %v1154, 4294901760
      %4572 = vmatpush1.msra.mxu0 %v4571
      %4573 = vmatprep.subr.mxu0 0.0
      %4574 = vmatpush1.msra.mxu0 0.0
      %4575 = vmatprep.subr.mxu0 0.0
      %4576 = vmatpush1.msra.mxu0 0.0
      %4577 = vmatprep.subr.mxu0 0.0
      %4578 = vmatpush1.msra.mxu0 0.0
      %4579 = vmatprep.subr.mxu0 0.0
      %4580 = vmatpush1.msra.mxu0 0.0
      %4581 = vmatprep.subr.mxu0 0.0
      %4582 = vmatpush1.msra.mxu0 0.0
      %4583 = vmatprep.subr.mxu0 0.0
      %4584 = vmatpush1.msra.mxu0 0.0
      %4585 = vmatprep.subr.mxu0 0.0
      %4586 = vmatpush1.msra.mxu0 0.0
      %4587 = vmatprep.subr.mxu0 0.0
      %4588 = vmatpush1.msra.mxu0 0.0
      %4589 = vmatprep.subr.mxu0 0.0
      %4590 = vmatpush1.msra.mxu0 0.0
      %4591 = vmatprep.subr.mxu0 0.0
      %4592 = vmatpush1.msra.mxu0 0.0
      %4593 = vmatprep.subr.mxu0 0.0
      %4594 = vmatpush1.msra.mxu0 0.0
      %4595 = vmatprep.subr.mxu0 0.0
      %4596 = vmatpush1.msra.mxu0 0.0
      %4597 = vmatprep.subr.mxu0 0.0
      %4598 = vmatpush1.msra.mxu0 0.0
      %4599 = vmatprep.subr.mxu0 0.0
      %4600 = vmatpush1.msra.mxu0 0.0
      %4601 = vmatprep.subr.mxu0 0.0
      %4602 = vmatpush1.msra.mxu0 0.0
      %4603 = vmatprep.subr.mxu0 0.0
      %4604 = vmatpush1.msra.mxu0 0.0
      %4605 = vmatprep.subr.mxu0 0.0
      %4606 = vmatpush1.msra.mxu0 0.0
      %4607 = vmatprep.subr.mxu0 0.0
      %4608 = vmatpush1.msra.mxu0 0.0
      %4609 = vmatprep.subr.mxu0 0.0
      %4610 = vmatpush1.msra.mxu0 0.0
      %4611 = vmatprep.subr.mxu0 0.0
      %4612 = vmatpush1.msra.mxu0 0.0
      %4613 = vmatprep.subr.mxu0 0.0
      %4614 = vmatpush1.msra.mxu0 0.0
      %4615 = vmatprep.subr.mxu0 0.0
      %4616 = vmatpush1.msra.mxu0 0.0
      %4617 = vmatprep.subr.mxu0 0.0
      %4618 = vmatpush1.msra.mxu0 0.0
      %4619 = vmatprep.subr.mxu0 0.0
      %4620 = vmatpush1.msra.mxu0 0.0
      %4621 = vmatprep.mubr.f32.mxu0 0.0
      %v4622 = vand.u32 %v4544, 4294901760
      %v4623 = vsub.f32 %v4544, %v4622
      %v4624 = vand.u32 %v4623, 4294901760
      %v4625 = vsub.f32 %v4623, %v4624
      %v4626 = vand.u32 %v4625, 4294901760
      %4627 = vmatmul.mubr.f32.gmra.mrb[0].mxu0 %v4626
      %v4628 = vpop.f32.mrb[0].mxu0
      %v4629 = vadd.f32 0.0, %v4628
      %v4630 = vpop.f32.mrb[0].mxu0
      %4631 = vmatprep.mubr.f32.mxu0 0.0
      %v4632 = vand.u32 %v4547, 4294901760
      %v4633 = vsub.f32 %v4547, %v4632
      %v4634 = vand.u32 %v4633, 4294901760
      %v4635 = vsub.f32 %v4633, %v4634
      %v4636 = vand.u32 %v4635, 4294901760
      %4637 = vmatmul.mubr.f32.gmra.mrb[0].mxu0 %v4636
      %v4638 = vpop.f32.mrb[0].mxu0
      %v4639 = vadd.f32 0.0, %v4638
      %v4640 = vpop.f32.mrb[0].mxu0
      %4641 = vdwg.mxu0
      %4642 = vmatprep.subr.mxu0 0.0
      %v4643 = vand.u32 %v1147, 4294901760
      %v4644 = vsub.f32 %v1147, %v4643
      %v4645 = vand.u32 %v4644, 4294901760
      %v4646 = vsub.f32 %v4644, %v4645
      %v4647 = vand.u32 %v4646, 4294901760
      %4648 = vmatpush1.msra.mxu0 %v4647
      %4649 = vmatprep.subr.mxu0 0.0
      %v4650 = vand.u32 %v1148, 4294901760
      %v4651 = vsub.f32 %v1148, %v4650
      %v4652 = vand.u32 %v4651, 4294901760
      %v4653 = vsub.f32 %v4651, %v4652
      %v4654 = vand.u32 %v4653, 4294901760
      %4655 = vmatpush1.msra.mxu0 %v4654
      %4656 = vmatprep.subr.mxu0 0.0
      %v4657 = vand.u32 %v1149, 4294901760
      %v4658 = vsub.f32 %v1149, %v4657
      %v4659 = vand.u32 %v4658, 4294901760
      %v4660 = vsub.f32 %v4658, %v4659
      %v4661 = vand.u32 %v4660, 4294901760
      %4662 = vmatpush1.msra.mxu0 %v4661
      %4663 = vmatprep.subr.mxu0 0.0
      %v4664 = vand.u32 %v1150, 4294901760
      %v4665 = vsub.f32 %v1150, %v4664
      %v4666 = vand.u32 %v4665, 4294901760
      %v4667 = vsub.f32 %v4665, %v4666
      %v4668 = vand.u32 %v4667, 4294901760
      %4669 = vmatpush1.msra.mxu0 %v4668
      %4670 = vmatprep.subr.mxu0 0.0
      %v4671 = vand.u32 %v1151, 4294901760
      %v4672 = vsub.f32 %v1151, %v4671
      %v4673 = vand.u32 %v4672, 4294901760
      %v4674 = vsub.f32 %v4672, %v4673
      %v4675 = vand.u32 %v4674, 4294901760
      %4676 = vmatpush1.msra.mxu0 %v4675
      %4677 = vmatprep.subr.mxu0 0.0
      %v4678 = vand.u32 %v1152, 4294901760
      %v4679 = vsub.f32 %v1152, %v4678
      %v4680 = vand.u32 %v4679, 4294901760
      %v4681 = vsub.f32 %v4679, %v4680
      %v4682 = vand.u32 %v4681, 4294901760
      %4683 = vmatpush1.msra.mxu0 %v4682
      %4684 = vmatprep.subr.mxu0 0.0
      %v4685 = vand.u32 %v1153, 4294901760
      %v4686 = vsub.f32 %v1153, %v4685
      %v4687 = vand.u32 %v4686, 4294901760
      %v4688 = vsub.f32 %v4686, %v4687
      %v4689 = vand.u32 %v4688, 4294901760
      %4690 = vmatpush1.msra.mxu0 %v4689
      %4691 = vmatprep.subr.mxu0 0.0
      %v4692 = vand.u32 %v1154, 4294901760
      %v4693 = vsub.f32 %v1154, %v4692
      %v4694 = vand.u32 %v4693, 4294901760
      %v4695 = vsub.f32 %v4693, %v4694
      %v4696 = vand.u32 %v4695, 4294901760
      %4697 = vmatpush1.msra.mxu0 %v4696
      %4698 = vmatprep.subr.mxu0 0.0
      %4699 = vmatpush1.msra.mxu0 0.0
      %4700 = vmatprep.subr.mxu0 0.0
      %4701 = vmatpush1.msra.mxu0 0.0
      %4702 = vmatprep.subr.mxu0 0.0
      %4703 = vmatpush1.msra.mxu0 0.0
      %4704 = vmatprep.subr.mxu0 0.0
      %4705 = vmatpush1.msra.mxu0 0.0
      %4706 = vmatprep.subr.mxu0 0.0
      %4707 = vmatpush1.msra.mxu0 0.0
      %4708 = vmatprep.subr.mxu0 0.0
      %4709 = vmatpush1.msra.mxu0 0.0
      %4710 = vmatprep.subr.mxu0 0.0
      %4711 = vmatpush1.msra.mxu0 0.0
      %4712 = vmatprep.subr.mxu0 0.0
      %4713 = vmatpush1.msra.mxu0 0.0
      %4714 = vmatprep.subr.mxu0 0.0
      %4715 = vmatpush1.msra.mxu0 0.0
      %4716 = vmatprep.subr.mxu0 0.0
      %4717 = vmatpush1.msra.mxu0 0.0
      %4718 = vmatprep.subr.mxu0 0.0
      %4719 = vmatpush1.msra.mxu0 0.0
      %4720 = vmatprep.subr.mxu0 0.0
      %4721 = vmatpush1.msra.mxu0 0.0
      %4722 = vmatprep.subr.mxu0 0.0
      %4723 = vmatpush1.msra.mxu0 0.0
      %4724 = vmatprep.subr.mxu0 0.0
      %4725 = vmatpush1.msra.mxu0 0.0
      %4726 = vmatprep.subr.mxu0 0.0
      %4727 = vmatpush1.msra.mxu0 0.0
      %4728 = vmatprep.subr.mxu0 0.0
      %4729 = vmatpush1.msra.mxu0 0.0
      %4730 = vmatprep.subr.mxu0 0.0
      %4731 = vmatpush1.msra.mxu0 0.0
      %4732 = vmatprep.subr.mxu0 0.0
      %4733 = vmatpush1.msra.mxu0 0.0
      %4734 = vmatprep.subr.mxu0 0.0
      %4735 = vmatpush1.msra.mxu0 0.0
      %4736 = vmatprep.subr.mxu0 0.0
      %4737 = vmatpush1.msra.mxu0 0.0
      %4738 = vmatprep.subr.mxu0 0.0
      %4739 = vmatpush1.msra.mxu0 0.0
      %4740 = vmatprep.subr.mxu0 0.0
      %4741 = vmatpush1.msra.mxu0 0.0
      %4742 = vmatprep.subr.mxu0 0.0
      %4743 = vmatpush1.msra.mxu0 0.0
      %4744 = vmatprep.subr.mxu0 0.0
      %4745 = vmatpush1.msra.mxu0 0.0
      %4746 = vmatprep.mubr.f32.mxu0 0.0
      %v4747 = vand.u32 %v4544, 4294901760
      %4748 = vmatmul.mubr.f32.gmra.mrb[0].mxu0 %v4747
      %v4749 = vpop.f32.mrb[0].mxu0
      %v4750 = vadd.f32 %v4629, %v4749
      %v4751 = vpop.f32.mrb[0].mxu0
      %4752 = vmatprep.mubr.f32.mxu0 0.0
      %v4753 = vand.u32 %v4547, 4294901760
      %4754 = vmatmul.mubr.f32.gmra.mrb[0].mxu0 %v4753
      %v4755 = vpop.f32.mrb[0].mxu0
      %v4756 = vadd.f32 %v4639, %v4755
      %v4757 = vpop.f32.mrb[0].mxu0
      %4758 = vdwg.mxu0
      %4759 = vmatprep.subr.mxu0 0.0
      %v4760 = vand.u32 %v1147, 4294901760
      %v4761 = vsub.f32 %v1147, %v4760
      %4762 = vmatpush1.msra.mxu0 %v4761
      %4763 = vmatprep.subr.mxu0 0.0
      %v4764 = vand.u32 %v1148, 4294901760
      %v4765 = vsub.f32 %v1148, %v4764
      %4766 = vmatpush1.msra.mxu0 %v4765
      %4767 = vmatprep.subr.mxu0 0.0
      %v4768 = vand.u32 %v1149, 4294901760
      %v4769 = vsub.f32 %v1149, %v4768
      %4770 = vmatpush1.msra.mxu0 %v4769
      %4771 = vmatprep.subr.mxu0 0.0
      %v4772 = vand.u32 %v1150, 4294901760
      %v4773 = vsub.f32 %v1150, %v4772
      %4774 = vmatpush1.msra.mxu0 %v4773
      %4775 = vmatprep.subr.mxu0 0.0
      %v4776 = vand.u32 %v1151, 4294901760
      %v4777 = vsub.f32 %v1151, %v4776
      %4778 = vmatpush1.msra.mxu0 %v4777
      %4779 = vmatprep.subr.mxu0 0.0
      %v4780 = vand.u32 %v1152, 4294901760
      %v4781 = vsub.f32 %v1152, %v4780
      %4782 = vmatpush1.msra.mxu0 %v4781
      %4783 = vmatprep.subr.mxu0 0.0
      %v4784 = vand.u32 %v1153, 4294901760
      %v4785 = vsub.f32 %v1153, %v4784
      %4786 = vmatpush1.msra.mxu0 %v4785
      %4787 = vmatprep.subr.mxu0 0.0
      %v4788 = vand.u32 %v1154, 4294901760
      %v4789 = vsub.f32 %v1154, %v4788
      %4790 = vmatpush1.msra.mxu0 %v4789
      %4791 = vmatprep.subr.mxu0 0.0
      %4792 = vmatpush1.msra.mxu0 0.0
      %4793 = vmatprep.subr.mxu0 0.0
      %4794 = vmatpush1.msra.mxu0 0.0
      %4795 = vmatprep.subr.mxu0 0.0
      %4796 = vmatpush1.msra.mxu0 0.0
      %4797 = vmatprep.subr.mxu0 0.0
      %4798 = vmatpush1.msra.mxu0 0.0
      %4799 = vmatprep.subr.mxu0 0.0
      %4800 = vmatpush1.msra.mxu0 0.0
      %4801 = vmatprep.subr.mxu0 0.0
      %4802 = vmatpush1.msra.mxu0 0.0
      %4803 = vmatprep.subr.mxu0 0.0
      %4804 = vmatpush1.msra.mxu0 0.0
      %4805 = vmatprep.subr.mxu0 0.0
      %4806 = vmatpush1.msra.mxu0 0.0
      %4807 = vmatprep.subr.mxu0 0.0
      %4808 = vmatpush1.msra.mxu0 0.0
      %4809 = vmatprep.subr.mxu0 0.0
      %4810 = vmatpush1.msra.mxu0 0.0
      %4811 = vmatprep.subr.mxu0 0.0
      %4812 = vmatpush1.msra.mxu0 0.0
      %4813 = vmatprep.subr.mxu0 0.0
      %4814 = vmatpush1.msra.mxu0 0.0
      %4815 = vmatprep.subr.mxu0 0.0
      %4816 = vmatpush1.msra.mxu0 0.0
      %4817 = vmatprep.subr.mxu0 0.0
      %4818 = vmatpush1.msra.mxu0 0.0
      %4819 = vmatprep.subr.mxu0 0.0
      %4820 = vmatpush1.msra.mxu0 0.0
      %4821 = vmatprep.subr.mxu0 0.0
      %4822 = vmatpush1.msra.mxu0 0.0
      %4823 = vmatprep.subr.mxu0 0.0
      %4824 = vmatpush1.msra.mxu0 0.0
      %4825 = vmatprep.subr.mxu0 0.0
      %4826 = vmatpush1.msra.mxu0 0.0
      %4827 = vmatprep.subr.mxu0 0.0
      %4828 = vmatpush1.msra.mxu0 0.0
      %4829 = vmatprep.subr.mxu0 0.0
      %4830 = vmatpush1.msra.mxu0 0.0
      %4831 = vmatprep.subr.mxu0 0.0
      %4832 = vmatpush1.msra.mxu0 0.0
      %4833 = vmatprep.subr.mxu0 0.0
      %4834 = vmatpush1.msra.mxu0 0.0
      %4835 = vmatprep.subr.mxu0 0.0
      %4836 = vmatpush1.msra.mxu0 0.0
      %4837 = vmatprep.subr.mxu0 0.0
      %4838 = vmatpush1.msra.mxu0 0.0
      %4839 = vmatprep.mubr.f32.mxu0 0.0
      %v4840 = vand.u32 %v4544, 4294901760
      %v4841 = vsub.f32 %v4544, %v4840
      %4842 = vmatmul.mubr.f32.gmra.mrb[0].mxu0 %v4841
      %v4843 = vpop.f32.mrb[0].mxu0
      %v4844 = vadd.f32 %v4750, %v4843
      %v4845 = vpop.f32.mrb[0].mxu0
      %4846 = vmatprep.mubr.f32.mxu0 0.0
      %v4847 = vand.u32 %v4547, 4294901760
      %v4848 = vsub.f32 %v4547, %v4847
      %4849 = vmatmul.mubr.f32.gmra.mrb[0].mxu0 %v4848
      %v4850 = vpop.f32.mrb[0].mxu0
      %v4851 = vadd.f32 %v4756, %v4850
      %v4852 = vpop.f32.mrb[0].mxu0
      %4853 = vdwg.mxu0
      %4854 = vmatprep.subr.mxu0 0.0
      %v4855 = vand.u32 %v1147, 4294901760
      %4856 = vmatpush1.msra.mxu0 %v4855
      %4857 = vmatprep.subr.mxu0 0.0
      %v4858 = vand.u32 %v1148, 4294901760
      %4859 = vmatpush1.msra.mxu0 %v4858
      %4860 = vmatprep.subr.mxu0 0.0
      %v4861 = vand.u32 %v1149, 4294901760
      %4862 = vmatpush1.msra.mxu0 %v4861
      %4863 = vmatprep.subr.mxu0 0.0
      %v4864 = vand.u32 %v1150, 4294901760
      %4865 = vmatpush1.msra.mxu0 %v4864
      %4866 = vmatprep.subr.mxu0 0.0
      %v4867 = vand.u32 %v1151, 4294901760
      %4868 = vmatpush1.msra.mxu0 %v4867
      %4869 = vmatprep.subr.mxu0 0.0
      %v4870 = vand.u32 %v1152, 4294901760
      %4871 = vmatpush1.msra.mxu0 %v4870
      %4872 = vmatprep.subr.mxu0 0.0
      %v4873 = vand.u32 %v1153, 4294901760
      %4874 = vmatpush1.msra.mxu0 %v4873
      %4875 = vmatprep.subr.mxu0 0.0
      %v4876 = vand.u32 %v1154, 4294901760
      %4877 = vmatpush1.msra.mxu0 %v4876
      %4878 = vmatprep.subr.mxu0 0.0
      %4879 = vmatpush1.msra.mxu0 0.0
      %4880 = vmatprep.subr.mxu0 0.0
      %4881 = vmatpush1.msra.mxu0 0.0
      %4882 = vmatprep.subr.mxu0 0.0
      %4883 = vmatpush1.msra.mxu0 0.0
      %4884 = vmatprep.subr.mxu0 0.0
      %4885 = vmatpush1.msra.mxu0 0.0
      %4886 = vmatprep.subr.mxu0 0.0
      %4887 = vmatpush1.msra.mxu0 0.0
      %4888 = vmatprep.subr.mxu0 0.0
      %4889 = vmatpush1.msra.mxu0 0.0
      %4890 = vmatprep.subr.mxu0 0.0
      %4891 = vmatpush1.msra.mxu0 0.0
      %4892 = vmatprep.subr.mxu0 0.0
      %4893 = vmatpush1.msra.mxu0 0.0
      %4894 = vmatprep.subr.mxu0 0.0
      %4895 = vmatpush1.msra.mxu0 0.0
      %4896 = vmatprep.subr.mxu0 0.0
      %4897 = vmatpush1.msra.mxu0 0.0
      %4898 = vmatprep.subr.mxu0 0.0
      %4899 = vmatpush1.msra.mxu0 0.0
      %4900 = vmatprep.subr.mxu0 0.0
      %4901 = vmatpush1.msra.mxu0 0.0
      %4902 = vmatprep.subr.mxu0 0.0
      %4903 = vmatpush1.msra.mxu0 0.0
      %4904 = vmatprep.subr.mxu0 0.0
      %4905 = vmatpush1.msra.mxu0 0.0
      %4906 = vmatprep.subr.mxu0 0.0
      %4907 = vmatpush1.msra.mxu0 0.0
      %4908 = vmatprep.subr.mxu0 0.0
      %4909 = vmatpush1.msra.mxu0 0.0
      %4910 = vmatprep.subr.mxu0 0.0
      %4911 = vmatpush1.msra.mxu0 0.0
      %4912 = vmatprep.subr.mxu0 0.0
      %4913 = vmatpush1.msra.mxu0 0.0
      %4914 = vmatprep.subr.mxu0 0.0
      %4915 = vmatpush1.msra.mxu0 0.0
      %4916 = vmatprep.subr.mxu0 0.0
      %4917 = vmatpush1.msra.mxu0 0.0
      %4918 = vmatprep.subr.mxu0 0.0
      %4919 = vmatpush1.msra.mxu0 0.0
      %4920 = vmatprep.subr.mxu0 0.0
      %4921 = vmatpush1.msra.mxu0 0.0
      %4922 = vmatprep.subr.mxu0 0.0
      %4923 = vmatpush1.msra.mxu0 0.0
      %4924 = vmatprep.subr.mxu0 0.0
      %4925 = vmatpush1.msra.mxu0 0.0
      %4926 = vmatprep.mubr.f32.mxu0 0.0
      %v4927 = vand.u32 %v4544, 4294901760
      %v4928 = vsub.f32 %v4544, %v4927
      %v4929 = vand.u32 %v4928, 4294901760
      %4930 = vmatmul.mubr.f32.gmra.mrb[0].mxu0 %v4929
      %v4931 = vpop.f32.mrb[0].mxu0
      %v4932 = vadd.f32 %v4844, %v4931
      %v4933 = vpop.f32.mrb[0].mxu0
      %4934 = vmatprep.mubr.f32.mxu0 0.0
      %v4935 = vand.u32 %v4547, 4294901760
      %v4936 = vsub.f32 %v4547, %v4935
      %v4937 = vand.u32 %v4936, 4294901760
      %4938 = vmatmul.mubr.f32.gmra.mrb[0].mxu0 %v4937
      %v4939 = vpop.f32.mrb[0].mxu0
      %v4940 = vadd.f32 %v4851, %v4939
      %v4941 = vpop.f32.mrb[0].mxu0
      %4942 = vdwg.mxu0
      %4943 = vmatprep.subr.mxu0 0.0
      %v4944 = vand.u32 %v1147, 4294901760
      %v4945 = vsub.f32 %v1147, %v4944
      %v4946 = vand.u32 %v4945, 4294901760
      %4947 = vmatpush1.msra.mxu0 %v4946
      %4948 = vmatprep.subr.mxu0 0.0
      %v4949 = vand.u32 %v1148, 4294901760
      %v4950 = vsub.f32 %v1148, %v4949
      %v4951 = vand.u32 %v4950, 4294901760
      %4952 = vmatpush1.msra.mxu0 %v4951
      %4953 = vmatprep.subr.mxu0 0.0
      %v4954 = vand.u32 %v1149, 4294901760
      %v4955 = vsub.f32 %v1149, %v4954
      %v4956 = vand.u32 %v4955, 4294901760
      %4957 = vmatpush1.msra.mxu0 %v4956
      %4958 = vmatprep.subr.mxu0 0.0
      %v4959 = vand.u32 %v1150, 4294901760
      %v4960 = vsub.f32 %v1150, %v4959
      %v4961 = vand.u32 %v4960, 4294901760
      %4962 = vmatpush1.msra.mxu0 %v4961
      %4963 = vmatprep.subr.mxu0 0.0
      %v4964 = vand.u32 %v1151, 4294901760
      %v4965 = vsub.f32 %v1151, %v4964
      %v4966 = vand.u32 %v4965, 4294901760
      %4967 = vmatpush1.msra.mxu0 %v4966
      %4968 = vmatprep.subr.mxu0 0.0
      %v4969 = vand.u32 %v1152, 4294901760
      %v4970 = vsub.f32 %v1152, %v4969
      %v4971 = vand.u32 %v4970, 4294901760
      %4972 = vmatpush1.msra.mxu0 %v4971
      %4973 = vmatprep.subr.mxu0 0.0
      %v4974 = vand.u32 %v1153, 4294901760
      %v4975 = vsub.f32 %v1153, %v4974
      %v4976 = vand.u32 %v4975, 4294901760
      %4977 = vmatpush1.msra.mxu0 %v4976
      %4978 = vmatprep.subr.mxu0 0.0
      %v4979 = vand.u32 %v1154, 4294901760
      %v4980 = vsub.f32 %v1154, %v4979
      %v4981 = vand.u32 %v4980, 4294901760
      %4982 = vmatpush1.msra.mxu0 %v4981
      %4983 = vmatprep.subr.mxu0 0.0
      %4984 = vmatpush1.msra.mxu0 0.0
      %4985 = vmatprep.subr.mxu0 0.0
      %4986 = vmatpush1.msra.mxu0 0.0
      %4987 = vmatprep.subr.mxu0 0.0
      %4988 = vmatpush1.msra.mxu0 0.0
      %4989 = vmatprep.subr.mxu0 0.0
      %4990 = vmatpush1.msra.mxu0 0.0
      %4991 = vmatprep.subr.mxu0 0.0
      %4992 = vmatpush1.msra.mxu0 0.0
      %4993 = vmatprep.subr.mxu0 0.0
      %4994 = vmatpush1.msra.mxu0 0.0
      %4995 = vmatprep.subr.mxu0 0.0
      %4996 = vmatpush1.msra.mxu0 0.0
      %4997 = vmatprep.subr.mxu0 0.0
      %4998 = vmatpush1.msra.mxu0 0.0
      %4999 = vmatprep.subr.mxu0 0.0
      %5000 = vmatpush1.msra.mxu0 0.0
      %5001 = vmatprep.subr.mxu0 0.0
      %5002 = vmatpush1.msra.mxu0 0.0
      %5003 = vmatprep.subr.mxu0 0.0
      %5004 = vmatpush1.msra.mxu0 0.0
      %5005 = vmatprep.subr.mxu0 0.0
      %5006 = vmatpush1.msra.mxu0 0.0
      %5007 = vmatprep.subr.mxu0 0.0
      %5008 = vmatpush1.msra.mxu0 0.0
      %5009 = vmatprep.subr.mxu0 0.0
      %5010 = vmatpush1.msra.mxu0 0.0
      %5011 = vmatprep.subr.mxu0 0.0
      %5012 = vmatpush1.msra.mxu0 0.0
      %5013 = vmatprep.subr.mxu0 0.0
      %5014 = vmatpush1.msra.mxu0 0.0
      %5015 = vmatprep.subr.mxu0 0.0
      %5016 = vmatpush1.msra.mxu0 0.0
      %5017 = vmatprep.subr.mxu0 0.0
      %5018 = vmatpush1.msra.mxu0 0.0
      %5019 = vmatprep.subr.mxu0 0.0
      %5020 = vmatpush1.msra.mxu0 0.0
      %5021 = vmatprep.subr.mxu0 0.0
      %5022 = vmatpush1.msra.mxu0 0.0
      %5023 = vmatprep.subr.mxu0 0.0
      %5024 = vmatpush1.msra.mxu0 0.0
      %5025 = vmatprep.subr.mxu0 0.0
      %5026 = vmatpush1.msra.mxu0 0.0
      %5027 = vmatprep.subr.mxu0 0.0
      %5028 = vmatpush1.msra.mxu0 0.0
      %5029 = vmatprep.subr.mxu0 0.0
      %5030 = vmatpush1.msra.mxu0 0.0
      %5031 = vmatprep.mubr.f32.mxu0 0.0
      %v5032 = vand.u32 %v4544, 4294901760
      %5033 = vmatmul.mubr.f32.gmra.mrb[0].mxu0 %v5032
      %v5034 = vpop.f32.mrb[0].mxu0
      %v5035 = vadd.f32 %v4932, %v5034
      %v5036 = vpop.f32.mrb[0].mxu0
      %5037 = vmatprep.mubr.f32.mxu0 0.0
      %v5038 = vand.u32 %v4547, 4294901760
      %5039 = vmatmul.mubr.f32.gmra.mrb[0].mxu0 %v5038
      %v5040 = vpop.f32.mrb[0].mxu0
      %v5041 = vadd.f32 %v4940, %v5040
      %v5042 = vpop.f32.mrb[0].mxu0
      %5043 = vdwg.mxu0
      %5044 = vmatprep.subr.mxu0 0.0
      %v5045 = vand.u32 %v1147, 4294901760
      %5046 = vmatpush1.msra.mxu0 %v5045
      %5047 = vmatprep.subr.mxu0 0.0
      %v5048 = vand.u32 %v1148, 4294901760
      %5049 = vmatpush1.msra.mxu0 %v5048
      %5050 = vmatprep.subr.mxu0 0.0
      %v5051 = vand.u32 %v1149, 4294901760
      %5052 = vmatpush1.msra.mxu0 %v5051
      %5053 = vmatprep.subr.mxu0 0.0
      %v5054 = vand.u32 %v1150, 4294901760
      %5055 = vmatpush1.msra.mxu0 %v5054
      %5056 = vmatprep.subr.mxu0 0.0
      %v5057 = vand.u32 %v1151, 4294901760
      %5058 = vmatpush1.msra.mxu0 %v5057
      %5059 = vmatprep.subr.mxu0 0.0
      %v5060 = vand.u32 %v1152, 4294901760
      %5061 = vmatpush1.msra.mxu0 %v5060
      %5062 = vmatprep.subr.mxu0 0.0
      %v5063 = vand.u32 %v1153, 4294901760
      %5064 = vmatpush1.msra.mxu0 %v5063
      %5065 = vmatprep.subr.mxu0 0.0
      %v5066 = vand.u32 %v1154, 4294901760
      %5067 = vmatpush1.msra.mxu0 %v5066
      %5068 = vmatprep.subr.mxu0 0.0
      %5069 = vmatpush1.msra.mxu0 0.0
      %5070 = vmatprep.subr.mxu0 0.0
      %5071 = vmatpush1.msra.mxu0 0.0
      %5072 = vmatprep.subr.mxu0 0.0
      %5073 = vmatpush1.msra.mxu0 0.0
      %5074 = vmatprep.subr.mxu0 0.0
      %5075 = vmatpush1.msra.mxu0 0.0
      %5076 = vmatprep.subr.mxu0 0.0
      %5077 = vmatpush1.msra.mxu0 0.0
      %5078 = vmatprep.subr.mxu0 0.0
      %5079 = vmatpush1.msra.mxu0 0.0
      %5080 = vmatprep.subr.mxu0 0.0
      %5081 = vmatpush1.msra.mxu0 0.0
      %5082 = vmatprep.subr.mxu0 0.0
      %5083 = vmatpush1.msra.mxu0 0.0
      %5084 = vmatprep.subr.mxu0 0.0
      %5085 = vmatpush1.msra.mxu0 0.0
      %5086 = vmatprep.subr.mxu0 0.0
      %5087 = vmatpush1.msra.mxu0 0.0
      %5088 = vmatprep.subr.mxu0 0.0
      %5089 = vmatpush1.msra.mxu0 0.0
      %5090 = vmatprep.subr.mxu0 0.0
      %5091 = vmatpush1.msra.mxu0 0.0
      %5092 = vmatprep.subr.mxu0 0.0
      %5093 = vmatpush1.msra.mxu0 0.0
      %5094 = vmatprep.subr.mxu0 0.0
      %5095 = vmatpush1.msra.mxu0 0.0
      %5096 = vmatprep.subr.mxu0 0.0
      %5097 = vmatpush1.msra.mxu0 0.0
      %5098 = vmatprep.subr.mxu0 0.0
      %5099 = vmatpush1.msra.mxu0 0.0
      %5100 = vmatprep.subr.mxu0 0.0
      %5101 = vmatpush1.msra.mxu0 0.0
      %5102 = vmatprep.subr.mxu0 0.0
      %5103 = vmatpush1.msra.mxu0 0.0
      %5104 = vmatprep.subr.mxu0 0.0
      %5105 = vmatpush1.msra.mxu0 0.0
      %5106 = vmatprep.subr.mxu0 0.0
      %5107 = vmatpush1.msra.mxu0 0.0
      %5108 = vmatprep.subr.mxu0 0.0
      %5109 = vmatpush1.msra.mxu0 0.0
      %5110 = vmatprep.subr.mxu0 0.0
      %5111 = vmatpush1.msra.mxu0 0.0
      %5112 = vmatprep.subr.mxu0 0.0
      %5113 = vmatpush1.msra.mxu0 0.0
      %5114 = vmatprep.subr.mxu0 0.0
      %5115 = vmatpush1.msra.mxu0 0.0
      %5116 = vmatprep.mubr.f32.mxu0 0.0
      %v5117 = vand.u32 %v4544, 4294901760
      %5118 = vmatmul.mubr.f32.gmra.mrb[0].mxu0 %v5117
      %v5119 = vpop.f32.mrb[0].mxu0
      %v5120 = vadd.f32 %v5035, %v5119
      %v5121 = vpop.f32.mrb[0].mxu0
      %5122 = vmatprep.mubr.f32.mxu0 0.0
      %v5123 = vand.u32 %v4547, 4294901760
      %5124 = vmatmul.mubr.f32.gmra.mrb[0].mxu0 %v5123
      %v5125 = vpop.f32.mrb[0].mxu0
      %v5126 = vadd.f32 %v5041, %v5125
      %v5127 = vpop.f32.mrb[0].mxu0
      %5128 = vdwg.mxu0
      %s5129 = scalar_lea.vmem %s3, 96
      %v5130 = vld [vmem:[%s5129] sm:$0xff]
      %v5131 = vld [vmem:[%s5129 + $0x8] sm:$0xff]
      %v5132 = vld [vmem:[%s5129 + $0x10] sm:$0xff]
      %v5133 = vld [vmem:[%s5129 + $0x18] sm:$0xff]
      %v5135 = vsel %vm1039, %v5120, 0
      %v5138 = vsel %vm1039, %v5126, 0
      %5140 = vmatprep.subr.mxu0 0.0
      %v5141 = vand.u32 %v5130, 4294901760
      %5142 = vmatpush1.msra.mxu0 %v5141
      %5143 = vmatprep.subr.mxu0 0.0
      %v5144 = vand.u32 %v5131, 4294901760
      %5145 = vmatpush1.msra.mxu0 %v5144
      %5146 = vmatprep.subr.mxu0 0.0
      %v5147 = vand.u32 %v5132, 4294901760
      %5148 = vmatpush1.msra.mxu0 %v5147
      %5149 = vmatprep.subr.mxu0 0.0
      %v5150 = vand.u32 %v5133, 4294901760
      %5151 = vmatpush1.msra.mxu0 %v5150
      %5152 = vmatprep.subr.mxu0 0.0
      %5153 = vmatpush1.msra.mxu0 0.0
      %5154 = vmatprep.subr.mxu0 0.0
      %5155 = vmatpush1.msra.mxu0 0.0
      %5156 = vmatprep.subr.mxu0 0.0
      %5157 = vmatpush1.msra.mxu0 0.0
      %5158 = vmatprep.subr.mxu0 0.0
      %5159 = vmatpush1.msra.mxu0 0.0
      %5160 = vmatprep.subr.mxu0 0.0
      %5161 = vmatpush1.msra.mxu0 0.0
      %5162 = vmatprep.subr.mxu0 0.0
      %5163 = vmatpush1.msra.mxu0 0.0
      %5164 = vmatprep.subr.mxu0 0.0
      %5165 = vmatpush1.msra.mxu0 0.0
      %5166 = vmatprep.subr.mxu0 0.0
      %5167 = vmatpush1.msra.mxu0 0.0
      %5168 = vmatprep.subr.mxu0 0.0
      %5169 = vmatpush1.msra.mxu0 0.0
      %5170 = vmatprep.subr.mxu0 0.0
      %5171 = vmatpush1.msra.mxu0 0.0
      %5172 = vmatprep.subr.mxu0 0.0
      %5173 = vmatpush1.msra.mxu0 0.0
      %5174 = vmatprep.subr.mxu0 0.0
      %5175 = vmatpush1.msra.mxu0 0.0
      %5176 = vmatprep.subr.mxu0 0.0
      %5177 = vmatpush1.msra.mxu0 0.0
      %5178 = vmatprep.subr.mxu0 0.0
      %5179 = vmatpush1.msra.mxu0 0.0
      %5180 = vmatprep.subr.mxu0 0.0
      %5181 = vmatpush1.msra.mxu0 0.0
      %5182 = vmatprep.subr.mxu0 0.0
      %5183 = vmatpush1.msra.mxu0 0.0
      %5184 = vmatprep.subr.mxu0 0.0
      %5185 = vmatpush1.msra.mxu0 0.0
      %5186 = vmatprep.subr.mxu0 0.0
      %5187 = vmatpush1.msra.mxu0 0.0
      %5188 = vmatprep.subr.mxu0 0.0
      %5189 = vmatpush1.msra.mxu0 0.0
      %5190 = vmatprep.subr.mxu0 0.0
      %5191 = vmatpush1.msra.mxu0 0.0
      %5192 = vmatprep.subr.mxu0 0.0
      %5193 = vmatpush1.msra.mxu0 0.0
      %5194 = vmatprep.subr.mxu0 0.0
      %5195 = vmatpush1.msra.mxu0 0.0
      %5196 = vmatprep.subr.mxu0 0.0
      %5197 = vmatpush1.msra.mxu0 0.0
      %5198 = vmatprep.subr.mxu0 0.0
      %5199 = vmatpush1.msra.mxu0 0.0
      %5200 = vmatprep.subr.mxu0 0.0
      %5201 = vmatpush1.msra.mxu0 0.0
      %5202 = vmatprep.subr.mxu0 0.0
      %5203 = vmatpush1.msra.mxu0 0.0
      %5204 = vmatprep.subr.mxu0 0.0
      %5205 = vmatpush1.msra.mxu0 0.0
      %5206 = vmatprep.subr.mxu0 0.0
      %5207 = vmatpush1.msra.mxu0 0.0
      %5208 = vmatprep.mubr.f32.mxu0 0.0
      %v5209 = vand.u32 %v5135, 4294901760
      %v5210 = vsub.f32 %v5135, %v5209
      %v5211 = vand.u32 %v5210, 4294901760
      %v5212 = vsub.f32 %v5210, %v5211
      %v5213 = vand.u32 %v5212, 4294901760
      %5214 = vmatmul.mubr.f32.gmra.mrb[0].mxu0 %v5213
      %v5215 = vpop.f32.mrb[0].mxu0
      %v5216 = vadd.f32 0.0, %v5215
      %v5217 = vpop.f32.mrb[0].mxu0
      %5218 = vmatprep.mubr.f32.mxu0 0.0
      %v5219 = vand.u32 %v5138, 4294901760
      %v5220 = vsub.f32 %v5138, %v5219
      %v5221 = vand.u32 %v5220, 4294901760
      %v5222 = vsub.f32 %v5220, %v5221
      %v5223 = vand.u32 %v5222, 4294901760
      %5224 = vmatmul.mubr.f32.gmra.mrb[0].mxu0 %v5223
      %v5225 = vpop.f32.mrb[0].mxu0
      %v5226 = vadd.f32 0.0, %v5225
      %v5227 = vpop.f32.mrb[0].mxu0
      %5228 = vdwg.mxu0
      %5229 = vmatprep.subr.mxu0 0.0
      %v5230 = vand.u32 %v5130, 4294901760
      %v5231 = vsub.f32 %v5130, %v5230
      %v5232 = vand.u32 %v5231, 4294901760
      %v5233 = vsub.f32 %v5231, %v5232
      %v5234 = vand.u32 %v5233, 4294901760
      %5235 = vmatpush1.msra.mxu0 %v5234
      %5236 = vmatprep.subr.mxu0 0.0
      %v5237 = vand.u32 %v5131, 4294901760
      %v5238 = vsub.f32 %v5131, %v5237
      %v5239 = vand.u32 %v5238, 4294901760
      %v5240 = vsub.f32 %v5238, %v5239
      %v5241 = vand.u32 %v5240, 4294901760
      %5242 = vmatpush1.msra.mxu0 %v5241
      %5243 = vmatprep.subr.mxu0 0.0
      %v5244 = vand.u32 %v5132, 4294901760
      %v5245 = vsub.f32 %v5132, %v5244
      %v5246 = vand.u32 %v5245, 4294901760
      %v5247 = vsub.f32 %v5245, %v5246
      %v5248 = vand.u32 %v5247, 4294901760
      %5249 = vmatpush1.msra.mxu0 %v5248
      %5250 = vmatprep.subr.mxu0 0.0
      %v5251 = vand.u32 %v5133, 4294901760
      %v5252 = vsub.f32 %v5133, %v5251
      %v5253 = vand.u32 %v5252, 4294901760
      %v5254 = vsub.f32 %v5252, %v5253
      %v5255 = vand.u32 %v5254, 4294901760
      %5256 = vmatpush1.msra.mxu0 %v5255
      %5257 = vmatprep.subr.mxu0 0.0
      %5258 = vmatpush1.msra.mxu0 0.0
      %5259 = vmatprep.subr.mxu0 0.0
      %5260 = vmatpush1.msra.mxu0 0.0
      %5261 = vmatprep.subr.mxu0 0.0
      %5262 = vmatpush1.msra.mxu0 0.0
      %5263 = vmatprep.subr.mxu0 0.0
      %5264 = vmatpush1.msra.mxu0 0.0
      %5265 = vmatprep.subr.mxu0 0.0
      %5266 = vmatpush1.msra.mxu0 0.0
      %5267 = vmatprep.subr.mxu0 0.0
      %5268 = vmatpush1.msra.mxu0 0.0
      %5269 = vmatprep.subr.mxu0 0.0
      %5270 = vmatpush1.msra.mxu0 0.0
      %5271 = vmatprep.subr.mxu0 0.0
      %5272 = vmatpush1.msra.mxu0 0.0
      %5273 = vmatprep.subr.mxu0 0.0
      %5274 = vmatpush1.msra.mxu0 0.0
      %5275 = vmatprep.subr.mxu0 0.0
      %5276 = vmatpush1.msra.mxu0 0.0
      %5277 = vmatprep.subr.mxu0 0.0
      %5278 = vmatpush1.msra.mxu0 0.0
      %5279 = vmatprep.subr.mxu0 0.0
      %5280 = vmatpush1.msra.mxu0 0.0
      %5281 = vmatprep.subr.mxu0 0.0
      %5282 = vmatpush1.msra.mxu0 0.0
      %5283 = vmatprep.subr.mxu0 0.0
      %5284 = vmatpush1.msra.mxu0 0.0
      %5285 = vmatprep.subr.mxu0 0.0
      %5286 = vmatpush1.msra.mxu0 0.0
      %5287 = vmatprep.subr.mxu0 0.0
      %5288 = vmatpush1.msra.mxu0 0.0
      %5289 = vmatprep.subr.mxu0 0.0
      %5290 = vmatpush1.msra.mxu0 0.0
      %5291 = vmatprep.subr.mxu0 0.0
      %5292 = vmatpush1.msra.mxu0 0.0
      %5293 = vmatprep.subr.mxu0 0.0
      %5294 = vmatpush1.msra.mxu0 0.0
      %5295 = vmatprep.subr.mxu0 0.0
      %5296 = vmatpush1.msra.mxu0 0.0
      %5297 = vmatprep.subr.mxu0 0.0
      %5298 = vmatpush1.msra.mxu0 0.0
      %5299 = vmatprep.subr.mxu0 0.0
      %5300 = vmatpush1.msra.mxu0 0.0
      %5301 = vmatprep.subr.mxu0 0.0
      %5302 = vmatpush1.msra.mxu0 0.0
      %5303 = vmatprep.subr.mxu0 0.0
      %5304 = vmatpush1.msra.mxu0 0.0
      %5305 = vmatprep.subr.mxu0 0.0
      %5306 = vmatpush1.msra.mxu0 0.0
      %5307 = vmatprep.subr.mxu0 0.0
      %5308 = vmatpush1.msra.mxu0 0.0
      %5309 = vmatprep.subr.mxu0 0.0
      %5310 = vmatpush1.msra.mxu0 0.0
      %5311 = vmatprep.subr.mxu0 0.0
      %5312 = vmatpush1.msra.mxu0 0.0
      %5313 = vmatprep.mubr.f32.mxu0 0.0
      %v5314 = vand.u32 %v5135, 4294901760
      %5315 = vmatmul.mubr.f32.gmra.mrb[0].mxu0 %v5314
      %v5316 = vpop.f32.mrb[0].mxu0
      %v5317 = vadd.f32 %v5216, %v5316
      %v5318 = vpop.f32.mrb[0].mxu0
      %5319 = vmatprep.mubr.f32.mxu0 0.0
      %v5320 = vand.u32 %v5138, 4294901760
      %5321 = vmatmul.mubr.f32.gmra.mrb[0].mxu0 %v5320
      %v5322 = vpop.f32.mrb[0].mxu0
      %v5323 = vadd.f32 %v5226, %v5322
      %v5324 = vpop.f32.mrb[0].mxu0
      %5325 = vdwg.mxu0
      %5326 = vmatprep.subr.mxu0 0.0
      %v5327 = vand.u32 %v5130, 4294901760
      %v5328 = vsub.f32 %v5130, %v5327
      %5329 = vmatpush1.msra.mxu0 %v5328
      %5330 = vmatprep.subr.mxu0 0.0
      %v5331 = vand.u32 %v5131, 4294901760
      %v5332 = vsub.f32 %v5131, %v5331
      %5333 = vmatpush1.msra.mxu0 %v5332
      %5334 = vmatprep.subr.mxu0 0.0
      %v5335 = vand.u32 %v5132, 4294901760
      %v5336 = vsub.f32 %v5132, %v5335
      %5337 = vmatpush1.msra.mxu0 %v5336
      %5338 = vmatprep.subr.mxu0 0.0
      %v5339 = vand.u32 %v5133, 4294901760
      %v5340 = vsub.f32 %v5133, %v5339
      %5341 = vmatpush1.msra.mxu0 %v5340
      %5342 = vmatprep.subr.mxu0 0.0
      %5343 = vmatpush1.msra.mxu0 0.0
      %5344 = vmatprep.subr.mxu0 0.0
      %5345 = vmatpush1.msra.mxu0 0.0
      %5346 = vmatprep.subr.mxu0 0.0
      %5347 = vmatpush1.msra.mxu0 0.0
      %5348 = vmatprep.subr.mxu0 0.0
      %5349 = vmatpush1.msra.mxu0 0.0
      %5350 = vmatprep.subr.mxu0 0.0
      %5351 = vmatpush1.msra.mxu0 0.0
      %5352 = vmatprep.subr.mxu0 0.0
      %5353 = vmatpush1.msra.mxu0 0.0
      %5354 = vmatprep.subr.mxu0 0.0
      %5355 = vmatpush1.msra.mxu0 0.0
      %5356 = vmatprep.subr.mxu0 0.0
      %5357 = vmatpush1.msra.mxu0 0.0
      %5358 = vmatprep.subr.mxu0 0.0
      %5359 = vmatpush1.msra.mxu0 0.0
      %5360 = vmatprep.subr.mxu0 0.0
      %5361 = vmatpush1.msra.mxu0 0.0
      %5362 = vmatprep.subr.mxu0 0.0
      %5363 = vmatpush1.msra.mxu0 0.0
      %5364 = vmatprep.subr.mxu0 0.0
      %5365 = vmatpush1.msra.mxu0 0.0
      %5366 = vmatprep.subr.mxu0 0.0
      %5367 = vmatpush1.msra.mxu0 0.0
      %5368 = vmatprep.subr.mxu0 0.0
      %5369 = vmatpush1.msra.mxu0 0.0
      %5370 = vmatprep.subr.mxu0 0.0
      %5371 = vmatpush1.msra.mxu0 0.0
      %5372 = vmatprep.subr.mxu0 0.0
      %5373 = vmatpush1.msra.mxu0 0.0
      %5374 = vmatprep.subr.mxu0 0.0
      %5375 = vmatpush1.msra.mxu0 0.0
      %5376 = vmatprep.subr.mxu0 0.0
      %5377 = vmatpush1.msra.mxu0 0.0
      %5378 = vmatprep.subr.mxu0 0.0
      %5379 = vmatpush1.msra.mxu0 0.0
      %5380 = vmatprep.subr.mxu0 0.0
      %5381 = vmatpush1.msra.mxu0 0.0
      %5382 = vmatprep.subr.mxu0 0.0
      %5383 = vmatpush1.msra.mxu0 0.0
      %5384 = vmatprep.subr.mxu0 0.0
      %5385 = vmatpush1.msra.mxu0 0.0
      %5386 = vmatprep.subr.mxu0 0.0
      %5387 = vmatpush1.msra.mxu0 0.0
      %5388 = vmatprep.subr.mxu0 0.0
      %5389 = vmatpush1.msra.mxu0 0.0
      %5390 = vmatprep.subr.mxu0 0.0
      %5391 = vmatpush1.msra.mxu0 0.0
      %5392 = vmatprep.subr.mxu0 0.0
      %5393 = vmatpush1.msra.mxu0 0.0
      %5394 = vmatprep.subr.mxu0 0.0
      %5395 = vmatpush1.msra.mxu0 0.0
      %5396 = vmatprep.subr.mxu0 0.0
      %5397 = vmatpush1.msra.mxu0 0.0
      %5398 = vmatprep.mubr.f32.mxu0 0.0
      %v5399 = vand.u32 %v5135, 4294901760
      %v5400 = vsub.f32 %v5135, %v5399
      %5401 = vmatmul.mubr.f32.gmra.mrb[0].mxu0 %v5400
      %v5402 = vpop.f32.mrb[0].mxu0
      %v5403 = vadd.f32 %v5317, %v5402
      %v5404 = vpop.f32.mrb[0].mxu0
      %5405 = vmatprep.mubr.f32.mxu0 0.0
      %v5406 = vand.u32 %v5138, 4294901760
      %v5407 = vsub.f32 %v5138, %v5406
      %5408 = vmatmul.mubr.f32.gmra.mrb[0].mxu0 %v5407
      %v5409 = vpop.f32.mrb[0].mxu0
      %v5410 = vadd.f32 %v5323, %v5409
      %v5411 = vpop.f32.mrb[0].mxu0
      %5412 = vdwg.mxu0
      %5413 = vmatprep.subr.mxu0 0.0
      %v5414 = vand.u32 %v5130, 4294901760
      %5415 = vmatpush1.msra.mxu0 %v5414
      %5416 = vmatprep.subr.mxu0 0.0
      %v5417 = vand.u32 %v5131, 4294901760
      %5418 = vmatpush1.msra.mxu0 %v5417
      %5419 = vmatprep.subr.mxu0 0.0
      %v5420 = vand.u32 %v5132, 4294901760
      %5421 = vmatpush1.msra.mxu0 %v5420
      %5422 = vmatprep.subr.mxu0 0.0
      %v5423 = vand.u32 %v5133, 4294901760
      %5424 = vmatpush1.msra.mxu0 %v5423
      %5425 = vmatprep.subr.mxu0 0.0
      %5426 = vmatpush1.msra.mxu0 0.0
      %5427 = vmatprep.subr.mxu0 0.0
      %5428 = vmatpush1.msra.mxu0 0.0
      %5429 = vmatprep.subr.mxu0 0.0
      %5430 = vmatpush1.msra.mxu0 0.0
      %5431 = vmatprep.subr.mxu0 0.0
      %5432 = vmatpush1.msra.mxu0 0.0
      %5433 = vmatprep.subr.mxu0 0.0
      %5434 = vmatpush1.msra.mxu0 0.0
      %5435 = vmatprep.subr.mxu0 0.0
      %5436 = vmatpush1.msra.mxu0 0.0
      %5437 = vmatprep.subr.mxu0 0.0
      %5438 = vmatpush1.msra.mxu0 0.0
      %5439 = vmatprep.subr.mxu0 0.0
      %5440 = vmatpush1.msra.mxu0 0.0
      %5441 = vmatprep.subr.mxu0 0.0
      %5442 = vmatpush1.msra.mxu0 0.0
      %5443 = vmatprep.subr.mxu0 0.0
      %5444 = vmatpush1.msra.mxu0 0.0
      %5445 = vmatprep.subr.mxu0 0.0
      %5446 = vmatpush1.msra.mxu0 0.0
      %5447 = vmatprep.subr.mxu0 0.0
      %5448 = vmatpush1.msra.mxu0 0.0
      %5449 = vmatprep.subr.mxu0 0.0
      %5450 = vmatpush1.msra.mxu0 0.0
      %5451 = vmatprep.subr.mxu0 0.0
      %5452 = vmatpush1.msra.mxu0 0.0
      %5453 = vmatprep.subr.mxu0 0.0
      %5454 = vmatpush1.msra.mxu0 0.0
      %5455 = vmatprep.subr.mxu0 0.0
      %5456 = vmatpush1.msra.mxu0 0.0
      %5457 = vmatprep.subr.mxu0 0.0
      %5458 = vmatpush1.msra.mxu0 0.0
      %5459 = vmatprep.subr.mxu0 0.0
      %5460 = vmatpush1.msra.mxu0 0.0
      %5461 = vmatprep.subr.mxu0 0.0
      %5462 = vmatpush1.msra.mxu0 0.0
      %5463 = vmatprep.subr.mxu0 0.0
      %5464 = vmatpush1.msra.mxu0 0.0
      %5465 = vmatprep.subr.mxu0 0.0
      %5466 = vmatpush1.msra.mxu0 0.0
      %5467 = vmatprep.subr.mxu0 0.0
      %5468 = vmatpush1.msra.mxu0 0.0
      %5469 = vmatprep.subr.mxu0 0.0
      %5470 = vmatpush1.msra.mxu0 0.0
      %5471 = vmatprep.subr.mxu0 0.0
      %5472 = vmatpush1.msra.mxu0 0.0
      %5473 = vmatprep.subr.mxu0 0.0
      %5474 = vmatpush1.msra.mxu0 0.0
      %5475 = vmatprep.subr.mxu0 0.0
      %5476 = vmatpush1.msra.mxu0 0.0
      %5477 = vmatprep.subr.mxu0 0.0
      %5478 = vmatpush1.msra.mxu0 0.0
      %5479 = vmatprep.subr.mxu0 0.0
      %5480 = vmatpush1.msra.mxu0 0.0
      %5481 = vmatprep.mubr.f32.mxu0 0.0
      %v5482 = vand.u32 %v5135, 4294901760
      %v5483 = vsub.f32 %v5135, %v5482
      %v5484 = vand.u32 %v5483, 4294901760
      %5485 = vmatmul.mubr.f32.gmra.mrb[0].mxu0 %v5484
      %v5486 = vpop.f32.mrb[0].mxu0
      %v5487 = vadd.f32 %v5403, %v5486
      %v5488 = vpop.f32.mrb[0].mxu0
      %5489 = vmatprep.mubr.f32.mxu0 0.0
      %v5490 = vand.u32 %v5138, 4294901760
      %v5491 = vsub.f32 %v5138, %v5490
      %v5492 = vand.u32 %v5491, 4294901760
      %5493 = vmatmul.mubr.f32.gmra.mrb[0].mxu0 %v5492
      %v5494 = vpop.f32.mrb[0].mxu0
      %v5495 = vadd.f32 %v5410, %v5494
      %v5496 = vpop.f32.mrb[0].mxu0
      %5497 = vdwg.mxu0
      %5498 = vmatprep.subr.mxu0 0.0
      %v5499 = vand.u32 %v5130, 4294901760
      %v5500 = vsub.f32 %v5130, %v5499
      %v5501 = vand.u32 %v5500, 4294901760
      %5502 = vmatpush1.msra.mxu0 %v5501
      %5503 = vmatprep.subr.mxu0 0.0
      %v5504 = vand.u32 %v5131, 4294901760
      %v5505 = vsub.f32 %v5131, %v5504
      %v5506 = vand.u32 %v5505, 4294901760
      %5507 = vmatpush1.msra.mxu0 %v5506
      %5508 = vmatprep.subr.mxu0 0.0
      %v5509 = vand.u32 %v5132, 4294901760
      %v5510 = vsub.f32 %v5132, %v5509
      %v5511 = vand.u32 %v5510, 4294901760
      %5512 = vmatpush1.msra.mxu0 %v5511
      %5513 = vmatprep.subr.mxu0 0.0
      %v5514 = vand.u32 %v5133, 4294901760
      %v5515 = vsub.f32 %v5133, %v5514
      %v5516 = vand.u32 %v5515, 4294901760
      %5517 = vmatpush1.msra.mxu0 %v5516
      %5518 = vmatprep.subr.mxu0 0.0
      %5519 = vmatpush1.msra.mxu0 0.0
      %5520 = vmatprep.subr.mxu0 0.0
      %5521 = vmatpush1.msra.mxu0 0.0
      %5522 = vmatprep.subr.mxu0 0.0
      %5523 = vmatpush1.msra.mxu0 0.0
      %5524 = vmatprep.subr.mxu0 0.0
      %5525 = vmatpush1.msra.mxu0 0.0
      %5526 = vmatprep.subr.mxu0 0.0
      %5527 = vmatpush1.msra.mxu0 0.0
      %5528 = vmatprep.subr.mxu0 0.0
      %5529 = vmatpush1.msra.mxu0 0.0
      %5530 = vmatprep.subr.mxu0 0.0
      %5531 = vmatpush1.msra.mxu0 0.0
      %5532 = vmatprep.subr.mxu0 0.0
      %5533 = vmatpush1.msra.mxu0 0.0
      %5534 = vmatprep.subr.mxu0 0.0
      %5535 = vmatpush1.msra.mxu0 0.0
      %5536 = vmatprep.subr.mxu0 0.0
      %5537 = vmatpush1.msra.mxu0 0.0
      %5538 = vmatprep.subr.mxu0 0.0
      %5539 = vmatpush1.msra.mxu0 0.0
      %5540 = vmatprep.subr.mxu0 0.0
      %5541 = vmatpush1.msra.mxu0 0.0
      %5542 = vmatprep.subr.mxu0 0.0
      %5543 = vmatpush1.msra.mxu0 0.0
      %5544 = vmatprep.subr.mxu0 0.0
      %5545 = vmatpush1.msra.mxu0 0.0
      %5546 = vmatprep.subr.mxu0 0.0
      %5547 = vmatpush1.msra.mxu0 0.0
      %5548 = vmatprep.subr.mxu0 0.0
      %5549 = vmatpush1.msra.mxu0 0.0
      %5550 = vmatprep.subr.mxu0 0.0
      %5551 = vmatpush1.msra.mxu0 0.0
      %5552 = vmatprep.subr.mxu0 0.0
      %5553 = vmatpush1.msra.mxu0 0.0
      %5554 = vmatprep.subr.mxu0 0.0
      %5555 = vmatpush1.msra.mxu0 0.0
      %5556 = vmatprep.subr.mxu0 0.0
      %5557 = vmatpush1.msra.mxu0 0.0
      %5558 = vmatprep.subr.mxu0 0.0
      %5559 = vmatpush1.msra.mxu0 0.0
      %5560 = vmatprep.subr.mxu0 0.0
      %5561 = vmatpush1.msra.mxu0 0.0
      %5562 = vmatprep.subr.mxu0 0.0
      %5563 = vmatpush1.msra.mxu0 0.0
      %5564 = vmatprep.subr.mxu0 0.0
      %5565 = vmatpush1.msra.mxu0 0.0
      %5566 = vmatprep.subr.mxu0 0.0
      %5567 = vmatpush1.msra.mxu0 0.0
      %5568 = vmatprep.subr.mxu0 0.0
      %5569 = vmatpush1.msra.mxu0 0.0
      %5570 = vmatprep.subr.mxu0 0.0
      %5571 = vmatpush1.msra.mxu0 0.0
      %5572 = vmatprep.subr.mxu0 0.0
      %5573 = vmatpush1.msra.mxu0 0.0
      %5574 = vmatprep.mubr.f32.mxu0 0.0
      %v5575 = vand.u32 %v5135, 4294901760
      %5576 = vmatmul.mubr.f32.gmra.mrb[0].mxu0 %v5575
      %v5577 = vpop.f32.mrb[0].mxu0
      %v5578 = vadd.f32 %v5487, %v5577
      %v5579 = vpop.f32.mrb[0].mxu0
      %5580 = vmatprep.mubr.f32.mxu0 0.0
      %v5581 = vand.u32 %v5138, 4294901760
      %5582 = vmatmul.mubr.f32.gmra.mrb[0].mxu0 %v5581
      %v5583 = vpop.f32.mrb[0].mxu0
      %v5584 = vadd.f32 %v5495, %v5583
      %v5585 = vpop.f32.mrb[0].mxu0
      %5586 = vdwg.mxu0
      %5587 = vmatprep.subr.mxu0 0.0
      %v5588 = vand.u32 %v5130, 4294901760
      %5589 = vmatpush1.msra.mxu0 %v5588
      %5590 = vmatprep.subr.mxu0 0.0
      %v5591 = vand.u32 %v5131, 4294901760
      %5592 = vmatpush1.msra.mxu0 %v5591
      %5593 = vmatprep.subr.mxu0 0.0
      %v5594 = vand.u32 %v5132, 4294901760
      %5595 = vmatpush1.msra.mxu0 %v5594
      %5596 = vmatprep.subr.mxu0 0.0
      %v5597 = vand.u32 %v5133, 4294901760
      %5598 = vmatpush1.msra.mxu0 %v5597
      %5599 = vmatprep.subr.mxu0 0.0
      %5600 = vmatpush1.msra.mxu0 0.0
      %5601 = vmatprep.subr.mxu0 0.0
      %5602 = vmatpush1.msra.mxu0 0.0
      %5603 = vmatprep.subr.mxu0 0.0
      %5604 = vmatpush1.msra.mxu0 0.0
      %5605 = vmatprep.subr.mxu0 0.0
      %5606 = vmatpush1.msra.mxu0 0.0
      %5607 = vmatprep.subr.mxu0 0.0
      %5608 = vmatpush1.msra.mxu0 0.0
      %5609 = vmatprep.subr.mxu0 0.0
      %5610 = vmatpush1.msra.mxu0 0.0
      %5611 = vmatprep.subr.mxu0 0.0
      %5612 = vmatpush1.msra.mxu0 0.0
      %5613 = vmatprep.subr.mxu0 0.0
      %5614 = vmatpush1.msra.mxu0 0.0
      %5615 = vmatprep.subr.mxu0 0.0
      %5616 = vmatpush1.msra.mxu0 0.0
      %5617 = vmatprep.subr.mxu0 0.0
      %5618 = vmatpush1.msra.mxu0 0.0
      %5619 = vmatprep.subr.mxu0 0.0
      %5620 = vmatpush1.msra.mxu0 0.0
      %5621 = vmatprep.subr.mxu0 0.0
      %5622 = vmatpush1.msra.mxu0 0.0
      %5623 = vmatprep.subr.mxu0 0.0
      %5624 = vmatpush1.msra.mxu0 0.0
      %5625 = vmatprep.subr.mxu0 0.0
      %5626 = vmatpush1.msra.mxu0 0.0
      %5627 = vmatprep.subr.mxu0 0.0
      %5628 = vmatpush1.msra.mxu0 0.0
      %5629 = vmatprep.subr.mxu0 0.0
      %5630 = vmatpush1.msra.mxu0 0.0
      %5631 = vmatprep.subr.mxu0 0.0
      %5632 = vmatpush1.msra.mxu0 0.0
      %5633 = vmatprep.subr.mxu0 0.0
      %5634 = vmatpush1.msra.mxu0 0.0
      %5635 = vmatprep.subr.mxu0 0.0
      %5636 = vmatpush1.msra.mxu0 0.0
      %5637 = vmatprep.subr.mxu0 0.0
      %5638 = vmatpush1.msra.mxu0 0.0
      %5639 = vmatprep.subr.mxu0 0.0
      %5640 = vmatpush1.msra.mxu0 0.0
      %5641 = vmatprep.subr.mxu0 0.0
      %5642 = vmatpush1.msra.mxu0 0.0
      %5643 = vmatprep.subr.mxu0 0.0
      %5644 = vmatpush1.msra.mxu0 0.0
      %5645 = vmatprep.subr.mxu0 0.0
      %5646 = vmatpush1.msra.mxu0 0.0
      %5647 = vmatprep.subr.mxu0 0.0
      %5648 = vmatpush1.msra.mxu0 0.0
      %5649 = vmatprep.subr.mxu0 0.0
      %5650 = vmatpush1.msra.mxu0 0.0
      %5651 = vmatprep.subr.mxu0 0.0
      %5652 = vmatpush1.msra.mxu0 0.0
      %5653 = vmatprep.subr.mxu0 0.0
      %5654 = vmatpush1.msra.mxu0 0.0
      %5655 = vmatprep.mubr.f32.mxu0 0.0
      %v5656 = vand.u32 %v5135, 4294901760
      %5657 = vmatmul.mubr.f32.gmra.mrb[0].mxu0 %v5656
      %v5658 = vpop.f32.mrb[0].mxu0
      %v5659 = vadd.f32 %v5578, %v5658
      %v5660 = vpop.f32.mrb[0].mxu0
      %5661 = vmatprep.mubr.f32.mxu0 0.0
      %v5662 = vand.u32 %v5138, 4294901760
      %5663 = vmatmul.mubr.f32.gmra.mrb[0].mxu0 %v5662
      %v5664 = vpop.f32.mrb[0].mxu0
      %v5665 = vadd.f32 %v5584, %v5664
      %v5666 = vpop.f32.mrb[0].mxu0
      %5667 = vdwg.mxu0
      %v5668 = vadd.f32 %v4538, %v5659
      %v5669 = vadd.f32 %v4539, %v5665
      %s5670 = scalar_lea.vmem %s2, 64
      %v5671 = vld [vmem:[%s5670] sm:$0xff]
      %v5672 = vld [vmem:[%s5670 + $0x8] sm:$0xff]
      %v5674 = vsel %vm1157, %v5671, 0
      %v5677 = vsel %vm1157, %v5672, 0
      %5679 = vmatprep.subr.mxu0 0.0
      %v5680 = vand.u32 %v1147, 4294901760
      %5681 = vmatpush1.msra.mxu0 %v5680
      %5682 = vmatprep.subr.mxu0 0.0
      %v5683 = vand.u32 %v1148, 4294901760
      %5684 = vmatpush1.msra.mxu0 %v5683
      %5685 = vmatprep.subr.mxu0 0.0
      %v5686 = vand.u32 %v1149, 4294901760
      %5687 = vmatpush1.msra.mxu0 %v5686
      %5688 = vmatprep.subr.mxu0 0.0
      %v5689 = vand.u32 %v1150, 4294901760
      %5690 = vmatpush1.msra.mxu0 %v5689
      %5691 = vmatprep.subr.mxu0 0.0
      %v5692 = vand.u32 %v1151, 4294901760
      %5693 = vmatpush1.msra.mxu0 %v5692
      %5694 = vmatprep.subr.mxu0 0.0
      %v5695 = vand.u32 %v1152, 4294901760
      %5696 = vmatpush1.msra.mxu0 %v5695
      %5697 = vmatprep.subr.mxu0 0.0
      %v5698 = vand.u32 %v1153, 4294901760
      %5699 = vmatpush1.msra.mxu0 %v5698
      %5700 = vmatprep.subr.mxu0 0.0
      %v5701 = vand.u32 %v1154, 4294901760
      %5702 = vmatpush1.msra.mxu0 %v5701
      %5703 = vmatprep.subr.mxu0 0.0
      %5704 = vmatpush1.msra.mxu0 0.0
      %5705 = vmatprep.subr.mxu0 0.0
      %5706 = vmatpush1.msra.mxu0 0.0
      %5707 = vmatprep.subr.mxu0 0.0
      %5708 = vmatpush1.msra.mxu0 0.0
      %5709 = vmatprep.subr.mxu0 0.0
      %5710 = vmatpush1.msra.mxu0 0.0
      %5711 = vmatprep.subr.mxu0 0.0
      %5712 = vmatpush1.msra.mxu0 0.0
      %5713 = vmatprep.subr.mxu0 0.0
      %5714 = vmatpush1.msra.mxu0 0.0
      %5715 = vmatprep.subr.mxu0 0.0
      %5716 = vmatpush1.msra.mxu0 0.0
      %5717 = vmatprep.subr.mxu0 0.0
      %5718 = vmatpush1.msra.mxu0 0.0
      %5719 = vmatprep.subr.mxu0 0.0
      %5720 = vmatpush1.msra.mxu0 0.0
      %5721 = vmatprep.subr.mxu0 0.0
      %5722 = vmatpush1.msra.mxu0 0.0
      %5723 = vmatprep.subr.mxu0 0.0
      %5724 = vmatpush1.msra.mxu0 0.0
      %5725 = vmatprep.subr.mxu0 0.0
      %5726 = vmatpush1.msra.mxu0 0.0
      %5727 = vmatprep.subr.mxu0 0.0
      %5728 = vmatpush1.msra.mxu0 0.0
      %5729 = vmatprep.subr.mxu0 0.0
      %5730 = vmatpush1.msra.mxu0 0.0
      %5731 = vmatprep.subr.mxu0 0.0
      %5732 = vmatpush1.msra.mxu0 0.0
      %5733 = vmatprep.subr.mxu0 0.0
      %5734 = vmatpush1.msra.mxu0 0.0
      %5735 = vmatprep.subr.mxu0 0.0
      %5736 = vmatpush1.msra.mxu0 0.0
      %5737 = vmatprep.subr.mxu0 0.0
      %5738 = vmatpush1.msra.mxu0 0.0
      %5739 = vmatprep.subr.mxu0 0.0
      %5740 = vmatpush1.msra.mxu0 0.0
      %5741 = vmatprep.subr.mxu0 0.0
      %5742 = vmatpush1.msra.mxu0 0.0
      %5743 = vmatprep.subr.mxu0 0.0
      %5744 = vmatpush1.msra.mxu0 0.0
      %5745 = vmatprep.subr.mxu0 0.0
      %5746 = vmatpush1.msra.mxu0 0.0
      %5747 = vmatprep.subr.mxu0 0.0
      %5748 = vmatpush1.msra.mxu0 0.0
      %5749 = vmatprep.subr.mxu0 0.0
      %5750 = vmatpush1.msra.mxu0 0.0
      %5751 = vmatprep.mubr.f32.mxu0 0.0
      %v5752 = vand.u32 %v5674, 4294901760
      %v5753 = vsub.f32 %v5674, %v5752
      %v5754 = vand.u32 %v5753, 4294901760
      %v5755 = vsub.f32 %v5753, %v5754
      %v5756 = vand.u32 %v5755, 4294901760
      %5757 = vmatmul.mubr.f32.gmra.mrb[0].mxu0 %v5756
      %v5758 = vpop.f32.mrb[0].mxu0
      %v5759 = vadd.f32 0.0, %v5758
      %v5760 = vpop.f32.mrb[0].mxu0
      %5761 = vmatprep.mubr.f32.mxu0 0.0
      %v5762 = vand.u32 %v5677, 4294901760
      %v5763 = vsub.f32 %v5677, %v5762
      %v5764 = vand.u32 %v5763, 4294901760
      %v5765 = vsub.f32 %v5763, %v5764
      %v5766 = vand.u32 %v5765, 4294901760
      %5767 = vmatmul.mubr.f32.gmra.mrb[0].mxu0 %v5766
      %v5768 = vpop.f32.mrb[0].mxu0
      %v5769 = vadd.f32 0.0, %v5768
      %v5770 = vpop.f32.mrb[0].mxu0
      %5771 = vdwg.mxu0
      %5772 = vmatprep.subr.mxu0 0.0
      %v5773 = vand.u32 %v1147, 4294901760
      %v5774 = vsub.f32 %v1147, %v5773
      %v5775 = vand.u32 %v5774, 4294901760
      %v5776 = vsub.f32 %v5774, %v5775
      %v5777 = vand.u32 %v5776, 4294901760
      %5778 = vmatpush1.msra.mxu0 %v5777
      %5779 = vmatprep.subr.mxu0 0.0
      %v5780 = vand.u32 %v1148, 4294901760
      %v5781 = vsub.f32 %v1148, %v5780
      %v5782 = vand.u32 %v5781, 4294901760
      %v5783 = vsub.f32 %v5781, %v5782
      %v5784 = vand.u32 %v5783, 4294901760
      %5785 = vmatpush1.msra.mxu0 %v5784
      %5786 = vmatprep.subr.mxu0 0.0
      %v5787 = vand.u32 %v1149, 4294901760
      %v5788 = vsub.f32 %v1149, %v5787
      %v5789 = vand.u32 %v5788, 4294901760
      %v5790 = vsub.f32 %v5788, %v5789
      %v5791 = vand.u32 %v5790, 4294901760
      %5792 = vmatpush1.msra.mxu0 %v5791
      %5793 = vmatprep.subr.mxu0 0.0
      %v5794 = vand.u32 %v1150, 4294901760
      %v5795 = vsub.f32 %v1150, %v5794
      %v5796 = vand.u32 %v5795, 4294901760
      %v5797 = vsub.f32 %v5795, %v5796
      %v5798 = vand.u32 %v5797, 4294901760
      %5799 = vmatpush1.msra.mxu0 %v5798
      %5800 = vmatprep.subr.mxu0 0.0
      %v5801 = vand.u32 %v1151, 4294901760
      %v5802 = vsub.f32 %v1151, %v5801
      %v5803 = vand.u32 %v5802, 4294901760
      %v5804 = vsub.f32 %v5802, %v5803
      %v5805 = vand.u32 %v5804, 4294901760
      %5806 = vmatpush1.msra.mxu0 %v5805
      %5807 = vmatprep.subr.mxu0 0.0
      %v5808 = vand.u32 %v1152, 4294901760
      %v5809 = vsub.f32 %v1152, %v5808
      %v5810 = vand.u32 %v5809, 4294901760
      %v5811 = vsub.f32 %v5809, %v5810
      %v5812 = vand.u32 %v5811, 4294901760
      %5813 = vmatpush1.msra.mxu0 %v5812
      %5814 = vmatprep.subr.mxu0 0.0
      %v5815 = vand.u32 %v1153, 4294901760
      %v5816 = vsub.f32 %v1153, %v5815
      %v5817 = vand.u32 %v5816, 4294901760
      %v5818 = vsub.f32 %v5816, %v5817
      %v5819 = vand.u32 %v5818, 4294901760
      %5820 = vmatpush1.msra.mxu0 %v5819
      %5821 = vmatprep.subr.mxu0 0.0
      %v5822 = vand.u32 %v1154, 4294901760
      %v5823 = vsub.f32 %v1154, %v5822
      %v5824 = vand.u32 %v5823, 4294901760
      %v5825 = vsub.f32 %v5823, %v5824
      %v5826 = vand.u32 %v5825, 4294901760
      %5827 = vmatpush1.msra.mxu0 %v5826
      %5828 = vmatprep.subr.mxu0 0.0
      %5829 = vmatpush1.msra.mxu0 0.0
      %5830 = vmatprep.subr.mxu0 0.0
      %5831 = vmatpush1.msra.mxu0 0.0
      %5832 = vmatprep.subr.mxu0 0.0
      %5833 = vmatpush1.msra.mxu0 0.0
      %5834 = vmatprep.subr.mxu0 0.0
      %5835 = vmatpush1.msra.mxu0 0.0
      %5836 = vmatprep.subr.mxu0 0.0
      %5837 = vmatpush1.msra.mxu0 0.0
      %5838 = vmatprep.subr.mxu0 0.0
      %5839 = vmatpush1.msra.mxu0 0.0
      %5840 = vmatprep.subr.mxu0 0.0
      %5841 = vmatpush1.msra.mxu0 0.0
      %5842 = vmatprep.subr.mxu0 0.0
      %5843 = vmatpush1.msra.mxu0 0.0
      %5844 = vmatprep.subr.mxu0 0.0
      %5845 = vmatpush1.msra.mxu0 0.0
      %5846 = vmatprep.subr.mxu0 0.0
      %5847 = vmatpush1.msra.mxu0 0.0
      %5848 = vmatprep.subr.mxu0 0.0
      %5849 = vmatpush1.msra.mxu0 0.0
      %5850 = vmatprep.subr.mxu0 0.0
      %5851 = vmatpush1.msra.mxu0 0.0
      %5852 = vmatprep.subr.mxu0 0.0
      %5853 = vmatpush1.msra.mxu0 0.0
      %5854 = vmatprep.subr.mxu0 0.0
      %5855 = vmatpush1.msra.mxu0 0.0
      %5856 = vmatprep.subr.mxu0 0.0
      %5857 = vmatpush1.msra.mxu0 0.0
      %5858 = vmatprep.subr.mxu0 0.0
      %5859 = vmatpush1.msra.mxu0 0.0
      %5860 = vmatprep.subr.mxu0 0.0
      %5861 = vmatpush1.msra.mxu0 0.0
      %5862 = vmatprep.subr.mxu0 0.0
      %5863 = vmatpush1.msra.mxu0 0.0
      %5864 = vmatprep.subr.mxu0 0.0
      %5865 = vmatpush1.msra.mxu0 0.0
      %5866 = vmatprep.subr.mxu0 0.0
      %5867 = vmatpush1.msra.mxu0 0.0
      %5868 = vmatprep.subr.mxu0 0.0
      %5869 = vmatpush1.msra.mxu0 0.0
      %5870 = vmatprep.subr.mxu0 0.0
      %5871 = vmatpush1.msra.mxu0 0.0
      %5872 = vmatprep.subr.mxu0 0.0
      %5873 = vmatpush1.msra.mxu0 0.0
      %5874 = vmatprep.subr.mxu0 0.0
      %5875 = vmatpush1.msra.mxu0 0.0
      %5876 = vmatprep.mubr.f32.mxu0 0.0
      %v5877 = vand.u32 %v5674, 4294901760
      %5878 = vmatmul.mubr.f32.gmra.mrb[0].mxu0 %v5877
      %v5879 = vpop.f32.mrb[0].mxu0
      %v5880 = vadd.f32 %v5759, %v5879
      %v5881 = vpop.f32.mrb[0].mxu0
      %5882 = vmatprep.mubr.f32.mxu0 0.0
      %v5883 = vand.u32 %v5677, 4294901760
      %5884 = vmatmul.mubr.f32.gmra.mrb[0].mxu0 %v5883
      %v5885 = vpop.f32.mrb[0].mxu0
      %v5886 = vadd.f32 %v5769, %v5885
      %v5887 = vpop.f32.mrb[0].mxu0
      %5888 = vdwg.mxu0
      %5889 = vmatprep.subr.mxu0 0.0
      %v5890 = vand.u32 %v1147, 4294901760
      %v5891 = vsub.f32 %v1147, %v5890
      %5892 = vmatpush1.msra.mxu0 %v5891
      %5893 = vmatprep.subr.mxu0 0.0
      %v5894 = vand.u32 %v1148, 4294901760
      %v5895 = vsub.f32 %v1148, %v5894
      %5896 = vmatpush1.msra.mxu0 %v5895
      %5897 = vmatprep.subr.mxu0 0.0
      %v5898 = vand.u32 %v1149, 4294901760
      %v5899 = vsub.f32 %v1149, %v5898
      %5900 = vmatpush1.msra.mxu0 %v5899
      %5901 = vmatprep.subr.mxu0 0.0
      %v5902 = vand.u32 %v1150, 4294901760
      %v5903 = vsub.f32 %v1150, %v5902
      %5904 = vmatpush1.msra.mxu0 %v5903
      %5905 = vmatprep.subr.mxu0 0.0
      %v5906 = vand.u32 %v1151, 4294901760
      %v5907 = vsub.f32 %v1151, %v5906
      %5908 = vmatpush1.msra.mxu0 %v5907
      %5909 = vmatprep.subr.mxu0 0.0
      %v5910 = vand.u32 %v1152, 4294901760
      %v5911 = vsub.f32 %v1152, %v5910
      %5912 = vmatpush1.msra.mxu0 %v5911
      %5913 = vmatprep.subr.mxu0 0.0
      %v5914 = vand.u32 %v1153, 4294901760
      %v5915 = vsub.f32 %v1153, %v5914
      %5916 = vmatpush1.msra.mxu0 %v5915
      %5917 = vmatprep.subr.mxu0 0.0
      %v5918 = vand.u32 %v1154, 4294901760
      %v5919 = vsub.f32 %v1154, %v5918
      %5920 = vmatpush1.msra.mxu0 %v5919
      %5921 = vmatprep.subr.mxu0 0.0
      %5922 = vmatpush1.msra.mxu0 0.0
      %5923 = vmatprep.subr.mxu0 0.0
      %5924 = vmatpush1.msra.mxu0 0.0
      %5925 = vmatprep.subr.mxu0 0.0
      %5926 = vmatpush1.msra.mxu0 0.0
      %5927 = vmatprep.subr.mxu0 0.0
      %5928 = vmatpush1.msra.mxu0 0.0
      %5929 = vmatprep.subr.mxu0 0.0
      %5930 = vmatpush1.msra.mxu0 0.0
      %5931 = vmatprep.subr.mxu0 0.0
      %5932 = vmatpush1.msra.mxu0 0.0
      %5933 = vmatprep.subr.mxu0 0.0
      %5934 = vmatpush1.msra.mxu0 0.0
      %5935 = vmatprep.subr.mxu0 0.0
      %5936 = vmatpush1.msra.mxu0 0.0
      %5937 = vmatprep.subr.mxu0 0.0
      %5938 = vmatpush1.msra.mxu0 0.0
      %5939 = vmatprep.subr.mxu0 0.0
      %5940 = vmatpush1.msra.mxu0 0.0
      %5941 = vmatprep.subr.mxu0 0.0
      %5942 = vmatpush1.msra.mxu0 0.0
      %5943 = vmatprep.subr.mxu0 0.0
      %5944 = vmatpush1.msra.mxu0 0.0
      %5945 = vmatprep.subr.mxu0 0.0
      %5946 = vmatpush1.msra.mxu0 0.0
      %5947 = vmatprep.subr.mxu0 0.0
      %5948 = vmatpush1.msra.mxu0 0.0
      %5949 = vmatprep.subr.mxu0 0.0
      %5950 = vmatpush1.msra.mxu0 0.0
      %5951 = vmatprep.subr.mxu0 0.0
      %5952 = vmatpush1.msra.mxu0 0.0
      %5953 = vmatprep.subr.mxu0 0.0
      %5954 = vmatpush1.msra.mxu0 0.0
      %5955 = vmatprep.subr.mxu0 0.0
      %5956 = vmatpush1.msra.mxu0 0.0
      %5957 = vmatprep.subr.mxu0 0.0
      %5958 = vmatpush1.msra.mxu0 0.0
      %5959 = vmatprep.subr.mxu0 0.0
      %5960 = vmatpush1.msra.mxu0 0.0
      %5961 = vmatprep.subr.mxu0 0.0
      %5962 = vmatpush1.msra.mxu0 0.0
      %5963 = vmatprep.subr.mxu0 0.0
      %5964 = vmatpush1.msra.mxu0 0.0
      %5965 = vmatprep.subr.mxu0 0.0
      %5966 = vmatpush1.msra.mxu0 0.0
      %5967 = vmatprep.subr.mxu0 0.0
      %5968 = vmatpush1.msra.mxu0 0.0
      %5969 = vmatprep.mubr.f32.mxu0 0.0
      %v5970 = vand.u32 %v5674, 4294901760
      %v5971 = vsub.f32 %v5674, %v5970
      %5972 = vmatmul.mubr.f32.gmra.mrb[0].mxu0 %v5971
      %v5973 = vpop.f32.mrb[0].mxu0
      %v5974 = vadd.f32 %v5880, %v5973
      %v5975 = vpop.f32.mrb[0].mxu0
      %5976 = vmatprep.mubr.f32.mxu0 0.0
      %v5977 = vand.u32 %v5677, 4294901760
      %v5978 = vsub.f32 %v5677, %v5977
      %5979 = vmatmul.mubr.f32.gmra.mrb[0].mxu0 %v5978
      %v5980 = vpop.f32.mrb[0].mxu0
      %v5981 = vadd.f32 %v5886, %v5980
      %v5982 = vpop.f32.mrb[0].mxu0
      %5983 = vdwg.mxu0
      %5984 = vmatprep.subr.mxu0 0.0
      %v5985 = vand.u32 %v1147, 4294901760
      %5986 = vmatpush1.msra.mxu0 %v5985
      %5987 = vmatprep.subr.mxu0 0.0
      %v5988 = vand.u32 %v1148, 4294901760
      %5989 = vmatpush1.msra.mxu0 %v5988
      %5990 = vmatprep.subr.mxu0 0.0
      %v5991 = vand.u32 %v1149, 4294901760
      %5992 = vmatpush1.msra.mxu0 %v5991
      %5993 = vmatprep.subr.mxu0 0.0
      %v5994 = vand.u32 %v1150, 4294901760
      %5995 = vmatpush1.msra.mxu0 %v5994
      %5996 = vmatprep.subr.mxu0 0.0
      %v5997 = vand.u32 %v1151, 4294901760
      %5998 = vmatpush1.msra.mxu0 %v5997
      %5999 = vmatprep.subr.mxu0 0.0
      %v6000 = vand.u32 %v1152, 4294901760
      %6001 = vmatpush1.msra.mxu0 %v6000
      %6002 = vmatprep.subr.mxu0 0.0
      %v6003 = vand.u32 %v1153, 4294901760
      %6004 = vmatpush1.msra.mxu0 %v6003
      %6005 = vmatprep.subr.mxu0 0.0
      %v6006 = vand.u32 %v1154, 4294901760
      %6007 = vmatpush1.msra.mxu0 %v6006
      %6008 = vmatprep.subr.mxu0 0.0
      %6009 = vmatpush1.msra.mxu0 0.0
      %6010 = vmatprep.subr.mxu0 0.0
      %6011 = vmatpush1.msra.mxu0 0.0
      %6012 = vmatprep.subr.mxu0 0.0
      %6013 = vmatpush1.msra.mxu0 0.0
      %6014 = vmatprep.subr.mxu0 0.0
      %6015 = vmatpush1.msra.mxu0 0.0
      %6016 = vmatprep.subr.mxu0 0.0
      %6017 = vmatpush1.msra.mxu0 0.0
      %6018 = vmatprep.subr.mxu0 0.0
      %6019 = vmatpush1.msra.mxu0 0.0
      %6020 = vmatprep.subr.mxu0 0.0
      %6021 = vmatpush1.msra.mxu0 0.0
      %6022 = vmatprep.subr.mxu0 0.0
      %6023 = vmatpush1.msra.mxu0 0.0
      %6024 = vmatprep.subr.mxu0 0.0
      %6025 = vmatpush1.msra.mxu0 0.0
      %6026 = vmatprep.subr.mxu0 0.0
      %6027 = vmatpush1.msra.mxu0 0.0
      %6028 = vmatprep.subr.mxu0 0.0
      %6029 = vmatpush1.msra.mxu0 0.0
      %6030 = vmatprep.subr.mxu0 0.0
      %6031 = vmatpush1.msra.mxu0 0.0
      %6032 = vmatprep.subr.mxu0 0.0
      %6033 = vmatpush1.msra.mxu0 0.0
      %6034 = vmatprep.subr.mxu0 0.0
      %6035 = vmatpush1.msra.mxu0 0.0
      %6036 = vmatprep.subr.mxu0 0.0
      %6037 = vmatpush1.msra.mxu0 0.0
      %6038 = vmatprep.subr.mxu0 0.0
      %6039 = vmatpush1.msra.mxu0 0.0
      %6040 = vmatprep.subr.mxu0 0.0
      %6041 = vmatpush1.msra.mxu0 0.0
      %6042 = vmatprep.subr.mxu0 0.0
      %6043 = vmatpush1.msra.mxu0 0.0
      %6044 = vmatprep.subr.mxu0 0.0
      %6045 = vmatpush1.msra.mxu0 0.0
      %6046 = vmatprep.subr.mxu0 0.0
      %6047 = vmatpush1.msra.mxu0 0.0
      %6048 = vmatprep.subr.mxu0 0.0
      %6049 = vmatpush1.msra.mxu0 0.0
      %6050 = vmatprep.subr.mxu0 0.0
      %6051 = vmatpush1.msra.mxu0 0.0
      %6052 = vmatprep.subr.mxu0 0.0
      %6053 = vmatpush1.msra.mxu0 0.0
      %6054 = vmatprep.subr.mxu0 0.0
      %6055 = vmatpush1.msra.mxu0 0.0
      %6056 = vmatprep.mubr.f32.mxu0 0.0
      %v6057 = vand.u32 %v5674, 4294901760
      %v6058 = vsub.f32 %v5674, %v6057
      %v6059 = vand.u32 %v6058, 4294901760
      %6060 = vmatmul.mubr.f32.gmra.mrb[0].mxu0 %v6059
      %v6061 = vpop.f32.mrb[0].mxu0
      %v6062 = vadd.f32 %v5974, %v6061
      %v6063 = vpop.f32.mrb[0].mxu0
      %6064 = vmatprep.mubr.f32.mxu0 0.0
      %v6065 = vand.u32 %v5677, 4294901760
      %v6066 = vsub.f32 %v5677, %v6065
      %v6067 = vand.u32 %v6066, 4294901760
      %6068 = vmatmul.mubr.f32.gmra.mrb[0].mxu0 %v6067
      %v6069 = vpop.f32.mrb[0].mxu0
      %v6070 = vadd.f32 %v5981, %v6069
      %v6071 = vpop.f32.mrb[0].mxu0
      %6072 = vdwg.mxu0
      %6073 = vmatprep.subr.mxu0 0.0
      %v6074 = vand.u32 %v1147, 4294901760
      %v6075 = vsub.f32 %v1147, %v6074
      %v6076 = vand.u32 %v6075, 4294901760
      %6077 = vmatpush1.msra.mxu0 %v6076
      %6078 = vmatprep.subr.mxu0 0.0
      %v6079 = vand.u32 %v1148, 4294901760
      %v6080 = vsub.f32 %v1148, %v6079
      %v6081 = vand.u32 %v6080, 4294901760
      %6082 = vmatpush1.msra.mxu0 %v6081
      %6083 = vmatprep.subr.mxu0 0.0
      %v6084 = vand.u32 %v1149, 4294901760
      %v6085 = vsub.f32 %v1149, %v6084
      %v6086 = vand.u32 %v6085, 4294901760
      %6087 = vmatpush1.msra.mxu0 %v6086
      %6088 = vmatprep.subr.mxu0 0.0
      %v6089 = vand.u32 %v1150, 4294901760
      %v6090 = vsub.f32 %v1150, %v6089
      %v6091 = vand.u32 %v6090, 4294901760
      %6092 = vmatpush1.msra.mxu0 %v6091
      %6093 = vmatprep.subr.mxu0 0.0
      %v6094 = vand.u32 %v1151, 4294901760
      %v6095 = vsub.f32 %v1151, %v6094
      %v6096 = vand.u32 %v6095, 4294901760
      %6097 = vmatpush1.msra.mxu0 %v6096
      %6098 = vmatprep.subr.mxu0 0.0
      %v6099 = vand.u32 %v1152, 4294901760
      %v6100 = vsub.f32 %v1152, %v6099
      %v6101 = vand.u32 %v6100, 4294901760
      %6102 = vmatpush1.msra.mxu0 %v6101
      %6103 = vmatprep.subr.mxu0 0.0
      %v6104 = vand.u32 %v1153, 4294901760
      %v6105 = vsub.f32 %v1153, %v6104
      %v6106 = vand.u32 %v6105, 4294901760
      %6107 = vmatpush1.msra.mxu0 %v6106
      %6108 = vmatprep.subr.mxu0 0.0
      %v6109 = vand.u32 %v1154, 4294901760
      %v6110 = vsub.f32 %v1154, %v6109
      %v6111 = vand.u32 %v6110, 4294901760
      %6112 = vmatpush1.msra.mxu0 %v6111
      %6113 = vmatprep.subr.mxu0 0.0
      %6114 = vmatpush1.msra.mxu0 0.0
      %6115 = vmatprep.subr.mxu0 0.0
      %6116 = vmatpush1.msra.mxu0 0.0
      %6117 = vmatprep.subr.mxu0 0.0
      %6118 = vmatpush1.msra.mxu0 0.0
      %6119 = vmatprep.subr.mxu0 0.0
      %6120 = vmatpush1.msra.mxu0 0.0
      %6121 = vmatprep.subr.mxu0 0.0
      %6122 = vmatpush1.msra.mxu0 0.0
      %6123 = vmatprep.subr.mxu0 0.0
      %6124 = vmatpush1.msra.mxu0 0.0
      %6125 = vmatprep.subr.mxu0 0.0
      %6126 = vmatpush1.msra.mxu0 0.0
      %6127 = vmatprep.subr.mxu0 0.0
      %6128 = vmatpush1.msra.mxu0 0.0
      %6129 = vmatprep.subr.mxu0 0.0
      %6130 = vmatpush1.msra.mxu0 0.0
      %6131 = vmatprep.subr.mxu0 0.0
      %6132 = vmatpush1.msra.mxu0 0.0
      %6133 = vmatprep.subr.mxu0 0.0
      %6134 = vmatpush1.msra.mxu0 0.0
      %6135 = vmatprep.subr.mxu0 0.0
      %6136 = vmatpush1.msra.mxu0 0.0
      %6137 = vmatprep.subr.mxu0 0.0
      %6138 = vmatpush1.msra.mxu0 0.0
      %6139 = vmatprep.subr.mxu0 0.0
      %6140 = vmatpush1.msra.mxu0 0.0
      %6141 = vmatprep.subr.mxu0 0.0
      %6142 = vmatpush1.msra.mxu0 0.0
      %6143 = vmatprep.subr.mxu0 0.0
      %6144 = vmatpush1.msra.mxu0 0.0
      %6145 = vmatprep.subr.mxu0 0.0
      %6146 = vmatpush1.msra.mxu0 0.0
      %6147 = vmatprep.subr.mxu0 0.0
      %6148 = vmatpush1.msra.mxu0 0.0
      %6149 = vmatprep.subr.mxu0 0.0
      %6150 = vmatpush1.msra.mxu0 0.0
      %6151 = vmatprep.subr.mxu0 0.0
      %6152 = vmatpush1.msra.mxu0 0.0
      %6153 = vmatprep.subr.mxu0 0.0
      %6154 = vmatpush1.msra.mxu0 0.0
      %6155 = vmatprep.subr.mxu0 0.0
      %6156 = vmatpush1.msra.mxu0 0.0
      %6157 = vmatprep.subr.mxu0 0.0
      %6158 = vmatpush1.msra.mxu0 0.0
      %6159 = vmatprep.subr.mxu0 0.0
      %6160 = vmatpush1.msra.mxu0 0.0
      %6161 = vmatprep.mubr.f32.mxu0 0.0
      %v6162 = vand.u32 %v5674, 4294901760
      %6163 = vmatmul.mubr.f32.gmra.mrb[0].mxu0 %v6162
      %v6164 = vpop.f32.mrb[0].mxu0
      %v6165 = vadd.f32 %v6062, %v6164
      %v6166 = vpop.f32.mrb[0].mxu0
      %6167 = vmatprep.mubr.f32.mxu0 0.0
      %v6168 = vand.u32 %v5677, 4294901760
      %6169 = vmatmul.mubr.f32.gmra.mrb[0].mxu0 %v6168
      %v6170 = vpop.f32.mrb[0].mxu0
      %v6171 = vadd.f32 %v6070, %v6170
      %v6172 = vpop.f32.mrb[0].mxu0
      %6173 = vdwg.mxu0
      %6174 = vmatprep.subr.mxu0 0.0
      %v6175 = vand.u32 %v1147, 4294901760
      %6176 = vmatpush1.msra.mxu0 %v6175
      %6177 = vmatprep.subr.mxu0 0.0
      %v6178 = vand.u32 %v1148, 4294901760
      %6179 = vmatpush1.msra.mxu0 %v6178
      %6180 = vmatprep.subr.mxu0 0.0
      %v6181 = vand.u32 %v1149, 4294901760
      %6182 = vmatpush1.msra.mxu0 %v6181
      %6183 = vmatprep.subr.mxu0 0.0
      %v6184 = vand.u32 %v1150, 4294901760
      %6185 = vmatpush1.msra.mxu0 %v6184
      %6186 = vmatprep.subr.mxu0 0.0
      %v6187 = vand.u32 %v1151, 4294901760
      %6188 = vmatpush1.msra.mxu0 %v6187
      %6189 = vmatprep.subr.mxu0 0.0
      %v6190 = vand.u32 %v1152, 4294901760
      %6191 = vmatpush1.msra.mxu0 %v6190
      %6192 = vmatprep.subr.mxu0 0.0
      %v6193 = vand.u32 %v1153, 4294901760
      %6194 = vmatpush1.msra.mxu0 %v6193
      %6195 = vmatprep.subr.mxu0 0.0
      %v6196 = vand.u32 %v1154, 4294901760
      %6197 = vmatpush1.msra.mxu0 %v6196
      %6198 = vmatprep.subr.mxu0 0.0
      %6199 = vmatpush1.msra.mxu0 0.0
      %6200 = vmatprep.subr.mxu0 0.0
      %6201 = vmatpush1.msra.mxu0 0.0
      %6202 = vmatprep.subr.mxu0 0.0
      %6203 = vmatpush1.msra.mxu0 0.0
      %6204 = vmatprep.subr.mxu0 0.0
      %6205 = vmatpush1.msra.mxu0 0.0
      %6206 = vmatprep.subr.mxu0 0.0
      %6207 = vmatpush1.msra.mxu0 0.0
      %6208 = vmatprep.subr.mxu0 0.0
      %6209 = vmatpush1.msra.mxu0 0.0
      %6210 = vmatprep.subr.mxu0 0.0
      %6211 = vmatpush1.msra.mxu0 0.0
      %6212 = vmatprep.subr.mxu0 0.0
      %6213 = vmatpush1.msra.mxu0 0.0
      %6214 = vmatprep.subr.mxu0 0.0
      %6215 = vmatpush1.msra.mxu0 0.0
      %6216 = vmatprep.subr.mxu0 0.0
      %6217 = vmatpush1.msra.mxu0 0.0
      %6218 = vmatprep.subr.mxu0 0.0
      %6219 = vmatpush1.msra.mxu0 0.0
      %6220 = vmatprep.subr.mxu0 0.0
      %6221 = vmatpush1.msra.mxu0 0.0
      %6222 = vmatprep.subr.mxu0 0.0
      %6223 = vmatpush1.msra.mxu0 0.0
      %6224 = vmatprep.subr.mxu0 0.0
      %6225 = vmatpush1.msra.mxu0 0.0
      %6226 = vmatprep.subr.mxu0 0.0
      %6227 = vmatpush1.msra.mxu0 0.0
      %6228 = vmatprep.subr.mxu0 0.0
      %6229 = vmatpush1.msra.mxu0 0.0
      %6230 = vmatprep.subr.mxu0 0.0
      %6231 = vmatpush1.msra.mxu0 0.0
      %6232 = vmatprep.subr.mxu0 0.0
      %6233 = vmatpush1.msra.mxu0 0.0
      %6234 = vmatprep.subr.mxu0 0.0
      %6235 = vmatpush1.msra.mxu0 0.0
      %6236 = vmatprep.subr.mxu0 0.0
      %6237 = vmatpush1.msra.mxu0 0.0
      %6238 = vmatprep.subr.mxu0 0.0
      %6239 = vmatpush1.msra.mxu0 0.0
      %6240 = vmatprep.subr.mxu0 0.0
      %6241 = vmatpush1.msra.mxu0 0.0
      %6242 = vmatprep.subr.mxu0 0.0
      %6243 = vmatpush1.msra.mxu0 0.0
      %6244 = vmatprep.subr.mxu0 0.0
      %6245 = vmatpush1.msra.mxu0 0.0
      %6246 = vmatprep.mubr.f32.mxu0 0.0
      %v6247 = vand.u32 %v5674, 4294901760
      %6248 = vmatmul.mubr.f32.gmra.mrb[0].mxu0 %v6247
      %v6249 = vpop.f32.mrb[0].mxu0
      %v6250 = vadd.f32 %v6165, %v6249
      %v6251 = vpop.f32.mrb[0].mxu0
      %6252 = vmatprep.mubr.f32.mxu0 0.0
      %v6253 = vand.u32 %v5677, 4294901760
      %6254 = vmatmul.mubr.f32.gmra.mrb[0].mxu0 %v6253
      %v6255 = vpop.f32.mrb[0].mxu0
      %v6256 = vadd.f32 %v6171, %v6255
      %v6257 = vpop.f32.mrb[0].mxu0
      %6258 = vdwg.mxu0
      %s6259 = scalar_lea.vmem %s3, 128
      %v6260 = vld [vmem:[%s6259] sm:$0xff]
      %v6261 = vld [vmem:[%s6259 + $0x8] sm:$0xff]
      %v6262 = vld [vmem:[%s6259 + $0x10] sm:$0xff]
      %v6263 = vld [vmem:[%s6259 + $0x18] sm:$0xff]
      %v6265 = vsel %vm1039, %v6250, 0
      %v6268 = vsel %vm1039, %v6256, 0
      %6270 = vmatprep.subr.mxu0 0.0
      %v6271 = vand.u32 %v6260, 4294901760
      %6272 = vmatpush1.msra.mxu0 %v6271
      %6273 = vmatprep.subr.mxu0 0.0
      %v6274 = vand.u32 %v6261, 4294901760
      %6275 = vmatpush1.msra.mxu0 %v6274
      %6276 = vmatprep.subr.mxu0 0.0
      %v6277 = vand.u32 %v6262, 4294901760
      %6278 = vmatpush1.msra.mxu0 %v6277
      %6279 = vmatprep.subr.mxu0 0.0
      %v6280 = vand.u32 %v6263, 4294901760
      %6281 = vmatpush1.msra.mxu0 %v6280
      %6282 = vmatprep.subr.mxu0 0.0
      %6283 = vmatpush1.msra.mxu0 0.0
      %6284 = vmatprep.subr.mxu0 0.0
      %6285 = vmatpush1.msra.mxu0 0.0
      %6286 = vmatprep.subr.mxu0 0.0
      %6287 = vmatpush1.msra.mxu0 0.0
      %6288 = vmatprep.subr.mxu0 0.0
      %6289 = vmatpush1.msra.mxu0 0.0
      %6290 = vmatprep.subr.mxu0 0.0
      %6291 = vmatpush1.msra.mxu0 0.0
      %6292 = vmatprep.subr.mxu0 0.0
      %6293 = vmatpush1.msra.mxu0 0.0
      %6294 = vmatprep.subr.mxu0 0.0
      %6295 = vmatpush1.msra.mxu0 0.0
      %6296 = vmatprep.subr.mxu0 0.0
      %6297 = vmatpush1.msra.mxu0 0.0
      %6298 = vmatprep.subr.mxu0 0.0
      %6299 = vmatpush1.msra.mxu0 0.0
      %6300 = vmatprep.subr.mxu0 0.0
      %6301 = vmatpush1.msra.mxu0 0.0
      %6302 = vmatprep.subr.mxu0 0.0
      %6303 = vmatpush1.msra.mxu0 0.0
      %6304 = vmatprep.subr.mxu0 0.0
      %6305 = vmatpush1.msra.mxu0 0.0
      %6306 = vmatprep.subr.mxu0 0.0
      %6307 = vmatpush1.msra.mxu0 0.0
      %6308 = vmatprep.subr.mxu0 0.0
      %6309 = vmatpush1.msra.mxu0 0.0
      %6310 = vmatprep.subr.mxu0 0.0
      %6311 = vmatpush1.msra.mxu0 0.0
      %6312 = vmatprep.subr.mxu0 0.0
      %6313 = vmatpush1.msra.mxu0 0.0
      %6314 = vmatprep.subr.mxu0 0.0
      %6315 = vmatpush1.msra.mxu0 0.0
      %6316 = vmatprep.subr.mxu0 0.0
      %6317 = vmatpush1.msra.mxu0 0.0
      %6318 = vmatprep.subr.mxu0 0.0
      %6319 = vmatpush1.msra.mxu0 0.0
      %6320 = vmatprep.subr.mxu0 0.0
      %6321 = vmatpush1.msra.mxu0 0.0
      %6322 = vmatprep.subr.mxu0 0.0
      %6323 = vmatpush1.msra.mxu0 0.0
      %6324 = vmatprep.subr.mxu0 0.0
      %6325 = vmatpush1.msra.mxu0 0.0
      %6326 = vmatprep.subr.mxu0 0.0
      %6327 = vmatpush1.msra.mxu0 0.0
      %6328 = vmatprep.subr.mxu0 0.0
      %6329 = vmatpush1.msra.mxu0 0.0
      %6330 = vmatprep.subr.mxu0 0.0
      %6331 = vmatpush1.msra.mxu0 0.0
      %6332 = vmatprep.subr.mxu0 0.0
      %6333 = vmatpush1.msra.mxu0 0.0
      %6334 = vmatprep.subr.mxu0 0.0
      %6335 = vmatpush1.msra.mxu0 0.0
      %6336 = vmatprep.subr.mxu0 0.0
      %6337 = vmatpush1.msra.mxu0 0.0
      %6338 = vmatprep.mubr.f32.mxu0 0.0
      %v6339 = vand.u32 %v6265, 4294901760
      %v6340 = vsub.f32 %v6265, %v6339
      %v6341 = vand.u32 %v6340, 4294901760
      %v6342 = vsub.f32 %v6340, %v6341
      %v6343 = vand.u32 %v6342, 4294901760
      %6344 = vmatmul.mubr.f32.gmra.mrb[0].mxu0 %v6343
      %v6345 = vpop.f32.mrb[0].mxu0
      %v6346 = vadd.f32 0.0, %v6345
      %v6347 = vpop.f32.mrb[0].mxu0
      %6348 = vmatprep.mubr.f32.mxu0 0.0
      %v6349 = vand.u32 %v6268, 4294901760
      %v6350 = vsub.f32 %v6268, %v6349
      %v6351 = vand.u32 %v6350, 4294901760
      %v6352 = vsub.f32 %v6350, %v6351
      %v6353 = vand.u32 %v6352, 4294901760
      %6354 = vmatmul.mubr.f32.gmra.mrb[0].mxu0 %v6353
      %v6355 = vpop.f32.mrb[0].mxu0
      %v6356 = vadd.f32 0.0, %v6355
      %v6357 = vpop.f32.mrb[0].mxu0
      %6358 = vdwg.mxu0
      %6359 = vmatprep.subr.mxu0 0.0
      %v6360 = vand.u32 %v6260, 4294901760
      %v6361 = vsub.f32 %v6260, %v6360
      %v6362 = vand.u32 %v6361, 4294901760
      %v6363 = vsub.f32 %v6361, %v6362
      %v6364 = vand.u32 %v6363, 4294901760
      %6365 = vmatpush1.msra.mxu0 %v6364
      %6366 = vmatprep.subr.mxu0 0.0
      %v6367 = vand.u32 %v6261, 4294901760
      %v6368 = vsub.f32 %v6261, %v6367
      %v6369 = vand.u32 %v6368, 4294901760
      %v6370 = vsub.f32 %v6368, %v6369
      %v6371 = vand.u32 %v6370, 4294901760
      %6372 = vmatpush1.msra.mxu0 %v6371
      %6373 = vmatprep.subr.mxu0 0.0
      %v6374 = vand.u32 %v6262, 4294901760
      %v6375 = vsub.f32 %v6262, %v6374
      %v6376 = vand.u32 %v6375, 4294901760
      %v6377 = vsub.f32 %v6375, %v6376
      %v6378 = vand.u32 %v6377, 4294901760
      %6379 = vmatpush1.msra.mxu0 %v6378
      %6380 = vmatprep.subr.mxu0 0.0
      %v6381 = vand.u32 %v6263, 4294901760
      %v6382 = vsub.f32 %v6263, %v6381
      %v6383 = vand.u32 %v6382, 4294901760
      %v6384 = vsub.f32 %v6382, %v6383
      %v6385 = vand.u32 %v6384, 4294901760
      %6386 = vmatpush1.msra.mxu0 %v6385
      %6387 = vmatprep.subr.mxu0 0.0
      %6388 = vmatpush1.msra.mxu0 0.0
      %6389 = vmatprep.subr.mxu0 0.0
      %6390 = vmatpush1.msra.mxu0 0.0
      %6391 = vmatprep.subr.mxu0 0.0
      %6392 = vmatpush1.msra.mxu0 0.0
      %6393 = vmatprep.subr.mxu0 0.0
      %6394 = vmatpush1.msra.mxu0 0.0
      %6395 = vmatprep.subr.mxu0 0.0
      %6396 = vmatpush1.msra.mxu0 0.0
      %6397 = vmatprep.subr.mxu0 0.0
      %6398 = vmatpush1.msra.mxu0 0.0
      %6399 = vmatprep.subr.mxu0 0.0
      %6400 = vmatpush1.msra.mxu0 0.0
      %6401 = vmatprep.subr.mxu0 0.0
      %6402 = vmatpush1.msra.mxu0 0.0
      %6403 = vmatprep.subr.mxu0 0.0
      %6404 = vmatpush1.msra.mxu0 0.0
      %6405 = vmatprep.subr.mxu0 0.0
      %6406 = vmatpush1.msra.mxu0 0.0
      %6407 = vmatprep.subr.mxu0 0.0
      %6408 = vmatpush1.msra.mxu0 0.0
      %6409 = vmatprep.subr.mxu0 0.0
      %6410 = vmatpush1.msra.mxu0 0.0
      %6411 = vmatprep.subr.mxu0 0.0
      %6412 = vmatpush1.msra.mxu0 0.0
      %6413 = vmatprep.subr.mxu0 0.0
      %6414 = vmatpush1.msra.mxu0 0.0
      %6415 = vmatprep.subr.mxu0 0.0
      %6416 = vmatpush1.msra.mxu0 0.0
      %6417 = vmatprep.subr.mxu0 0.0
      %6418 = vmatpush1.msra.mxu0 0.0
      %6419 = vmatprep.subr.mxu0 0.0
      %6420 = vmatpush1.msra.mxu0 0.0
      %6421 = vmatprep.subr.mxu0 0.0
      %6422 = vmatpush1.msra.mxu0 0.0
      %6423 = vmatprep.subr.mxu0 0.0
      %6424 = vmatpush1.msra.mxu0 0.0
      %6425 = vmatprep.subr.mxu0 0.0
      %6426 = vmatpush1.msra.mxu0 0.0
      %6427 = vmatprep.subr.mxu0 0.0
      %6428 = vmatpush1.msra.mxu0 0.0
      %6429 = vmatprep.subr.mxu0 0.0
      %6430 = vmatpush1.msra.mxu0 0.0
      %6431 = vmatprep.subr.mxu0 0.0
      %6432 = vmatpush1.msra.mxu0 0.0
      %6433 = vmatprep.subr.mxu0 0.0
      %6434 = vmatpush1.msra.mxu0 0.0
      %6435 = vmatprep.subr.mxu0 0.0
      %6436 = vmatpush1.msra.mxu0 0.0
      %6437 = vmatprep.subr.mxu0 0.0
      %6438 = vmatpush1.msra.mxu0 0.0
      %6439 = vmatprep.subr.mxu0 0.0
      %6440 = vmatpush1.msra.mxu0 0.0
      %6441 = vmatprep.subr.mxu0 0.0
      %6442 = vmatpush1.msra.mxu0 0.0
      %6443 = vmatprep.mubr.f32.mxu0 0.0
      %v6444 = vand.u32 %v6265, 4294901760
      %6445 = vmatmul.mubr.f32.gmra.mrb[0].mxu0 %v6444
      %v6446 = vpop.f32.mrb[0].mxu0
      %v6447 = vadd.f32 %v6346, %v6446
      %v6448 = vpop.f32.mrb[0].mxu0
      %6449 = vmatprep.mubr.f32.mxu0 0.0
      %v6450 = vand.u32 %v6268, 4294901760
      %6451 = vmatmul.mubr.f32.gmra.mrb[0].mxu0 %v6450
      %v6452 = vpop.f32.mrb[0].mxu0
      %v6453 = vadd.f32 %v6356, %v6452
      %v6454 = vpop.f32.mrb[0].mxu0
      %6455 = vdwg.mxu0
      %6456 = vmatprep.subr.mxu0 0.0
      %v6457 = vand.u32 %v6260, 4294901760
      %v6458 = vsub.f32 %v6260, %v6457
      %6459 = vmatpush1.msra.mxu0 %v6458
      %6460 = vmatprep.subr.mxu0 0.0
      %v6461 = vand.u32 %v6261, 4294901760
      %v6462 = vsub.f32 %v6261, %v6461
      %6463 = vmatpush1.msra.mxu0 %v6462
      %6464 = vmatprep.subr.mxu0 0.0
      %v6465 = vand.u32 %v6262, 4294901760
      %v6466 = vsub.f32 %v6262, %v6465
      %6467 = vmatpush1.msra.mxu0 %v6466
      %6468 = vmatprep.subr.mxu0 0.0
      %v6469 = vand.u32 %v6263, 4294901760
      %v6470 = vsub.f32 %v6263, %v6469
      %6471 = vmatpush1.msra.mxu0 %v6470
      %6472 = vmatprep.subr.mxu0 0.0
      %6473 = vmatpush1.msra.mxu0 0.0
      %6474 = vmatprep.subr.mxu0 0.0
      %6475 = vmatpush1.msra.mxu0 0.0
      %6476 = vmatprep.subr.mxu0 0.0
      %6477 = vmatpush1.msra.mxu0 0.0
      %6478 = vmatprep.subr.mxu0 0.0
      %6479 = vmatpush1.msra.mxu0 0.0
      %6480 = vmatprep.subr.mxu0 0.0
      %6481 = vmatpush1.msra.mxu0 0.0
      %6482 = vmatprep.subr.mxu0 0.0
      %6483 = vmatpush1.msra.mxu0 0.0
      %6484 = vmatprep.subr.mxu0 0.0
      %6485 = vmatpush1.msra.mxu0 0.0
      %6486 = vmatprep.subr.mxu0 0.0
      %6487 = vmatpush1.msra.mxu0 0.0
      %6488 = vmatprep.subr.mxu0 0.0
      %6489 = vmatpush1.msra.mxu0 0.0
      %6490 = vmatprep.subr.mxu0 0.0
      %6491 = vmatpush1.msra.mxu0 0.0
      %6492 = vmatprep.subr.mxu0 0.0
      %6493 = vmatpush1.msra.mxu0 0.0
      %6494 = vmatprep.subr.mxu0 0.0
      %6495 = vmatpush1.msra.mxu0 0.0
      %6496 = vmatprep.subr.mxu0 0.0
      %6497 = vmatpush1.msra.mxu0 0.0
      %6498 = vmatprep.subr.mxu0 0.0
      %6499 = vmatpush1.msra.mxu0 0.0
      %6500 = vmatprep.subr.mxu0 0.0
      %6501 = vmatpush1.msra.mxu0 0.0
      %6502 = vmatprep.subr.mxu0 0.0
      %6503 = vmatpush1.msra.mxu0 0.0
      %6504 = vmatprep.subr.mxu0 0.0
      %6505 = vmatpush1.msra.mxu0 0.0
      %6506 = vmatprep.subr.mxu0 0.0
      %6507 = vmatpush1.msra.mxu0 0.0
      %6508 = vmatprep.subr.mxu0 0.0
      %6509 = vmatpush1.msra.mxu0 0.0
      %6510 = vmatprep.subr.mxu0 0.0
      %6511 = vmatpush1.msra.mxu0 0.0
      %6512 = vmatprep.subr.mxu0 0.0
      %6513 = vmatpush1.msra.mxu0 0.0
      %6514 = vmatprep.subr.mxu0 0.0
      %6515 = vmatpush1.msra.mxu0 0.0
      %6516 = vmatprep.subr.mxu0 0.0
      %6517 = vmatpush1.msra.mxu0 0.0
      %6518 = vmatprep.subr.mxu0 0.0
      %6519 = vmatpush1.msra.mxu0 0.0
      %6520 = vmatprep.subr.mxu0 0.0
      %6521 = vmatpush1.msra.mxu0 0.0
      %6522 = vmatprep.subr.mxu0 0.0
      %6523 = vmatpush1.msra.mxu0 0.0
      %6524 = vmatprep.subr.mxu0 0.0
      %6525 = vmatpush1.msra.mxu0 0.0
      %6526 = vmatprep.subr.mxu0 0.0
      %6527 = vmatpush1.msra.mxu0 0.0
      %6528 = vmatprep.mubr.f32.mxu0 0.0
      %v6529 = vand.u32 %v6265, 4294901760
      %v6530 = vsub.f32 %v6265, %v6529
      %6531 = vmatmul.mubr.f32.gmra.mrb[0].mxu0 %v6530
      %v6532 = vpop.f32.mrb[0].mxu0
      %v6533 = vadd.f32 %v6447, %v6532
      %v6534 = vpop.f32.mrb[0].mxu0
      %6535 = vmatprep.mubr.f32.mxu0 0.0
      %v6536 = vand.u32 %v6268, 4294901760
      %v6537 = vsub.f32 %v6268, %v6536
      %6538 = vmatmul.mubr.f32.gmra.mrb[0].mxu0 %v6537
      %v6539 = vpop.f32.mrb[0].mxu0
      %v6540 = vadd.f32 %v6453, %v6539
      %v6541 = vpop.f32.mrb[0].mxu0
      %6542 = vdwg.mxu0
      %6543 = vmatprep.subr.mxu0 0.0
      %v6544 = vand.u32 %v6260, 4294901760
      %6545 = vmatpush1.msra.mxu0 %v6544
      %6546 = vmatprep.subr.mxu0 0.0
      %v6547 = vand.u32 %v6261, 4294901760
      %6548 = vmatpush1.msra.mxu0 %v6547
      %6549 = vmatprep.subr.mxu0 0.0
      %v6550 = vand.u32 %v6262, 4294901760
      %6551 = vmatpush1.msra.mxu0 %v6550
      %6552 = vmatprep.subr.mxu0 0.0
      %v6553 = vand.u32 %v6263, 4294901760
      %6554 = vmatpush1.msra.mxu0 %v6553
      %6555 = vmatprep.subr.mxu0 0.0
      %6556 = vmatpush1.msra.mxu0 0.0
      %6557 = vmatprep.subr.mxu0 0.0
      %6558 = vmatpush1.msra.mxu0 0.0
      %6559 = vmatprep.subr.mxu0 0.0
      %6560 = vmatpush1.msra.mxu0 0.0
      %6561 = vmatprep.subr.mxu0 0.0
      %6562 = vmatpush1.msra.mxu0 0.0
      %6563 = vmatprep.subr.mxu0 0.0
      %6564 = vmatpush1.msra.mxu0 0.0
      %6565 = vmatprep.subr.mxu0 0.0
      %6566 = vmatpush1.msra.mxu0 0.0
      %6567 = vmatprep.subr.mxu0 0.0
      %6568 = vmatpush1.msra.mxu0 0.0
      %6569 = vmatprep.subr.mxu0 0.0
      %6570 = vmatpush1.msra.mxu0 0.0
      %6571 = vmatprep.subr.mxu0 0.0
      %6572 = vmatpush1.msra.mxu0 0.0
      %6573 = vmatprep.subr.mxu0 0.0
      %6574 = vmatpush1.msra.mxu0 0.0
      %6575 = vmatprep.subr.mxu0 0.0
      %6576 = vmatpush1.msra.mxu0 0.0
      %6577 = vmatprep.subr.mxu0 0.0
      %6578 = vmatpush1.msra.mxu0 0.0
      %6579 = vmatprep.subr.mxu0 0.0
      %6580 = vmatpush1.msra.mxu0 0.0
      %6581 = vmatprep.subr.mxu0 0.0
      %6582 = vmatpush1.msra.mxu0 0.0
      %6583 = vmatprep.subr.mxu0 0.0
      %6584 = vmatpush1.msra.mxu0 0.0
      %6585 = vmatprep.subr.mxu0 0.0
      %6586 = vmatpush1.msra.mxu0 0.0
      %6587 = vmatprep.subr.mxu0 0.0
      %6588 = vmatpush1.msra.mxu0 0.0
      %6589 = vmatprep.subr.mxu0 0.0
      %6590 = vmatpush1.msra.mxu0 0.0
      %6591 = vmatprep.subr.mxu0 0.0
      %6592 = vmatpush1.msra.mxu0 0.0
      %6593 = vmatprep.subr.mxu0 0.0
      %6594 = vmatpush1.msra.mxu0 0.0
      %6595 = vmatprep.subr.mxu0 0.0
      %6596 = vmatpush1.msra.mxu0 0.0
      %6597 = vmatprep.subr.mxu0 0.0
      %6598 = vmatpush1.msra.mxu0 0.0
      %6599 = vmatprep.subr.mxu0 0.0
      %6600 = vmatpush1.msra.mxu0 0.0
      %6601 = vmatprep.subr.mxu0 0.0
      %6602 = vmatpush1.msra.mxu0 0.0
      %6603 = vmatprep.subr.mxu0 0.0
      %6604 = vmatpush1.msra.mxu0 0.0
      %6605 = vmatprep.subr.mxu0 0.0
      %6606 = vmatpush1.msra.mxu0 0.0
      %6607 = vmatprep.subr.mxu0 0.0
      %6608 = vmatpush1.msra.mxu0 0.0
      %6609 = vmatprep.subr.mxu0 0.0
      %6610 = vmatpush1.msra.mxu0 0.0
      %6611 = vmatprep.mubr.f32.mxu0 0.0
      %v6612 = vand.u32 %v6265, 4294901760
      %v6613 = vsub.f32 %v6265, %v6612
      %v6614 = vand.u32 %v6613, 4294901760
      %6615 = vmatmul.mubr.f32.gmra.mrb[0].mxu0 %v6614
      %v6616 = vpop.f32.mrb[0].mxu0
      %v6617 = vadd.f32 %v6533, %v6616
      %v6618 = vpop.f32.mrb[0].mxu0
      %6619 = vmatprep.mubr.f32.mxu0 0.0
      %v6620 = vand.u32 %v6268, 4294901760
      %v6621 = vsub.f32 %v6268, %v6620
      %v6622 = vand.u32 %v6621, 4294901760
      %6623 = vmatmul.mubr.f32.gmra.mrb[0].mxu0 %v6622
      %v6624 = vpop.f32.mrb[0].mxu0
      %v6625 = vadd.f32 %v6540, %v6624
      %v6626 = vpop.f32.mrb[0].mxu0
      %6627 = vdwg.mxu0
      %6628 = vmatprep.subr.mxu0 0.0
      %v6629 = vand.u32 %v6260, 4294901760
      %v6630 = vsub.f32 %v6260, %v6629
      %v6631 = vand.u32 %v6630, 4294901760
      %6632 = vmatpush1.msra.mxu0 %v6631
      %6633 = vmatprep.subr.mxu0 0.0
      %v6634 = vand.u32 %v6261, 4294901760
      %v6635 = vsub.f32 %v6261, %v6634
      %v6636 = vand.u32 %v6635, 4294901760
      %6637 = vmatpush1.msra.mxu0 %v6636
      %6638 = vmatprep.subr.mxu0 0.0
      %v6639 = vand.u32 %v6262, 4294901760
      %v6640 = vsub.f32 %v6262, %v6639
      %v6641 = vand.u32 %v6640, 4294901760
      %6642 = vmatpush1.msra.mxu0 %v6641
      %6643 = vmatprep.subr.mxu0 0.0
      %v6644 = vand.u32 %v6263, 4294901760
      %v6645 = vsub.f32 %v6263, %v6644
      %v6646 = vand.u32 %v6645, 4294901760
      %6647 = vmatpush1.msra.mxu0 %v6646
      %6648 = vmatprep.subr.mxu0 0.0
      %6649 = vmatpush1.msra.mxu0 0.0
      %6650 = vmatprep.subr.mxu0 0.0
      %6651 = vmatpush1.msra.mxu0 0.0
      %6652 = vmatprep.subr.mxu0 0.0
      %6653 = vmatpush1.msra.mxu0 0.0
      %6654 = vmatprep.subr.mxu0 0.0
      %6655 = vmatpush1.msra.mxu0 0.0
      %6656 = vmatprep.subr.mxu0 0.0
      %6657 = vmatpush1.msra.mxu0 0.0
      %6658 = vmatprep.subr.mxu0 0.0
      %6659 = vmatpush1.msra.mxu0 0.0
      %6660 = vmatprep.subr.mxu0 0.0
      %6661 = vmatpush1.msra.mxu0 0.0
      %6662 = vmatprep.subr.mxu0 0.0
      %6663 = vmatpush1.msra.mxu0 0.0
      %6664 = vmatprep.subr.mxu0 0.0
      %6665 = vmatpush1.msra.mxu0 0.0
      %6666 = vmatprep.subr.mxu0 0.0
      %6667 = vmatpush1.msra.mxu0 0.0
      %6668 = vmatprep.subr.mxu0 0.0
      %6669 = vmatpush1.msra.mxu0 0.0
      %6670 = vmatprep.subr.mxu0 0.0
      %6671 = vmatpush1.msra.mxu0 0.0
      %6672 = vmatprep.subr.mxu0 0.0
      %6673 = vmatpush1.msra.mxu0 0.0
      %6674 = vmatprep.subr.mxu0 0.0
      %6675 = vmatpush1.msra.mxu0 0.0
      %6676 = vmatprep.subr.mxu0 0.0
      %6677 = vmatpush1.msra.mxu0 0.0
      %6678 = vmatprep.subr.mxu0 0.0
      %6679 = vmatpush1.msra.mxu0 0.0
      %6680 = vmatprep.subr.mxu0 0.0
      %6681 = vmatpush1.msra.mxu0 0.0
      %6682 = vmatprep.subr.mxu0 0.0
      %6683 = vmatpush1.msra.mxu0 0.0
      %6684 = vmatprep.subr.mxu0 0.0
      %6685 = vmatpush1.msra.mxu0 0.0
      %6686 = vmatprep.subr.mxu0 0.0
      %6687 = vmatpush1.msra.mxu0 0.0
      %6688 = vmatprep.subr.mxu0 0.0
      %6689 = vmatpush1.msra.mxu0 0.0
      %6690 = vmatprep.subr.mxu0 0.0
      %6691 = vmatpush1.msra.mxu0 0.0
      %6692 = vmatprep.subr.mxu0 0.0
      %6693 = vmatpush1.msra.mxu0 0.0
      %6694 = vmatprep.subr.mxu0 0.0
      %6695 = vmatpush1.msra.mxu0 0.0
      %6696 = vmatprep.subr.mxu0 0.0
      %6697 = vmatpush1.msra.mxu0 0.0
      %6698 = vmatprep.subr.mxu0 0.0
      %6699 = vmatpush1.msra.mxu0 0.0
      %6700 = vmatprep.subr.mxu0 0.0
      %6701 = vmatpush1.msra.mxu0 0.0
      %6702 = vmatprep.subr.mxu0 0.0
      %6703 = vmatpush1.msra.mxu0 0.0
      %6704 = vmatprep.mubr.f32.mxu0 0.0
      %v6705 = vand.u32 %v6265, 4294901760
      %6706 = vmatmul.mubr.f32.gmra.mrb[0].mxu0 %v6705
      %v6707 = vpop.f32.mrb[0].mxu0
      %v6708 = vadd.f32 %v6617, %v6707
      %v6709 = vpop.f32.mrb[0].mxu0
      %6710 = vmatprep.mubr.f32.mxu0 0.0
      %v6711 = vand.u32 %v6268, 4294901760
      %6712 = vmatmul.mubr.f32.gmra.mrb[0].mxu0 %v6711
      %v6713 = vpop.f32.mrb[0].mxu0
      %v6714 = vadd.f32 %v6625, %v6713
      %v6715 = vpop.f32.mrb[0].mxu0
      %6716 = vdwg.mxu0
      %6717 = vmatprep.subr.mxu0 0.0
      %v6718 = vand.u32 %v6260, 4294901760
      %6719 = vmatpush1.msra.mxu0 %v6718
      %6720 = vmatprep.subr.mxu0 0.0
      %v6721 = vand.u32 %v6261, 4294901760
      %6722 = vmatpush1.msra.mxu0 %v6721
      %6723 = vmatprep.subr.mxu0 0.0
      %v6724 = vand.u32 %v6262, 4294901760
      %6725 = vmatpush1.msra.mxu0 %v6724
      %6726 = vmatprep.subr.mxu0 0.0
      %v6727 = vand.u32 %v6263, 4294901760
      %6728 = vmatpush1.msra.mxu0 %v6727
      %6729 = vmatprep.subr.mxu0 0.0
      %6730 = vmatpush1.msra.mxu0 0.0
      %6731 = vmatprep.subr.mxu0 0.0
      %6732 = vmatpush1.msra.mxu0 0.0
      %6733 = vmatprep.subr.mxu0 0.0
      %6734 = vmatpush1.msra.mxu0 0.0
      %6735 = vmatprep.subr.mxu0 0.0
      %6736 = vmatpush1.msra.mxu0 0.0
      %6737 = vmatprep.subr.mxu0 0.0
      %6738 = vmatpush1.msra.mxu0 0.0
      %6739 = vmatprep.subr.mxu0 0.0
      %6740 = vmatpush1.msra.mxu0 0.0
      %6741 = vmatprep.subr.mxu0 0.0
      %6742 = vmatpush1.msra.mxu0 0.0
      %6743 = vmatprep.subr.mxu0 0.0
      %6744 = vmatpush1.msra.mxu0 0.0
      %6745 = vmatprep.subr.mxu0 0.0
      %6746 = vmatpush1.msra.mxu0 0.0
      %6747 = vmatprep.subr.mxu0 0.0
      %6748 = vmatpush1.msra.mxu0 0.0
      %6749 = vmatprep.subr.mxu0 0.0
      %6750 = vmatpush1.msra.mxu0 0.0
      %6751 = vmatprep.subr.mxu0 0.0
      %6752 = vmatpush1.msra.mxu0 0.0
      %6753 = vmatprep.subr.mxu0 0.0
      %6754 = vmatpush1.msra.mxu0 0.0
      %6755 = vmatprep.subr.mxu0 0.0
      %6756 = vmatpush1.msra.mxu0 0.0
      %6757 = vmatprep.subr.mxu0 0.0
      %6758 = vmatpush1.msra.mxu0 0.0
      %6759 = vmatprep.subr.mxu0 0.0
      %6760 = vmatpush1.msra.mxu0 0.0
      %6761 = vmatprep.subr.mxu0 0.0
      %6762 = vmatpush1.msra.mxu0 0.0
      %6763 = vmatprep.subr.mxu0 0.0
      %6764 = vmatpush1.msra.mxu0 0.0
      %6765 = vmatprep.subr.mxu0 0.0
      %6766 = vmatpush1.msra.mxu0 0.0
      %6767 = vmatprep.subr.mxu0 0.0
      %6768 = vmatpush1.msra.mxu0 0.0
      %6769 = vmatprep.subr.mxu0 0.0
      %6770 = vmatpush1.msra.mxu0 0.0
      %6771 = vmatprep.subr.mxu0 0.0
      %6772 = vmatpush1.msra.mxu0 0.0
      %6773 = vmatprep.subr.mxu0 0.0
      %6774 = vmatpush1.msra.mxu0 0.0
      %6775 = vmatprep.subr.mxu0 0.0
      %6776 = vmatpush1.msra.mxu0 0.0
      %6777 = vmatprep.subr.mxu0 0.0
      %6778 = vmatpush1.msra.mxu0 0.0
      %6779 = vmatprep.subr.mxu0 0.0
      %6780 = vmatpush1.msra.mxu0 0.0
      %6781 = vmatprep.subr.mxu0 0.0
      %6782 = vmatpush1.msra.mxu0 0.0
      %6783 = vmatprep.subr.mxu0 0.0
      %6784 = vmatpush1.msra.mxu0 0.0
      %6785 = vmatprep.mubr.f32.mxu0 0.0
      %v6786 = vand.u32 %v6265, 4294901760
      %6787 = vmatmul.mubr.f32.gmra.mrb[0].mxu0 %v6786
      %v6788 = vpop.f32.mrb[0].mxu0
      %v6789 = vadd.f32 %v6708, %v6788
      %v6790 = vpop.f32.mrb[0].mxu0
      %6791 = vmatprep.mubr.f32.mxu0 0.0
      %v6792 = vand.u32 %v6268, 4294901760
      %6793 = vmatmul.mubr.f32.gmra.mrb[0].mxu0 %v6792
      %v6794 = vpop.f32.mrb[0].mxu0
      %v6795 = vadd.f32 %v6714, %v6794
      %v6796 = vpop.f32.mrb[0].mxu0
      %6797 = vdwg.mxu0
      %v6798 = vadd.f32 %v5668, %v6789
      %v6799 = vadd.f32 %v5669, %v6795
      %s6800 = scalar_lea.vmem %s2, 80
      %v6801 = vld [vmem:[%s6800] sm:$0xff]
      %v6802 = vld [vmem:[%s6800 + $0x8] sm:$0xff]
      %v6804 = vsel %vm1157, %v6801, 0
      %v6807 = vsel %vm1157, %v6802, 0
      %6809 = vmatprep.subr.mxu0 0.0
      %v6810 = vand.u32 %v1147, 4294901760
      %6811 = vmatpush1.msra.mxu0 %v6810
      %6812 = vmatprep.subr.mxu0 0.0
      %v6813 = vand.u32 %v1148, 4294901760
      %6814 = vmatpush1.msra.mxu0 %v6813
      %6815 = vmatprep.subr.mxu0 0.0
      %v6816 = vand.u32 %v1149, 4294901760
      %6817 = vmatpush1.msra.mxu0 %v6816
      %6818 = vmatprep.subr.mxu0 0.0
      %v6819 = vand.u32 %v1150, 4294901760
      %6820 = vmatpush1.msra.mxu0 %v6819
      %6821 = vmatprep.subr.mxu0 0.0
      %v6822 = vand.u32 %v1151, 4294901760
      %6823 = vmatpush1.msra.mxu0 %v6822
      %6824 = vmatprep.subr.mxu0 0.0
      %v6825 = vand.u32 %v1152, 4294901760
      %6826 = vmatpush1.msra.mxu0 %v6825
      %6827 = vmatprep.subr.mxu0 0.0
      %v6828 = vand.u32 %v1153, 4294901760
      %6829 = vmatpush1.msra.mxu0 %v6828
      %6830 = vmatprep.subr.mxu0 0.0
      %v6831 = vand.u32 %v1154, 4294901760
      %6832 = vmatpush1.msra.mxu0 %v6831
      %6833 = vmatprep.subr.mxu0 0.0
      %6834 = vmatpush1.msra.mxu0 0.0
      %6835 = vmatprep.subr.mxu0 0.0
      %6836 = vmatpush1.msra.mxu0 0.0
      %6837 = vmatprep.subr.mxu0 0.0
      %6838 = vmatpush1.msra.mxu0 0.0
      %6839 = vmatprep.subr.mxu0 0.0
      %6840 = vmatpush1.msra.mxu0 0.0
      %6841 = vmatprep.subr.mxu0 0.0
      %6842 = vmatpush1.msra.mxu0 0.0
      %6843 = vmatprep.subr.mxu0 0.0
      %6844 = vmatpush1.msra.mxu0 0.0
      %6845 = vmatprep.subr.mxu0 0.0
      %6846 = vmatpush1.msra.mxu0 0.0
      %6847 = vmatprep.subr.mxu0 0.0
      %6848 = vmatpush1.msra.mxu0 0.0
      %6849 = vmatprep.subr.mxu0 0.0
      %6850 = vmatpush1.msra.mxu0 0.0
      %6851 = vmatprep.subr.mxu0 0.0
      %6852 = vmatpush1.msra.mxu0 0.0
      %6853 = vmatprep.subr.mxu0 0.0
      %6854 = vmatpush1.msra.mxu0 0.0
      %6855 = vmatprep.subr.mxu0 0.0
      %6856 = vmatpush1.msra.mxu0 0.0
      %6857 = vmatprep.subr.mxu0 0.0
      %6858 = vmatpush1.msra.mxu0 0.0
      %6859 = vmatprep.subr.mxu0 0.0
      %6860 = vmatpush1.msra.mxu0 0.0
      %6861 = vmatprep.subr.mxu0 0.0
      %6862 = vmatpush1.msra.mxu0 0.0
      %6863 = vmatprep.subr.mxu0 0.0
      %6864 = vmatpush1.msra.mxu0 0.0
      %6865 = vmatprep.subr.mxu0 0.0
      %6866 = vmatpush1.msra.mxu0 0.0
      %6867 = vmatprep.subr.mxu0 0.0
      %6868 = vmatpush1.msra.mxu0 0.0
      %6869 = vmatprep.subr.mxu0 0.0
      %6870 = vmatpush1.msra.mxu0 0.0
      %6871 = vmatprep.subr.mxu0 0.0
      %6872 = vmatpush1.msra.mxu0 0.0
      %6873 = vmatprep.subr.mxu0 0.0
      %6874 = vmatpush1.msra.mxu0 0.0
      %6875 = vmatprep.subr.mxu0 0.0
      %6876 = vmatpush1.msra.mxu0 0.0
      %6877 = vmatprep.subr.mxu0 0.0
      %6878 = vmatpush1.msra.mxu0 0.0
      %6879 = vmatprep.subr.mxu0 0.0
      %6880 = vmatpush1.msra.mxu0 0.0
      %6881 = vmatprep.mubr.f32.mxu0 0.0
      %v6882 = vand.u32 %v6804, 4294901760
      %v6883 = vsub.f32 %v6804, %v6882
      %v6884 = vand.u32 %v6883, 4294901760
      %v6885 = vsub.f32 %v6883, %v6884
      %v6886 = vand.u32 %v6885, 4294901760
      %6887 = vmatmul.mubr.f32.gmra.mrb[0].mxu0 %v6886
      %v6888 = vpop.f32.mrb[0].mxu0
      %v6889 = vadd.f32 0.0, %v6888
      %v6890 = vpop.f32.mrb[0].mxu0
      %6891 = vmatprep.mubr.f32.mxu0 0.0
      %v6892 = vand.u32 %v6807, 4294901760
      %v6893 = vsub.f32 %v6807, %v6892
      %v6894 = vand.u32 %v6893, 4294901760
      %v6895 = vsub.f32 %v6893, %v6894
      %v6896 = vand.u32 %v6895, 4294901760
      %6897 = vmatmul.mubr.f32.gmra.mrb[0].mxu0 %v6896
      %v6898 = vpop.f32.mrb[0].mxu0
      %v6899 = vadd.f32 0.0, %v6898
      %v6900 = vpop.f32.mrb[0].mxu0
      %6901 = vdwg.mxu0
      %6902 = vmatprep.subr.mxu0 0.0
      %v6903 = vand.u32 %v1147, 4294901760
      %v6904 = vsub.f32 %v1147, %v6903
      %v6905 = vand.u32 %v6904, 4294901760
      %v6906 = vsub.f32 %v6904, %v6905
      %v6907 = vand.u32 %v6906, 4294901760
      %6908 = vmatpush1.msra.mxu0 %v6907
      %6909 = vmatprep.subr.mxu0 0.0
      %v6910 = vand.u32 %v1148, 4294901760
      %v6911 = vsub.f32 %v1148, %v6910
      %v6912 = vand.u32 %v6911, 4294901760
      %v6913 = vsub.f32 %v6911, %v6912
      %v6914 = vand.u32 %v6913, 4294901760
      %6915 = vmatpush1.msra.mxu0 %v6914
      %6916 = vmatprep.subr.mxu0 0.0
      %v6917 = vand.u32 %v1149, 4294901760
      %v6918 = vsub.f32 %v1149, %v6917
      %v6919 = vand.u32 %v6918, 4294901760
      %v6920 = vsub.f32 %v6918, %v6919
      %v6921 = vand.u32 %v6920, 4294901760
      %6922 = vmatpush1.msra.mxu0 %v6921
      %6923 = vmatprep.subr.mxu0 0.0
      %v6924 = vand.u32 %v1150, 4294901760
      %v6925 = vsub.f32 %v1150, %v6924
      %v6926 = vand.u32 %v6925, 4294901760
      %v6927 = vsub.f32 %v6925, %v6926
      %v6928 = vand.u32 %v6927, 4294901760
      %6929 = vmatpush1.msra.mxu0 %v6928
      %6930 = vmatprep.subr.mxu0 0.0
      %v6931 = vand.u32 %v1151, 4294901760
      %v6932 = vsub.f32 %v1151, %v6931
      %v6933 = vand.u32 %v6932, 4294901760
      %v6934 = vsub.f32 %v6932, %v6933
      %v6935 = vand.u32 %v6934, 4294901760
      %6936 = vmatpush1.msra.mxu0 %v6935
      %6937 = vmatprep.subr.mxu0 0.0
      %v6938 = vand.u32 %v1152, 4294901760
      %v6939 = vsub.f32 %v1152, %v6938
      %v6940 = vand.u32 %v6939, 4294901760
      %v6941 = vsub.f32 %v6939, %v6940
      %v6942 = vand.u32 %v6941, 4294901760
      %6943 = vmatpush1.msra.mxu0 %v6942
      %6944 = vmatprep.subr.mxu0 0.0
      %v6945 = vand.u32 %v1153, 4294901760
      %v6946 = vsub.f32 %v1153, %v6945
      %v6947 = vand.u32 %v6946, 4294901760
      %v6948 = vsub.f32 %v6946, %v6947
      %v6949 = vand.u32 %v6948, 4294901760
      %6950 = vmatpush1.msra.mxu0 %v6949
      %6951 = vmatprep.subr.mxu0 0.0
      %v6952 = vand.u32 %v1154, 4294901760
      %v6953 = vsub.f32 %v1154, %v6952
      %v6954 = vand.u32 %v6953, 4294901760
      %v6955 = vsub.f32 %v6953, %v6954
      %v6956 = vand.u32 %v6955, 4294901760
      %6957 = vmatpush1.msra.mxu0 %v6956
      %6958 = vmatprep.subr.mxu0 0.0
      %6959 = vmatpush1.msra.mxu0 0.0
      %6960 = vmatprep.subr.mxu0 0.0
      %6961 = vmatpush1.msra.mxu0 0.0
      %6962 = vmatprep.subr.mxu0 0.0
      %6963 = vmatpush1.msra.mxu0 0.0
      %6964 = vmatprep.subr.mxu0 0.0
      %6965 = vmatpush1.msra.mxu0 0.0
      %6966 = vmatprep.subr.mxu0 0.0
      %6967 = vmatpush1.msra.mxu0 0.0
      %6968 = vmatprep.subr.mxu0 0.0
      %6969 = vmatpush1.msra.mxu0 0.0
      %6970 = vmatprep.subr.mxu0 0.0
      %6971 = vmatpush1.msra.mxu0 0.0
      %6972 = vmatprep.subr.mxu0 0.0
      %6973 = vmatpush1.msra.mxu0 0.0
      %6974 = vmatprep.subr.mxu0 0.0
      %6975 = vmatpush1.msra.mxu0 0.0
      %6976 = vmatprep.subr.mxu0 0.0
      %6977 = vmatpush1.msra.mxu0 0.0
      %6978 = vmatprep.subr.mxu0 0.0
      %6979 = vmatpush1.msra.mxu0 0.0
      %6980 = vmatprep.subr.mxu0 0.0
      %6981 = vmatpush1.msra.mxu0 0.0
      %6982 = vmatprep.subr.mxu0 0.0
      %6983 = vmatpush1.msra.mxu0 0.0
      %6984 = vmatprep.subr.mxu0 0.0
      %6985 = vmatpush1.msra.mxu0 0.0
      %6986 = vmatprep.subr.mxu0 0.0
      %6987 = vmatpush1.msra.mxu0 0.0
      %6988 = vmatprep.subr.mxu0 0.0
      %6989 = vmatpush1.msra.mxu0 0.0
      %6990 = vmatprep.subr.mxu0 0.0
      %6991 = vmatpush1.msra.mxu0 0.0
      %6992 = vmatprep.subr.mxu0 0.0
      %6993 = vmatpush1.msra.mxu0 0.0
      %6994 = vmatprep.subr.mxu0 0.0
      %6995 = vmatpush1.msra.mxu0 0.0
      %6996 = vmatprep.subr.mxu0 0.0
      %6997 = vmatpush1.msra.mxu0 0.0
      %6998 = vmatprep.subr.mxu0 0.0
      %6999 = vmatpush1.msra.mxu0 0.0
      %7000 = vmatprep.subr.mxu0 0.0
      %7001 = vmatpush1.msra.mxu0 0.0
      %7002 = vmatprep.subr.mxu0 0.0
      %7003 = vmatpush1.msra.mxu0 0.0
      %7004 = vmatprep.subr.mxu0 0.0
      %7005 = vmatpush1.msra.mxu0 0.0
      %7006 = vmatprep.mubr.f32.mxu0 0.0
      %v7007 = vand.u32 %v6804, 4294901760
      %7008 = vmatmul.mubr.f32.gmra.mrb[0].mxu0 %v7007
      %v7009 = vpop.f32.mrb[0].mxu0
      %v7010 = vadd.f32 %v6889, %v7009
      %v7011 = vpop.f32.mrb[0].mxu0
      %7012 = vmatprep.mubr.f32.mxu0 0.0
      %v7013 = vand.u32 %v6807, 4294901760
      %7014 = vmatmul.mubr.f32.gmra.mrb[0].mxu0 %v7013
      %v7015 = vpop.f32.mrb[0].mxu0
      %v7016 = vadd.f32 %v6899, %v7015
      %v7017 = vpop.f32.mrb[0].mxu0
      %7018 = vdwg.mxu0
      %7019 = vmatprep.subr.mxu0 0.0
      %v7020 = vand.u32 %v1147, 4294901760
      %v7021 = vsub.f32 %v1147, %v7020
      %7022 = vmatpush1.msra.mxu0 %v7021
      %7023 = vmatprep.subr.mxu0 0.0
      %v7024 = vand.u32 %v1148, 4294901760
      %v7025 = vsub.f32 %v1148, %v7024
      %7026 = vmatpush1.msra.mxu0 %v7025
      %7027 = vmatprep.subr.mxu0 0.0
      %v7028 = vand.u32 %v1149, 4294901760
      %v7029 = vsub.f32 %v1149, %v7028
      %7030 = vmatpush1.msra.mxu0 %v7029
      %7031 = vmatprep.subr.mxu0 0.0
      %v7032 = vand.u32 %v1150, 4294901760
      %v7033 = vsub.f32 %v1150, %v7032
      %7034 = vmatpush1.msra.mxu0 %v7033
      %7035 = vmatprep.subr.mxu0 0.0
      %v7036 = vand.u32 %v1151, 4294901760
      %v7037 = vsub.f32 %v1151, %v7036
      %7038 = vmatpush1.msra.mxu0 %v7037
      %7039 = vmatprep.subr.mxu0 0.0
      %v7040 = vand.u32 %v1152, 4294901760
      %v7041 = vsub.f32 %v1152, %v7040
      %7042 = vmatpush1.msra.mxu0 %v7041
      %7043 = vmatprep.subr.mxu0 0.0
      %v7044 = vand.u32 %v1153, 4294901760
      %v7045 = vsub.f32 %v1153, %v7044
      %7046 = vmatpush1.msra.mxu0 %v7045
      %7047 = vmatprep.subr.mxu0 0.0
      %v7048 = vand.u32 %v1154, 4294901760
      %v7049 = vsub.f32 %v1154, %v7048
      %7050 = vmatpush1.msra.mxu0 %v7049
      %7051 = vmatprep.subr.mxu0 0.0
      %7052 = vmatpush1.msra.mxu0 0.0
      %7053 = vmatprep.subr.mxu0 0.0
      %7054 = vmatpush1.msra.mxu0 0.0
      %7055 = vmatprep.subr.mxu0 0.0
      %7056 = vmatpush1.msra.mxu0 0.0
      %7057 = vmatprep.subr.mxu0 0.0
      %7058 = vmatpush1.msra.mxu0 0.0
      %7059 = vmatprep.subr.mxu0 0.0
      %7060 = vmatpush1.msra.mxu0 0.0
      %7061 = vmatprep.subr.mxu0 0.0
      %7062 = vmatpush1.msra.mxu0 0.0
      %7063 = vmatprep.subr.mxu0 0.0
      %7064 = vmatpush1.msra.mxu0 0.0
      %7065 = vmatprep.subr.mxu0 0.0
      %7066 = vmatpush1.msra.mxu0 0.0
      %7067 = vmatprep.subr.mxu0 0.0
      %7068 = vmatpush1.msra.mxu0 0.0
      %7069 = vmatprep.subr.mxu0 0.0
      %7070 = vmatpush1.msra.mxu0 0.0
      %7071 = vmatprep.subr.mxu0 0.0
      %7072 = vmatpush1.msra.mxu0 0.0
      %7073 = vmatprep.subr.mxu0 0.0
      %7074 = vmatpush1.msra.mxu0 0.0
      %7075 = vmatprep.subr.mxu0 0.0
      %7076 = vmatpush1.msra.mxu0 0.0
      %7077 = vmatprep.subr.mxu0 0.0
      %7078 = vmatpush1.msra.mxu0 0.0
      %7079 = vmatprep.subr.mxu0 0.0
      %7080 = vmatpush1.msra.mxu0 0.0
      %7081 = vmatprep.subr.mxu0 0.0
      %7082 = vmatpush1.msra.mxu0 0.0
      %7083 = vmatprep.subr.mxu0 0.0
      %7084 = vmatpush1.msra.mxu0 0.0
      %7085 = vmatprep.subr.mxu0 0.0
      %7086 = vmatpush1.msra.mxu0 0.0
      %7087 = vmatprep.subr.mxu0 0.0
      %7088 = vmatpush1.msra.mxu0 0.0
      %7089 = vmatprep.subr.mxu0 0.0
      %7090 = vmatpush1.msra.mxu0 0.0
      %7091 = vmatprep.subr.mxu0 0.0
      %7092 = vmatpush1.msra.mxu0 0.0
      %7093 = vmatprep.subr.mxu0 0.0
      %7094 = vmatpush1.msra.mxu0 0.0
      %7095 = vmatprep.subr.mxu0 0.0
      %7096 = vmatpush1.msra.mxu0 0.0
      %7097 = vmatprep.subr.mxu0 0.0
      %7098 = vmatpush1.msra.mxu0 0.0
      %7099 = vmatprep.mubr.f32.mxu0 0.0
      %v7100 = vand.u32 %v6804, 4294901760
      %v7101 = vsub.f32 %v6804, %v7100
      %7102 = vmatmul.mubr.f32.gmra.mrb[0].mxu0 %v7101
      %v7103 = vpop.f32.mrb[0].mxu0
      %v7104 = vadd.f32 %v7010, %v7103
      %v7105 = vpop.f32.mrb[0].mxu0
      %7106 = vmatprep.mubr.f32.mxu0 0.0
      %v7107 = vand.u32 %v6807, 4294901760
      %v7108 = vsub.f32 %v6807, %v7107
      %7109 = vmatmul.mubr.f32.gmra.mrb[0].mxu0 %v7108
      %v7110 = vpop.f32.mrb[0].mxu0
      %v7111 = vadd.f32 %v7016, %v7110
      %v7112 = vpop.f32.mrb[0].mxu0
      %7113 = vdwg.mxu0
      %7114 = vmatprep.subr.mxu0 0.0
      %v7115 = vand.u32 %v1147, 4294901760
      %7116 = vmatpush1.msra.mxu0 %v7115
      %7117 = vmatprep.subr.mxu0 0.0
      %v7118 = vand.u32 %v1148, 4294901760
      %7119 = vmatpush1.msra.mxu0 %v7118
      %7120 = vmatprep.subr.mxu0 0.0
      %v7121 = vand.u32 %v1149, 4294901760
      %7122 = vmatpush1.msra.mxu0 %v7121
      %7123 = vmatprep.subr.mxu0 0.0
      %v7124 = vand.u32 %v1150, 4294901760
      %7125 = vmatpush1.msra.mxu0 %v7124
      %7126 = vmatprep.subr.mxu0 0.0
      %v7127 = vand.u32 %v1151, 4294901760
      %7128 = vmatpush1.msra.mxu0 %v7127
      %7129 = vmatprep.subr.mxu0 0.0
      %v7130 = vand.u32 %v1152, 4294901760
      %7131 = vmatpush1.msra.mxu0 %v7130
      %7132 = vmatprep.subr.mxu0 0.0
      %v7133 = vand.u32 %v1153, 4294901760
      %7134 = vmatpush1.msra.mxu0 %v7133
      %7135 = vmatprep.subr.mxu0 0.0
      %v7136 = vand.u32 %v1154, 4294901760
      %7137 = vmatpush1.msra.mxu0 %v7136
      %7138 = vmatprep.subr.mxu0 0.0
      %7139 = vmatpush1.msra.mxu0 0.0
      %7140 = vmatprep.subr.mxu0 0.0
      %7141 = vmatpush1.msra.mxu0 0.0
      %7142 = vmatprep.subr.mxu0 0.0
      %7143 = vmatpush1.msra.mxu0 0.0
      %7144 = vmatprep.subr.mxu0 0.0
      %7145 = vmatpush1.msra.mxu0 0.0
      %7146 = vmatprep.subr.mxu0 0.0
      %7147 = vmatpush1.msra.mxu0 0.0
      %7148 = vmatprep.subr.mxu0 0.0
      %7149 = vmatpush1.msra.mxu0 0.0
      %7150 = vmatprep.subr.mxu0 0.0
      %7151 = vmatpush1.msra.mxu0 0.0
      %7152 = vmatprep.subr.mxu0 0.0
      %7153 = vmatpush1.msra.mxu0 0.0
      %7154 = vmatprep.subr.mxu0 0.0
      %7155 = vmatpush1.msra.mxu0 0.0
      %7156 = vmatprep.subr.mxu0 0.0
      %7157 = vmatpush1.msra.mxu0 0.0
      %7158 = vmatprep.subr.mxu0 0.0
      %7159 = vmatpush1.msra.mxu0 0.0
      %7160 = vmatprep.subr.mxu0 0.0
      %7161 = vmatpush1.msra.mxu0 0.0
      %7162 = vmatprep.subr.mxu0 0.0
      %7163 = vmatpush1.msra.mxu0 0.0
      %7164 = vmatprep.subr.mxu0 0.0
      %7165 = vmatpush1.msra.mxu0 0.0
      %7166 = vmatprep.subr.mxu0 0.0
      %7167 = vmatpush1.msra.mxu0 0.0
      %7168 = vmatprep.subr.mxu0 0.0
      %7169 = vmatpush1.msra.mxu0 0.0
      %7170 = vmatprep.subr.mxu0 0.0
      %7171 = vmatpush1.msra.mxu0 0.0
      %7172 = vmatprep.subr.mxu0 0.0
      %7173 = vmatpush1.msra.mxu0 0.0
      %7174 = vmatprep.subr.mxu0 0.0
      %7175 = vmatpush1.msra.mxu0 0.0
      %7176 = vmatprep.subr.mxu0 0.0
      %7177 = vmatpush1.msra.mxu0 0.0
      %7178 = vmatprep.subr.mxu0 0.0
      %7179 = vmatpush1.msra.mxu0 0.0
      %7180 = vmatprep.subr.mxu0 0.0
      %7181 = vmatpush1.msra.mxu0 0.0
      %7182 = vmatprep.subr.mxu0 0.0
      %7183 = vmatpush1.msra.mxu0 0.0
      %7184 = vmatprep.subr.mxu0 0.0
      %7185 = vmatpush1.msra.mxu0 0.0
      %7186 = vmatprep.mubr.f32.mxu0 0.0
      %v7187 = vand.u32 %v6804, 4294901760
      %v7188 = vsub.f32 %v6804, %v7187
      %v7189 = vand.u32 %v7188, 4294901760
      %7190 = vmatmul.mubr.f32.gmra.mrb[0].mxu0 %v7189
      %v7191 = vpop.f32.mrb[0].mxu0
      %v7192 = vadd.f32 %v7104, %v7191
      %v7193 = vpop.f32.mrb[0].mxu0
      %7194 = vmatprep.mubr.f32.mxu0 0.0
      %v7195 = vand.u32 %v6807, 4294901760
      %v7196 = vsub.f32 %v6807, %v7195
      %v7197 = vand.u32 %v7196, 4294901760
      %7198 = vmatmul.mubr.f32.gmra.mrb[0].mxu0 %v7197
      %v7199 = vpop.f32.mrb[0].mxu0
      %v7200 = vadd.f32 %v7111, %v7199
      %v7201 = vpop.f32.mrb[0].mxu0
      %7202 = vdwg.mxu0
      %7203 = vmatprep.subr.mxu0 0.0
      %v7204 = vand.u32 %v1147, 4294901760
      %v7205 = vsub.f32 %v1147, %v7204
      %v7206 = vand.u32 %v7205, 4294901760
      %7207 = vmatpush1.msra.mxu0 %v7206
      %7208 = vmatprep.subr.mxu0 0.0
      %v7209 = vand.u32 %v1148, 4294901760
      %v7210 = vsub.f32 %v1148, %v7209
      %v7211 = vand.u32 %v7210, 4294901760
      %7212 = vmatpush1.msra.mxu0 %v7211
      %7213 = vmatprep.subr.mxu0 0.0
      %v7214 = vand.u32 %v1149, 4294901760
      %v7215 = vsub.f32 %v1149, %v7214
      %v7216 = vand.u32 %v7215, 4294901760
      %7217 = vmatpush1.msra.mxu0 %v7216
      %7218 = vmatprep.subr.mxu0 0.0
      %v7219 = vand.u32 %v1150, 4294901760
      %v7220 = vsub.f32 %v1150, %v7219
      %v7221 = vand.u32 %v7220, 4294901760
      %7222 = vmatpush1.msra.mxu0 %v7221
      %7223 = vmatprep.subr.mxu0 0.0
      %v7224 = vand.u32 %v1151, 4294901760
      %v7225 = vsub.f32 %v1151, %v7224
      %v7226 = vand.u32 %v7225, 4294901760
      %7227 = vmatpush1.msra.mxu0 %v7226
      %7228 = vmatprep.subr.mxu0 0.0
      %v7229 = vand.u32 %v1152, 4294901760
      %v7230 = vsub.f32 %v1152, %v7229
      %v7231 = vand.u32 %v7230, 4294901760
      %7232 = vmatpush1.msra.mxu0 %v7231
      %7233 = vmatprep.subr.mxu0 0.0
      %v7234 = vand.u32 %v1153, 4294901760
      %v7235 = vsub.f32 %v1153, %v7234
      %v7236 = vand.u32 %v7235, 4294901760
      %7237 = vmatpush1.msra.mxu0 %v7236
      %7238 = vmatprep.subr.mxu0 0.0
      %v7239 = vand.u32 %v1154, 4294901760
      %v7240 = vsub.f32 %v1154, %v7239
      %v7241 = vand.u32 %v7240, 4294901760
      %7242 = vmatpush1.msra.mxu0 %v7241
      %7243 = vmatprep.subr.mxu0 0.0
      %7244 = vmatpush1.msra.mxu0 0.0
      %7245 = vmatprep.subr.mxu0 0.0
      %7246 = vmatpush1.msra.mxu0 0.0
      %7247 = vmatprep.subr.mxu0 0.0
      %7248 = vmatpush1.msra.mxu0 0.0
      %7249 = vmatprep.subr.mxu0 0.0
      %7250 = vmatpush1.msra.mxu0 0.0
      %7251 = vmatprep.subr.mxu0 0.0
      %7252 = vmatpush1.msra.mxu0 0.0
      %7253 = vmatprep.subr.mxu0 0.0
      %7254 = vmatpush1.msra.mxu0 0.0
      %7255 = vmatprep.subr.mxu0 0.0
      %7256 = vmatpush1.msra.mxu0 0.0
      %7257 = vmatprep.subr.mxu0 0.0
      %7258 = vmatpush1.msra.mxu0 0.0
      %7259 = vmatprep.subr.mxu0 0.0
      %7260 = vmatpush1.msra.mxu0 0.0
      %7261 = vmatprep.subr.mxu0 0.0
      %7262 = vmatpush1.msra.mxu0 0.0
      %7263 = vmatprep.subr.mxu0 0.0
      %7264 = vmatpush1.msra.mxu0 0.0
      %7265 = vmatprep.subr.mxu0 0.0
      %7266 = vmatpush1.msra.mxu0 0.0
      %7267 = vmatprep.subr.mxu0 0.0
      %7268 = vmatpush1.msra.mxu0 0.0
      %7269 = vmatprep.subr.mxu0 0.0
      %7270 = vmatpush1.msra.mxu0 0.0
      %7271 = vmatprep.subr.mxu0 0.0
      %7272 = vmatpush1.msra.mxu0 0.0
      %7273 = vmatprep.subr.mxu0 0.0
      %7274 = vmatpush1.msra.mxu0 0.0
      %7275 = vmatprep.subr.mxu0 0.0
      %7276 = vmatpush1.msra.mxu0 0.0
      %7277 = vmatprep.subr.mxu0 0.0
      %7278 = vmatpush1.msra.mxu0 0.0
      %7279 = vmatprep.subr.mxu0 0.0
      %7280 = vmatpush1.msra.mxu0 0.0
      %7281 = vmatprep.subr.mxu0 0.0
      %7282 = vmatpush1.msra.mxu0 0.0
      %7283 = vmatprep.subr.mxu0 0.0
      %7284 = vmatpush1.msra.mxu0 0.0
      %7285 = vmatprep.subr.mxu0 0.0
      %7286 = vmatpush1.msra.mxu0 0.0
      %7287 = vmatprep.subr.mxu0 0.0
      %7288 = vmatpush1.msra.mxu0 0.0
      %7289 = vmatprep.subr.mxu0 0.0
      %7290 = vmatpush1.msra.mxu0 0.0
      %7291 = vmatprep.mubr.f32.mxu0 0.0
      %v7292 = vand.u32 %v6804, 4294901760
      %7293 = vmatmul.mubr.f32.gmra.mrb[0].mxu0 %v7292
      %v7294 = vpop.f32.mrb[0].mxu0
      %v7295 = vadd.f32 %v7192, %v7294
      %v7296 = vpop.f32.mrb[0].mxu0
      %7297 = vmatprep.mubr.f32.mxu0 0.0
      %v7298 = vand.u32 %v6807, 4294901760
      %7299 = vmatmul.mubr.f32.gmra.mrb[0].mxu0 %v7298
      %v7300 = vpop.f32.mrb[0].mxu0
      %v7301 = vadd.f32 %v7200, %v7300
      %v7302 = vpop.f32.mrb[0].mxu0
      %7303 = vdwg.mxu0
      %7304 = vmatprep.subr.mxu0 0.0
      %v7305 = vand.u32 %v1147, 4294901760
      %7306 = vmatpush1.msra.mxu0 %v7305
      %7307 = vmatprep.subr.mxu0 0.0
      %v7308 = vand.u32 %v1148, 4294901760
      %7309 = vmatpush1.msra.mxu0 %v7308
      %7310 = vmatprep.subr.mxu0 0.0
      %v7311 = vand.u32 %v1149, 4294901760
      %7312 = vmatpush1.msra.mxu0 %v7311
      %7313 = vmatprep.subr.mxu0 0.0
      %v7314 = vand.u32 %v1150, 4294901760
      %7315 = vmatpush1.msra.mxu0 %v7314
      %7316 = vmatprep.subr.mxu0 0.0
      %v7317 = vand.u32 %v1151, 4294901760
      %7318 = vmatpush1.msra.mxu0 %v7317
      %7319 = vmatprep.subr.mxu0 0.0
      %v7320 = vand.u32 %v1152, 4294901760
      %7321 = vmatpush1.msra.mxu0 %v7320
      %7322 = vmatprep.subr.mxu0 0.0
      %v7323 = vand.u32 %v1153, 4294901760
      %7324 = vmatpush1.msra.mxu0 %v7323
      %7325 = vmatprep.subr.mxu0 0.0
      %v7326 = vand.u32 %v1154, 4294901760
      %7327 = vmatpush1.msra.mxu0 %v7326
      %7328 = vmatprep.subr.mxu0 0.0
      %7329 = vmatpush1.msra.mxu0 0.0
      %7330 = vmatprep.subr.mxu0 0.0
      %7331 = vmatpush1.msra.mxu0 0.0
      %7332 = vmatprep.subr.mxu0 0.0
      %7333 = vmatpush1.msra.mxu0 0.0
      %7334 = vmatprep.subr.mxu0 0.0
      %7335 = vmatpush1.msra.mxu0 0.0
      %7336 = vmatprep.subr.mxu0 0.0
      %7337 = vmatpush1.msra.mxu0 0.0
      %7338 = vmatprep.subr.mxu0 0.0
      %7339 = vmatpush1.msra.mxu0 0.0
      %7340 = vmatprep.subr.mxu0 0.0
      %7341 = vmatpush1.msra.mxu0 0.0
      %7342 = vmatprep.subr.mxu0 0.0
      %7343 = vmatpush1.msra.mxu0 0.0
      %7344 = vmatprep.subr.mxu0 0.0
      %7345 = vmatpush1.msra.mxu0 0.0
      %7346 = vmatprep.subr.mxu0 0.0
      %7347 = vmatpush1.msra.mxu0 0.0
      %7348 = vmatprep.subr.mxu0 0.0
      %7349 = vmatpush1.msra.mxu0 0.0
      %7350 = vmatprep.subr.mxu0 0.0
      %7351 = vmatpush1.msra.mxu0 0.0
      %7352 = vmatprep.subr.mxu0 0.0
      %7353 = vmatpush1.msra.mxu0 0.0
      %7354 = vmatprep.subr.mxu0 0.0
      %7355 = vmatpush1.msra.mxu0 0.0
      %7356 = vmatprep.subr.mxu0 0.0
      %7357 = vmatpush1.msra.mxu0 0.0
      %7358 = vmatprep.subr.mxu0 0.0
      %7359 = vmatpush1.msra.mxu0 0.0
      %7360 = vmatprep.subr.mxu0 0.0
      %7361 = vmatpush1.msra.mxu0 0.0
      %7362 = vmatprep.subr.mxu0 0.0
      %7363 = vmatpush1.msra.mxu0 0.0
      %7364 = vmatprep.subr.mxu0 0.0
      %7365 = vmatpush1.msra.mxu0 0.0
      %7366 = vmatprep.subr.mxu0 0.0
      %7367 = vmatpush1.msra.mxu0 0.0
      %7368 = vmatprep.subr.mxu0 0.0
      %7369 = vmatpush1.msra.mxu0 0.0
      %7370 = vmatprep.subr.mxu0 0.0
      %7371 = vmatpush1.msra.mxu0 0.0
      %7372 = vmatprep.subr.mxu0 0.0
      %7373 = vmatpush1.msra.mxu0 0.0
      %7374 = vmatprep.subr.mxu0 0.0
      %7375 = vmatpush1.msra.mxu0 0.0
      %7376 = vmatprep.mubr.f32.mxu0 0.0
      %v7377 = vand.u32 %v6804, 4294901760
      %7378 = vmatmul.mubr.f32.gmra.mrb[0].mxu0 %v7377
      %v7379 = vpop.f32.mrb[0].mxu0
      %v7380 = vadd.f32 %v7295, %v7379
      %v7381 = vpop.f32.mrb[0].mxu0
      %7382 = vmatprep.mubr.f32.mxu0 0.0
      %v7383 = vand.u32 %v6807, 4294901760
      %7384 = vmatmul.mubr.f32.gmra.mrb[0].mxu0 %v7383
      %v7385 = vpop.f32.mrb[0].mxu0
      %v7386 = vadd.f32 %v7301, %v7385
      %v7387 = vpop.f32.mrb[0].mxu0
      %7388 = vdwg.mxu0
      %s7389 = scalar_lea.vmem %s3, 160
      %v7390 = vld [vmem:[%s7389] sm:$0xff]
      %v7391 = vld [vmem:[%s7389 + $0x8] sm:$0xff]
      %v7392 = vld [vmem:[%s7389 + $0x10] sm:$0xff]
      %v7393 = vld [vmem:[%s7389 + $0x18] sm:$0xff]
      %v7395 = vsel %vm1039, %v7380, 0
      %v7398 = vsel %vm1039, %v7386, 0
      %7400 = vmatprep.subr.mxu0 0.0
      %v7401 = vand.u32 %v7390, 4294901760
      %7402 = vmatpush1.msra.mxu0 %v7401
      %7403 = vmatprep.subr.mxu0 0.0
      %v7404 = vand.u32 %v7391, 4294901760
      %7405 = vmatpush1.msra.mxu0 %v7404
      %7406 = vmatprep.subr.mxu0 0.0
      %v7407 = vand.u32 %v7392, 4294901760
      %7408 = vmatpush1.msra.mxu0 %v7407
      %7409 = vmatprep.subr.mxu0 0.0
      %v7410 = vand.u32 %v7393, 4294901760
      %7411 = vmatpush1.msra.mxu0 %v7410
      %7412 = vmatprep.subr.mxu0 0.0
      %7413 = vmatpush1.msra.mxu0 0.0
      %7414 = vmatprep.subr.mxu0 0.0
      %7415 = vmatpush1.msra.mxu0 0.0
      %7416 = vmatprep.subr.mxu0 0.0
      %7417 = vmatpush1.msra.mxu0 0.0
      %7418 = vmatprep.subr.mxu0 0.0
      %7419 = vmatpush1.msra.mxu0 0.0
      %7420 = vmatprep.subr.mxu0 0.0
      %7421 = vmatpush1.msra.mxu0 0.0
      %7422 = vmatprep.subr.mxu0 0.0
      %7423 = vmatpush1.msra.mxu0 0.0
      %7424 = vmatprep.subr.mxu0 0.0
      %7425 = vmatpush1.msra.mxu0 0.0
      %7426 = vmatprep.subr.mxu0 0.0
      %7427 = vmatpush1.msra.mxu0 0.0
      %7428 = vmatprep.subr.mxu0 0.0
      %7429 = vmatpush1.msra.mxu0 0.0
      %7430 = vmatprep.subr.mxu0 0.0
      %7431 = vmatpush1.msra.mxu0 0.0
      %7432 = vmatprep.subr.mxu0 0.0
      %7433 = vmatpush1.msra.mxu0 0.0
      %7434 = vmatprep.subr.mxu0 0.0
      %7435 = vmatpush1.msra.mxu0 0.0
      %7436 = vmatprep.subr.mxu0 0.0
      %7437 = vmatpush1.msra.mxu0 0.0
      %7438 = vmatprep.subr.mxu0 0.0
      %7439 = vmatpush1.msra.mxu0 0.0
      %7440 = vmatprep.subr.mxu0 0.0
      %7441 = vmatpush1.msra.mxu0 0.0
      %7442 = vmatprep.subr.mxu0 0.0
      %7443 = vmatpush1.msra.mxu0 0.0
      %7444 = vmatprep.subr.mxu0 0.0
      %7445 = vmatpush1.msra.mxu0 0.0
      %7446 = vmatprep.subr.mxu0 0.0
      %7447 = vmatpush1.msra.mxu0 0.0
      %7448 = vmatprep.subr.mxu0 0.0
      %7449 = vmatpush1.msra.mxu0 0.0
      %7450 = vmatprep.subr.mxu0 0.0
      %7451 = vmatpush1.msra.mxu0 0.0
      %7452 = vmatprep.subr.mxu0 0.0
      %7453 = vmatpush1.msra.mxu0 0.0
      %7454 = vmatprep.subr.mxu0 0.0
      %7455 = vmatpush1.msra.mxu0 0.0
      %7456 = vmatprep.subr.mxu0 0.0
      %7457 = vmatpush1.msra.mxu0 0.0
      %7458 = vmatprep.subr.mxu0 0.0
      %7459 = vmatpush1.msra.mxu0 0.0
      %7460 = vmatprep.subr.mxu0 0.0
      %7461 = vmatpush1.msra.mxu0 0.0
      %7462 = vmatprep.subr.mxu0 0.0
      %7463 = vmatpush1.msra.mxu0 0.0
      %7464 = vmatprep.subr.mxu0 0.0
      %7465 = vmatpush1.msra.mxu0 0.0
      %7466 = vmatprep.subr.mxu0 0.0
      %7467 = vmatpush1.msra.mxu0 0.0
      %7468 = vmatprep.mubr.f32.mxu0 0.0
      %v7469 = vand.u32 %v7395, 4294901760
      %v7470 = vsub.f32 %v7395, %v7469
      %v7471 = vand.u32 %v7470, 4294901760
      %v7472 = vsub.f32 %v7470, %v7471
      %v7473 = vand.u32 %v7472, 4294901760
      %7474 = vmatmul.mubr.f32.gmra.mrb[0].mxu0 %v7473
      %v7475 = vpop.f32.mrb[0].mxu0
      %v7476 = vadd.f32 0.0, %v7475
      %v7477 = vpop.f32.mrb[0].mxu0
      %7478 = vmatprep.mubr.f32.mxu0 0.0
      %v7479 = vand.u32 %v7398, 4294901760
      %v7480 = vsub.f32 %v7398, %v7479
      %v7481 = vand.u32 %v7480, 4294901760
      %v7482 = vsub.f32 %v7480, %v7481
      %v7483 = vand.u32 %v7482, 4294901760
      %7484 = vmatmul.mubr.f32.gmra.mrb[0].mxu0 %v7483
      %v7485 = vpop.f32.mrb[0].mxu0
      %v7486 = vadd.f32 0.0, %v7485
      %v7487 = vpop.f32.mrb[0].mxu0
      %7488 = vdwg.mxu0
      %7489 = vmatprep.subr.mxu0 0.0
      %v7490 = vand.u32 %v7390, 4294901760
      %v7491 = vsub.f32 %v7390, %v7490
      %v7492 = vand.u32 %v7491, 4294901760
      %v7493 = vsub.f32 %v7491, %v7492
      %v7494 = vand.u32 %v7493, 4294901760
      %7495 = vmatpush1.msra.mxu0 %v7494
      %7496 = vmatprep.subr.mxu0 0.0
      %v7497 = vand.u32 %v7391, 4294901760
      %v7498 = vsub.f32 %v7391, %v7497
      %v7499 = vand.u32 %v7498, 4294901760
      %v7500 = vsub.f32 %v7498, %v7499
      %v7501 = vand.u32 %v7500, 4294901760
      %7502 = vmatpush1.msra.mxu0 %v7501
      %7503 = vmatprep.subr.mxu0 0.0
      %v7504 = vand.u32 %v7392, 4294901760
      %v7505 = vsub.f32 %v7392, %v7504
      %v7506 = vand.u32 %v7505, 4294901760
      %v7507 = vsub.f32 %v7505, %v7506
      %v7508 = vand.u32 %v7507, 4294901760
      %7509 = vmatpush1.msra.mxu0 %v7508
      %7510 = vmatprep.subr.mxu0 0.0
      %v7511 = vand.u32 %v7393, 4294901760
      %v7512 = vsub.f32 %v7393, %v7511
      %v7513 = vand.u32 %v7512, 4294901760
      %v7514 = vsub.f32 %v7512, %v7513
      %v7515 = vand.u32 %v7514, 4294901760
      %7516 = vmatpush1.msra.mxu0 %v7515
      %7517 = vmatprep.subr.mxu0 0.0
      %7518 = vmatpush1.msra.mxu0 0.0
      %7519 = vmatprep.subr.mxu0 0.0
      %7520 = vmatpush1.msra.mxu0 0.0
      %7521 = vmatprep.subr.mxu0 0.0
      %7522 = vmatpush1.msra.mxu0 0.0
      %7523 = vmatprep.subr.mxu0 0.0
      %7524 = vmatpush1.msra.mxu0 0.0
      %7525 = vmatprep.subr.mxu0 0.0
      %7526 = vmatpush1.msra.mxu0 0.0
      %7527 = vmatprep.subr.mxu0 0.0
      %7528 = vmatpush1.msra.mxu0 0.0
      %7529 = vmatprep.subr.mxu0 0.0
      %7530 = vmatpush1.msra.mxu0 0.0
      %7531 = vmatprep.subr.mxu0 0.0
      %7532 = vmatpush1.msra.mxu0 0.0
      %7533 = vmatprep.subr.mxu0 0.0
      %7534 = vmatpush1.msra.mxu0 0.0
      %7535 = vmatprep.subr.mxu0 0.0
      %7536 = vmatpush1.msra.mxu0 0.0
      %7537 = vmatprep.subr.mxu0 0.0
      %7538 = vmatpush1.msra.mxu0 0.0
      %7539 = vmatprep.subr.mxu0 0.0
      %7540 = vmatpush1.msra.mxu0 0.0
      %7541 = vmatprep.subr.mxu0 0.0
      %7542 = vmatpush1.msra.mxu0 0.0
      %7543 = vmatprep.subr.mxu0 0.0
      %7544 = vmatpush1.msra.mxu0 0.0
      %7545 = vmatprep.subr.mxu0 0.0
      %7546 = vmatpush1.msra.mxu0 0.0
      %7547 = vmatprep.subr.mxu0 0.0
      %7548 = vmatpush1.msra.mxu0 0.0
      %7549 = vmatprep.subr.mxu0 0.0
      %7550 = vmatpush1.msra.mxu0 0.0
      %7551 = vmatprep.subr.mxu0 0.0
      %7552 = vmatpush1.msra.mxu0 0.0
      %7553 = vmatprep.subr.mxu0 0.0
      %7554 = vmatpush1.msra.mxu0 0.0
      %7555 = vmatprep.subr.mxu0 0.0
      %7556 = vmatpush1.msra.mxu0 0.0
      %7557 = vmatprep.subr.mxu0 0.0
      %7558 = vmatpush1.msra.mxu0 0.0
      %7559 = vmatprep.subr.mxu0 0.0
      %7560 = vmatpush1.msra.mxu0 0.0
      %7561 = vmatprep.subr.mxu0 0.0
      %7562 = vmatpush1.msra.mxu0 0.0
      %7563 = vmatprep.subr.mxu0 0.0
      %7564 = vmatpush1.msra.mxu0 0.0
      %7565 = vmatprep.subr.mxu0 0.0
      %7566 = vmatpush1.msra.mxu0 0.0
      %7567 = vmatprep.subr.mxu0 0.0
      %7568 = vmatpush1.msra.mxu0 0.0
      %7569 = vmatprep.subr.mxu0 0.0
      %7570 = vmatpush1.msra.mxu0 0.0
      %7571 = vmatprep.subr.mxu0 0.0
      %7572 = vmatpush1.msra.mxu0 0.0
      %7573 = vmatprep.mubr.f32.mxu0 0.0
      %v7574 = vand.u32 %v7395, 4294901760
      %7575 = vmatmul.mubr.f32.gmra.mrb[0].mxu0 %v7574
      %v7576 = vpop.f32.mrb[0].mxu0
      %v7577 = vadd.f32 %v7476, %v7576
      %v7578 = vpop.f32.mrb[0].mxu0
      %7579 = vmatprep.mubr.f32.mxu0 0.0
      %v7580 = vand.u32 %v7398, 4294901760
      %7581 = vmatmul.mubr.f32.gmra.mrb[0].mxu0 %v7580
      %v7582 = vpop.f32.mrb[0].mxu0
      %v7583 = vadd.f32 %v7486, %v7582
      %v7584 = vpop.f32.mrb[0].mxu0
      %7585 = vdwg.mxu0
      %7586 = vmatprep.subr.mxu0 0.0
      %v7587 = vand.u32 %v7390, 4294901760
      %v7588 = vsub.f32 %v7390, %v7587
      %7589 = vmatpush1.msra.mxu0 %v7588
      %7590 = vmatprep.subr.mxu0 0.0
      %v7591 = vand.u32 %v7391, 4294901760
      %v7592 = vsub.f32 %v7391, %v7591
      %7593 = vmatpush1.msra.mxu0 %v7592
      %7594 = vmatprep.subr.mxu0 0.0
      %v7595 = vand.u32 %v7392, 4294901760
      %v7596 = vsub.f32 %v7392, %v7595
      %7597 = vmatpush1.msra.mxu0 %v7596
      %7598 = vmatprep.subr.mxu0 0.0
      %v7599 = vand.u32 %v7393, 4294901760
      %v7600 = vsub.f32 %v7393, %v7599
      %7601 = vmatpush1.msra.mxu0 %v7600
      %7602 = vmatprep.subr.mxu0 0.0
      %7603 = vmatpush1.msra.mxu0 0.0
      %7604 = vmatprep.subr.mxu0 0.0
      %7605 = vmatpush1.msra.mxu0 0.0
      %7606 = vmatprep.subr.mxu0 0.0
      %7607 = vmatpush1.msra.mxu0 0.0
      %7608 = vmatprep.subr.mxu0 0.0
      %7609 = vmatpush1.msra.mxu0 0.0
      %7610 = vmatprep.subr.mxu0 0.0
      %7611 = vmatpush1.msra.mxu0 0.0
      %7612 = vmatprep.subr.mxu0 0.0
      %7613 = vmatpush1.msra.mxu0 0.0
      %7614 = vmatprep.subr.mxu0 0.0
      %7615 = vmatpush1.msra.mxu0 0.0
      %7616 = vmatprep.subr.mxu0 0.0
      %7617 = vmatpush1.msra.mxu0 0.0
      %7618 = vmatprep.subr.mxu0 0.0
      %7619 = vmatpush1.msra.mxu0 0.0
      %7620 = vmatprep.subr.mxu0 0.0
      %7621 = vmatpush1.msra.mxu0 0.0
      %7622 = vmatprep.subr.mxu0 0.0
      %7623 = vmatpush1.msra.mxu0 0.0
      %7624 = vmatprep.subr.mxu0 0.0
      %7625 = vmatpush1.msra.mxu0 0.0
      %7626 = vmatprep.subr.mxu0 0.0
      %7627 = vmatpush1.msra.mxu0 0.0
      %7628 = vmatprep.subr.mxu0 0.0
      %7629 = vmatpush1.msra.mxu0 0.0
      %7630 = vmatprep.subr.mxu0 0.0
      %7631 = vmatpush1.msra.mxu0 0.0
      %7632 = vmatprep.subr.mxu0 0.0
      %7633 = vmatpush1.msra.mxu0 0.0
      %7634 = vmatprep.subr.mxu0 0.0
      %7635 = vmatpush1.msra.mxu0 0.0
      %7636 = vmatprep.subr.mxu0 0.0
      %7637 = vmatpush1.msra.mxu0 0.0
      %7638 = vmatprep.subr.mxu0 0.0
      %7639 = vmatpush1.msra.mxu0 0.0
      %7640 = vmatprep.subr.mxu0 0.0
      %7641 = vmatpush1.msra.mxu0 0.0
      %7642 = vmatprep.subr.mxu0 0.0
      %7643 = vmatpush1.msra.mxu0 0.0
      %7644 = vmatprep.subr.mxu0 0.0
      %7645 = vmatpush1.msra.mxu0 0.0
      %7646 = vmatprep.subr.mxu0 0.0
      %7647 = vmatpush1.msra.mxu0 0.0
      %7648 = vmatprep.subr.mxu0 0.0
      %7649 = vmatpush1.msra.mxu0 0.0
      %7650 = vmatprep.subr.mxu0 0.0
      %7651 = vmatpush1.msra.mxu0 0.0
      %7652 = vmatprep.subr.mxu0 0.0
      %7653 = vmatpush1.msra.mxu0 0.0
      %7654 = vmatprep.subr.mxu0 0.0
      %7655 = vmatpush1.msra.mxu0 0.0
      %7656 = vmatprep.subr.mxu0 0.0
      %7657 = vmatpush1.msra.mxu0 0.0
      %7658 = vmatprep.mubr.f32.mxu0 0.0
      %v7659 = vand.u32 %v7395, 4294901760
      %v7660 = vsub.f32 %v7395, %v7659
      %7661 = vmatmul.mubr.f32.gmra.mrb[0].mxu0 %v7660
      %v7662 = vpop.f32.mrb[0].mxu0
      %v7663 = vadd.f32 %v7577, %v7662
      %v7664 = vpop.f32.mrb[0].mxu0
      %7665 = vmatprep.mubr.f32.mxu0 0.0
      %v7666 = vand.u32 %v7398, 4294901760
      %v7667 = vsub.f32 %v7398, %v7666
      %7668 = vmatmul.mubr.f32.gmra.mrb[0].mxu0 %v7667
      %v7669 = vpop.f32.mrb[0].mxu0
      %v7670 = vadd.f32 %v7583, %v7669
      %v7671 = vpop.f32.mrb[0].mxu0
      %7672 = vdwg.mxu0
      %7673 = vmatprep.subr.mxu0 0.0
      %v7674 = vand.u32 %v7390, 4294901760
      %7675 = vmatpush1.msra.mxu0 %v7674
      %7676 = vmatprep.subr.mxu0 0.0
      %v7677 = vand.u32 %v7391, 4294901760
      %7678 = vmatpush1.msra.mxu0 %v7677
      %7679 = vmatprep.subr.mxu0 0.0
      %v7680 = vand.u32 %v7392, 4294901760
      %7681 = vmatpush1.msra.mxu0 %v7680
      %7682 = vmatprep.subr.mxu0 0.0
      %v7683 = vand.u32 %v7393, 4294901760
      %7684 = vmatpush1.msra.mxu0 %v7683
      %7685 = vmatprep.subr.mxu0 0.0
      %7686 = vmatpush1.msra.mxu0 0.0
      %7687 = vmatprep.subr.mxu0 0.0
      %7688 = vmatpush1.msra.mxu0 0.0
      %7689 = vmatprep.subr.mxu0 0.0
      %7690 = vmatpush1.msra.mxu0 0.0
      %7691 = vmatprep.subr.mxu0 0.0
      %7692 = vmatpush1.msra.mxu0 0.0
      %7693 = vmatprep.subr.mxu0 0.0
      %7694 = vmatpush1.msra.mxu0 0.0
      %7695 = vmatprep.subr.mxu0 0.0
      %7696 = vmatpush1.msra.mxu0 0.0
      %7697 = vmatprep.subr.mxu0 0.0
      %7698 = vmatpush1.msra.mxu0 0.0
      %7699 = vmatprep.subr.mxu0 0.0
      %7700 = vmatpush1.msra.mxu0 0.0
      %7701 = vmatprep.subr.mxu0 0.0
      %7702 = vmatpush1.msra.mxu0 0.0
      %7703 = vmatprep.subr.mxu0 0.0
      %7704 = vmatpush1.msra.mxu0 0.0
      %7705 = vmatprep.subr.mxu0 0.0
      %7706 = vmatpush1.msra.mxu0 0.0
      %7707 = vmatprep.subr.mxu0 0.0
      %7708 = vmatpush1.msra.mxu0 0.0
      %7709 = vmatprep.subr.mxu0 0.0
      %7710 = vmatpush1.msra.mxu0 0.0
      %7711 = vmatprep.subr.mxu0 0.0
      %7712 = vmatpush1.msra.mxu0 0.0
      %7713 = vmatprep.subr.mxu0 0.0
      %7714 = vmatpush1.msra.mxu0 0.0
      %7715 = vmatprep.subr.mxu0 0.0
      %7716 = vmatpush1.msra.mxu0 0.0
      %7717 = vmatprep.subr.mxu0 0.0
      %7718 = vmatpush1.msra.mxu0 0.0
      %7719 = vmatprep.subr.mxu0 0.0
      %7720 = vmatpush1.msra.mxu0 0.0
      %7721 = vmatprep.subr.mxu0 0.0
      %7722 = vmatpush1.msra.mxu0 0.0
      %7723 = vmatprep.subr.mxu0 0.0
      %7724 = vmatpush1.msra.mxu0 0.0
      %7725 = vmatprep.subr.mxu0 0.0
      %7726 = vmatpush1.msra.mxu0 0.0
      %7727 = vmatprep.subr.mxu0 0.0
      %7728 = vmatpush1.msra.mxu0 0.0
      %7729 = vmatprep.subr.mxu0 0.0
      %7730 = vmatpush1.msra.mxu0 0.0
      %7731 = vmatprep.subr.mxu0 0.0
      %7732 = vmatpush1.msra.mxu0 0.0
      %7733 = vmatprep.subr.mxu0 0.0
      %7734 = vmatpush1.msra.mxu0 0.0
      %7735 = vmatprep.subr.mxu0 0.0
      %7736 = vmatpush1.msra.mxu0 0.0
      %7737 = vmatprep.subr.mxu0 0.0
      %7738 = vmatpush1.msra.mxu0 0.0
      %7739 = vmatprep.subr.mxu0 0.0
      %7740 = vmatpush1.msra.mxu0 0.0
      %7741 = vmatprep.mubr.f32.mxu0 0.0
      %v7742 = vand.u32 %v7395, 4294901760
      %v7743 = vsub.f32 %v7395, %v7742
      %v7744 = vand.u32 %v7743, 4294901760
      %7745 = vmatmul.mubr.f32.gmra.mrb[0].mxu0 %v7744
      %v7746 = vpop.f32.mrb[0].mxu0
      %v7747 = vadd.f32 %v7663, %v7746
      %v7748 = vpop.f32.mrb[0].mxu0
      %7749 = vmatprep.mubr.f32.mxu0 0.0
      %v7750 = vand.u32 %v7398, 4294901760
      %v7751 = vsub.f32 %v7398, %v7750
      %v7752 = vand.u32 %v7751, 4294901760
      %7753 = vmatmul.mubr.f32.gmra.mrb[0].mxu0 %v7752
      %v7754 = vpop.f32.mrb[0].mxu0
      %v7755 = vadd.f32 %v7670, %v7754
      %v7756 = vpop.f32.mrb[0].mxu0
      %7757 = vdwg.mxu0
      %7758 = vmatprep.subr.mxu0 0.0
      %v7759 = vand.u32 %v7390, 4294901760
      %v7760 = vsub.f32 %v7390, %v7759
      %v7761 = vand.u32 %v7760, 4294901760
      %7762 = vmatpush1.msra.mxu0 %v7761
      %7763 = vmatprep.subr.mxu0 0.0
      %v7764 = vand.u32 %v7391, 4294901760
      %v7765 = vsub.f32 %v7391, %v7764
      %v7766 = vand.u32 %v7765, 4294901760
      %7767 = vmatpush1.msra.mxu0 %v7766
      %7768 = vmatprep.subr.mxu0 0.0
      %v7769 = vand.u32 %v7392, 4294901760
      %v7770 = vsub.f32 %v7392, %v7769
      %v7771 = vand.u32 %v7770, 4294901760
      %7772 = vmatpush1.msra.mxu0 %v7771
      %7773 = vmatprep.subr.mxu0 0.0
      %v7774 = vand.u32 %v7393, 4294901760
      %v7775 = vsub.f32 %v7393, %v7774
      %v7776 = vand.u32 %v7775, 4294901760
      %7777 = vmatpush1.msra.mxu0 %v7776
      %7778 = vmatprep.subr.mxu0 0.0
      %7779 = vmatpush1.msra.mxu0 0.0
      %7780 = vmatprep.subr.mxu0 0.0
      %7781 = vmatpush1.msra.mxu0 0.0
      %7782 = vmatprep.subr.mxu0 0.0
      %7783 = vmatpush1.msra.mxu0 0.0
      %7784 = vmatprep.subr.mxu0 0.0
      %7785 = vmatpush1.msra.mxu0 0.0
      %7786 = vmatprep.subr.mxu0 0.0
      %7787 = vmatpush1.msra.mxu0 0.0
      %7788 = vmatprep.subr.mxu0 0.0
      %7789 = vmatpush1.msra.mxu0 0.0
      %7790 = vmatprep.subr.mxu0 0.0
      %7791 = vmatpush1.msra.mxu0 0.0
      %7792 = vmatprep.subr.mxu0 0.0
      %7793 = vmatpush1.msra.mxu0 0.0
      %7794 = vmatprep.subr.mxu0 0.0
      %7795 = vmatpush1.msra.mxu0 0.0
      %7796 = vmatprep.subr.mxu0 0.0
      %7797 = vmatpush1.msra.mxu0 0.0
      %7798 = vmatprep.subr.mxu0 0.0
      %7799 = vmatpush1.msra.mxu0 0.0
      %7800 = vmatprep.subr.mxu0 0.0
      %7801 = vmatpush1.msra.mxu0 0.0
      %7802 = vmatprep.subr.mxu0 0.0
      %7803 = vmatpush1.msra.mxu0 0.0
      %7804 = vmatprep.subr.mxu0 0.0
      %7805 = vmatpush1.msra.mxu0 0.0
      %7806 = vmatprep.subr.mxu0 0.0
      %7807 = vmatpush1.msra.mxu0 0.0
      %7808 = vmatprep.subr.mxu0 0.0
      %7809 = vmatpush1.msra.mxu0 0.0
      %7810 = vmatprep.subr.mxu0 0.0
      %7811 = vmatpush1.msra.mxu0 0.0
      %7812 = vmatprep.subr.mxu0 0.0
      %7813 = vmatpush1.msra.mxu0 0.0
      %7814 = vmatprep.subr.mxu0 0.0
      %7815 = vmatpush1.msra.mxu0 0.0
      %7816 = vmatprep.subr.mxu0 0.0
      %7817 = vmatpush1.msra.mxu0 0.0
      %7818 = vmatprep.subr.mxu0 0.0
      %7819 = vmatpush1.msra.mxu0 0.0
      %7820 = vmatprep.subr.mxu0 0.0
      %7821 = vmatpush1.msra.mxu0 0.0
      %7822 = vmatprep.subr.mxu0 0.0
      %7823 = vmatpush1.msra.mxu0 0.0
      %7824 = vmatprep.subr.mxu0 0.0
      %7825 = vmatpush1.msra.mxu0 0.0
      %7826 = vmatprep.subr.mxu0 0.0
      %7827 = vmatpush1.msra.mxu0 0.0
      %7828 = vmatprep.subr.mxu0 0.0
      %7829 = vmatpush1.msra.mxu0 0.0
      %7830 = vmatprep.subr.mxu0 0.0
      %7831 = vmatpush1.msra.mxu0 0.0
      %7832 = vmatprep.subr.mxu0 0.0
      %7833 = vmatpush1.msra.mxu0 0.0
      %7834 = vmatprep.mubr.f32.mxu0 0.0
      %v7835 = vand.u32 %v7395, 4294901760
      %7836 = vmatmul.mubr.f32.gmra.mrb[0].mxu0 %v7835
      %v7837 = vpop.f32.mrb[0].mxu0
      %v7838 = vadd.f32 %v7747, %v7837
      %v7839 = vpop.f32.mrb[0].mxu0
      %7840 = vmatprep.mubr.f32.mxu0 0.0
      %v7841 = vand.u32 %v7398, 4294901760
      %7842 = vmatmul.mubr.f32.gmra.mrb[0].mxu0 %v7841
      %v7843 = vpop.f32.mrb[0].mxu0
      %v7844 = vadd.f32 %v7755, %v7843
      %v7845 = vpop.f32.mrb[0].mxu0
      %7846 = vdwg.mxu0
      %7847 = vmatprep.subr.mxu0 0.0
      %v7848 = vand.u32 %v7390, 4294901760
      %7849 = vmatpush1.msra.mxu0 %v7848
      %7850 = vmatprep.subr.mxu0 0.0
      %v7851 = vand.u32 %v7391, 4294901760
      %7852 = vmatpush1.msra.mxu0 %v7851
      %7853 = vmatprep.subr.mxu0 0.0
      %v7854 = vand.u32 %v7392, 4294901760
      %7855 = vmatpush1.msra.mxu0 %v7854
      %7856 = vmatprep.subr.mxu0 0.0
      %v7857 = vand.u32 %v7393, 4294901760
      %7858 = vmatpush1.msra.mxu0 %v7857
      %7859 = vmatprep.subr.mxu0 0.0
      %7860 = vmatpush1.msra.mxu0 0.0
      %7861 = vmatprep.subr.mxu0 0.0
      %7862 = vmatpush1.msra.mxu0 0.0
      %7863 = vmatprep.subr.mxu0 0.0
      %7864 = vmatpush1.msra.mxu0 0.0
      %7865 = vmatprep.subr.mxu0 0.0
      %7866 = vmatpush1.msra.mxu0 0.0
      %7867 = vmatprep.subr.mxu0 0.0
      %7868 = vmatpush1.msra.mxu0 0.0
      %7869 = vmatprep.subr.mxu0 0.0
      %7870 = vmatpush1.msra.mxu0 0.0
      %7871 = vmatprep.subr.mxu0 0.0
      %7872 = vmatpush1.msra.mxu0 0.0
      %7873 = vmatprep.subr.mxu0 0.0
      %7874 = vmatpush1.msra.mxu0 0.0
      %7875 = vmatprep.subr.mxu0 0.0
      %7876 = vmatpush1.msra.mxu0 0.0
      %7877 = vmatprep.subr.mxu0 0.0
      %7878 = vmatpush1.msra.mxu0 0.0
      %7879 = vmatprep.subr.mxu0 0.0
      %7880 = vmatpush1.msra.mxu0 0.0
      %7881 = vmatprep.subr.mxu0 0.0
      %7882 = vmatpush1.msra.mxu0 0.0
      %7883 = vmatprep.subr.mxu0 0.0
      %7884 = vmatpush1.msra.mxu0 0.0
      %7885 = vmatprep.subr.mxu0 0.0
      %7886 = vmatpush1.msra.mxu0 0.0
      %7887 = vmatprep.subr.mxu0 0.0
      %7888 = vmatpush1.msra.mxu0 0.0
      %7889 = vmatprep.subr.mxu0 0.0
      %7890 = vmatpush1.msra.mxu0 0.0
      %7891 = vmatprep.subr.mxu0 0.0
      %7892 = vmatpush1.msra.mxu0 0.0
      %7893 = vmatprep.subr.mxu0 0.0
      %7894 = vmatpush1.msra.mxu0 0.0
      %7895 = vmatprep.subr.mxu0 0.0
      %7896 = vmatpush1.msra.mxu0 0.0
      %7897 = vmatprep.subr.mxu0 0.0
      %7898 = vmatpush1.msra.mxu0 0.0
      %7899 = vmatprep.subr.mxu0 0.0
      %7900 = vmatpush1.msra.mxu0 0.0
      %7901 = vmatprep.subr.mxu0 0.0
      %7902 = vmatpush1.msra.mxu0 0.0
      %7903 = vmatprep.subr.mxu0 0.0
      %7904 = vmatpush1.msra.mxu0 0.0
      %7905 = vmatprep.subr.mxu0 0.0
      %7906 = vmatpush1.msra.mxu0 0.0
      %7907 = vmatprep.subr.mxu0 0.0
      %7908 = vmatpush1.msra.mxu0 0.0
      %7909 = vmatprep.subr.mxu0 0.0
      %7910 = vmatpush1.msra.mxu0 0.0
      %7911 = vmatprep.subr.mxu0 0.0
      %7912 = vmatpush1.msra.mxu0 0.0
      %7913 = vmatprep.subr.mxu0 0.0
      %7914 = vmatpush1.msra.mxu0 0.0
      %7915 = vmatprep.mubr.f32.mxu0 0.0
      %v7916 = vand.u32 %v7395, 4294901760
      %7917 = vmatmul.mubr.f32.gmra.mrb[0].mxu0 %v7916
      %v7918 = vpop.f32.mrb[0].mxu0
      %v7919 = vadd.f32 %v7838, %v7918
      %v7920 = vpop.f32.mrb[0].mxu0
      %7921 = vmatprep.mubr.f32.mxu0 0.0
      %v7922 = vand.u32 %v7398, 4294901760
      %7923 = vmatmul.mubr.f32.gmra.mrb[0].mxu0 %v7922
      %v7924 = vpop.f32.mrb[0].mxu0
      %v7925 = vadd.f32 %v7844, %v7924
      %v7926 = vpop.f32.mrb[0].mxu0
      %7927 = vdwg.mxu0
      %v7928 = vadd.f32 %v6798, %v7919
      %v7929 = vadd.f32 %v6799, %v7925
      %s7930 = scalar_lea.vmem %s2, 96
      %v7931 = vld [vmem:[%s7930] sm:$0xff]
      %v7932 = vld [vmem:[%s7930 + $0x8] sm:$0xff]
      %v7934 = vsel %vm1157, %v7931, 0
      %v7937 = vsel %vm1157, %v7932, 0
      %7939 = vmatprep.subr.mxu0 0.0
      %v7940 = vand.u32 %v1147, 4294901760
      %7941 = vmatpush1.msra.mxu0 %v7940
      %7942 = vmatprep.subr.mxu0 0.0
      %v7943 = vand.u32 %v1148, 4294901760
      %7944 = vmatpush1.msra.mxu0 %v7943
      %7945 = vmatprep.subr.mxu0 0.0
      %v7946 = vand.u32 %v1149, 4294901760
      %7947 = vmatpush1.msra.mxu0 %v7946
      %7948 = vmatprep.subr.mxu0 0.0
      %v7949 = vand.u32 %v1150, 4294901760
      %7950 = vmatpush1.msra.mxu0 %v7949
      %7951 = vmatprep.subr.mxu0 0.0
      %v7952 = vand.u32 %v1151, 4294901760
      %7953 = vmatpush1.msra.mxu0 %v7952
      %7954 = vmatprep.subr.mxu0 0.0
      %v7955 = vand.u32 %v1152, 4294901760
      %7956 = vmatpush1.msra.mxu0 %v7955
      %7957 = vmatprep.subr.mxu0 0.0
      %v7958 = vand.u32 %v1153, 4294901760
      %7959 = vmatpush1.msra.mxu0 %v7958
      %7960 = vmatprep.subr.mxu0 0.0
      %v7961 = vand.u32 %v1154, 4294901760
      %7962 = vmatpush1.msra.mxu0 %v7961
      %7963 = vmatprep.subr.mxu0 0.0
      %7964 = vmatpush1.msra.mxu0 0.0
      %7965 = vmatprep.subr.mxu0 0.0
      %7966 = vmatpush1.msra.mxu0 0.0
      %7967 = vmatprep.subr.mxu0 0.0
      %7968 = vmatpush1.msra.mxu0 0.0
      %7969 = vmatprep.subr.mxu0 0.0
      %7970 = vmatpush1.msra.mxu0 0.0
      %7971 = vmatprep.subr.mxu0 0.0
      %7972 = vmatpush1.msra.mxu0 0.0
      %7973 = vmatprep.subr.mxu0 0.0
      %7974 = vmatpush1.msra.mxu0 0.0
      %7975 = vmatprep.subr.mxu0 0.0
      %7976 = vmatpush1.msra.mxu0 0.0
      %7977 = vmatprep.subr.mxu0 0.0
      %7978 = vmatpush1.msra.mxu0 0.0
      %7979 = vmatprep.subr.mxu0 0.0
      %7980 = vmatpush1.msra.mxu0 0.0
      %7981 = vmatprep.subr.mxu0 0.0
      %7982 = vmatpush1.msra.mxu0 0.0
      %7983 = vmatprep.subr.mxu0 0.0
      %7984 = vmatpush1.msra.mxu0 0.0
      %7985 = vmatprep.subr.mxu0 0.0
      %7986 = vmatpush1.msra.mxu0 0.0
      %7987 = vmatprep.subr.mxu0 0.0
      %7988 = vmatpush1.msra.mxu0 0.0
      %7989 = vmatprep.subr.mxu0 0.0
      %7990 = vmatpush1.msra.mxu0 0.0
      %7991 = vmatprep.subr.mxu0 0.0
      %7992 = vmatpush1.msra.mxu0 0.0
      %7993 = vmatprep.subr.mxu0 0.0
      %7994 = vmatpush1.msra.mxu0 0.0
      %7995 = vmatprep.subr.mxu0 0.0
      %7996 = vmatpush1.msra.mxu0 0.0
      %7997 = vmatprep.subr.mxu0 0.0
      %7998 = vmatpush1.msra.mxu0 0.0
      %7999 = vmatprep.subr.mxu0 0.0
      %8000 = vmatpush1.msra.mxu0 0.0
      %8001 = vmatprep.subr.mxu0 0.0
      %8002 = vmatpush1.msra.mxu0 0.0
      %8003 = vmatprep.subr.mxu0 0.0
      %8004 = vmatpush1.msra.mxu0 0.0
      %8005 = vmatprep.subr.mxu0 0.0
      %8006 = vmatpush1.msra.mxu0 0.0
      %8007 = vmatprep.subr.mxu0 0.0
      %8008 = vmatpush1.msra.mxu0 0.0
      %8009 = vmatprep.subr.mxu0 0.0
      %8010 = vmatpush1.msra.mxu0 0.0
      %8011 = vmatprep.mubr.f32.mxu0 0.0
      %v8012 = vand.u32 %v7934, 4294901760
      %v8013 = vsub.f32 %v7934, %v8012
      %v8014 = vand.u32 %v8013, 4294901760
      %v8015 = vsub.f32 %v8013, %v8014
      %v8016 = vand.u32 %v8015, 4294901760
      %8017 = vmatmul.mubr.f32.gmra.mrb[0].mxu0 %v8016
      %v8018 = vpop.f32.mrb[0].mxu0
      %v8019 = vadd.f32 0.0, %v8018
      %v8020 = vpop.f32.mrb[0].mxu0
      %8021 = vmatprep.mubr.f32.mxu0 0.0
      %v8022 = vand.u32 %v7937, 4294901760
      %v8023 = vsub.f32 %v7937, %v8022
      %v8024 = vand.u32 %v8023, 4294901760
      %v8025 = vsub.f32 %v8023, %v8024
      %v8026 = vand.u32 %v8025, 4294901760
      %8027 = vmatmul.mubr.f32.gmra.mrb[0].mxu0 %v8026
      %v8028 = vpop.f32.mrb[0].mxu0
      %v8029 = vadd.f32 0.0, %v8028
      %v8030 = vpop.f32.mrb[0].mxu0
      %8031 = vdwg.mxu0
      %8032 = vmatprep.subr.mxu0 0.0
      %v8033 = vand.u32 %v1147, 4294901760
      %v8034 = vsub.f32 %v1147, %v8033
      %v8035 = vand.u32 %v8034, 4294901760
      %v8036 = vsub.f32 %v8034, %v8035
      %v8037 = vand.u32 %v8036, 4294901760
      %8038 = vmatpush1.msra.mxu0 %v8037
      %8039 = vmatprep.subr.mxu0 0.0
      %v8040 = vand.u32 %v1148, 4294901760
      %v8041 = vsub.f32 %v1148, %v8040
      %v8042 = vand.u32 %v8041, 4294901760
      %v8043 = vsub.f32 %v8041, %v8042
      %v8044 = vand.u32 %v8043, 4294901760
      %8045 = vmatpush1.msra.mxu0 %v8044
      %8046 = vmatprep.subr.mxu0 0.0
      %v8047 = vand.u32 %v1149, 4294901760
      %v8048 = vsub.f32 %v1149, %v8047
      %v8049 = vand.u32 %v8048, 4294901760
      %v8050 = vsub.f32 %v8048, %v8049
      %v8051 = vand.u32 %v8050, 4294901760
      %8052 = vmatpush1.msra.mxu0 %v8051
      %8053 = vmatprep.subr.mxu0 0.0
      %v8054 = vand.u32 %v1150, 4294901760
      %v8055 = vsub.f32 %v1150, %v8054
      %v8056 = vand.u32 %v8055, 4294901760
      %v8057 = vsub.f32 %v8055, %v8056
      %v8058 = vand.u32 %v8057, 4294901760
      %8059 = vmatpush1.msra.mxu0 %v8058
      %8060 = vmatprep.subr.mxu0 0.0
      %v8061 = vand.u32 %v1151, 4294901760
      %v8062 = vsub.f32 %v1151, %v8061
      %v8063 = vand.u32 %v8062, 4294901760
      %v8064 = vsub.f32 %v8062, %v8063
      %v8065 = vand.u32 %v8064, 4294901760
      %8066 = vmatpush1.msra.mxu0 %v8065
      %8067 = vmatprep.subr.mxu0 0.0
      %v8068 = vand.u32 %v1152, 4294901760
      %v8069 = vsub.f32 %v1152, %v8068
      %v8070 = vand.u32 %v8069, 4294901760
      %v8071 = vsub.f32 %v8069, %v8070
      %v8072 = vand.u32 %v8071, 4294901760
      %8073 = vmatpush1.msra.mxu0 %v8072
      %8074 = vmatprep.subr.mxu0 0.0
      %v8075 = vand.u32 %v1153, 4294901760
      %v8076 = vsub.f32 %v1153, %v8075
      %v8077 = vand.u32 %v8076, 4294901760
      %v8078 = vsub.f32 %v8076, %v8077
      %v8079 = vand.u32 %v8078, 4294901760
      %8080 = vmatpush1.msra.mxu0 %v8079
      %8081 = vmatprep.subr.mxu0 0.0
      %v8082 = vand.u32 %v1154, 4294901760
      %v8083 = vsub.f32 %v1154, %v8082
      %v8084 = vand.u32 %v8083, 4294901760
      %v8085 = vsub.f32 %v8083, %v8084
      %v8086 = vand.u32 %v8085, 4294901760
      %8087 = vmatpush1.msra.mxu0 %v8086
      %8088 = vmatprep.subr.mxu0 0.0
      %8089 = vmatpush1.msra.mxu0 0.0
      %8090 = vmatprep.subr.mxu0 0.0
      %8091 = vmatpush1.msra.mxu0 0.0
      %8092 = vmatprep.subr.mxu0 0.0
      %8093 = vmatpush1.msra.mxu0 0.0
      %8094 = vmatprep.subr.mxu0 0.0
      %8095 = vmatpush1.msra.mxu0 0.0
      %8096 = vmatprep.subr.mxu0 0.0
      %8097 = vmatpush1.msra.mxu0 0.0
      %8098 = vmatprep.subr.mxu0 0.0
      %8099 = vmatpush1.msra.mxu0 0.0
      %8100 = vmatprep.subr.mxu0 0.0
      %8101 = vmatpush1.msra.mxu0 0.0
      %8102 = vmatprep.subr.mxu0 0.0
      %8103 = vmatpush1.msra.mxu0 0.0
      %8104 = vmatprep.subr.mxu0 0.0
      %8105 = vmatpush1.msra.mxu0 0.0
      %8106 = vmatprep.subr.mxu0 0.0
      %8107 = vmatpush1.msra.mxu0 0.0
      %8108 = vmatprep.subr.mxu0 0.0
      %8109 = vmatpush1.msra.mxu0 0.0
      %8110 = vmatprep.subr.mxu0 0.0
      %8111 = vmatpush1.msra.mxu0 0.0
      %8112 = vmatprep.subr.mxu0 0.0
      %8113 = vmatpush1.msra.mxu0 0.0
      %8114 = vmatprep.subr.mxu0 0.0
      %8115 = vmatpush1.msra.mxu0 0.0
      %8116 = vmatprep.subr.mxu0 0.0
      %8117 = vmatpush1.msra.mxu0 0.0
      %8118 = vmatprep.subr.mxu0 0.0
      %8119 = vmatpush1.msra.mxu0 0.0
      %8120 = vmatprep.subr.mxu0 0.0
      %8121 = vmatpush1.msra.mxu0 0.0
      %8122 = vmatprep.subr.mxu0 0.0
      %8123 = vmatpush1.msra.mxu0 0.0
      %8124 = vmatprep.subr.mxu0 0.0
      %8125 = vmatpush1.msra.mxu0 0.0
      %8126 = vmatprep.subr.mxu0 0.0
      %8127 = vmatpush1.msra.mxu0 0.0
      %8128 = vmatprep.subr.mxu0 0.0
      %8129 = vmatpush1.msra.mxu0 0.0
      %8130 = vmatprep.subr.mxu0 0.0
      %8131 = vmatpush1.msra.mxu0 0.0
      %8132 = vmatprep.subr.mxu0 0.0
      %8133 = vmatpush1.msra.mxu0 0.0
      %8134 = vmatprep.subr.mxu0 0.0
      %8135 = vmatpush1.msra.mxu0 0.0
      %8136 = vmatprep.mubr.f32.mxu0 0.0
      %v8137 = vand.u32 %v7934, 4294901760
      %8138 = vmatmul.mubr.f32.gmra.mrb[0].mxu0 %v8137
      %v8139 = vpop.f32.mrb[0].mxu0
      %v8140 = vadd.f32 %v8019, %v8139
      %v8141 = vpop.f32.mrb[0].mxu0
      %8142 = vmatprep.mubr.f32.mxu0 0.0
      %v8143 = vand.u32 %v7937, 4294901760
      %8144 = vmatmul.mubr.f32.gmra.mrb[0].mxu0 %v8143
      %v8145 = vpop.f32.mrb[0].mxu0
      %v8146 = vadd.f32 %v8029, %v8145
      %v8147 = vpop.f32.mrb[0].mxu0
      %8148 = vdwg.mxu0
      %8149 = vmatprep.subr.mxu0 0.0
      %v8150 = vand.u32 %v1147, 4294901760
      %v8151 = vsub.f32 %v1147, %v8150
      %8152 = vmatpush1.msra.mxu0 %v8151
      %8153 = vmatprep.subr.mxu0 0.0
      %v8154 = vand.u32 %v1148, 4294901760
      %v8155 = vsub.f32 %v1148, %v8154
      %8156 = vmatpush1.msra.mxu0 %v8155
      %8157 = vmatprep.subr.mxu0 0.0
      %v8158 = vand.u32 %v1149, 4294901760
      %v8159 = vsub.f32 %v1149, %v8158
      %8160 = vmatpush1.msra.mxu0 %v8159
      %8161 = vmatprep.subr.mxu0 0.0
      %v8162 = vand.u32 %v1150, 4294901760
      %v8163 = vsub.f32 %v1150, %v8162
      %8164 = vmatpush1.msra.mxu0 %v8163
      %8165 = vmatprep.subr.mxu0 0.0
      %v8166 = vand.u32 %v1151, 4294901760
      %v8167 = vsub.f32 %v1151, %v8166
      %8168 = vmatpush1.msra.mxu0 %v8167
      %8169 = vmatprep.subr.mxu0 0.0
      %v8170 = vand.u32 %v1152, 4294901760
      %v8171 = vsub.f32 %v1152, %v8170
      %8172 = vmatpush1.msra.mxu0 %v8171
      %8173 = vmatprep.subr.mxu0 0.0
      %v8174 = vand.u32 %v1153, 4294901760
      %v8175 = vsub.f32 %v1153, %v8174
      %8176 = vmatpush1.msra.mxu0 %v8175
      %8177 = vmatprep.subr.mxu0 0.0
      %v8178 = vand.u32 %v1154, 4294901760
      %v8179 = vsub.f32 %v1154, %v8178
      %8180 = vmatpush1.msra.mxu0 %v8179
      %8181 = vmatprep.subr.mxu0 0.0
      %8182 = vmatpush1.msra.mxu0 0.0
      %8183 = vmatprep.subr.mxu0 0.0
      %8184 = vmatpush1.msra.mxu0 0.0
      %8185 = vmatprep.subr.mxu0 0.0
      %8186 = vmatpush1.msra.mxu0 0.0
      %8187 = vmatprep.subr.mxu0 0.0
      %8188 = vmatpush1.msra.mxu0 0.0
      %8189 = vmatprep.subr.mxu0 0.0
      %8190 = vmatpush1.msra.mxu0 0.0
      %8191 = vmatprep.subr.mxu0 0.0
      %8192 = vmatpush1.msra.mxu0 0.0
      %8193 = vmatprep.subr.mxu0 0.0
      %8194 = vmatpush1.msra.mxu0 0.0
      %8195 = vmatprep.subr.mxu0 0.0
      %8196 = vmatpush1.msra.mxu0 0.0
      %8197 = vmatprep.subr.mxu0 0.0
      %8198 = vmatpush1.msra.mxu0 0.0
      %8199 = vmatprep.subr.mxu0 0.0
      %8200 = vmatpush1.msra.mxu0 0.0
      %8201 = vmatprep.subr.mxu0 0.0
      %8202 = vmatpush1.msra.mxu0 0.0
      %8203 = vmatprep.subr.mxu0 0.0
      %8204 = vmatpush1.msra.mxu0 0.0
      %8205 = vmatprep.subr.mxu0 0.0
      %8206 = vmatpush1.msra.mxu0 0.0
      %8207 = vmatprep.subr.mxu0 0.0
      %8208 = vmatpush1.msra.mxu0 0.0
      %8209 = vmatprep.subr.mxu0 0.0
      %8210 = vmatpush1.msra.mxu0 0.0
      %8211 = vmatprep.subr.mxu0 0.0
      %8212 = vmatpush1.msra.mxu0 0.0
      %8213 = vmatprep.subr.mxu0 0.0
      %8214 = vmatpush1.msra.mxu0 0.0
      %8215 = vmatprep.subr.mxu0 0.0
      %8216 = vmatpush1.msra.mxu0 0.0
      %8217 = vmatprep.subr.mxu0 0.0
      %8218 = vmatpush1.msra.mxu0 0.0
      %8219 = vmatprep.subr.mxu0 0.0
      %8220 = vmatpush1.msra.mxu0 0.0
      %8221 = vmatprep.subr.mxu0 0.0
      %8222 = vmatpush1.msra.mxu0 0.0
      %8223 = vmatprep.subr.mxu0 0.0
      %8224 = vmatpush1.msra.mxu0 0.0
      %8225 = vmatprep.subr.mxu0 0.0
      %8226 = vmatpush1.msra.mxu0 0.0
      %8227 = vmatprep.subr.mxu0 0.0
      %8228 = vmatpush1.msra.mxu0 0.0
      %8229 = vmatprep.mubr.f32.mxu0 0.0
      %v8230 = vand.u32 %v7934, 4294901760
      %v8231 = vsub.f32 %v7934, %v8230
      %8232 = vmatmul.mubr.f32.gmra.mrb[0].mxu0 %v8231
      %v8233 = vpop.f32.mrb[0].mxu0
      %v8234 = vadd.f32 %v8140, %v8233
      %v8235 = vpop.f32.mrb[0].mxu0
      %8236 = vmatprep.mubr.f32.mxu0 0.0
      %v8237 = vand.u32 %v7937, 4294901760
      %v8238 = vsub.f32 %v7937, %v8237
      %8239 = vmatmul.mubr.f32.gmra.mrb[0].mxu0 %v8238
      %v8240 = vpop.f32.mrb[0].mxu0
      %v8241 = vadd.f32 %v8146, %v8240
      %v8242 = vpop.f32.mrb[0].mxu0
      %8243 = vdwg.mxu0
      %8244 = vmatprep.subr.mxu0 0.0
      %v8245 = vand.u32 %v1147, 4294901760
      %8246 = vmatpush1.msra.mxu0 %v8245
      %8247 = vmatprep.subr.mxu0 0.0
      %v8248 = vand.u32 %v1148, 4294901760
      %8249 = vmatpush1.msra.mxu0 %v8248
      %8250 = vmatprep.subr.mxu0 0.0
      %v8251 = vand.u32 %v1149, 4294901760
      %8252 = vmatpush1.msra.mxu0 %v8251
      %8253 = vmatprep.subr.mxu0 0.0
      %v8254 = vand.u32 %v1150, 4294901760
      %8255 = vmatpush1.msra.mxu0 %v8254
      %8256 = vmatprep.subr.mxu0 0.0
      %v8257 = vand.u32 %v1151, 4294901760
      %8258 = vmatpush1.msra.mxu0 %v8257
      %8259 = vmatprep.subr.mxu0 0.0
      %v8260 = vand.u32 %v1152, 4294901760
      %8261 = vmatpush1.msra.mxu0 %v8260
      %8262 = vmatprep.subr.mxu0 0.0
      %v8263 = vand.u32 %v1153, 4294901760
      %8264 = vmatpush1.msra.mxu0 %v8263
      %8265 = vmatprep.subr.mxu0 0.0
      %v8266 = vand.u32 %v1154, 4294901760
      %8267 = vmatpush1.msra.mxu0 %v8266
      %8268 = vmatprep.subr.mxu0 0.0
      %8269 = vmatpush1.msra.mxu0 0.0
      %8270 = vmatprep.subr.mxu0 0.0
      %8271 = vmatpush1.msra.mxu0 0.0
      %8272 = vmatprep.subr.mxu0 0.0
      %8273 = vmatpush1.msra.mxu0 0.0
      %8274 = vmatprep.subr.mxu0 0.0
      %8275 = vmatpush1.msra.mxu0 0.0
      %8276 = vmatprep.subr.mxu0 0.0
      %8277 = vmatpush1.msra.mxu0 0.0
      %8278 = vmatprep.subr.mxu0 0.0
      %8279 = vmatpush1.msra.mxu0 0.0
      %8280 = vmatprep.subr.mxu0 0.0
      %8281 = vmatpush1.msra.mxu0 0.0
      %8282 = vmatprep.subr.mxu0 0.0
      %8283 = vmatpush1.msra.mxu0 0.0
      %8284 = vmatprep.subr.mxu0 0.0
      %8285 = vmatpush1.msra.mxu0 0.0
      %8286 = vmatprep.subr.mxu0 0.0
      %8287 = vmatpush1.msra.mxu0 0.0
      %8288 = vmatprep.subr.mxu0 0.0
      %8289 = vmatpush1.msra.mxu0 0.0
      %8290 = vmatprep.subr.mxu0 0.0
      %8291 = vmatpush1.msra.mxu0 0.0
      %8292 = vmatprep.subr.mxu0 0.0
      %8293 = vmatpush1.msra.mxu0 0.0
      %8294 = vmatprep.subr.mxu0 0.0
      %8295 = vmatpush1.msra.mxu0 0.0
      %8296 = vmatprep.subr.mxu0 0.0
      %8297 = vmatpush1.msra.mxu0 0.0
      %8298 = vmatprep.subr.mxu0 0.0
      %8299 = vmatpush1.msra.mxu0 0.0
      %8300 = vmatprep.subr.mxu0 0.0
      %8301 = vmatpush1.msra.mxu0 0.0
      %8302 = vmatprep.subr.mxu0 0.0
      %8303 = vmatpush1.msra.mxu0 0.0
      %8304 = vmatprep.subr.mxu0 0.0
      %8305 = vmatpush1.msra.mxu0 0.0
      %8306 = vmatprep.subr.mxu0 0.0
      %8307 = vmatpush1.msra.mxu0 0.0
      %8308 = vmatprep.subr.mxu0 0.0
      %8309 = vmatpush1.msra.mxu0 0.0
      %8310 = vmatprep.subr.mxu0 0.0
      %8311 = vmatpush1.msra.mxu0 0.0
      %8312 = vmatprep.subr.mxu0 0.0
      %8313 = vmatpush1.msra.mxu0 0.0
      %8314 = vmatprep.subr.mxu0 0.0
      %8315 = vmatpush1.msra.mxu0 0.0
      %8316 = vmatprep.mubr.f32.mxu0 0.0
      %v8317 = vand.u32 %v7934, 4294901760
      %v8318 = vsub.f32 %v7934, %v8317
      %v8319 = vand.u32 %v8318, 4294901760
      %8320 = vmatmul.mubr.f32.gmra.mrb[0].mxu0 %v8319
      %v8321 = vpop.f32.mrb[0].mxu0
      %v8322 = vadd.f32 %v8234, %v8321
      %v8323 = vpop.f32.mrb[0].mxu0
      %8324 = vmatprep.mubr.f32.mxu0 0.0
      %v8325 = vand.u32 %v7937, 4294901760
      %v8326 = vsub.f32 %v7937, %v8325
      %v8327 = vand.u32 %v8326, 4294901760
      %8328 = vmatmul.mubr.f32.gmra.mrb[0].mxu0 %v8327
      %v8329 = vpop.f32.mrb[0].mxu0
      %v8330 = vadd.f32 %v8241, %v8329
      %v8331 = vpop.f32.mrb[0].mxu0
      %8332 = vdwg.mxu0
      %8333 = vmatprep.subr.mxu0 0.0
      %v8334 = vand.u32 %v1147, 4294901760
      %v8335 = vsub.f32 %v1147, %v8334
      %v8336 = vand.u32 %v8335, 4294901760
      %8337 = vmatpush1.msra.mxu0 %v8336
      %8338 = vmatprep.subr.mxu0 0.0
      %v8339 = vand.u32 %v1148, 4294901760
      %v8340 = vsub.f32 %v1148, %v8339
      %v8341 = vand.u32 %v8340, 4294901760
      %8342 = vmatpush1.msra.mxu0 %v8341
      %8343 = vmatprep.subr.mxu0 0.0
      %v8344 = vand.u32 %v1149, 4294901760
      %v8345 = vsub.f32 %v1149, %v8344
      %v8346 = vand.u32 %v8345, 4294901760
      %8347 = vmatpush1.msra.mxu0 %v8346
      %8348 = vmatprep.subr.mxu0 0.0
      %v8349 = vand.u32 %v1150, 4294901760
      %v8350 = vsub.f32 %v1150, %v8349
      %v8351 = vand.u32 %v8350, 4294901760
      %8352 = vmatpush1.msra.mxu0 %v8351
      %8353 = vmatprep.subr.mxu0 0.0
      %v8354 = vand.u32 %v1151, 4294901760
      %v8355 = vsub.f32 %v1151, %v8354
      %v8356 = vand.u32 %v8355, 4294901760
      %8357 = vmatpush1.msra.mxu0 %v8356
      %8358 = vmatprep.subr.mxu0 0.0
      %v8359 = vand.u32 %v1152, 4294901760
      %v8360 = vsub.f32 %v1152, %v8359
      %v8361 = vand.u32 %v8360, 4294901760
      %8362 = vmatpush1.msra.mxu0 %v8361
      %8363 = vmatprep.subr.mxu0 0.0
      %v8364 = vand.u32 %v1153, 4294901760
      %v8365 = vsub.f32 %v1153, %v8364
      %v8366 = vand.u32 %v8365, 4294901760
      %8367 = vmatpush1.msra.mxu0 %v8366
      %8368 = vmatprep.subr.mxu0 0.0
      %v8369 = vand.u32 %v1154, 4294901760
      %v8370 = vsub.f32 %v1154, %v8369
      %v8371 = vand.u32 %v8370, 4294901760
      %8372 = vmatpush1.msra.mxu0 %v8371
      %8373 = vmatprep.subr.mxu0 0.0
      %8374 = vmatpush1.msra.mxu0 0.0
      %8375 = vmatprep.subr.mxu0 0.0
      %8376 = vmatpush1.msra.mxu0 0.0
      %8377 = vmatprep.subr.mxu0 0.0
      %8378 = vmatpush1.msra.mxu0 0.0
      %8379 = vmatprep.subr.mxu0 0.0
      %8380 = vmatpush1.msra.mxu0 0.0
      %8381 = vmatprep.subr.mxu0 0.0
      %8382 = vmatpush1.msra.mxu0 0.0
      %8383 = vmatprep.subr.mxu0 0.0
      %8384 = vmatpush1.msra.mxu0 0.0
      %8385 = vmatprep.subr.mxu0 0.0
      %8386 = vmatpush1.msra.mxu0 0.0
      %8387 = vmatprep.subr.mxu0 0.0
      %8388 = vmatpush1.msra.mxu0 0.0
      %8389 = vmatprep.subr.mxu0 0.0
      %8390 = vmatpush1.msra.mxu0 0.0
      %8391 = vmatprep.subr.mxu0 0.0
      %8392 = vmatpush1.msra.mxu0 0.0
      %8393 = vmatprep.subr.mxu0 0.0
      %8394 = vmatpush1.msra.mxu0 0.0
      %8395 = vmatprep.subr.mxu0 0.0
      %8396 = vmatpush1.msra.mxu0 0.0
      %8397 = vmatprep.subr.mxu0 0.0
      %8398 = vmatpush1.msra.mxu0 0.0
      %8399 = vmatprep.subr.mxu0 0.0
      %8400 = vmatpush1.msra.mxu0 0.0
      %8401 = vmatprep.subr.mxu0 0.0
      %8402 = vmatpush1.msra.mxu0 0.0
      %8403 = vmatprep.subr.mxu0 0.0
      %8404 = vmatpush1.msra.mxu0 0.0
      %8405 = vmatprep.subr.mxu0 0.0
      %8406 = vmatpush1.msra.mxu0 0.0
      %8407 = vmatprep.subr.mxu0 0.0
      %8408 = vmatpush1.msra.mxu0 0.0
      %8409 = vmatprep.subr.mxu0 0.0
      %8410 = vmatpush1.msra.mxu0 0.0
      %8411 = vmatprep.subr.mxu0 0.0
      %8412 = vmatpush1.msra.mxu0 0.0
      %8413 = vmatprep.subr.mxu0 0.0
      %8414 = vmatpush1.msra.mxu0 0.0
      %8415 = vmatprep.subr.mxu0 0.0
      %8416 = vmatpush1.msra.mxu0 0.0
      %8417 = vmatprep.subr.mxu0 0.0
      %8418 = vmatpush1.msra.mxu0 0.0
      %8419 = vmatprep.subr.mxu0 0.0
      %8420 = vmatpush1.msra.mxu0 0.0
      %8421 = vmatprep.mubr.f32.mxu0 0.0
      %v8422 = vand.u32 %v7934, 4294901760
      %8423 = vmatmul.mubr.f32.gmra.mrb[0].mxu0 %v8422
      %v8424 = vpop.f32.mrb[0].mxu0
      %v8425 = vadd.f32 %v8322, %v8424
      %v8426 = vpop.f32.mrb[0].mxu0
      %8427 = vmatprep.mubr.f32.mxu0 0.0
      %v8428 = vand.u32 %v7937, 4294901760
      %8429 = vmatmul.mubr.f32.gmra.mrb[0].mxu0 %v8428
      %v8430 = vpop.f32.mrb[0].mxu0
      %v8431 = vadd.f32 %v8330, %v8430
      %v8432 = vpop.f32.mrb[0].mxu0
      %8433 = vdwg.mxu0
      %8434 = vmatprep.subr.mxu0 0.0
      %v8435 = vand.u32 %v1147, 4294901760
      %8436 = vmatpush1.msra.mxu0 %v8435
      %8437 = vmatprep.subr.mxu0 0.0
      %v8438 = vand.u32 %v1148, 4294901760
      %8439 = vmatpush1.msra.mxu0 %v8438
      %8440 = vmatprep.subr.mxu0 0.0
      %v8441 = vand.u32 %v1149, 4294901760
      %8442 = vmatpush1.msra.mxu0 %v8441
      %8443 = vmatprep.subr.mxu0 0.0
      %v8444 = vand.u32 %v1150, 4294901760
      %8445 = vmatpush1.msra.mxu0 %v8444
      %8446 = vmatprep.subr.mxu0 0.0
      %v8447 = vand.u32 %v1151, 4294901760
      %8448 = vmatpush1.msra.mxu0 %v8447
      %8449 = vmatprep.subr.mxu0 0.0
      %v8450 = vand.u32 %v1152, 4294901760
      %8451 = vmatpush1.msra.mxu0 %v8450
      %8452 = vmatprep.subr.mxu0 0.0
      %v8453 = vand.u32 %v1153, 4294901760
      %8454 = vmatpush1.msra.mxu0 %v8453
      %8455 = vmatprep.subr.mxu0 0.0
      %v8456 = vand.u32 %v1154, 4294901760
      %8457 = vmatpush1.msra.mxu0 %v8456
      %8458 = vmatprep.subr.mxu0 0.0
      %8459 = vmatpush1.msra.mxu0 0.0
      %8460 = vmatprep.subr.mxu0 0.0
      %8461 = vmatpush1.msra.mxu0 0.0
      %8462 = vmatprep.subr.mxu0 0.0
      %8463 = vmatpush1.msra.mxu0 0.0
      %8464 = vmatprep.subr.mxu0 0.0
      %8465 = vmatpush1.msra.mxu0 0.0
      %8466 = vmatprep.subr.mxu0 0.0
      %8467 = vmatpush1.msra.mxu0 0.0
      %8468 = vmatprep.subr.mxu0 0.0
      %8469 = vmatpush1.msra.mxu0 0.0
      %8470 = vmatprep.subr.mxu0 0.0
      %8471 = vmatpush1.msra.mxu0 0.0
      %8472 = vmatprep.subr.mxu0 0.0
      %8473 = vmatpush1.msra.mxu0 0.0
      %8474 = vmatprep.subr.mxu0 0.0
      %8475 = vmatpush1.msra.mxu0 0.0
      %8476 = vmatprep.subr.mxu0 0.0
      %8477 = vmatpush1.msra.mxu0 0.0
      %8478 = vmatprep.subr.mxu0 0.0
      %8479 = vmatpush1.msra.mxu0 0.0
      %8480 = vmatprep.subr.mxu0 0.0
      %8481 = vmatpush1.msra.mxu0 0.0
      %8482 = vmatprep.subr.mxu0 0.0
      %8483 = vmatpush1.msra.mxu0 0.0
      %8484 = vmatprep.subr.mxu0 0.0
      %8485 = vmatpush1.msra.mxu0 0.0
      %8486 = vmatprep.subr.mxu0 0.0
      %8487 = vmatpush1.msra.mxu0 0.0
      %8488 = vmatprep.subr.mxu0 0.0
      %8489 = vmatpush1.msra.mxu0 0.0
      %8490 = vmatprep.subr.mxu0 0.0
      %8491 = vmatpush1.msra.mxu0 0.0
      %8492 = vmatprep.subr.mxu0 0.0
      %8493 = vmatpush1.msra.mxu0 0.0
      %8494 = vmatprep.subr.mxu0 0.0
      %8495 = vmatpush1.msra.mxu0 0.0
      %8496 = vmatprep.subr.mxu0 0.0
      %8497 = vmatpush1.msra.mxu0 0.0
      %8498 = vmatprep.subr.mxu0 0.0
      %8499 = vmatpush1.msra.mxu0 0.0
      %8500 = vmatprep.subr.mxu0 0.0
      %8501 = vmatpush1.msra.mxu0 0.0
      %8502 = vmatprep.subr.mxu0 0.0
      %8503 = vmatpush1.msra.mxu0 0.0
      %8504 = vmatprep.subr.mxu0 0.0
      %8505 = vmatpush1.msra.mxu0 0.0
      %8506 = vmatprep.mubr.f32.mxu0 0.0
      %v8507 = vand.u32 %v7934, 4294901760
      %8508 = vmatmul.mubr.f32.gmra.mrb[0].mxu0 %v8507
      %v8509 = vpop.f32.mrb[0].mxu0
      %v8510 = vadd.f32 %v8425, %v8509
      %v8511 = vpop.f32.mrb[0].mxu0
      %8512 = vmatprep.mubr.f32.mxu0 0.0
      %v8513 = vand.u32 %v7937, 4294901760
      %8514 = vmatmul.mubr.f32.gmra.mrb[0].mxu0 %v8513
      %v8515 = vpop.f32.mrb[0].mxu0
      %v8516 = vadd.f32 %v8431, %v8515
      %v8517 = vpop.f32.mrb[0].mxu0
      %8518 = vdwg.mxu0
      %s8519 = scalar_lea.vmem %s3, 192
      %v8520 = vld [vmem:[%s8519] sm:$0xff]
      %v8521 = vld [vmem:[%s8519 + $0x8] sm:$0xff]
      %v8522 = vld [vmem:[%s8519 + $0x10] sm:$0xff]
      %v8523 = vld [vmem:[%s8519 + $0x18] sm:$0xff]
      %v8525 = vsel %vm1039, %v8510, 0
      %v8528 = vsel %vm1039, %v8516, 0
      %8530 = vmatprep.subr.mxu0 0.0
      %v8531 = vand.u32 %v8520, 4294901760
      %8532 = vmatpush1.msra.mxu0 %v8531
      %8533 = vmatprep.subr.mxu0 0.0
      %v8534 = vand.u32 %v8521, 4294901760
      %8535 = vmatpush1.msra.mxu0 %v8534
      %8536 = vmatprep.subr.mxu0 0.0
      %v8537 = vand.u32 %v8522, 4294901760
      %8538 = vmatpush1.msra.mxu0 %v8537
      %8539 = vmatprep.subr.mxu0 0.0
      %v8540 = vand.u32 %v8523, 4294901760
      %8541 = vmatpush1.msra.mxu0 %v8540
      %8542 = vmatprep.subr.mxu0 0.0
      %8543 = vmatpush1.msra.mxu0 0.0
      %8544 = vmatprep.subr.mxu0 0.0
      %8545 = vmatpush1.msra.mxu0 0.0
      %8546 = vmatprep.subr.mxu0 0.0
      %8547 = vmatpush1.msra.mxu0 0.0
      %8548 = vmatprep.subr.mxu0 0.0
      %8549 = vmatpush1.msra.mxu0 0.0
      %8550 = vmatprep.subr.mxu0 0.0
      %8551 = vmatpush1.msra.mxu0 0.0
      %8552 = vmatprep.subr.mxu0 0.0
      %8553 = vmatpush1.msra.mxu0 0.0
      %8554 = vmatprep.subr.mxu0 0.0
      %8555 = vmatpush1.msra.mxu0 0.0
      %8556 = vmatprep.subr.mxu0 0.0
      %8557 = vmatpush1.msra.mxu0 0.0
      %8558 = vmatprep.subr.mxu0 0.0
      %8559 = vmatpush1.msra.mxu0 0.0
      %8560 = vmatprep.subr.mxu0 0.0
      %8561 = vmatpush1.msra.mxu0 0.0
      %8562 = vmatprep.subr.mxu0 0.0
      %8563 = vmatpush1.msra.mxu0 0.0
      %8564 = vmatprep.subr.mxu0 0.0
      %8565 = vmatpush1.msra.mxu0 0.0
      %8566 = vmatprep.subr.mxu0 0.0
      %8567 = vmatpush1.msra.mxu0 0.0
      %8568 = vmatprep.subr.mxu0 0.0
      %8569 = vmatpush1.msra.mxu0 0.0
      %8570 = vmatprep.subr.mxu0 0.0
      %8571 = vmatpush1.msra.mxu0 0.0
      %8572 = vmatprep.subr.mxu0 0.0
      %8573 = vmatpush1.msra.mxu0 0.0
      %8574 = vmatprep.subr.mxu0 0.0
      %8575 = vmatpush1.msra.mxu0 0.0
      %8576 = vmatprep.subr.mxu0 0.0
      %8577 = vmatpush1.msra.mxu0 0.0
      %8578 = vmatprep.subr.mxu0 0.0
      %8579 = vmatpush1.msra.mxu0 0.0
      %8580 = vmatprep.subr.mxu0 0.0
      %8581 = vmatpush1.msra.mxu0 0.0
      %8582 = vmatprep.subr.mxu0 0.0
      %8583 = vmatpush1.msra.mxu0 0.0
      %8584 = vmatprep.subr.mxu0 0.0
      %8585 = vmatpush1.msra.mxu0 0.0
      %8586 = vmatprep.subr.mxu0 0.0
      %8587 = vmatpush1.msra.mxu0 0.0
      %8588 = vmatprep.subr.mxu0 0.0
      %8589 = vmatpush1.msra.mxu0 0.0
      %8590 = vmatprep.subr.mxu0 0.0
      %8591 = vmatpush1.msra.mxu0 0.0
      %8592 = vmatprep.subr.mxu0 0.0
      %8593 = vmatpush1.msra.mxu0 0.0
      %8594 = vmatprep.subr.mxu0 0.0
      %8595 = vmatpush1.msra.mxu0 0.0
      %8596 = vmatprep.subr.mxu0 0.0
      %8597 = vmatpush1.msra.mxu0 0.0
      %8598 = vmatprep.mubr.f32.mxu0 0.0
      %v8599 = vand.u32 %v8525, 4294901760
      %v8600 = vsub.f32 %v8525, %v8599
      %v8601 = vand.u32 %v8600, 4294901760
      %v8602 = vsub.f32 %v8600, %v8601
      %v8603 = vand.u32 %v8602, 4294901760
      %8604 = vmatmul.mubr.f32.gmra.mrb[0].mxu0 %v8603
      %v8605 = vpop.f32.mrb[0].mxu0
      %v8606 = vadd.f32 0.0, %v8605
      %v8607 = vpop.f32.mrb[0].mxu0
      %8608 = vmatprep.mubr.f32.mxu0 0.0
      %v8609 = vand.u32 %v8528, 4294901760
      %v8610 = vsub.f32 %v8528, %v8609
      %v8611 = vand.u32 %v8610, 4294901760
      %v8612 = vsub.f32 %v8610, %v8611
      %v8613 = vand.u32 %v8612, 4294901760
      %8614 = vmatmul.mubr.f32.gmra.mrb[0].mxu0 %v8613
      %v8615 = vpop.f32.mrb[0].mxu0
      %v8616 = vadd.f32 0.0, %v8615
      %v8617 = vpop.f32.mrb[0].mxu0
      %8618 = vdwg.mxu0
      %8619 = vmatprep.subr.mxu0 0.0
      %v8620 = vand.u32 %v8520, 4294901760
      %v8621 = vsub.f32 %v8520, %v8620
      %v8622 = vand.u32 %v8621, 4294901760
      %v8623 = vsub.f32 %v8621, %v8622
      %v8624 = vand.u32 %v8623, 4294901760
      %8625 = vmatpush1.msra.mxu0 %v8624
      %8626 = vmatprep.subr.mxu0 0.0
      %v8627 = vand.u32 %v8521, 4294901760
      %v8628 = vsub.f32 %v8521, %v8627
      %v8629 = vand.u32 %v8628, 4294901760
      %v8630 = vsub.f32 %v8628, %v8629
      %v8631 = vand.u32 %v8630, 4294901760
      %8632 = vmatpush1.msra.mxu0 %v8631
      %8633 = vmatprep.subr.mxu0 0.0
      %v8634 = vand.u32 %v8522, 4294901760
      %v8635 = vsub.f32 %v8522, %v8634
      %v8636 = vand.u32 %v8635, 4294901760
      %v8637 = vsub.f32 %v8635, %v8636
      %v8638 = vand.u32 %v8637, 4294901760
      %8639 = vmatpush1.msra.mxu0 %v8638
      %8640 = vmatprep.subr.mxu0 0.0
      %v8641 = vand.u32 %v8523, 4294901760
      %v8642 = vsub.f32 %v8523, %v8641
      %v8643 = vand.u32 %v8642, 4294901760
      %v8644 = vsub.f32 %v8642, %v8643
      %v8645 = vand.u32 %v8644, 4294901760
      %8646 = vmatpush1.msra.mxu0 %v8645
      %8647 = vmatprep.subr.mxu0 0.0
      %8648 = vmatpush1.msra.mxu0 0.0
      %8649 = vmatprep.subr.mxu0 0.0
      %8650 = vmatpush1.msra.mxu0 0.0
      %8651 = vmatprep.subr.mxu0 0.0
      %8652 = vmatpush1.msra.mxu0 0.0
      %8653 = vmatprep.subr.mxu0 0.0
      %8654 = vmatpush1.msra.mxu0 0.0
      %8655 = vmatprep.subr.mxu0 0.0
      %8656 = vmatpush1.msra.mxu0 0.0
      %8657 = vmatprep.subr.mxu0 0.0
      %8658 = vmatpush1.msra.mxu0 0.0
      %8659 = vmatprep.subr.mxu0 0.0
      %8660 = vmatpush1.msra.mxu0 0.0
      %8661 = vmatprep.subr.mxu0 0.0
      %8662 = vmatpush1.msra.mxu0 0.0
      %8663 = vmatprep.subr.mxu0 0.0
      %8664 = vmatpush1.msra.mxu0 0.0
      %8665 = vmatprep.subr.mxu0 0.0
      %8666 = vmatpush1.msra.mxu0 0.0
      %8667 = vmatprep.subr.mxu0 0.0
      %8668 = vmatpush1.msra.mxu0 0.0
      %8669 = vmatprep.subr.mxu0 0.0
      %8670 = vmatpush1.msra.mxu0 0.0
      %8671 = vmatprep.subr.mxu0 0.0
      %8672 = vmatpush1.msra.mxu0 0.0
      %8673 = vmatprep.subr.mxu0 0.0
      %8674 = vmatpush1.msra.mxu0 0.0
      %8675 = vmatprep.subr.mxu0 0.0
      %8676 = vmatpush1.msra.mxu0 0.0
      %8677 = vmatprep.subr.mxu0 0.0
      %8678 = vmatpush1.msra.mxu0 0.0
      %8679 = vmatprep.subr.mxu0 0.0
      %8680 = vmatpush1.msra.mxu0 0.0
      %8681 = vmatprep.subr.mxu0 0.0
      %8682 = vmatpush1.msra.mxu0 0.0
      %8683 = vmatprep.subr.mxu0 0.0
      %8684 = vmatpush1.msra.mxu0 0.0
      %8685 = vmatprep.subr.mxu0 0.0
      %8686 = vmatpush1.msra.mxu0 0.0
      %8687 = vmatprep.subr.mxu0 0.0
      %8688 = vmatpush1.msra.mxu0 0.0
      %8689 = vmatprep.subr.mxu0 0.0
      %8690 = vmatpush1.msra.mxu0 0.0
      %8691 = vmatprep.subr.mxu0 0.0
      %8692 = vmatpush1.msra.mxu0 0.0
      %8693 = vmatprep.subr.mxu0 0.0
      %8694 = vmatpush1.msra.mxu0 0.0
      %8695 = vmatprep.subr.mxu0 0.0
      %8696 = vmatpush1.msra.mxu0 0.0
      %8697 = vmatprep.subr.mxu0 0.0
      %8698 = vmatpush1.msra.mxu0 0.0
      %8699 = vmatprep.subr.mxu0 0.0
      %8700 = vmatpush1.msra.mxu0 0.0
      %8701 = vmatprep.subr.mxu0 0.0
      %8702 = vmatpush1.msra.mxu0 0.0
      %8703 = vmatprep.mubr.f32.mxu0 0.0
      %v8704 = vand.u32 %v8525, 4294901760
      %8705 = vmatmul.mubr.f32.gmra.mrb[0].mxu0 %v8704
      %v8706 = vpop.f32.mrb[0].mxu0
      %v8707 = vadd.f32 %v8606, %v8706
      %v8708 = vpop.f32.mrb[0].mxu0
      %8709 = vmatprep.mubr.f32.mxu0 0.0
      %v8710 = vand.u32 %v8528, 4294901760
      %8711 = vmatmul.mubr.f32.gmra.mrb[0].mxu0 %v8710
      %v8712 = vpop.f32.mrb[0].mxu0
      %v8713 = vadd.f32 %v8616, %v8712
      %v8714 = vpop.f32.mrb[0].mxu0
      %8715 = vdwg.mxu0
      %8716 = vmatprep.subr.mxu0 0.0
      %v8717 = vand.u32 %v8520, 4294901760
      %v8718 = vsub.f32 %v8520, %v8717
      %8719 = vmatpush1.msra.mxu0 %v8718
      %8720 = vmatprep.subr.mxu0 0.0
      %v8721 = vand.u32 %v8521, 4294901760
      %v8722 = vsub.f32 %v8521, %v8721
      %8723 = vmatpush1.msra.mxu0 %v8722
      %8724 = vmatprep.subr.mxu0 0.0
      %v8725 = vand.u32 %v8522, 4294901760
      %v8726 = vsub.f32 %v8522, %v8725
      %8727 = vmatpush1.msra.mxu0 %v8726
      %8728 = vmatprep.subr.mxu0 0.0
      %v8729 = vand.u32 %v8523, 4294901760
      %v8730 = vsub.f32 %v8523, %v8729
      %8731 = vmatpush1.msra.mxu0 %v8730
      %8732 = vmatprep.subr.mxu0 0.0
      %8733 = vmatpush1.msra.mxu0 0.0
      %8734 = vmatprep.subr.mxu0 0.0
      %8735 = vmatpush1.msra.mxu0 0.0
      %8736 = vmatprep.subr.mxu0 0.0
      %8737 = vmatpush1.msra.mxu0 0.0
      %8738 = vmatprep.subr.mxu0 0.0
      %8739 = vmatpush1.msra.mxu0 0.0
      %8740 = vmatprep.subr.mxu0 0.0
      %8741 = vmatpush1.msra.mxu0 0.0
      %8742 = vmatprep.subr.mxu0 0.0
      %8743 = vmatpush1.msra.mxu0 0.0
      %8744 = vmatprep.subr.mxu0 0.0
      %8745 = vmatpush1.msra.mxu0 0.0
      %8746 = vmatprep.subr.mxu0 0.0
      %8747 = vmatpush1.msra.mxu0 0.0
      %8748 = vmatprep.subr.mxu0 0.0
      %8749 = vmatpush1.msra.mxu0 0.0
      %8750 = vmatprep.subr.mxu0 0.0
      %8751 = vmatpush1.msra.mxu0 0.0
      %8752 = vmatprep.subr.mxu0 0.0
      %8753 = vmatpush1.msra.mxu0 0.0
      %8754 = vmatprep.subr.mxu0 0.0
      %8755 = vmatpush1.msra.mxu0 0.0
      %8756 = vmatprep.subr.mxu0 0.0
      %8757 = vmatpush1.msra.mxu0 0.0
      %8758 = vmatprep.subr.mxu0 0.0
      %8759 = vmatpush1.msra.mxu0 0.0
      %8760 = vmatprep.subr.mxu0 0.0
      %8761 = vmatpush1.msra.mxu0 0.0
      %8762 = vmatprep.subr.mxu0 0.0
      %8763 = vmatpush1.msra.mxu0 0.0
      %8764 = vmatprep.subr.mxu0 0.0
      %8765 = vmatpush1.msra.mxu0 0.0
      %8766 = vmatprep.subr.mxu0 0.0
      %8767 = vmatpush1.msra.mxu0 0.0
      %8768 = vmatprep.subr.mxu0 0.0
      %8769 = vmatpush1.msra.mxu0 0.0
      %8770 = vmatprep.subr.mxu0 0.0
      %8771 = vmatpush1.msra.mxu0 0.0
      %8772 = vmatprep.subr.mxu0 0.0
      %8773 = vmatpush1.msra.mxu0 0.0
      %8774 = vmatprep.subr.mxu0 0.0
      %8775 = vmatpush1.msra.mxu0 0.0
      %8776 = vmatprep.subr.mxu0 0.0
      %8777 = vmatpush1.msra.mxu0 0.0
      %8778 = vmatprep.subr.mxu0 0.0
      %8779 = vmatpush1.msra.mxu0 0.0
      %8780 = vmatprep.subr.mxu0 0.0
      %8781 = vmatpush1.msra.mxu0 0.0
      %8782 = vmatprep.subr.mxu0 0.0
      %8783 = vmatpush1.msra.mxu0 0.0
      %8784 = vmatprep.subr.mxu0 0.0
      %8785 = vmatpush1.msra.mxu0 0.0
      %8786 = vmatprep.subr.mxu0 0.0
      %8787 = vmatpush1.msra.mxu0 0.0
      %8788 = vmatprep.mubr.f32.mxu0 0.0
      %v8789 = vand.u32 %v8525, 4294901760
      %v8790 = vsub.f32 %v8525, %v8789
      %8791 = vmatmul.mubr.f32.gmra.mrb[0].mxu0 %v8790
      %v8792 = vpop.f32.mrb[0].mxu0
      %v8793 = vadd.f32 %v8707, %v8792
      %v8794 = vpop.f32.mrb[0].mxu0
      %8795 = vmatprep.mubr.f32.mxu0 0.0
      %v8796 = vand.u32 %v8528, 4294901760
      %v8797 = vsub.f32 %v8528, %v8796
      %8798 = vmatmul.mubr.f32.gmra.mrb[0].mxu0 %v8797
      %v8799 = vpop.f32.mrb[0].mxu0
      %v8800 = vadd.f32 %v8713, %v8799
      %v8801 = vpop.f32.mrb[0].mxu0
      %8802 = vdwg.mxu0
      %8803 = vmatprep.subr.mxu0 0.0
      %v8804 = vand.u32 %v8520, 4294901760
      %8805 = vmatpush1.msra.mxu0 %v8804
      %8806 = vmatprep.subr.mxu0 0.0
      %v8807 = vand.u32 %v8521, 4294901760
      %8808 = vmatpush1.msra.mxu0 %v8807
      %8809 = vmatprep.subr.mxu0 0.0
      %v8810 = vand.u32 %v8522, 4294901760
      %8811 = vmatpush1.msra.mxu0 %v8810
      %8812 = vmatprep.subr.mxu0 0.0
      %v8813 = vand.u32 %v8523, 4294901760
      %8814 = vmatpush1.msra.mxu0 %v8813
      %8815 = vmatprep.subr.mxu0 0.0
      %8816 = vmatpush1.msra.mxu0 0.0
      %8817 = vmatprep.subr.mxu0 0.0
      %8818 = vmatpush1.msra.mxu0 0.0
      %8819 = vmatprep.subr.mxu0 0.0
      %8820 = vmatpush1.msra.mxu0 0.0
      %8821 = vmatprep.subr.mxu0 0.0
      %8822 = vmatpush1.msra.mxu0 0.0
      %8823 = vmatprep.subr.mxu0 0.0
      %8824 = vmatpush1.msra.mxu0 0.0
      %8825 = vmatprep.subr.mxu0 0.0
      %8826 = vmatpush1.msra.mxu0 0.0
      %8827 = vmatprep.subr.mxu0 0.0
      %8828 = vmatpush1.msra.mxu0 0.0
      %8829 = vmatprep.subr.mxu0 0.0
      %8830 = vmatpush1.msra.mxu0 0.0
      %8831 = vmatprep.subr.mxu0 0.0
      %8832 = vmatpush1.msra.mxu0 0.0
      %8833 = vmatprep.subr.mxu0 0.0
      %8834 = vmatpush1.msra.mxu0 0.0
      %8835 = vmatprep.subr.mxu0 0.0
      %8836 = vmatpush1.msra.mxu0 0.0
      %8837 = vmatprep.subr.mxu0 0.0
      %8838 = vmatpush1.msra.mxu0 0.0
      %8839 = vmatprep.subr.mxu0 0.0
      %8840 = vmatpush1.msra.mxu0 0.0
      %8841 = vmatprep.subr.mxu0 0.0
      %8842 = vmatpush1.msra.mxu0 0.0
      %8843 = vmatprep.subr.mxu0 0.0
      %8844 = vmatpush1.msra.mxu0 0.0
      %8845 = vmatprep.subr.mxu0 0.0
      %8846 = vmatpush1.msra.mxu0 0.0
      %8847 = vmatprep.subr.mxu0 0.0
      %8848 = vmatpush1.msra.mxu0 0.0
      %8849 = vmatprep.subr.mxu0 0.0
      %8850 = vmatpush1.msra.mxu0 0.0
      %8851 = vmatprep.subr.mxu0 0.0
      %8852 = vmatpush1.msra.mxu0 0.0
      %8853 = vmatprep.subr.mxu0 0.0
      %8854 = vmatpush1.msra.mxu0 0.0
      %8855 = vmatprep.subr.mxu0 0.0
      %8856 = vmatpush1.msra.mxu0 0.0
      %8857 = vmatprep.subr.mxu0 0.0
      %8858 = vmatpush1.msra.mxu0 0.0
      %8859 = vmatprep.subr.mxu0 0.0
      %8860 = vmatpush1.msra.mxu0 0.0
      %8861 = vmatprep.subr.mxu0 0.0
      %8862 = vmatpush1.msra.mxu0 0.0
      %8863 = vmatprep.subr.mxu0 0.0
      %8864 = vmatpush1.msra.mxu0 0.0
      %8865 = vmatprep.subr.mxu0 0.0
      %8866 = vmatpush1.msra.mxu0 0.0
      %8867 = vmatprep.subr.mxu0 0.0
      %8868 = vmatpush1.msra.mxu0 0.0
      %8869 = vmatprep.subr.mxu0 0.0
      %8870 = vmatpush1.msra.mxu0 0.0
      %8871 = vmatprep.mubr.f32.mxu0 0.0
      %v8872 = vand.u32 %v8525, 4294901760
      %v8873 = vsub.f32 %v8525, %v8872
      %v8874 = vand.u32 %v8873, 4294901760
      %8875 = vmatmul.mubr.f32.gmra.mrb[0].mxu0 %v8874
      %v8876 = vpop.f32.mrb[0].mxu0
      %v8877 = vadd.f32 %v8793, %v8876
      %v8878 = vpop.f32.mrb[0].mxu0
      %8879 = vmatprep.mubr.f32.mxu0 0.0
      %v8880 = vand.u32 %v8528, 4294901760
      %v8881 = vsub.f32 %v8528, %v8880
      %v8882 = vand.u32 %v8881, 4294901760
      %8883 = vmatmul.mubr.f32.gmra.mrb[0].mxu0 %v8882
      %v8884 = vpop.f32.mrb[0].mxu0
      %v8885 = vadd.f32 %v8800, %v8884
      %v8886 = vpop.f32.mrb[0].mxu0
      %8887 = vdwg.mxu0
      %8888 = vmatprep.subr.mxu0 0.0
      %v8889 = vand.u32 %v8520, 4294901760
      %v8890 = vsub.f32 %v8520, %v8889
      %v8891 = vand.u32 %v8890, 4294901760
      %8892 = vmatpush1.msra.mxu0 %v8891
      %8893 = vmatprep.subr.mxu0 0.0
      %v8894 = vand.u32 %v8521, 4294901760
      %v8895 = vsub.f32 %v8521, %v8894
      %v8896 = vand.u32 %v8895, 4294901760
      %8897 = vmatpush1.msra.mxu0 %v8896
      %8898 = vmatprep.subr.mxu0 0.0
      %v8899 = vand.u32 %v8522, 4294901760
      %v8900 = vsub.f32 %v8522, %v8899
      %v8901 = vand.u32 %v8900, 4294901760
      %8902 = vmatpush1.msra.mxu0 %v8901
      %8903 = vmatprep.subr.mxu0 0.0
      %v8904 = vand.u32 %v8523, 4294901760
      %v8905 = vsub.f32 %v8523, %v8904
      %v8906 = vand.u32 %v8905, 4294901760
      %8907 = vmatpush1.msra.mxu0 %v8906
      %8908 = vmatprep.subr.mxu0 0.0
      %8909 = vmatpush1.msra.mxu0 0.0
      %8910 = vmatprep.subr.mxu0 0.0
      %8911 = vmatpush1.msra.mxu0 0.0
      %8912 = vmatprep.subr.mxu0 0.0
      %8913 = vmatpush1.msra.mxu0 0.0
      %8914 = vmatprep.subr.mxu0 0.0
      %8915 = vmatpush1.msra.mxu0 0.0
      %8916 = vmatprep.subr.mxu0 0.0
      %8917 = vmatpush1.msra.mxu0 0.0
      %8918 = vmatprep.subr.mxu0 0.0
      %8919 = vmatpush1.msra.mxu0 0.0
      %8920 = vmatprep.subr.mxu0 0.0
      %8921 = vmatpush1.msra.mxu0 0.0
      %8922 = vmatprep.subr.mxu0 0.0
      %8923 = vmatpush1.msra.mxu0 0.0
      %8924 = vmatprep.subr.mxu0 0.0
      %8925 = vmatpush1.msra.mxu0 0.0
      %8926 = vmatprep.subr.mxu0 0.0
      %8927 = vmatpush1.msra.mxu0 0.0
      %8928 = vmatprep.subr.mxu0 0.0
      %8929 = vmatpush1.msra.mxu0 0.0
      %8930 = vmatprep.subr.mxu0 0.0
      %8931 = vmatpush1.msra.mxu0 0.0
      %8932 = vmatprep.subr.mxu0 0.0
      %8933 = vmatpush1.msra.mxu0 0.0
      %8934 = vmatprep.subr.mxu0 0.0
      %8935 = vmatpush1.msra.mxu0 0.0
      %8936 = vmatprep.subr.mxu0 0.0
      %8937 = vmatpush1.msra.mxu0 0.0
      %8938 = vmatprep.subr.mxu0 0.0
      %8939 = vmatpush1.msra.mxu0 0.0
      %8940 = vmatprep.subr.mxu0 0.0
      %8941 = vmatpush1.msra.mxu0 0.0
      %8942 = vmatprep.subr.mxu0 0.0
      %8943 = vmatpush1.msra.mxu0 0.0
      %8944 = vmatprep.subr.mxu0 0.0
      %8945 = vmatpush1.msra.mxu0 0.0
      %8946 = vmatprep.subr.mxu0 0.0
      %8947 = vmatpush1.msra.mxu0 0.0
      %8948 = vmatprep.subr.mxu0 0.0
      %8949 = vmatpush1.msra.mxu0 0.0
      %8950 = vmatprep.subr.mxu0 0.0
      %8951 = vmatpush1.msra.mxu0 0.0
      %8952 = vmatprep.subr.mxu0 0.0
      %8953 = vmatpush1.msra.mxu0 0.0
      %8954 = vmatprep.subr.mxu0 0.0
      %8955 = vmatpush1.msra.mxu0 0.0
      %8956 = vmatprep.subr.mxu0 0.0
      %8957 = vmatpush1.msra.mxu0 0.0
      %8958 = vmatprep.subr.mxu0 0.0
      %8959 = vmatpush1.msra.mxu0 0.0
      %8960 = vmatprep.subr.mxu0 0.0
      %8961 = vmatpush1.msra.mxu0 0.0
      %8962 = vmatprep.subr.mxu0 0.0
      %8963 = vmatpush1.msra.mxu0 0.0
      %8964 = vmatprep.mubr.f32.mxu0 0.0
      %v8965 = vand.u32 %v8525, 4294901760
      %8966 = vmatmul.mubr.f32.gmra.mrb[0].mxu0 %v8965
      %v8967 = vpop.f32.mrb[0].mxu0
      %v8968 = vadd.f32 %v8877, %v8967
      %v8969 = vpop.f32.mrb[0].mxu0
      %8970 = vmatprep.mubr.f32.mxu0 0.0
      %v8971 = vand.u32 %v8528, 4294901760
      %8972 = vmatmul.mubr.f32.gmra.mrb[0].mxu0 %v8971
      %v8973 = vpop.f32.mrb[0].mxu0
      %v8974 = vadd.f32 %v8885, %v8973
      %v8975 = vpop.f32.mrb[0].mxu0
      %8976 = vdwg.mxu0
      %8977 = vmatprep.subr.mxu0 0.0
      %v8978 = vand.u32 %v8520, 4294901760
      %8979 = vmatpush1.msra.mxu0 %v8978
      %8980 = vmatprep.subr.mxu0 0.0
      %v8981 = vand.u32 %v8521, 4294901760
      %8982 = vmatpush1.msra.mxu0 %v8981
      %8983 = vmatprep.subr.mxu0 0.0
      %v8984 = vand.u32 %v8522, 4294901760
      %8985 = vmatpush1.msra.mxu0 %v8984
      %8986 = vmatprep.subr.mxu0 0.0
      %v8987 = vand.u32 %v8523, 4294901760
      %8988 = vmatpush1.msra.mxu0 %v8987
      %8989 = vmatprep.subr.mxu0 0.0
      %8990 = vmatpush1.msra.mxu0 0.0
      %8991 = vmatprep.subr.mxu0 0.0
      %8992 = vmatpush1.msra.mxu0 0.0
      %8993 = vmatprep.subr.mxu0 0.0
      %8994 = vmatpush1.msra.mxu0 0.0
      %8995 = vmatprep.subr.mxu0 0.0
      %8996 = vmatpush1.msra.mxu0 0.0
      %8997 = vmatprep.subr.mxu0 0.0
      %8998 = vmatpush1.msra.mxu0 0.0
      %8999 = vmatprep.subr.mxu0 0.0
      %9000 = vmatpush1.msra.mxu0 0.0
      %9001 = vmatprep.subr.mxu0 0.0
      %9002 = vmatpush1.msra.mxu0 0.0
      %9003 = vmatprep.subr.mxu0 0.0
      %9004 = vmatpush1.msra.mxu0 0.0
      %9005 = vmatprep.subr.mxu0 0.0
      %9006 = vmatpush1.msra.mxu0 0.0
      %9007 = vmatprep.subr.mxu0 0.0
      %9008 = vmatpush1.msra.mxu0 0.0
      %9009 = vmatprep.subr.mxu0 0.0
      %9010 = vmatpush1.msra.mxu0 0.0
      %9011 = vmatprep.subr.mxu0 0.0
      %9012 = vmatpush1.msra.mxu0 0.0
      %9013 = vmatprep.subr.mxu0 0.0
      %9014 = vmatpush1.msra.mxu0 0.0
      %9015 = vmatprep.subr.mxu0 0.0
      %9016 = vmatpush1.msra.mxu0 0.0
      %9017 = vmatprep.subr.mxu0 0.0
      %9018 = vmatpush1.msra.mxu0 0.0
      %9019 = vmatprep.subr.mxu0 0.0
      %9020 = vmatpush1.msra.mxu0 0.0
      %9021 = vmatprep.subr.mxu0 0.0
      %9022 = vmatpush1.msra.mxu0 0.0
      %9023 = vmatprep.subr.mxu0 0.0
      %9024 = vmatpush1.msra.mxu0 0.0
      %9025 = vmatprep.subr.mxu0 0.0
      %9026 = vmatpush1.msra.mxu0 0.0
      %9027 = vmatprep.subr.mxu0 0.0
      %9028 = vmatpush1.msra.mxu0 0.0
      %9029 = vmatprep.subr.mxu0 0.0
      %9030 = vmatpush1.msra.mxu0 0.0
      %9031 = vmatprep.subr.mxu0 0.0
      %9032 = vmatpush1.msra.mxu0 0.0
      %9033 = vmatprep.subr.mxu0 0.0
      %9034 = vmatpush1.msra.mxu0 0.0
      %9035 = vmatprep.subr.mxu0 0.0
      %9036 = vmatpush1.msra.mxu0 0.0
      %9037 = vmatprep.subr.mxu0 0.0
      %9038 = vmatpush1.msra.mxu0 0.0
      %9039 = vmatprep.subr.mxu0 0.0
      %9040 = vmatpush1.msra.mxu0 0.0
      %9041 = vmatprep.subr.mxu0 0.0
      %9042 = vmatpush1.msra.mxu0 0.0
      %9043 = vmatprep.subr.mxu0 0.0
      %9044 = vmatpush1.msra.mxu0 0.0
      %9045 = vmatprep.mubr.f32.mxu0 0.0
      %v9046 = vand.u32 %v8525, 4294901760
      %9047 = vmatmul.mubr.f32.gmra.mrb[0].mxu0 %v9046
      %v9048 = vpop.f32.mrb[0].mxu0
      %v9049 = vadd.f32 %v8968, %v9048
      %v9050 = vpop.f32.mrb[0].mxu0
      %9051 = vmatprep.mubr.f32.mxu0 0.0
      %v9052 = vand.u32 %v8528, 4294901760
      %9053 = vmatmul.mubr.f32.gmra.mrb[0].mxu0 %v9052
      %v9054 = vpop.f32.mrb[0].mxu0
      %v9055 = vadd.f32 %v8974, %v9054
      %v9056 = vpop.f32.mrb[0].mxu0
      %9057 = vdwg.mxu0
      %v9058 = vadd.f32 %v7928, %v9049
      %v9059 = vadd.f32 %v7929, %v9055
      %s9060 = scalar_lea.vmem %s2, 112
      %v9061 = vld [vmem:[%s9060] sm:$0xff]
      %v9062 = vld [vmem:[%s9060 + $0x8] sm:$0xff]
      %v9064 = vsel %vm1157, %v9061, 0
      %v9067 = vsel %vm1157, %v9062, 0
      %9069 = vmatprep.subr.mxu0 0.0
      %v9070 = vand.u32 %v1147, 4294901760
      %9071 = vmatpush1.msra.mxu0 %v9070
      %9072 = vmatprep.subr.mxu0 0.0
      %v9073 = vand.u32 %v1148, 4294901760
      %9074 = vmatpush1.msra.mxu0 %v9073
      %9075 = vmatprep.subr.mxu0 0.0
      %v9076 = vand.u32 %v1149, 4294901760
      %9077 = vmatpush1.msra.mxu0 %v9076
      %9078 = vmatprep.subr.mxu0 0.0
      %v9079 = vand.u32 %v1150, 4294901760
      %9080 = vmatpush1.msra.mxu0 %v9079
      %9081 = vmatprep.subr.mxu0 0.0
      %v9082 = vand.u32 %v1151, 4294901760
      %9083 = vmatpush1.msra.mxu0 %v9082
      %9084 = vmatprep.subr.mxu0 0.0
      %v9085 = vand.u32 %v1152, 4294901760
      %9086 = vmatpush1.msra.mxu0 %v9085
      %9087 = vmatprep.subr.mxu0 0.0
      %v9088 = vand.u32 %v1153, 4294901760
      %9089 = vmatpush1.msra.mxu0 %v9088
      %9090 = vmatprep.subr.mxu0 0.0
      %v9091 = vand.u32 %v1154, 4294901760
      %9092 = vmatpush1.msra.mxu0 %v9091
      %9093 = vmatprep.subr.mxu0 0.0
      %9094 = vmatpush1.msra.mxu0 0.0
      %9095 = vmatprep.subr.mxu0 0.0
      %9096 = vmatpush1.msra.mxu0 0.0
      %9097 = vmatprep.subr.mxu0 0.0
      %9098 = vmatpush1.msra.mxu0 0.0
      %9099 = vmatprep.subr.mxu0 0.0
      %9100 = vmatpush1.msra.mxu0 0.0
      %9101 = vmatprep.subr.mxu0 0.0
      %9102 = vmatpush1.msra.mxu0 0.0
      %9103 = vmatprep.subr.mxu0 0.0
      %9104 = vmatpush1.msra.mxu0 0.0
      %9105 = vmatprep.subr.mxu0 0.0
      %9106 = vmatpush1.msra.mxu0 0.0
      %9107 = vmatprep.subr.mxu0 0.0
      %9108 = vmatpush1.msra.mxu0 0.0
      %9109 = vmatprep.subr.mxu0 0.0
      %9110 = vmatpush1.msra.mxu0 0.0
      %9111 = vmatprep.subr.mxu0 0.0
      %9112 = vmatpush1.msra.mxu0 0.0
      %9113 = vmatprep.subr.mxu0 0.0
      %9114 = vmatpush1.msra.mxu0 0.0
      %9115 = vmatprep.subr.mxu0 0.0
      %9116 = vmatpush1.msra.mxu0 0.0
      %9117 = vmatprep.subr.mxu0 0.0
      %9118 = vmatpush1.msra.mxu0 0.0
      %9119 = vmatprep.subr.mxu0 0.0
      %9120 = vmatpush1.msra.mxu0 0.0
      %9121 = vmatprep.subr.mxu0 0.0
      %9122 = vmatpush1.msra.mxu0 0.0
      %9123 = vmatprep.subr.mxu0 0.0
      %9124 = vmatpush1.msra.mxu0 0.0
      %9125 = vmatprep.subr.mxu0 0.0
      %9126 = vmatpush1.msra.mxu0 0.0
      %9127 = vmatprep.subr.mxu0 0.0
      %9128 = vmatpush1.msra.mxu0 0.0
      %9129 = vmatprep.subr.mxu0 0.0
      %9130 = vmatpush1.msra.mxu0 0.0
      %9131 = vmatprep.subr.mxu0 0.0
      %9132 = vmatpush1.msra.mxu0 0.0
      %9133 = vmatprep.subr.mxu0 0.0
      %9134 = vmatpush1.msra.mxu0 0.0
      %9135 = vmatprep.subr.mxu0 0.0
      %9136 = vmatpush1.msra.mxu0 0.0
      %9137 = vmatprep.subr.mxu0 0.0
      %9138 = vmatpush1.msra.mxu0 0.0
      %9139 = vmatprep.subr.mxu0 0.0
      %9140 = vmatpush1.msra.mxu0 0.0
      %9141 = vmatprep.mubr.f32.mxu0 0.0
      %v9142 = vand.u32 %v9064, 4294901760
      %v9143 = vsub.f32 %v9064, %v9142
      %v9144 = vand.u32 %v9143, 4294901760
      %v9145 = vsub.f32 %v9143, %v9144
      %v9146 = vand.u32 %v9145, 4294901760
      %9147 = vmatmul.mubr.f32.gmra.mrb[0].mxu0 %v9146
      %v9148 = vpop.f32.mrb[0].mxu0
      %v9149 = vadd.f32 0.0, %v9148
      %v9150 = vpop.f32.mrb[0].mxu0
      %9151 = vmatprep.mubr.f32.mxu0 0.0
      %v9152 = vand.u32 %v9067, 4294901760
      %v9153 = vsub.f32 %v9067, %v9152
      %v9154 = vand.u32 %v9153, 4294901760
      %v9155 = vsub.f32 %v9153, %v9154
      %v9156 = vand.u32 %v9155, 4294901760
      %9157 = vmatmul.mubr.f32.gmra.mrb[0].mxu0 %v9156
      %v9158 = vpop.f32.mrb[0].mxu0
      %v9159 = vadd.f32 0.0, %v9158
      %v9160 = vpop.f32.mrb[0].mxu0
      %9161 = vdwg.mxu0
      %9162 = vmatprep.subr.mxu0 0.0
      %v9163 = vand.u32 %v1147, 4294901760
      %v9164 = vsub.f32 %v1147, %v9163
      %v9165 = vand.u32 %v9164, 4294901760
      %v9166 = vsub.f32 %v9164, %v9165
      %v9167 = vand.u32 %v9166, 4294901760
      %9168 = vmatpush1.msra.mxu0 %v9167
      %9169 = vmatprep.subr.mxu0 0.0
      %v9170 = vand.u32 %v1148, 4294901760
      %v9171 = vsub.f32 %v1148, %v9170
      %v9172 = vand.u32 %v9171, 4294901760
      %v9173 = vsub.f32 %v9171, %v9172
      %v9174 = vand.u32 %v9173, 4294901760
      %9175 = vmatpush1.msra.mxu0 %v9174
      %9176 = vmatprep.subr.mxu0 0.0
      %v9177 = vand.u32 %v1149, 4294901760
      %v9178 = vsub.f32 %v1149, %v9177
      %v9179 = vand.u32 %v9178, 4294901760
      %v9180 = vsub.f32 %v9178, %v9179
      %v9181 = vand.u32 %v9180, 4294901760
      %9182 = vmatpush1.msra.mxu0 %v9181
      %9183 = vmatprep.subr.mxu0 0.0
      %v9184 = vand.u32 %v1150, 4294901760
      %v9185 = vsub.f32 %v1150, %v9184
      %v9186 = vand.u32 %v9185, 4294901760
      %v9187 = vsub.f32 %v9185, %v9186
      %v9188 = vand.u32 %v9187, 4294901760
      %9189 = vmatpush1.msra.mxu0 %v9188
      %9190 = vmatprep.subr.mxu0 0.0
      %v9191 = vand.u32 %v1151, 4294901760
      %v9192 = vsub.f32 %v1151, %v9191
      %v9193 = vand.u32 %v9192, 4294901760
      %v9194 = vsub.f32 %v9192, %v9193
      %v9195 = vand.u32 %v9194, 4294901760
      %9196 = vmatpush1.msra.mxu0 %v9195
      %9197 = vmatprep.subr.mxu0 0.0
      %v9198 = vand.u32 %v1152, 4294901760
      %v9199 = vsub.f32 %v1152, %v9198
      %v9200 = vand.u32 %v9199, 4294901760
      %v9201 = vsub.f32 %v9199, %v9200
      %v9202 = vand.u32 %v9201, 4294901760
      %9203 = vmatpush1.msra.mxu0 %v9202
      %9204 = vmatprep.subr.mxu0 0.0
      %v9205 = vand.u32 %v1153, 4294901760
      %v9206 = vsub.f32 %v1153, %v9205
      %v9207 = vand.u32 %v9206, 4294901760
      %v9208 = vsub.f32 %v9206, %v9207
      %v9209 = vand.u32 %v9208, 4294901760
      %9210 = vmatpush1.msra.mxu0 %v9209
      %9211 = vmatprep.subr.mxu0 0.0
      %v9212 = vand.u32 %v1154, 4294901760
      %v9213 = vsub.f32 %v1154, %v9212
      %v9214 = vand.u32 %v9213, 4294901760
      %v9215 = vsub.f32 %v9213, %v9214
      %v9216 = vand.u32 %v9215, 4294901760
      %9217 = vmatpush1.msra.mxu0 %v9216
      %9218 = vmatprep.subr.mxu0 0.0
      %9219 = vmatpush1.msra.mxu0 0.0
      %9220 = vmatprep.subr.mxu0 0.0
      %9221 = vmatpush1.msra.mxu0 0.0
      %9222 = vmatprep.subr.mxu0 0.0
      %9223 = vmatpush1.msra.mxu0 0.0
      %9224 = vmatprep.subr.mxu0 0.0
      %9225 = vmatpush1.msra.mxu0 0.0
      %9226 = vmatprep.subr.mxu0 0.0
      %9227 = vmatpush1.msra.mxu0 0.0
      %9228 = vmatprep.subr.mxu0 0.0
      %9229 = vmatpush1.msra.mxu0 0.0
      %9230 = vmatprep.subr.mxu0 0.0
      %9231 = vmatpush1.msra.mxu0 0.0
      %9232 = vmatprep.subr.mxu0 0.0
      %9233 = vmatpush1.msra.mxu0 0.0
      %9234 = vmatprep.subr.mxu0 0.0
      %9235 = vmatpush1.msra.mxu0 0.0
      %9236 = vmatprep.subr.mxu0 0.0
      %9237 = vmatpush1.msra.mxu0 0.0
      %9238 = vmatprep.subr.mxu0 0.0
      %9239 = vmatpush1.msra.mxu0 0.0
      %9240 = vmatprep.subr.mxu0 0.0
      %9241 = vmatpush1.msra.mxu0 0.0
      %9242 = vmatprep.subr.mxu0 0.0
      %9243 = vmatpush1.msra.mxu0 0.0
      %9244 = vmatprep.subr.mxu0 0.0
      %9245 = vmatpush1.msra.mxu0 0.0
      %9246 = vmatprep.subr.mxu0 0.0
      %9247 = vmatpush1.msra.mxu0 0.0
      %9248 = vmatprep.subr.mxu0 0.0
      %9249 = vmatpush1.msra.mxu0 0.0
      %9250 = vmatprep.subr.mxu0 0.0
      %9251 = vmatpush1.msra.mxu0 0.0
      %9252 = vmatprep.subr.mxu0 0.0
      %9253 = vmatpush1.msra.mxu0 0.0
      %9254 = vmatprep.subr.mxu0 0.0
      %9255 = vmatpush1.msra.mxu0 0.0
      %9256 = vmatprep.subr.mxu0 0.0
      %9257 = vmatpush1.msra.mxu0 0.0
      %9258 = vmatprep.subr.mxu0 0.0
      %9259 = vmatpush1.msra.mxu0 0.0
      %9260 = vmatprep.subr.mxu0 0.0
      %9261 = vmatpush1.msra.mxu0 0.0
      %9262 = vmatprep.subr.mxu0 0.0
      %9263 = vmatpush1.msra.mxu0 0.0
      %9264 = vmatprep.subr.mxu0 0.0
      %9265 = vmatpush1.msra.mxu0 0.0
      %9266 = vmatprep.mubr.f32.mxu0 0.0
      %v9267 = vand.u32 %v9064, 4294901760
      %9268 = vmatmul.mubr.f32.gmra.mrb[0].mxu0 %v9267
      %v9269 = vpop.f32.mrb[0].mxu0
      %v9270 = vadd.f32 %v9149, %v9269
      %v9271 = vpop.f32.mrb[0].mxu0
      %9272 = vmatprep.mubr.f32.mxu0 0.0
      %v9273 = vand.u32 %v9067, 4294901760
      %9274 = vmatmul.mubr.f32.gmra.mrb[0].mxu0 %v9273
      %v9275 = vpop.f32.mrb[0].mxu0
      %v9276 = vadd.f32 %v9159, %v9275
      %v9277 = vpop.f32.mrb[0].mxu0
      %9278 = vdwg.mxu0
      %9279 = vmatprep.subr.mxu0 0.0
      %v9280 = vand.u32 %v1147, 4294901760
      %v9281 = vsub.f32 %v1147, %v9280
      %9282 = vmatpush1.msra.mxu0 %v9281
      %9283 = vmatprep.subr.mxu0 0.0
      %v9284 = vand.u32 %v1148, 4294901760
      %v9285 = vsub.f32 %v1148, %v9284
      %9286 = vmatpush1.msra.mxu0 %v9285
      %9287 = vmatprep.subr.mxu0 0.0
      %v9288 = vand.u32 %v1149, 4294901760
      %v9289 = vsub.f32 %v1149, %v9288
      %9290 = vmatpush1.msra.mxu0 %v9289
      %9291 = vmatprep.subr.mxu0 0.0
      %v9292 = vand.u32 %v1150, 4294901760
      %v9293 = vsub.f32 %v1150, %v9292
      %9294 = vmatpush1.msra.mxu0 %v9293
      %9295 = vmatprep.subr.mxu0 0.0
      %v9296 = vand.u32 %v1151, 4294901760
      %v9297 = vsub.f32 %v1151, %v9296
      %9298 = vmatpush1.msra.mxu0 %v9297
      %9299 = vmatprep.subr.mxu0 0.0
      %v9300 = vand.u32 %v1152, 4294901760
      %v9301 = vsub.f32 %v1152, %v9300
      %9302 = vmatpush1.msra.mxu0 %v9301
      %9303 = vmatprep.subr.mxu0 0.0
      %v9304 = vand.u32 %v1153, 4294901760
      %v9305 = vsub.f32 %v1153, %v9304
      %9306 = vmatpush1.msra.mxu0 %v9305
      %9307 = vmatprep.subr.mxu0 0.0
      %v9308 = vand.u32 %v1154, 4294901760
      %v9309 = vsub.f32 %v1154, %v9308
      %9310 = vmatpush1.msra.mxu0 %v9309
      %9311 = vmatprep.subr.mxu0 0.0
      %9312 = vmatpush1.msra.mxu0 0.0
      %9313 = vmatprep.subr.mxu0 0.0
      %9314 = vmatpush1.msra.mxu0 0.0
      %9315 = vmatprep.subr.mxu0 0.0
      %9316 = vmatpush1.msra.mxu0 0.0
      %9317 = vmatprep.subr.mxu0 0.0
      %9318 = vmatpush1.msra.mxu0 0.0
      %9319 = vmatprep.subr.mxu0 0.0
      %9320 = vmatpush1.msra.mxu0 0.0
      %9321 = vmatprep.subr.mxu0 0.0
      %9322 = vmatpush1.msra.mxu0 0.0
      %9323 = vmatprep.subr.mxu0 0.0
      %9324 = vmatpush1.msra.mxu0 0.0
      %9325 = vmatprep.subr.mxu0 0.0
      %9326 = vmatpush1.msra.mxu0 0.0
      %9327 = vmatprep.subr.mxu0 0.0
      %9328 = vmatpush1.msra.mxu0 0.0
      %9329 = vmatprep.subr.mxu0 0.0
      %9330 = vmatpush1.msra.mxu0 0.0
      %9331 = vmatprep.subr.mxu0 0.0
      %9332 = vmatpush1.msra.mxu0 0.0
      %9333 = vmatprep.subr.mxu0 0.0
      %9334 = vmatpush1.msra.mxu0 0.0
      %9335 = vmatprep.subr.mxu0 0.0
      %9336 = vmatpush1.msra.mxu0 0.0
      %9337 = vmatprep.subr.mxu0 0.0
      %9338 = vmatpush1.msra.mxu0 0.0
      %9339 = vmatprep.subr.mxu0 0.0
      %9340 = vmatpush1.msra.mxu0 0.0
      %9341 = vmatprep.subr.mxu0 0.0
      %9342 = vmatpush1.msra.mxu0 0.0
      %9343 = vmatprep.subr.mxu0 0.0
      %9344 = vmatpush1.msra.mxu0 0.0
      %9345 = vmatprep.subr.mxu0 0.0
      %9346 = vmatpush1.msra.mxu0 0.0
      %9347 = vmatprep.subr.mxu0 0.0
      %9348 = vmatpush1.msra.mxu0 0.0
      %9349 = vmatprep.subr.mxu0 0.0
      %9350 = vmatpush1.msra.mxu0 0.0
      %9351 = vmatprep.subr.mxu0 0.0
      %9352 = vmatpush1.msra.mxu0 0.0
      %9353 = vmatprep.subr.mxu0 0.0
      %9354 = vmatpush1.msra.mxu0 0.0
      %9355 = vmatprep.subr.mxu0 0.0
      %9356 = vmatpush1.msra.mxu0 0.0
      %9357 = vmatprep.subr.mxu0 0.0
      %9358 = vmatpush1.msra.mxu0 0.0
      %9359 = vmatprep.mubr.f32.mxu0 0.0
      %v9360 = vand.u32 %v9064, 4294901760
      %v9361 = vsub.f32 %v9064, %v9360
      %9362 = vmatmul.mubr.f32.gmra.mrb[0].mxu0 %v9361
      %v9363 = vpop.f32.mrb[0].mxu0
      %v9364 = vadd.f32 %v9270, %v9363
      %v9365 = vpop.f32.mrb[0].mxu0
      %9366 = vmatprep.mubr.f32.mxu0 0.0
      %v9367 = vand.u32 %v9067, 4294901760
      %v9368 = vsub.f32 %v9067, %v9367
      %9369 = vmatmul.mubr.f32.gmra.mrb[0].mxu0 %v9368
      %v9370 = vpop.f32.mrb[0].mxu0
      %v9371 = vadd.f32 %v9276, %v9370
      %v9372 = vpop.f32.mrb[0].mxu0
      %9373 = vdwg.mxu0
      %9374 = vmatprep.subr.mxu0 0.0
      %v9375 = vand.u32 %v1147, 4294901760
      %9376 = vmatpush1.msra.mxu0 %v9375
      %9377 = vmatprep.subr.mxu0 0.0
      %v9378 = vand.u32 %v1148, 4294901760
      %9379 = vmatpush1.msra.mxu0 %v9378
      %9380 = vmatprep.subr.mxu0 0.0
      %v9381 = vand.u32 %v1149, 4294901760
      %9382 = vmatpush1.msra.mxu0 %v9381
      %9383 = vmatprep.subr.mxu0 0.0
      %v9384 = vand.u32 %v1150, 4294901760
      %9385 = vmatpush1.msra.mxu0 %v9384
      %9386 = vmatprep.subr.mxu0 0.0
      %v9387 = vand.u32 %v1151, 4294901760
      %9388 = vmatpush1.msra.mxu0 %v9387
      %9389 = vmatprep.subr.mxu0 0.0
      %v9390 = vand.u32 %v1152, 4294901760
      %9391 = vmatpush1.msra.mxu0 %v9390
      %9392 = vmatprep.subr.mxu0 0.0
      %v9393 = vand.u32 %v1153, 4294901760
      %9394 = vmatpush1.msra.mxu0 %v9393
      %9395 = vmatprep.subr.mxu0 0.0
      %v9396 = vand.u32 %v1154, 4294901760
      %9397 = vmatpush1.msra.mxu0 %v9396
      %9398 = vmatprep.subr.mxu0 0.0
      %9399 = vmatpush1.msra.mxu0 0.0
      %9400 = vmatprep.subr.mxu0 0.0
      %9401 = vmatpush1.msra.mxu0 0.0
      %9402 = vmatprep.subr.mxu0 0.0
      %9403 = vmatpush1.msra.mxu0 0.0
      %9404 = vmatprep.subr.mxu0 0.0
      %9405 = vmatpush1.msra.mxu0 0.0
      %9406 = vmatprep.subr.mxu0 0.0
      %9407 = vmatpush1.msra.mxu0 0.0
      %9408 = vmatprep.subr.mxu0 0.0
      %9409 = vmatpush1.msra.mxu0 0.0
      %9410 = vmatprep.subr.mxu0 0.0
      %9411 = vmatpush1.msra.mxu0 0.0
      %9412 = vmatprep.subr.mxu0 0.0
      %9413 = vmatpush1.msra.mxu0 0.0
      %9414 = vmatprep.subr.mxu0 0.0
      %9415 = vmatpush1.msra.mxu0 0.0
      %9416 = vmatprep.subr.mxu0 0.0
      %9417 = vmatpush1.msra.mxu0 0.0
      %9418 = vmatprep.subr.mxu0 0.0
      %9419 = vmatpush1.msra.mxu0 0.0
      %9420 = vmatprep.subr.mxu0 0.0
      %9421 = vmatpush1.msra.mxu0 0.0
      %9422 = vmatprep.subr.mxu0 0.0
      %9423 = vmatpush1.msra.mxu0 0.0
      %9424 = vmatprep.subr.mxu0 0.0
      %9425 = vmatpush1.msra.mxu0 0.0
      %9426 = vmatprep.subr.mxu0 0.0
      %9427 = vmatpush1.msra.mxu0 0.0
      %9428 = vmatprep.subr.mxu0 0.0
      %9429 = vmatpush1.msra.mxu0 0.0
      %9430 = vmatprep.subr.mxu0 0.0
      %9431 = vmatpush1.msra.mxu0 0.0
      %9432 = vmatprep.subr.mxu0 0.0
      %9433 = vmatpush1.msra.mxu0 0.0
      %9434 = vmatprep.subr.mxu0 0.0
      %9435 = vmatpush1.msra.mxu0 0.0
      %9436 = vmatprep.subr.mxu0 0.0
      %9437 = vmatpush1.msra.mxu0 0.0
      %9438 = vmatprep.subr.mxu0 0.0
      %9439 = vmatpush1.msra.mxu0 0.0
      %9440 = vmatprep.subr.mxu0 0.0
      %9441 = vmatpush1.msra.mxu0 0.0
      %9442 = vmatprep.subr.mxu0 0.0
      %9443 = vmatpush1.msra.mxu0 0.0
      %9444 = vmatprep.subr.mxu0 0.0
      %9445 = vmatpush1.msra.mxu0 0.0
      %9446 = vmatprep.mubr.f32.mxu0 0.0
      %v9447 = vand.u32 %v9064, 4294901760
      %v9448 = vsub.f32 %v9064, %v9447
      %v9449 = vand.u32 %v9448, 4294901760
      %9450 = vmatmul.mubr.f32.gmra.mrb[0].mxu0 %v9449
      %v9451 = vpop.f32.mrb[0].mxu0
      %v9452 = vadd.f32 %v9364, %v9451
      %v9453 = vpop.f32.mrb[0].mxu0
      %9454 = vmatprep.mubr.f32.mxu0 0.0
      %v9455 = vand.u32 %v9067, 4294901760
      %v9456 = vsub.f32 %v9067, %v9455
      %v9457 = vand.u32 %v9456, 4294901760
      %9458 = vmatmul.mubr.f32.gmra.mrb[0].mxu0 %v9457
      %v9459 = vpop.f32.mrb[0].mxu0
      %v9460 = vadd.f32 %v9371, %v9459
      %v9461 = vpop.f32.mrb[0].mxu0
      %9462 = vdwg.mxu0
      %9463 = vmatprep.subr.mxu0 0.0
      %v9464 = vand.u32 %v1147, 4294901760
      %v9465 = vsub.f32 %v1147, %v9464
      %v9466 = vand.u32 %v9465, 4294901760
      %9467 = vmatpush1.msra.mxu0 %v9466
      %9468 = vmatprep.subr.mxu0 0.0
      %v9469 = vand.u32 %v1148, 4294901760
      %v9470 = vsub.f32 %v1148, %v9469
      %v9471 = vand.u32 %v9470, 4294901760
      %9472 = vmatpush1.msra.mxu0 %v9471
      %9473 = vmatprep.subr.mxu0 0.0
      %v9474 = vand.u32 %v1149, 4294901760
      %v9475 = vsub.f32 %v1149, %v9474
      %v9476 = vand.u32 %v9475, 4294901760
      %9477 = vmatpush1.msra.mxu0 %v9476
      %9478 = vmatprep.subr.mxu0 0.0
      %v9479 = vand.u32 %v1150, 4294901760
      %v9480 = vsub.f32 %v1150, %v9479
      %v9481 = vand.u32 %v9480, 4294901760
      %9482 = vmatpush1.msra.mxu0 %v9481
      %9483 = vmatprep.subr.mxu0 0.0
      %v9484 = vand.u32 %v1151, 4294901760
      %v9485 = vsub.f32 %v1151, %v9484
      %v9486 = vand.u32 %v9485, 4294901760
      %9487 = vmatpush1.msra.mxu0 %v9486
      %9488 = vmatprep.subr.mxu0 0.0
      %v9489 = vand.u32 %v1152, 4294901760
      %v9490 = vsub.f32 %v1152, %v9489
      %v9491 = vand.u32 %v9490, 4294901760
      %9492 = vmatpush1.msra.mxu0 %v9491
      %9493 = vmatprep.subr.mxu0 0.0
      %v9494 = vand.u32 %v1153, 4294901760
      %v9495 = vsub.f32 %v1153, %v9494
      %v9496 = vand.u32 %v9495, 4294901760
      %9497 = vmatpush1.msra.mxu0 %v9496
      %9498 = vmatprep.subr.mxu0 0.0
      %v9499 = vand.u32 %v1154, 4294901760
      %v9500 = vsub.f32 %v1154, %v9499
      %v9501 = vand.u32 %v9500, 4294901760
      %9502 = vmatpush1.msra.mxu0 %v9501
      %9503 = vmatprep.subr.mxu0 0.0
      %9504 = vmatpush1.msra.mxu0 0.0
      %9505 = vmatprep.subr.mxu0 0.0
      %9506 = vmatpush1.msra.mxu0 0.0
      %9507 = vmatprep.subr.mxu0 0.0
      %9508 = vmatpush1.msra.mxu0 0.0
      %9509 = vmatprep.subr.mxu0 0.0
      %9510 = vmatpush1.msra.mxu0 0.0
      %9511 = vmatprep.subr.mxu0 0.0
      %9512 = vmatpush1.msra.mxu0 0.0
      %9513 = vmatprep.subr.mxu0 0.0
      %9514 = vmatpush1.msra.mxu0 0.0
      %9515 = vmatprep.subr.mxu0 0.0
      %9516 = vmatpush1.msra.mxu0 0.0
      %9517 = vmatprep.subr.mxu0 0.0
      %9518 = vmatpush1.msra.mxu0 0.0
      %9519 = vmatprep.subr.mxu0 0.0
      %9520 = vmatpush1.msra.mxu0 0.0
      %9521 = vmatprep.subr.mxu0 0.0
      %9522 = vmatpush1.msra.mxu0 0.0
      %9523 = vmatprep.subr.mxu0 0.0
      %9524 = vmatpush1.msra.mxu0 0.0
      %9525 = vmatprep.subr.mxu0 0.0
      %9526 = vmatpush1.msra.mxu0 0.0
      %9527 = vmatprep.subr.mxu0 0.0
      %9528 = vmatpush1.msra.mxu0 0.0
      %9529 = vmatprep.subr.mxu0 0.0
      %9530 = vmatpush1.msra.mxu0 0.0
      %9531 = vmatprep.subr.mxu0 0.0
      %9532 = vmatpush1.msra.mxu0 0.0
      %9533 = vmatprep.subr.mxu0 0.0
      %9534 = vmatpush1.msra.mxu0 0.0
      %9535 = vmatprep.subr.mxu0 0.0
      %9536 = vmatpush1.msra.mxu0 0.0
      %9537 = vmatprep.subr.mxu0 0.0
      %9538 = vmatpush1.msra.mxu0 0.0
      %9539 = vmatprep.subr.mxu0 0.0
      %9540 = vmatpush1.msra.mxu0 0.0
      %9541 = vmatprep.subr.mxu0 0.0
      %9542 = vmatpush1.msra.mxu0 0.0
      %9543 = vmatprep.subr.mxu0 0.0
      %9544 = vmatpush1.msra.mxu0 0.0
      %9545 = vmatprep.subr.mxu0 0.0
      %9546 = vmatpush1.msra.mxu0 0.0
      %9547 = vmatprep.subr.mxu0 0.0
      %9548 = vmatpush1.msra.mxu0 0.0
      %9549 = vmatprep.subr.mxu0 0.0
      %9550 = vmatpush1.msra.mxu0 0.0
      %9551 = vmatprep.mubr.f32.mxu0 0.0
      %v9552 = vand.u32 %v9064, 4294901760
      %9553 = vmatmul.mubr.f32.gmra.mrb[0].mxu0 %v9552
      %v9554 = vpop.f32.mrb[0].mxu0
      %v9555 = vadd.f32 %v9452, %v9554
      %v9556 = vpop.f32.mrb[0].mxu0
      %9557 = vmatprep.mubr.f32.mxu0 0.0
      %v9558 = vand.u32 %v9067, 4294901760
      %9559 = vmatmul.mubr.f32.gmra.mrb[0].mxu0 %v9558
      %v9560 = vpop.f32.mrb[0].mxu0
      %v9561 = vadd.f32 %v9460, %v9560
      %v9562 = vpop.f32.mrb[0].mxu0
      %9563 = vdwg.mxu0
      %9564 = vmatprep.subr.mxu0 0.0
      %v9565 = vand.u32 %v1147, 4294901760
      %9566 = vmatpush1.msra.mxu0 %v9565
      %9567 = vmatprep.subr.mxu0 0.0
      %v9568 = vand.u32 %v1148, 4294901760
      %9569 = vmatpush1.msra.mxu0 %v9568
      %9570 = vmatprep.subr.mxu0 0.0
      %v9571 = vand.u32 %v1149, 4294901760
      %9572 = vmatpush1.msra.mxu0 %v9571
      %9573 = vmatprep.subr.mxu0 0.0
      %v9574 = vand.u32 %v1150, 4294901760
      %9575 = vmatpush1.msra.mxu0 %v9574
      %9576 = vmatprep.subr.mxu0 0.0
      %v9577 = vand.u32 %v1151, 4294901760
      %9578 = vmatpush1.msra.mxu0 %v9577
      %9579 = vmatprep.subr.mxu0 0.0
      %v9580 = vand.u32 %v1152, 4294901760
      %9581 = vmatpush1.msra.mxu0 %v9580
      %9582 = vmatprep.subr.mxu0 0.0
      %v9583 = vand.u32 %v1153, 4294901760
      %9584 = vmatpush1.msra.mxu0 %v9583
      %9585 = vmatprep.subr.mxu0 0.0
      %v9586 = vand.u32 %v1154, 4294901760
      %9587 = vmatpush1.msra.mxu0 %v9586
      %9588 = vmatprep.subr.mxu0 0.0
      %9589 = vmatpush1.msra.mxu0 0.0
      %9590 = vmatprep.subr.mxu0 0.0
      %9591 = vmatpush1.msra.mxu0 0.0
      %9592 = vmatprep.subr.mxu0 0.0
      %9593 = vmatpush1.msra.mxu0 0.0
      %9594 = vmatprep.subr.mxu0 0.0
      %9595 = vmatpush1.msra.mxu0 0.0
      %9596 = vmatprep.subr.mxu0 0.0
      %9597 = vmatpush1.msra.mxu0 0.0
      %9598 = vmatprep.subr.mxu0 0.0
      %9599 = vmatpush1.msra.mxu0 0.0
      %9600 = vmatprep.subr.mxu0 0.0
      %9601 = vmatpush1.msra.mxu0 0.0
      %9602 = vmatprep.subr.mxu0 0.0
      %9603 = vmatpush1.msra.mxu0 0.0
      %9604 = vmatprep.subr.mxu0 0.0
      %9605 = vmatpush1.msra.mxu0 0.0
      %9606 = vmatprep.subr.mxu0 0.0
      %9607 = vmatpush1.msra.mxu0 0.0
      %9608 = vmatprep.subr.mxu0 0.0
      %9609 = vmatpush1.msra.mxu0 0.0
      %9610 = vmatprep.subr.mxu0 0.0
      %9611 = vmatpush1.msra.mxu0 0.0
      %9612 = vmatprep.subr.mxu0 0.0
      %9613 = vmatpush1.msra.mxu0 0.0
      %9614 = vmatprep.subr.mxu0 0.0
      %9615 = vmatpush1.msra.mxu0 0.0
      %9616 = vmatprep.subr.mxu0 0.0
      %9617 = vmatpush1.msra.mxu0 0.0
      %9618 = vmatprep.subr.mxu0 0.0
      %9619 = vmatpush1.msra.mxu0 0.0
      %9620 = vmatprep.subr.mxu0 0.0
      %9621 = vmatpush1.msra.mxu0 0.0
      %9622 = vmatprep.subr.mxu0 0.0
      %9623 = vmatpush1.msra.mxu0 0.0
      %9624 = vmatprep.subr.mxu0 0.0
      %9625 = vmatpush1.msra.mxu0 0.0
      %9626 = vmatprep.subr.mxu0 0.0
      %9627 = vmatpush1.msra.mxu0 0.0
      %9628 = vmatprep.subr.mxu0 0.0
      %9629 = vmatpush1.msra.mxu0 0.0
      %9630 = vmatprep.subr.mxu0 0.0
      %9631 = vmatpush1.msra.mxu0 0.0
      %9632 = vmatprep.subr.mxu0 0.0
      %9633 = vmatpush1.msra.mxu0 0.0
      %9634 = vmatprep.subr.mxu0 0.0
      %9635 = vmatpush1.msra.mxu0 0.0
      %9636 = vmatprep.mubr.f32.mxu0 0.0
      %v9637 = vand.u32 %v9064, 4294901760
      %9638 = vmatmul.mubr.f32.gmra.mrb[0].mxu0 %v9637
      %v9639 = vpop.f32.mrb[0].mxu0
      %v9640 = vadd.f32 %v9555, %v9639
      %v9641 = vpop.f32.mrb[0].mxu0
      %9642 = vmatprep.mubr.f32.mxu0 0.0
      %v9643 = vand.u32 %v9067, 4294901760
      %9644 = vmatmul.mubr.f32.gmra.mrb[0].mxu0 %v9643
      %v9645 = vpop.f32.mrb[0].mxu0
      %v9646 = vadd.f32 %v9561, %v9645
      %v9647 = vpop.f32.mrb[0].mxu0
      %9648 = vdwg.mxu0
      %s9649 = scalar_lea.vmem %s3, 224
      %v9650 = vld [vmem:[%s9649] sm:$0xff]
      %v9651 = vld [vmem:[%s9649 + $0x8] sm:$0xff]
      %v9652 = vld [vmem:[%s9649 + $0x10] sm:$0xff]
      %v9653 = vld [vmem:[%s9649 + $0x18] sm:$0xff]
      %v9655 = vsel %vm1039, %v9640, 0
      %v9658 = vsel %vm1039, %v9646, 0
      %9660 = vmatprep.subr.mxu0 0.0
      %v9661 = vand.u32 %v9650, 4294901760
      %9662 = vmatpush1.msra.mxu0 %v9661
      %9663 = vmatprep.subr.mxu0 0.0
      %v9664 = vand.u32 %v9651, 4294901760
      %9665 = vmatpush1.msra.mxu0 %v9664
      %9666 = vmatprep.subr.mxu0 0.0
      %v9667 = vand.u32 %v9652, 4294901760
      %9668 = vmatpush1.msra.mxu0 %v9667
      %9669 = vmatprep.subr.mxu0 0.0
      %v9670 = vand.u32 %v9653, 4294901760
      %9671 = vmatpush1.msra.mxu0 %v9670
      %9672 = vmatprep.subr.mxu0 0.0
      %9673 = vmatpush1.msra.mxu0 0.0
      %9674 = vmatprep.subr.mxu0 0.0
      %9675 = vmatpush1.msra.mxu0 0.0
      %9676 = vmatprep.subr.mxu0 0.0
      %9677 = vmatpush1.msra.mxu0 0.0
      %9678 = vmatprep.subr.mxu0 0.0
      %9679 = vmatpush1.msra.mxu0 0.0
      %9680 = vmatprep.subr.mxu0 0.0
      %9681 = vmatpush1.msra.mxu0 0.0
      %9682 = vmatprep.subr.mxu0 0.0
      %9683 = vmatpush1.msra.mxu0 0.0
      %9684 = vmatprep.subr.mxu0 0.0
      %9685 = vmatpush1.msra.mxu0 0.0
      %9686 = vmatprep.subr.mxu0 0.0
      %9687 = vmatpush1.msra.mxu0 0.0
      %9688 = vmatprep.subr.mxu0 0.0
      %9689 = vmatpush1.msra.mxu0 0.0
      %9690 = vmatprep.subr.mxu0 0.0
      %9691 = vmatpush1.msra.mxu0 0.0
      %9692 = vmatprep.subr.mxu0 0.0
      %9693 = vmatpush1.msra.mxu0 0.0
      %9694 = vmatprep.subr.mxu0 0.0
      %9695 = vmatpush1.msra.mxu0 0.0
      %9696 = vmatprep.subr.mxu0 0.0
      %9697 = vmatpush1.msra.mxu0 0.0
      %9698 = vmatprep.subr.mxu0 0.0
      %9699 = vmatpush1.msra.mxu0 0.0
      %9700 = vmatprep.subr.mxu0 0.0
      %9701 = vmatpush1.msra.mxu0 0.0
      %9702 = vmatprep.subr.mxu0 0.0
      %9703 = vmatpush1.msra.mxu0 0.0
      %9704 = vmatprep.subr.mxu0 0.0
      %9705 = vmatpush1.msra.mxu0 0.0
      %9706 = vmatprep.subr.mxu0 0.0
      %9707 = vmatpush1.msra.mxu0 0.0
      %9708 = vmatprep.subr.mxu0 0.0
      %9709 = vmatpush1.msra.mxu0 0.0
      %9710 = vmatprep.subr.mxu0 0.0
      %9711 = vmatpush1.msra.mxu0 0.0
      %9712 = vmatprep.subr.mxu0 0.0
      %9713 = vmatpush1.msra.mxu0 0.0
      %9714 = vmatprep.subr.mxu0 0.0
      %9715 = vmatpush1.msra.mxu0 0.0
      %9716 = vmatprep.subr.mxu0 0.0
      %9717 = vmatpush1.msra.mxu0 0.0
      %9718 = vmatprep.subr.mxu0 0.0
      %9719 = vmatpush1.msra.mxu0 0.0
      %9720 = vmatprep.subr.mxu0 0.0
      %9721 = vmatpush1.msra.mxu0 0.0
      %9722 = vmatprep.subr.mxu0 0.0
      %9723 = vmatpush1.msra.mxu0 0.0
      %9724 = vmatprep.subr.mxu0 0.0
      %9725 = vmatpush1.msra.mxu0 0.0
      %9726 = vmatprep.subr.mxu0 0.0
      %9727 = vmatpush1.msra.mxu0 0.0
      %9728 = vmatprep.mubr.f32.mxu0 0.0
      %v9729 = vand.u32 %v9655, 4294901760
      %v9730 = vsub.f32 %v9655, %v9729
      %v9731 = vand.u32 %v9730, 4294901760
      %v9732 = vsub.f32 %v9730, %v9731
      %v9733 = vand.u32 %v9732, 4294901760
      %9734 = vmatmul.mubr.f32.gmra.mrb[0].mxu0 %v9733
      %v9735 = vpop.f32.mrb[0].mxu0
      %v9736 = vadd.f32 0.0, %v9735
      %v9737 = vpop.f32.mrb[0].mxu0
      %9738 = vmatprep.mubr.f32.mxu0 0.0
      %v9739 = vand.u32 %v9658, 4294901760
      %v9740 = vsub.f32 %v9658, %v9739
      %v9741 = vand.u32 %v9740, 4294901760
      %v9742 = vsub.f32 %v9740, %v9741
      %v9743 = vand.u32 %v9742, 4294901760
      %9744 = vmatmul.mubr.f32.gmra.mrb[0].mxu0 %v9743
      %v9745 = vpop.f32.mrb[0].mxu0
      %v9746 = vadd.f32 0.0, %v9745
      %v9747 = vpop.f32.mrb[0].mxu0
      %9748 = vdwg.mxu0
      %9749 = vmatprep.subr.mxu0 0.0
      %v9750 = vand.u32 %v9650, 4294901760
      %v9751 = vsub.f32 %v9650, %v9750
      %v9752 = vand.u32 %v9751, 4294901760
      %v9753 = vsub.f32 %v9751, %v9752
      %v9754 = vand.u32 %v9753, 4294901760
      %9755 = vmatpush1.msra.mxu0 %v9754
      %9756 = vmatprep.subr.mxu0 0.0
      %v9757 = vand.u32 %v9651, 4294901760
      %v9758 = vsub.f32 %v9651, %v9757
      %v9759 = vand.u32 %v9758, 4294901760
      %v9760 = vsub.f32 %v9758, %v9759
      %v9761 = vand.u32 %v9760, 4294901760
      %9762 = vmatpush1.msra.mxu0 %v9761
      %9763 = vmatprep.subr.mxu0 0.0
      %v9764 = vand.u32 %v9652, 4294901760
      %v9765 = vsub.f32 %v9652, %v9764
      %v9766 = vand.u32 %v9765, 4294901760
      %v9767 = vsub.f32 %v9765, %v9766
      %v9768 = vand.u32 %v9767, 4294901760
      %9769 = vmatpush1.msra.mxu0 %v9768
      %9770 = vmatprep.subr.mxu0 0.0
      %v9771 = vand.u32 %v9653, 4294901760
      %v9772 = vsub.f32 %v9653, %v9771
      %v9773 = vand.u32 %v9772, 4294901760
      %v9774 = vsub.f32 %v9772, %v9773
      %v9775 = vand.u32 %v9774, 4294901760
      %9776 = vmatpush1.msra.mxu0 %v9775
      %9777 = vmatprep.subr.mxu0 0.0
      %9778 = vmatpush1.msra.mxu0 0.0
      %9779 = vmatprep.subr.mxu0 0.0
      %9780 = vmatpush1.msra.mxu0 0.0
      %9781 = vmatprep.subr.mxu0 0.0
      %9782 = vmatpush1.msra.mxu0 0.0
      %9783 = vmatprep.subr.mxu0 0.0
      %9784 = vmatpush1.msra.mxu0 0.0
      %9785 = vmatprep.subr.mxu0 0.0
      %9786 = vmatpush1.msra.mxu0 0.0
      %9787 = vmatprep.subr.mxu0 0.0
      %9788 = vmatpush1.msra.mxu0 0.0
      %9789 = vmatprep.subr.mxu0 0.0
      %9790 = vmatpush1.msra.mxu0 0.0
      %9791 = vmatprep.subr.mxu0 0.0
      %9792 = vmatpush1.msra.mxu0 0.0
      %9793 = vmatprep.subr.mxu0 0.0
      %9794 = vmatpush1.msra.mxu0 0.0
      %9795 = vmatprep.subr.mxu0 0.0
      %9796 = vmatpush1.msra.mxu0 0.0
      %9797 = vmatprep.subr.mxu0 0.0
      %9798 = vmatpush1.msra.mxu0 0.0
      %9799 = vmatprep.subr.mxu0 0.0
      %9800 = vmatpush1.msra.mxu0 0.0
      %9801 = vmatprep.subr.mxu0 0.0
      %9802 = vmatpush1.msra.mxu0 0.0
      %9803 = vmatprep.subr.mxu0 0.0
      %9804 = vmatpush1.msra.mxu0 0.0
      %9805 = vmatprep.subr.mxu0 0.0
      %9806 = vmatpush1.msra.mxu0 0.0
      %9807 = vmatprep.subr.mxu0 0.0
      %9808 = vmatpush1.msra.mxu0 0.0
      %9809 = vmatprep.subr.mxu0 0.0
      %9810 = vmatpush1.msra.mxu0 0.0
      %9811 = vmatprep.subr.mxu0 0.0
      %9812 = vmatpush1.msra.mxu0 0.0
      %9813 = vmatprep.subr.mxu0 0.0
      %9814 = vmatpush1.msra.mxu0 0.0
      %9815 = vmatprep.subr.mxu0 0.0
      %9816 = vmatpush1.msra.mxu0 0.0
      %9817 = vmatprep.subr.mxu0 0.0
      %9818 = vmatpush1.msra.mxu0 0.0
      %9819 = vmatprep.subr.mxu0 0.0
      %9820 = vmatpush1.msra.mxu0 0.0
      %9821 = vmatprep.subr.mxu0 0.0
      %9822 = vmatpush1.msra.mxu0 0.0
      %9823 = vmatprep.subr.mxu0 0.0
      %9824 = vmatpush1.msra.mxu0 0.0
      %9825 = vmatprep.subr.mxu0 0.0
      %9826 = vmatpush1.msra.mxu0 0.0
      %9827 = vmatprep.subr.mxu0 0.0
      %9828 = vmatpush1.msra.mxu0 0.0
      %9829 = vmatprep.subr.mxu0 0.0
      %9830 = vmatpush1.msra.mxu0 0.0
      %9831 = vmatprep.subr.mxu0 0.0
      %9832 = vmatpush1.msra.mxu0 0.0
      %9833 = vmatprep.mubr.f32.mxu0 0.0
      %v9834 = vand.u32 %v9655, 4294901760
      %9835 = vmatmul.mubr.f32.gmra.mrb[0].mxu0 %v9834
      %v9836 = vpop.f32.mrb[0].mxu0
      %v9837 = vadd.f32 %v9736, %v9836
      %v9838 = vpop.f32.mrb[0].mxu0
      %9839 = vmatprep.mubr.f32.mxu0 0.0
      %v9840 = vand.u32 %v9658, 4294901760
      %9841 = vmatmul.mubr.f32.gmra.mrb[0].mxu0 %v9840
      %v9842 = vpop.f32.mrb[0].mxu0
      %v9843 = vadd.f32 %v9746, %v9842
      %v9844 = vpop.f32.mrb[0].mxu0
      %9845 = vdwg.mxu0
      %9846 = vmatprep.subr.mxu0 0.0
      %v9847 = vand.u32 %v9650, 4294901760
      %v9848 = vsub.f32 %v9650, %v9847
      %9849 = vmatpush1.msra.mxu0 %v9848
      %9850 = vmatprep.subr.mxu0 0.0
      %v9851 = vand.u32 %v9651, 4294901760
      %v9852 = vsub.f32 %v9651, %v9851
      %9853 = vmatpush1.msra.mxu0 %v9852
      %9854 = vmatprep.subr.mxu0 0.0
      %v9855 = vand.u32 %v9652, 4294901760
      %v9856 = vsub.f32 %v9652, %v9855
      %9857 = vmatpush1.msra.mxu0 %v9856
      %9858 = vmatprep.subr.mxu0 0.0
      %v9859 = vand.u32 %v9653, 4294901760
      %v9860 = vsub.f32 %v9653, %v9859
      %9861 = vmatpush1.msra.mxu0 %v9860
      %9862 = vmatprep.subr.mxu0 0.0
      %9863 = vmatpush1.msra.mxu0 0.0
      %9864 = vmatprep.subr.mxu0 0.0
      %9865 = vmatpush1.msra.mxu0 0.0
      %9866 = vmatprep.subr.mxu0 0.0
      %9867 = vmatpush1.msra.mxu0 0.0
      %9868 = vmatprep.subr.mxu0 0.0
      %9869 = vmatpush1.msra.mxu0 0.0
      %9870 = vmatprep.subr.mxu0 0.0
      %9871 = vmatpush1.msra.mxu0 0.0
      %9872 = vmatprep.subr.mxu0 0.0
      %9873 = vmatpush1.msra.mxu0 0.0
      %9874 = vmatprep.subr.mxu0 0.0
      %9875 = vmatpush1.msra.mxu0 0.0
      %9876 = vmatprep.subr.mxu0 0.0
      %9877 = vmatpush1.msra.mxu0 0.0
      %9878 = vmatprep.subr.mxu0 0.0
      %9879 = vmatpush1.msra.mxu0 0.0
      %9880 = vmatprep.subr.mxu0 0.0
      %9881 = vmatpush1.msra.mxu0 0.0
      %9882 = vmatprep.subr.mxu0 0.0
      %9883 = vmatpush1.msra.mxu0 0.0
      %9884 = vmatprep.subr.mxu0 0.0
      %9885 = vmatpush1.msra.mxu0 0.0
      %9886 = vmatprep.subr.mxu0 0.0
      %9887 = vmatpush1.msra.mxu0 0.0
      %9888 = vmatprep.subr.mxu0 0.0
      %9889 = vmatpush1.msra.mxu0 0.0
      %9890 = vmatprep.subr.mxu0 0.0
      %9891 = vmatpush1.msra.mxu0 0.0
      %9892 = vmatprep.subr.mxu0 0.0
      %9893 = vmatpush1.msra.mxu0 0.0
      %9894 = vmatprep.subr.mxu0 0.0
      %9895 = vmatpush1.msra.mxu0 0.0
      %9896 = vmatprep.subr.mxu0 0.0
      %9897 = vmatpush1.msra.mxu0 0.0
      %9898 = vmatprep.subr.mxu0 0.0
      %9899 = vmatpush1.msra.mxu0 0.0
      %9900 = vmatprep.subr.mxu0 0.0
      %9901 = vmatpush1.msra.mxu0 0.0
      %9902 = vmatprep.subr.mxu0 0.0
      %9903 = vmatpush1.msra.mxu0 0.0
      %9904 = vmatprep.subr.mxu0 0.0
      %9905 = vmatpush1.msra.mxu0 0.0
      %9906 = vmatprep.subr.mxu0 0.0
      %9907 = vmatpush1.msra.mxu0 0.0
      %9908 = vmatprep.subr.mxu0 0.0
      %9909 = vmatpush1.msra.mxu0 0.0
      %9910 = vmatprep.subr.mxu0 0.0
      %9911 = vmatpush1.msra.mxu0 0.0
      %9912 = vmatprep.subr.mxu0 0.0
      %9913 = vmatpush1.msra.mxu0 0.0
      %9914 = vmatprep.subr.mxu0 0.0
      %9915 = vmatpush1.msra.mxu0 0.0
      %9916 = vmatprep.subr.mxu0 0.0
      %9917 = vmatpush1.msra.mxu0 0.0
      %9918 = vmatprep.mubr.f32.mxu0 0.0
      %v9919 = vand.u32 %v9655, 4294901760
      %v9920 = vsub.f32 %v9655, %v9919
      %9921 = vmatmul.mubr.f32.gmra.mrb[0].mxu0 %v9920
      %v9922 = vpop.f32.mrb[0].mxu0
      %v9923 = vadd.f32 %v9837, %v9922
      %v9924 = vpop.f32.mrb[0].mxu0
      %9925 = vmatprep.mubr.f32.mxu0 0.0
      %v9926 = vand.u32 %v9658, 4294901760
      %v9927 = vsub.f32 %v9658, %v9926
      %9928 = vmatmul.mubr.f32.gmra.mrb[0].mxu0 %v9927
      %v9929 = vpop.f32.mrb[0].mxu0
      %v9930 = vadd.f32 %v9843, %v9929
      %v9931 = vpop.f32.mrb[0].mxu0
      %9932 = vdwg.mxu0
      %9933 = vmatprep.subr.mxu0 0.0
      %v9934 = vand.u32 %v9650, 4294901760
      %9935 = vmatpush1.msra.mxu0 %v9934
      %9936 = vmatprep.subr.mxu0 0.0
      %v9937 = vand.u32 %v9651, 4294901760
      %9938 = vmatpush1.msra.mxu0 %v9937
      %9939 = vmatprep.subr.mxu0 0.0
      %v9940 = vand.u32 %v9652, 4294901760
      %9941 = vmatpush1.msra.mxu0 %v9940
      %9942 = vmatprep.subr.mxu0 0.0
      %v9943 = vand.u32 %v9653, 4294901760
      %9944 = vmatpush1.msra.mxu0 %v9943
      %9945 = vmatprep.subr.mxu0 0.0
      %9946 = vmatpush1.msra.mxu0 0.0
      %9947 = vmatprep.subr.mxu0 0.0
      %9948 = vmatpush1.msra.mxu0 0.0
      %9949 = vmatprep.subr.mxu0 0.0
      %9950 = vmatpush1.msra.mxu0 0.0
      %9951 = vmatprep.subr.mxu0 0.0
      %9952 = vmatpush1.msra.mxu0 0.0
      %9953 = vmatprep.subr.mxu0 0.0
      %9954 = vmatpush1.msra.mxu0 0.0
      %9955 = vmatprep.subr.mxu0 0.0
      %9956 = vmatpush1.msra.mxu0 0.0
      %9957 = vmatprep.subr.mxu0 0.0
      %9958 = vmatpush1.msra.mxu0 0.0
      %9959 = vmatprep.subr.mxu0 0.0
      %9960 = vmatpush1.msra.mxu0 0.0
      %9961 = vmatprep.subr.mxu0 0.0
      %9962 = vmatpush1.msra.mxu0 0.0
      %9963 = vmatprep.subr.mxu0 0.0
      %9964 = vmatpush1.msra.mxu0 0.0
      %9965 = vmatprep.subr.mxu0 0.0
      %9966 = vmatpush1.msra.mxu0 0.0
      %9967 = vmatprep.subr.mxu0 0.0
      %9968 = vmatpush1.msra.mxu0 0.0
      %9969 = vmatprep.subr.mxu0 0.0
      %9970 = vmatpush1.msra.mxu0 0.0
      %9971 = vmatprep.subr.mxu0 0.0
      %9972 = vmatpush1.msra.mxu0 0.0
      %9973 = vmatprep.subr.mxu0 0.0
      %9974 = vmatpush1.msra.mxu0 0.0
      %9975 = vmatprep.subr.mxu0 0.0
      %9976 = vmatpush1.msra.mxu0 0.0
      %9977 = vmatprep.subr.mxu0 0.0
      %9978 = vmatpush1.msra.mxu0 0.0
      %9979 = vmatprep.subr.mxu0 0.0
      %9980 = vmatpush1.msra.mxu0 0.0
      %9981 = vmatprep.subr.mxu0 0.0
      %9982 = vmatpush1.msra.mxu0 0.0
      %9983 = vmatprep.subr.mxu0 0.0
      %9984 = vmatpush1.msra.mxu0 0.0
      %9985 = vmatprep.subr.mxu0 0.0
      %9986 = vmatpush1.msra.mxu0 0.0
      %9987 = vmatprep.subr.mxu0 0.0
      %9988 = vmatpush1.msra.mxu0 0.0
      %9989 = vmatprep.subr.mxu0 0.0
      %9990 = vmatpush1.msra.mxu0 0.0
      %9991 = vmatprep.subr.mxu0 0.0
      %9992 = vmatpush1.msra.mxu0 0.0
      %9993 = vmatprep.subr.mxu0 0.0
      %9994 = vmatpush1.msra.mxu0 0.0
      %9995 = vmatprep.subr.mxu0 0.0
      %9996 = vmatpush1.msra.mxu0 0.0
      %9997 = vmatprep.subr.mxu0 0.0
      %9998 = vmatpush1.msra.mxu0 0.0
      %9999 = vmatprep.subr.mxu0 0.0
      %10000 = vmatpush1.msra.mxu0 0.0
      %10001 = vmatprep.mubr.f32.mxu0 0.0
      %v10002 = vand.u32 %v9655, 4294901760
      %v10003 = vsub.f32 %v9655, %v10002
      %v10004 = vand.u32 %v10003, 4294901760
      %10005 = vmatmul.mubr.f32.gmra.mrb[0].mxu0 %v10004
      %v10006 = vpop.f32.mrb[0].mxu0
      %v10007 = vadd.f32 %v9923, %v10006
      %v10008 = vpop.f32.mrb[0].mxu0
      %10009 = vmatprep.mubr.f32.mxu0 0.0
      %v10010 = vand.u32 %v9658, 4294901760
      %v10011 = vsub.f32 %v9658, %v10010
      %v10012 = vand.u32 %v10011, 4294901760
      %10013 = vmatmul.mubr.f32.gmra.mrb[0].mxu0 %v10012
      %v10014 = vpop.f32.mrb[0].mxu0
      %v10015 = vadd.f32 %v9930, %v10014
      %v10016 = vpop.f32.mrb[0].mxu0
      %10017 = vdwg.mxu0
      %10018 = vmatprep.subr.mxu0 0.0
      %v10019 = vand.u32 %v9650, 4294901760
      %v10020 = vsub.f32 %v9650, %v10019
      %v10021 = vand.u32 %v10020, 4294901760
      %10022 = vmatpush1.msra.mxu0 %v10021
      %10023 = vmatprep.subr.mxu0 0.0
      %v10024 = vand.u32 %v9651, 4294901760
      %v10025 = vsub.f32 %v9651, %v10024
      %v10026 = vand.u32 %v10025, 4294901760
      %10027 = vmatpush1.msra.mxu0 %v10026
      %10028 = vmatprep.subr.mxu0 0.0
      %v10029 = vand.u32 %v9652, 4294901760
      %v10030 = vsub.f32 %v9652, %v10029
      %v10031 = vand.u32 %v10030, 4294901760
      %10032 = vmatpush1.msra.mxu0 %v10031
      %10033 = vmatprep.subr.mxu0 0.0
      %v10034 = vand.u32 %v9653, 4294901760
      %v10035 = vsub.f32 %v9653, %v10034
      %v10036 = vand.u32 %v10035, 4294901760
      %10037 = vmatpush1.msra.mxu0 %v10036
      %10038 = vmatprep.subr.mxu0 0.0
      %10039 = vmatpush1.msra.mxu0 0.0
      %10040 = vmatprep.subr.mxu0 0.0
      %10041 = vmatpush1.msra.mxu0 0.0
      %10042 = vmatprep.subr.mxu0 0.0
      %10043 = vmatpush1.msra.mxu0 0.0
      %10044 = vmatprep.subr.mxu0 0.0
      %10045 = vmatpush1.msra.mxu0 0.0
      %10046 = vmatprep.subr.mxu0 0.0
      %10047 = vmatpush1.msra.mxu0 0.0
      %10048 = vmatprep.subr.mxu0 0.0
      %10049 = vmatpush1.msra.mxu0 0.0
      %10050 = vmatprep.subr.mxu0 0.0
      %10051 = vmatpush1.msra.mxu0 0.0
      %10052 = vmatprep.subr.mxu0 0.0
      %10053 = vmatpush1.msra.mxu0 0.0
      %10054 = vmatprep.subr.mxu0 0.0
      %10055 = vmatpush1.msra.mxu0 0.0
      %10056 = vmatprep.subr.mxu0 0.0
      %10057 = vmatpush1.msra.mxu0 0.0
      %10058 = vmatprep.subr.mxu0 0.0
      %10059 = vmatpush1.msra.mxu0 0.0
      %10060 = vmatprep.subr.mxu0 0.0
      %10061 = vmatpush1.msra.mxu0 0.0
      %10062 = vmatprep.subr.mxu0 0.0
      %10063 = vmatpush1.msra.mxu0 0.0
      %10064 = vmatprep.subr.mxu0 0.0
      %10065 = vmatpush1.msra.mxu0 0.0
      %10066 = vmatprep.subr.mxu0 0.0
      %10067 = vmatpush1.msra.mxu0 0.0
      %10068 = vmatprep.subr.mxu0 0.0
      %10069 = vmatpush1.msra.mxu0 0.0
      %10070 = vmatprep.subr.mxu0 0.0
      %10071 = vmatpush1.msra.mxu0 0.0
      %10072 = vmatprep.subr.mxu0 0.0
      %10073 = vmatpush1.msra.mxu0 0.0
      %10074 = vmatprep.subr.mxu0 0.0
      %10075 = vmatpush1.msra.mxu0 0.0
      %10076 = vmatprep.subr.mxu0 0.0
      %10077 = vmatpush1.msra.mxu0 0.0
      %10078 = vmatprep.subr.mxu0 0.0
      %10079 = vmatpush1.msra.mxu0 0.0
      %10080 = vmatprep.subr.mxu0 0.0
      %10081 = vmatpush1.msra.mxu0 0.0
      %10082 = vmatprep.subr.mxu0 0.0
      %10083 = vmatpush1.msra.mxu0 0.0
      %10084 = vmatprep.subr.mxu0 0.0
      %10085 = vmatpush1.msra.mxu0 0.0
      %10086 = vmatprep.subr.mxu0 0.0
      %10087 = vmatpush1.msra.mxu0 0.0
      %10088 = vmatprep.subr.mxu0 0.0
      %10089 = vmatpush1.msra.mxu0 0.0
      %10090 = vmatprep.subr.mxu0 0.0
      %10091 = vmatpush1.msra.mxu0 0.0
      %10092 = vmatprep.subr.mxu0 0.0
      %10093 = vmatpush1.msra.mxu0 0.0
      %10094 = vmatprep.mubr.f32.mxu0 0.0
      %v10095 = vand.u32 %v9655, 4294901760
      %10096 = vmatmul.mubr.f32.gmra.mrb[0].mxu0 %v10095
      %v10097 = vpop.f32.mrb[0].mxu0
      %v10098 = vadd.f32 %v10007, %v10097
      %v10099 = vpop.f32.mrb[0].mxu0
      %10100 = vmatprep.mubr.f32.mxu0 0.0
      %v10101 = vand.u32 %v9658, 4294901760
      %10102 = vmatmul.mubr.f32.gmra.mrb[0].mxu0 %v10101
      %v10103 = vpop.f32.mrb[0].mxu0
      %v10104 = vadd.f32 %v10015, %v10103
      %v10105 = vpop.f32.mrb[0].mxu0
      %10106 = vdwg.mxu0
      %10107 = vmatprep.subr.mxu0 0.0
      %v10108 = vand.u32 %v9650, 4294901760
      %10109 = vmatpush1.msra.mxu0 %v10108
      %10110 = vmatprep.subr.mxu0 0.0
      %v10111 = vand.u32 %v9651, 4294901760
      %10112 = vmatpush1.msra.mxu0 %v10111
      %10113 = vmatprep.subr.mxu0 0.0
      %v10114 = vand.u32 %v9652, 4294901760
      %10115 = vmatpush1.msra.mxu0 %v10114
      %10116 = vmatprep.subr.mxu0 0.0
      %v10117 = vand.u32 %v9653, 4294901760
      %10118 = vmatpush1.msra.mxu0 %v10117
      %10119 = vmatprep.subr.mxu0 0.0
      %10120 = vmatpush1.msra.mxu0 0.0
      %10121 = vmatprep.subr.mxu0 0.0
      %10122 = vmatpush1.msra.mxu0 0.0
      %10123 = vmatprep.subr.mxu0 0.0
      %10124 = vmatpush1.msra.mxu0 0.0
      %10125 = vmatprep.subr.mxu0 0.0
      %10126 = vmatpush1.msra.mxu0 0.0
      %10127 = vmatprep.subr.mxu0 0.0
      %10128 = vmatpush1.msra.mxu0 0.0
      %10129 = vmatprep.subr.mxu0 0.0
      %10130 = vmatpush1.msra.mxu0 0.0
      %10131 = vmatprep.subr.mxu0 0.0
      %10132 = vmatpush1.msra.mxu0 0.0
      %10133 = vmatprep.subr.mxu0 0.0
      %10134 = vmatpush1.msra.mxu0 0.0
      %10135 = vmatprep.subr.mxu0 0.0
      %10136 = vmatpush1.msra.mxu0 0.0
      %10137 = vmatprep.subr.mxu0 0.0
      %10138 = vmatpush1.msra.mxu0 0.0
      %10139 = vmatprep.subr.mxu0 0.0
      %10140 = vmatpush1.msra.mxu0 0.0
      %10141 = vmatprep.subr.mxu0 0.0
      %10142 = vmatpush1.msra.mxu0 0.0
      %10143 = vmatprep.subr.mxu0 0.0
      %10144 = vmatpush1.msra.mxu0 0.0
      %10145 = vmatprep.subr.mxu0 0.0
      %10146 = vmatpush1.msra.mxu0 0.0
      %10147 = vmatprep.subr.mxu0 0.0
      %10148 = vmatpush1.msra.mxu0 0.0
      %10149 = vmatprep.subr.mxu0 0.0
      %10150 = vmatpush1.msra.mxu0 0.0
      %10151 = vmatprep.subr.mxu0 0.0
      %10152 = vmatpush1.msra.mxu0 0.0
      %10153 = vmatprep.subr.mxu0 0.0
      %10154 = vmatpush1.msra.mxu0 0.0
      %10155 = vmatprep.subr.mxu0 0.0
      %10156 = vmatpush1.msra.mxu0 0.0
      %10157 = vmatprep.subr.mxu0 0.0
      %10158 = vmatpush1.msra.mxu0 0.0
      %10159 = vmatprep.subr.mxu0 0.0
      %10160 = vmatpush1.msra.mxu0 0.0
      %10161 = vmatprep.subr.mxu0 0.0
      %10162 = vmatpush1.msra.mxu0 0.0
      %10163 = vmatprep.subr.mxu0 0.0
      %10164 = vmatpush1.msra.mxu0 0.0
      %10165 = vmatprep.subr.mxu0 0.0
      %10166 = vmatpush1.msra.mxu0 0.0
      %10167 = vmatprep.subr.mxu0 0.0
      %10168 = vmatpush1.msra.mxu0 0.0
      %10169 = vmatprep.subr.mxu0 0.0
      %10170 = vmatpush1.msra.mxu0 0.0
      %10171 = vmatprep.subr.mxu0 0.0
      %10172 = vmatpush1.msra.mxu0 0.0
      %10173 = vmatprep.subr.mxu0 0.0
      %10174 = vmatpush1.msra.mxu0 0.0
      %10175 = vmatprep.mubr.f32.mxu0 0.0
      %v10176 = vand.u32 %v9655, 4294901760
      %10177 = vmatmul.mubr.f32.gmra.mrb[0].mxu0 %v10176
      %v10178 = vpop.f32.mrb[0].mxu0
      %v10179 = vadd.f32 %v10098, %v10178
      %v10180 = vpop.f32.mrb[0].mxu0
      %10181 = vmatprep.mubr.f32.mxu0 0.0
      %v10182 = vand.u32 %v9658, 4294901760
      %10183 = vmatmul.mubr.f32.gmra.mrb[0].mxu0 %v10182
      %v10184 = vpop.f32.mrb[0].mxu0
      %v10185 = vadd.f32 %v10104, %v10184
      %v10186 = vpop.f32.mrb[0].mxu0
      %10187 = vdwg.mxu0
      %v10188 = vadd.f32 %v9058, %v10179
      %v10189 = vadd.f32 %v9059, %v10185
      %s10190 = scalar_lea.vmem %s2, 128
      %v10191 = vld [vmem:[%s10190] sm:$0xff]
      %v10192 = vld [vmem:[%s10190 + $0x8] sm:$0xff]
      %v10194 = vsel %vm1157, %v10191, 0
      %v10197 = vsel %vm1157, %v10192, 0
      %10199 = vmatprep.subr.mxu0 0.0
      %v10200 = vand.u32 %v1147, 4294901760
      %10201 = vmatpush1.msra.mxu0 %v10200
      %10202 = vmatprep.subr.mxu0 0.0
      %v10203 = vand.u32 %v1148, 4294901760
      %10204 = vmatpush1.msra.mxu0 %v10203
      %10205 = vmatprep.subr.mxu0 0.0
      %v10206 = vand.u32 %v1149, 4294901760
      %10207 = vmatpush1.msra.mxu0 %v10206
      %10208 = vmatprep.subr.mxu0 0.0
      %v10209 = vand.u32 %v1150, 4294901760
      %10210 = vmatpush1.msra.mxu0 %v10209
      %10211 = vmatprep.subr.mxu0 0.0
      %v10212 = vand.u32 %v1151, 4294901760
      %10213 = vmatpush1.msra.mxu0 %v10212
      %10214 = vmatprep.subr.mxu0 0.0
      %v10215 = vand.u32 %v1152, 4294901760
      %10216 = vmatpush1.msra.mxu0 %v10215
      %10217 = vmatprep.subr.mxu0 0.0
      %v10218 = vand.u32 %v1153, 4294901760
      %10219 = vmatpush1.msra.mxu0 %v10218
      %10220 = vmatprep.subr.mxu0 0.0
      %v10221 = vand.u32 %v1154, 4294901760
      %10222 = vmatpush1.msra.mxu0 %v10221
      %10223 = vmatprep.subr.mxu0 0.0
      %10224 = vmatpush1.msra.mxu0 0.0
      %10225 = vmatprep.subr.mxu0 0.0
      %10226 = vmatpush1.msra.mxu0 0.0
      %10227 = vmatprep.subr.mxu0 0.0
      %10228 = vmatpush1.msra.mxu0 0.0
      %10229 = vmatprep.subr.mxu0 0.0
      %10230 = vmatpush1.msra.mxu0 0.0
      %10231 = vmatprep.subr.mxu0 0.0
      %10232 = vmatpush1.msra.mxu0 0.0
      %10233 = vmatprep.subr.mxu0 0.0
      %10234 = vmatpush1.msra.mxu0 0.0
      %10235 = vmatprep.subr.mxu0 0.0
      %10236 = vmatpush1.msra.mxu0 0.0
      %10237 = vmatprep.subr.mxu0 0.0
      %10238 = vmatpush1.msra.mxu0 0.0
      %10239 = vmatprep.subr.mxu0 0.0
      %10240 = vmatpush1.msra.mxu0 0.0
      %10241 = vmatprep.subr.mxu0 0.0
      %10242 = vmatpush1.msra.mxu0 0.0
      %10243 = vmatprep.subr.mxu0 0.0
      %10244 = vmatpush1.msra.mxu0 0.0
      %10245 = vmatprep.subr.mxu0 0.0
      %10246 = vmatpush1.msra.mxu0 0.0
      %10247 = vmatprep.subr.mxu0 0.0
      %10248 = vmatpush1.msra.mxu0 0.0
      %10249 = vmatprep.subr.mxu0 0.0
      %10250 = vmatpush1.msra.mxu0 0.0
      %10251 = vmatprep.subr.mxu0 0.0
      %10252 = vmatpush1.msra.mxu0 0.0
      %10253 = vmatprep.subr.mxu0 0.0
      %10254 = vmatpush1.msra.mxu0 0.0
      %10255 = vmatprep.subr.mxu0 0.0
      %10256 = vmatpush1.msra.mxu0 0.0
      %10257 = vmatprep.subr.mxu0 0.0
      %10258 = vmatpush1.msra.mxu0 0.0
      %10259 = vmatprep.subr.mxu0 0.0
      %10260 = vmatpush1.msra.mxu0 0.0
      %10261 = vmatprep.subr.mxu0 0.0
      %10262 = vmatpush1.msra.mxu0 0.0
      %10263 = vmatprep.subr.mxu0 0.0
      %10264 = vmatpush1.msra.mxu0 0.0
      %10265 = vmatprep.subr.mxu0 0.0
      %10266 = vmatpush1.msra.mxu0 0.0
      %10267 = vmatprep.subr.mxu0 0.0
      %10268 = vmatpush1.msra.mxu0 0.0
      %10269 = vmatprep.subr.mxu0 0.0
      %10270 = vmatpush1.msra.mxu0 0.0
      %10271 = vmatprep.mubr.f32.mxu0 0.0
      %v10272 = vand.u32 %v10194, 4294901760
      %v10273 = vsub.f32 %v10194, %v10272
      %v10274 = vand.u32 %v10273, 4294901760
      %v10275 = vsub.f32 %v10273, %v10274
      %v10276 = vand.u32 %v10275, 4294901760
      %10277 = vmatmul.mubr.f32.gmra.mrb[0].mxu0 %v10276
      %v10278 = vpop.f32.mrb[0].mxu0
      %v10279 = vadd.f32 0.0, %v10278
      %v10280 = vpop.f32.mrb[0].mxu0
      %10281 = vmatprep.mubr.f32.mxu0 0.0
      %v10282 = vand.u32 %v10197, 4294901760
      %v10283 = vsub.f32 %v10197, %v10282
      %v10284 = vand.u32 %v10283, 4294901760
      %v10285 = vsub.f32 %v10283, %v10284
      %v10286 = vand.u32 %v10285, 4294901760
      %10287 = vmatmul.mubr.f32.gmra.mrb[0].mxu0 %v10286
      %v10288 = vpop.f32.mrb[0].mxu0
      %v10289 = vadd.f32 0.0, %v10288
      %v10290 = vpop.f32.mrb[0].mxu0
      %10291 = vdwg.mxu0
      %10292 = vmatprep.subr.mxu0 0.0
      %v10293 = vand.u32 %v1147, 4294901760
      %v10294 = vsub.f32 %v1147, %v10293
      %v10295 = vand.u32 %v10294, 4294901760
      %v10296 = vsub.f32 %v10294, %v10295
      %v10297 = vand.u32 %v10296, 4294901760
      %10298 = vmatpush1.msra.mxu0 %v10297
      %10299 = vmatprep.subr.mxu0 0.0
      %v10300 = vand.u32 %v1148, 4294901760
      %v10301 = vsub.f32 %v1148, %v10300
      %v10302 = vand.u32 %v10301, 4294901760
      %v10303 = vsub.f32 %v10301, %v10302
      %v10304 = vand.u32 %v10303, 4294901760
      %10305 = vmatpush1.msra.mxu0 %v10304
      %10306 = vmatprep.subr.mxu0 0.0
      %v10307 = vand.u32 %v1149, 4294901760
      %v10308 = vsub.f32 %v1149, %v10307
      %v10309 = vand.u32 %v10308, 4294901760
      %v10310 = vsub.f32 %v10308, %v10309
      %v10311 = vand.u32 %v10310, 4294901760
      %10312 = vmatpush1.msra.mxu0 %v10311
      %10313 = vmatprep.subr.mxu0 0.0
      %v10314 = vand.u32 %v1150, 4294901760
      %v10315 = vsub.f32 %v1150, %v10314
      %v10316 = vand.u32 %v10315, 4294901760
      %v10317 = vsub.f32 %v10315, %v10316
      %v10318 = vand.u32 %v10317, 4294901760
      %10319 = vmatpush1.msra.mxu0 %v10318
      %10320 = vmatprep.subr.mxu0 0.0
      %v10321 = vand.u32 %v1151, 4294901760
      %v10322 = vsub.f32 %v1151, %v10321
      %v10323 = vand.u32 %v10322, 4294901760
      %v10324 = vsub.f32 %v10322, %v10323
      %v10325 = vand.u32 %v10324, 4294901760
      %10326 = vmatpush1.msra.mxu0 %v10325
      %10327 = vmatprep.subr.mxu0 0.0
      %v10328 = vand.u32 %v1152, 4294901760
      %v10329 = vsub.f32 %v1152, %v10328
      %v10330 = vand.u32 %v10329, 4294901760
      %v10331 = vsub.f32 %v10329, %v10330
      %v10332 = vand.u32 %v10331, 4294901760
      %10333 = vmatpush1.msra.mxu0 %v10332
      %10334 = vmatprep.subr.mxu0 0.0
      %v10335 = vand.u32 %v1153, 4294901760
      %v10336 = vsub.f32 %v1153, %v10335
      %v10337 = vand.u32 %v10336, 4294901760
      %v10338 = vsub.f32 %v10336, %v10337
      %v10339 = vand.u32 %v10338, 4294901760
      %10340 = vmatpush1.msra.mxu0 %v10339
      %10341 = vmatprep.subr.mxu0 0.0
      %v10342 = vand.u32 %v1154, 4294901760
      %v10343 = vsub.f32 %v1154, %v10342
      %v10344 = vand.u32 %v10343, 4294901760
      %v10345 = vsub.f32 %v10343, %v10344
      %v10346 = vand.u32 %v10345, 4294901760
      %10347 = vmatpush1.msra.mxu0 %v10346
      %10348 = vmatprep.subr.mxu0 0.0
      %10349 = vmatpush1.msra.mxu0 0.0
      %10350 = vmatprep.subr.mxu0 0.0
      %10351 = vmatpush1.msra.mxu0 0.0
      %10352 = vmatprep.subr.mxu0 0.0
      %10353 = vmatpush1.msra.mxu0 0.0
      %10354 = vmatprep.subr.mxu0 0.0
      %10355 = vmatpush1.msra.mxu0 0.0
      %10356 = vmatprep.subr.mxu0 0.0
      %10357 = vmatpush1.msra.mxu0 0.0
      %10358 = vmatprep.subr.mxu0 0.0
      %10359 = vmatpush1.msra.mxu0 0.0
      %10360 = vmatprep.subr.mxu0 0.0
      %10361 = vmatpush1.msra.mxu0 0.0
      %10362 = vmatprep.subr.mxu0 0.0
      %10363 = vmatpush1.msra.mxu0 0.0
      %10364 = vmatprep.subr.mxu0 0.0
      %10365 = vmatpush1.msra.mxu0 0.0
      %10366 = vmatprep.subr.mxu0 0.0
      %10367 = vmatpush1.msra.mxu0 0.0
      %10368 = vmatprep.subr.mxu0 0.0
      %10369 = vmatpush1.msra.mxu0 0.0
      %10370 = vmatprep.subr.mxu0 0.0
      %10371 = vmatpush1.msra.mxu0 0.0
      %10372 = vmatprep.subr.mxu0 0.0
      %10373 = vmatpush1.msra.mxu0 0.0
      %10374 = vmatprep.subr.mxu0 0.0
      %10375 = vmatpush1.msra.mxu0 0.0
      %10376 = vmatprep.subr.mxu0 0.0
      %10377 = vmatpush1.msra.mxu0 0.0
      %10378 = vmatprep.subr.mxu0 0.0
      %10379 = vmatpush1.msra.mxu0 0.0
      %10380 = vmatprep.subr.mxu0 0.0
      %10381 = vmatpush1.msra.mxu0 0.0
      %10382 = vmatprep.subr.mxu0 0.0
      %10383 = vmatpush1.msra.mxu0 0.0
      %10384 = vmatprep.subr.mxu0 0.0
      %10385 = vmatpush1.msra.mxu0 0.0
      %10386 = vmatprep.subr.mxu0 0.0
      %10387 = vmatpush1.msra.mxu0 0.0
      %10388 = vmatprep.subr.mxu0 0.0
      %10389 = vmatpush1.msra.mxu0 0.0
      %10390 = vmatprep.subr.mxu0 0.0
      %10391 = vmatpush1.msra.mxu0 0.0
      %10392 = vmatprep.subr.mxu0 0.0
      %10393 = vmatpush1.msra.mxu0 0.0
      %10394 = vmatprep.subr.mxu0 0.0
      %10395 = vmatpush1.msra.mxu0 0.0
      %10396 = vmatprep.mubr.f32.mxu0 0.0
      %v10397 = vand.u32 %v10194, 4294901760
      %10398 = vmatmul.mubr.f32.gmra.mrb[0].mxu0 %v10397
      %v10399 = vpop.f32.mrb[0].mxu0
      %v10400 = vadd.f32 %v10279, %v10399
      %v10401 = vpop.f32.mrb[0].mxu0
      %10402 = vmatprep.mubr.f32.mxu0 0.0
      %v10403 = vand.u32 %v10197, 4294901760
      %10404 = vmatmul.mubr.f32.gmra.mrb[0].mxu0 %v10403
      %v10405 = vpop.f32.mrb[0].mxu0
      %v10406 = vadd.f32 %v10289, %v10405
      %v10407 = vpop.f32.mrb[0].mxu0
      %10408 = vdwg.mxu0
      %10409 = vmatprep.subr.mxu0 0.0
      %v10410 = vand.u32 %v1147, 4294901760
      %v10411 = vsub.f32 %v1147, %v10410
      %10412 = vmatpush1.msra.mxu0 %v10411
      %10413 = vmatprep.subr.mxu0 0.0
      %v10414 = vand.u32 %v1148, 4294901760
      %v10415 = vsub.f32 %v1148, %v10414
      %10416 = vmatpush1.msra.mxu0 %v10415
      %10417 = vmatprep.subr.mxu0 0.0
      %v10418 = vand.u32 %v1149, 4294901760
      %v10419 = vsub.f32 %v1149, %v10418
      %10420 = vmatpush1.msra.mxu0 %v10419
      %10421 = vmatprep.subr.mxu0 0.0
      %v10422 = vand.u32 %v1150, 4294901760
      %v10423 = vsub.f32 %v1150, %v10422
      %10424 = vmatpush1.msra.mxu0 %v10423
      %10425 = vmatprep.subr.mxu0 0.0
      %v10426 = vand.u32 %v1151, 4294901760
      %v10427 = vsub.f32 %v1151, %v10426
      %10428 = vmatpush1.msra.mxu0 %v10427
      %10429 = vmatprep.subr.mxu0 0.0
      %v10430 = vand.u32 %v1152, 4294901760
      %v10431 = vsub.f32 %v1152, %v10430
      %10432 = vmatpush1.msra.mxu0 %v10431
      %10433 = vmatprep.subr.mxu0 0.0
      %v10434 = vand.u32 %v1153, 4294901760
      %v10435 = vsub.f32 %v1153, %v10434
      %10436 = vmatpush1.msra.mxu0 %v10435
      %10437 = vmatprep.subr.mxu0 0.0
      %v10438 = vand.u32 %v1154, 4294901760
      %v10439 = vsub.f32 %v1154, %v10438
      %10440 = vmatpush1.msra.mxu0 %v10439
      %10441 = vmatprep.subr.mxu0 0.0
      %10442 = vmatpush1.msra.mxu0 0.0
      %10443 = vmatprep.subr.mxu0 0.0
      %10444 = vmatpush1.msra.mxu0 0.0
      %10445 = vmatprep.subr.mxu0 0.0
      %10446 = vmatpush1.msra.mxu0 0.0
      %10447 = vmatprep.subr.mxu0 0.0
      %10448 = vmatpush1.msra.mxu0 0.0
      %10449 = vmatprep.subr.mxu0 0.0
      %10450 = vmatpush1.msra.mxu0 0.0
      %10451 = vmatprep.subr.mxu0 0.0
      %10452 = vmatpush1.msra.mxu0 0.0
      %10453 = vmatprep.subr.mxu0 0.0
      %10454 = vmatpush1.msra.mxu0 0.0
      %10455 = vmatprep.subr.mxu0 0.0
      %10456 = vmatpush1.msra.mxu0 0.0
      %10457 = vmatprep.subr.mxu0 0.0
      %10458 = vmatpush1.msra.mxu0 0.0
      %10459 = vmatprep.subr.mxu0 0.0
      %10460 = vmatpush1.msra.mxu0 0.0
      %10461 = vmatprep.subr.mxu0 0.0
      %10462 = vmatpush1.msra.mxu0 0.0
      %10463 = vmatprep.subr.mxu0 0.0
      %10464 = vmatpush1.msra.mxu0 0.0
      %10465 = vmatprep.subr.mxu0 0.0
      %10466 = vmatpush1.msra.mxu0 0.0
      %10467 = vmatprep.subr.mxu0 0.0
      %10468 = vmatpush1.msra.mxu0 0.0
      %10469 = vmatprep.subr.mxu0 0.0
      %10470 = vmatpush1.msra.mxu0 0.0
      %10471 = vmatprep.subr.mxu0 0.0
      %10472 = vmatpush1.msra.mxu0 0.0
      %10473 = vmatprep.subr.mxu0 0.0
      %10474 = vmatpush1.msra.mxu0 0.0
      %10475 = vmatprep.subr.mxu0 0.0
      %10476 = vmatpush1.msra.mxu0 0.0
      %10477 = vmatprep.subr.mxu0 0.0
      %10478 = vmatpush1.msra.mxu0 0.0
      %10479 = vmatprep.subr.mxu0 0.0
      %10480 = vmatpush1.msra.mxu0 0.0
      %10481 = vmatprep.subr.mxu0 0.0
      %10482 = vmatpush1.msra.mxu0 0.0
      %10483 = vmatprep.subr.mxu0 0.0
      %10484 = vmatpush1.msra.mxu0 0.0
      %10485 = vmatprep.subr.mxu0 0.0
      %10486 = vmatpush1.msra.mxu0 0.0
      %10487 = vmatprep.subr.mxu0 0.0
      %10488 = vmatpush1.msra.mxu0 0.0
      %10489 = vmatprep.mubr.f32.mxu0 0.0
      %v10490 = vand.u32 %v10194, 4294901760
      %v10491 = vsub.f32 %v10194, %v10490
      %10492 = vmatmul.mubr.f32.gmra.mrb[0].mxu0 %v10491
      %v10493 = vpop.f32.mrb[0].mxu0
      %v10494 = vadd.f32 %v10400, %v10493
      %v10495 = vpop.f32.mrb[0].mxu0
      %10496 = vmatprep.mubr.f32.mxu0 0.0
      %v10497 = vand.u32 %v10197, 4294901760
      %v10498 = vsub.f32 %v10197, %v10497
      %10499 = vmatmul.mubr.f32.gmra.mrb[0].mxu0 %v10498
      %v10500 = vpop.f32.mrb[0].mxu0
      %v10501 = vadd.f32 %v10406, %v10500
      %v10502 = vpop.f32.mrb[0].mxu0
      %10503 = vdwg.mxu0
      %10504 = vmatprep.subr.mxu0 0.0
      %v10505 = vand.u32 %v1147, 4294901760
      %10506 = vmatpush1.msra.mxu0 %v10505
      %10507 = vmatprep.subr.mxu0 0.0
      %v10508 = vand.u32 %v1148, 4294901760
      %10509 = vmatpush1.msra.mxu0 %v10508
      %10510 = vmatprep.subr.mxu0 0.0
      %v10511 = vand.u32 %v1149, 4294901760
      %10512 = vmatpush1.msra.mxu0 %v10511
      %10513 = vmatprep.subr.mxu0 0.0
      %v10514 = vand.u32 %v1150, 4294901760
      %10515 = vmatpush1.msra.mxu0 %v10514
      %10516 = vmatprep.subr.mxu0 0.0
      %v10517 = vand.u32 %v1151, 4294901760
      %10518 = vmatpush1.msra.mxu0 %v10517
      %10519 = vmatprep.subr.mxu0 0.0
      %v10520 = vand.u32 %v1152, 4294901760
      %10521 = vmatpush1.msra.mxu0 %v10520
      %10522 = vmatprep.subr.mxu0 0.0
      %v10523 = vand.u32 %v1153, 4294901760
      %10524 = vmatpush1.msra.mxu0 %v10523
      %10525 = vmatprep.subr.mxu0 0.0
      %v10526 = vand.u32 %v1154, 4294901760
      %10527 = vmatpush1.msra.mxu0 %v10526
      %10528 = vmatprep.subr.mxu0 0.0
      %10529 = vmatpush1.msra.mxu0 0.0
      %10530 = vmatprep.subr.mxu0 0.0
      %10531 = vmatpush1.msra.mxu0 0.0
      %10532 = vmatprep.subr.mxu0 0.0
      %10533 = vmatpush1.msra.mxu0 0.0
      %10534 = vmatprep.subr.mxu0 0.0
      %10535 = vmatpush1.msra.mxu0 0.0
      %10536 = vmatprep.subr.mxu0 0.0
      %10537 = vmatpush1.msra.mxu0 0.0
      %10538 = vmatprep.subr.mxu0 0.0
      %10539 = vmatpush1.msra.mxu0 0.0
      %10540 = vmatprep.subr.mxu0 0.0
      %10541 = vmatpush1.msra.mxu0 0.0
      %10542 = vmatprep.subr.mxu0 0.0
      %10543 = vmatpush1.msra.mxu0 0.0
      %10544 = vmatprep.subr.mxu0 0.0
      %10545 = vmatpush1.msra.mxu0 0.0
      %10546 = vmatprep.subr.mxu0 0.0
      %10547 = vmatpush1.msra.mxu0 0.0
      %10548 = vmatprep.subr.mxu0 0.0
      %10549 = vmatpush1.msra.mxu0 0.0
      %10550 = vmatprep.subr.mxu0 0.0
      %10551 = vmatpush1.msra.mxu0 0.0
      %10552 = vmatprep.subr.mxu0 0.0
      %10553 = vmatpush1.msra.mxu0 0.0
      %10554 = vmatprep.subr.mxu0 0.0
      %10555 = vmatpush1.msra.mxu0 0.0
      %10556 = vmatprep.subr.mxu0 0.0
      %10557 = vmatpush1.msra.mxu0 0.0
      %10558 = vmatprep.subr.mxu0 0.0
      %10559 = vmatpush1.msra.mxu0 0.0
      %10560 = vmatprep.subr.mxu0 0.0
      %10561 = vmatpush1.msra.mxu0 0.0
      %10562 = vmatprep.subr.mxu0 0.0
      %10563 = vmatpush1.msra.mxu0 0.0
      %10564 = vmatprep.subr.mxu0 0.0
      %10565 = vmatpush1.msra.mxu0 0.0
      %10566 = vmatprep.subr.mxu0 0.0
      %10567 = vmatpush1.msra.mxu0 0.0
      %10568 = vmatprep.subr.mxu0 0.0
      %10569 = vmatpush1.msra.mxu0 0.0
      %10570 = vmatprep.subr.mxu0 0.0
      %10571 = vmatpush1.msra.mxu0 0.0
      %10572 = vmatprep.subr.mxu0 0.0
      %10573 = vmatpush1.msra.mxu0 0.0
      %10574 = vmatprep.subr.mxu0 0.0
      %10575 = vmatpush1.msra.mxu0 0.0
      %10576 = vmatprep.mubr.f32.mxu0 0.0
      %v10577 = vand.u32 %v10194, 4294901760
      %v10578 = vsub.f32 %v10194, %v10577
      %v10579 = vand.u32 %v10578, 4294901760
      %10580 = vmatmul.mubr.f32.gmra.mrb[0].mxu0 %v10579
      %v10581 = vpop.f32.mrb[0].mxu0
      %v10582 = vadd.f32 %v10494, %v10581
      %v10583 = vpop.f32.mrb[0].mxu0
      %10584 = vmatprep.mubr.f32.mxu0 0.0
      %v10585 = vand.u32 %v10197, 4294901760
      %v10586 = vsub.f32 %v10197, %v10585
      %v10587 = vand.u32 %v10586, 4294901760
      %10588 = vmatmul.mubr.f32.gmra.mrb[0].mxu0 %v10587
      %v10589 = vpop.f32.mrb[0].mxu0
      %v10590 = vadd.f32 %v10501, %v10589
      %v10591 = vpop.f32.mrb[0].mxu0
      %10592 = vdwg.mxu0
      %10593 = vmatprep.subr.mxu0 0.0
      %v10594 = vand.u32 %v1147, 4294901760
      %v10595 = vsub.f32 %v1147, %v10594
      %v10596 = vand.u32 %v10595, 4294901760
      %10597 = vmatpush1.msra.mxu0 %v10596
      %10598 = vmatprep.subr.mxu0 0.0
      %v10599 = vand.u32 %v1148, 4294901760
      %v10600 = vsub.f32 %v1148, %v10599
      %v10601 = vand.u32 %v10600, 4294901760
      %10602 = vmatpush1.msra.mxu0 %v10601
      %10603 = vmatprep.subr.mxu0 0.0
      %v10604 = vand.u32 %v1149, 4294901760
      %v10605 = vsub.f32 %v1149, %v10604
      %v10606 = vand.u32 %v10605, 4294901760
      %10607 = vmatpush1.msra.mxu0 %v10606
      %10608 = vmatprep.subr.mxu0 0.0
      %v10609 = vand.u32 %v1150, 4294901760
      %v10610 = vsub.f32 %v1150, %v10609
      %v10611 = vand.u32 %v10610, 4294901760
      %10612 = vmatpush1.msra.mxu0 %v10611
      %10613 = vmatprep.subr.mxu0 0.0
      %v10614 = vand.u32 %v1151, 4294901760
      %v10615 = vsub.f32 %v1151, %v10614
      %v10616 = vand.u32 %v10615, 4294901760
      %10617 = vmatpush1.msra.mxu0 %v10616
      %10618 = vmatprep.subr.mxu0 0.0
      %v10619 = vand.u32 %v1152, 4294901760
      %v10620 = vsub.f32 %v1152, %v10619
      %v10621 = vand.u32 %v10620, 4294901760
      %10622 = vmatpush1.msra.mxu0 %v10621
      %10623 = vmatprep.subr.mxu0 0.0
      %v10624 = vand.u32 %v1153, 4294901760
      %v10625 = vsub.f32 %v1153, %v10624
      %v10626 = vand.u32 %v10625, 4294901760
      %10627 = vmatpush1.msra.mxu0 %v10626
      %10628 = vmatprep.subr.mxu0 0.0
      %v10629 = vand.u32 %v1154, 4294901760
      %v10630 = vsub.f32 %v1154, %v10629
      %v10631 = vand.u32 %v10630, 4294901760
      %10632 = vmatpush1.msra.mxu0 %v10631
      %10633 = vmatprep.subr.mxu0 0.0
      %10634 = vmatpush1.msra.mxu0 0.0
      %10635 = vmatprep.subr.mxu0 0.0
      %10636 = vmatpush1.msra.mxu0 0.0
      %10637 = vmatprep.subr.mxu0 0.0
      %10638 = vmatpush1.msra.mxu0 0.0
      %10639 = vmatprep.subr.mxu0 0.0
      %10640 = vmatpush1.msra.mxu0 0.0
      %10641 = vmatprep.subr.mxu0 0.0
      %10642 = vmatpush1.msra.mxu0 0.0
      %10643 = vmatprep.subr.mxu0 0.0
      %10644 = vmatpush1.msra.mxu0 0.0
      %10645 = vmatprep.subr.mxu0 0.0
      %10646 = vmatpush1.msra.mxu0 0.0
      %10647 = vmatprep.subr.mxu0 0.0
      %10648 = vmatpush1.msra.mxu0 0.0
      %10649 = vmatprep.subr.mxu0 0.0
      %10650 = vmatpush1.msra.mxu0 0.0
      %10651 = vmatprep.subr.mxu0 0.0
      %10652 = vmatpush1.msra.mxu0 0.0
      %10653 = vmatprep.subr.mxu0 0.0
      %10654 = vmatpush1.msra.mxu0 0.0
      %10655 = vmatprep.subr.mxu0 0.0
      %10656 = vmatpush1.msra.mxu0 0.0
      %10657 = vmatprep.subr.mxu0 0.0
      %10658 = vmatpush1.msra.mxu0 0.0
      %10659 = vmatprep.subr.mxu0 0.0
      %10660 = vmatpush1.msra.mxu0 0.0
      %10661 = vmatprep.subr.mxu0 0.0
      %10662 = vmatpush1.msra.mxu0 0.0
      %10663 = vmatprep.subr.mxu0 0.0
      %10664 = vmatpush1.msra.mxu0 0.0
      %10665 = vmatprep.subr.mxu0 0.0
      %10666 = vmatpush1.msra.mxu0 0.0
      %10667 = vmatprep.subr.mxu0 0.0
      %10668 = vmatpush1.msra.mxu0 0.0
      %10669 = vmatprep.subr.mxu0 0.0
      %10670 = vmatpush1.msra.mxu0 0.0
      %10671 = vmatprep.subr.mxu0 0.0
      %10672 = vmatpush1.msra.mxu0 0.0
      %10673 = vmatprep.subr.mxu0 0.0
      %10674 = vmatpush1.msra.mxu0 0.0
      %10675 = vmatprep.subr.mxu0 0.0
      %10676 = vmatpush1.msra.mxu0 0.0
      %10677 = vmatprep.subr.mxu0 0.0
      %10678 = vmatpush1.msra.mxu0 0.0
      %10679 = vmatprep.subr.mxu0 0.0
      %10680 = vmatpush1.msra.mxu0 0.0
      %10681 = vmatprep.mubr.f32.mxu0 0.0
      %v10682 = vand.u32 %v10194, 4294901760
      %10683 = vmatmul.mubr.f32.gmra.mrb[0].mxu0 %v10682
      %v10684 = vpop.f32.mrb[0].mxu0
      %v10685 = vadd.f32 %v10582, %v10684
      %v10686 = vpop.f32.mrb[0].mxu0
      %10687 = vmatprep.mubr.f32.mxu0 0.0
      %v10688 = vand.u32 %v10197, 4294901760
      %10689 = vmatmul.mubr.f32.gmra.mrb[0].mxu0 %v10688
      %v10690 = vpop.f32.mrb[0].mxu0
      %v10691 = vadd.f32 %v10590, %v10690
      %v10692 = vpop.f32.mrb[0].mxu0
      %10693 = vdwg.mxu0
      %10694 = vmatprep.subr.mxu0 0.0
      %v10695 = vand.u32 %v1147, 4294901760
      %10696 = vmatpush1.msra.mxu0 %v10695
      %10697 = vmatprep.subr.mxu0 0.0
      %v10698 = vand.u32 %v1148, 4294901760
      %10699 = vmatpush1.msra.mxu0 %v10698
      %10700 = vmatprep.subr.mxu0 0.0
      %v10701 = vand.u32 %v1149, 4294901760
      %10702 = vmatpush1.msra.mxu0 %v10701
      %10703 = vmatprep.subr.mxu0 0.0
      %v10704 = vand.u32 %v1150, 4294901760
      %10705 = vmatpush1.msra.mxu0 %v10704
      %10706 = vmatprep.subr.mxu0 0.0
      %v10707 = vand.u32 %v1151, 4294901760
      %10708 = vmatpush1.msra.mxu0 %v10707
      %10709 = vmatprep.subr.mxu0 0.0
      %v10710 = vand.u32 %v1152, 4294901760
      %10711 = vmatpush1.msra.mxu0 %v10710
      %10712 = vmatprep.subr.mxu0 0.0
      %v10713 = vand.u32 %v1153, 4294901760
      %10714 = vmatpush1.msra.mxu0 %v10713
      %10715 = vmatprep.subr.mxu0 0.0
      %v10716 = vand.u32 %v1154, 4294901760
      %10717 = vmatpush1.msra.mxu0 %v10716
      %10718 = vmatprep.subr.mxu0 0.0
      %10719 = vmatpush1.msra.mxu0 0.0
      %10720 = vmatprep.subr.mxu0 0.0
      %10721 = vmatpush1.msra.mxu0 0.0
      %10722 = vmatprep.subr.mxu0 0.0
      %10723 = vmatpush1.msra.mxu0 0.0
      %10724 = vmatprep.subr.mxu0 0.0
      %10725 = vmatpush1.msra.mxu0 0.0
      %10726 = vmatprep.subr.mxu0 0.0
      %10727 = vmatpush1.msra.mxu0 0.0
      %10728 = vmatprep.subr.mxu0 0.0
      %10729 = vmatpush1.msra.mxu0 0.0
      %10730 = vmatprep.subr.mxu0 0.0
      %10731 = vmatpush1.msra.mxu0 0.0
      %10732 = vmatprep.subr.mxu0 0.0
      %10733 = vmatpush1.msra.mxu0 0.0
      %10734 = vmatprep.subr.mxu0 0.0
      %10735 = vmatpush1.msra.mxu0 0.0
      %10736 = vmatprep.subr.mxu0 0.0
      %10737 = vmatpush1.msra.mxu0 0.0
      %10738 = vmatprep.subr.mxu0 0.0
      %10739 = vmatpush1.msra.mxu0 0.0
      %10740 = vmatprep.subr.mxu0 0.0
      %10741 = vmatpush1.msra.mxu0 0.0
      %10742 = vmatprep.subr.mxu0 0.0
      %10743 = vmatpush1.msra.mxu0 0.0
      %10744 = vmatprep.subr.mxu0 0.0
      %10745 = vmatpush1.msra.mxu0 0.0
      %10746 = vmatprep.subr.mxu0 0.0
      %10747 = vmatpush1.msra.mxu0 0.0
      %10748 = vmatprep.subr.mxu0 0.0
      %10749 = vmatpush1.msra.mxu0 0.0
      %10750 = vmatprep.subr.mxu0 0.0
      %10751 = vmatpush1.msra.mxu0 0.0
      %10752 = vmatprep.subr.mxu0 0.0
      %10753 = vmatpush1.msra.mxu0 0.0
      %10754 = vmatprep.subr.mxu0 0.0
      %10755 = vmatpush1.msra.mxu0 0.0
      %10756 = vmatprep.subr.mxu0 0.0
      %10757 = vmatpush1.msra.mxu0 0.0
      %10758 = vmatprep.subr.mxu0 0.0
      %10759 = vmatpush1.msra.mxu0 0.0
      %10760 = vmatprep.subr.mxu0 0.0
      %10761 = vmatpush1.msra.mxu0 0.0
      %10762 = vmatprep.subr.mxu0 0.0
      %10763 = vmatpush1.msra.mxu0 0.0
      %10764 = vmatprep.subr.mxu0 0.0
      %10765 = vmatpush1.msra.mxu0 0.0
      %10766 = vmatprep.mubr.f32.mxu0 0.0
      %v10767 = vand.u32 %v10194, 4294901760
      %10768 = vmatmul.mubr.f32.gmra.mrb[0].mxu0 %v10767
      %v10769 = vpop.f32.mrb[0].mxu0
      %v10770 = vadd.f32 %v10685, %v10769
      %v10771 = vpop.f32.mrb[0].mxu0
      %10772 = vmatprep.mubr.f32.mxu0 0.0
      %v10773 = vand.u32 %v10197, 4294901760
      %10774 = vmatmul.mubr.f32.gmra.mrb[0].mxu0 %v10773
      %v10775 = vpop.f32.mrb[0].mxu0
      %v10776 = vadd.f32 %v10691, %v10775
      %v10777 = vpop.f32.mrb[0].mxu0
      %10778 = vdwg.mxu0
      %s10779 = scalar_lea.vmem %s3, 256
      %v10780 = vld [vmem:[%s10779] sm:$0xff]
      %v10781 = vld [vmem:[%s10779 + $0x8] sm:$0xff]
      %v10782 = vld [vmem:[%s10779 + $0x10] sm:$0xff]
      %v10783 = vld [vmem:[%s10779 + $0x18] sm:$0xff]
      %v10785 = vsel %vm1039, %v10770, 0
      %v10788 = vsel %vm1039, %v10776, 0
      %10790 = vmatprep.subr.mxu0 0.0
      %v10791 = vand.u32 %v10780, 4294901760
      %10792 = vmatpush1.msra.mxu0 %v10791
      %10793 = vmatprep.subr.mxu0 0.0
      %v10794 = vand.u32 %v10781, 4294901760
      %10795 = vmatpush1.msra.mxu0 %v10794
      %10796 = vmatprep.subr.mxu0 0.0
      %v10797 = vand.u32 %v10782, 4294901760
      %10798 = vmatpush1.msra.mxu0 %v10797
      %10799 = vmatprep.subr.mxu0 0.0
      %v10800 = vand.u32 %v10783, 4294901760
      %10801 = vmatpush1.msra.mxu0 %v10800
      %10802 = vmatprep.subr.mxu0 0.0
      %10803 = vmatpush1.msra.mxu0 0.0
      %10804 = vmatprep.subr.mxu0 0.0
      %10805 = vmatpush1.msra.mxu0 0.0
      %10806 = vmatprep.subr.mxu0 0.0
      %10807 = vmatpush1.msra.mxu0 0.0
      %10808 = vmatprep.subr.mxu0 0.0
      %10809 = vmatpush1.msra.mxu0 0.0
      %10810 = vmatprep.subr.mxu0 0.0
      %10811 = vmatpush1.msra.mxu0 0.0
      %10812 = vmatprep.subr.mxu0 0.0
      %10813 = vmatpush1.msra.mxu0 0.0
      %10814 = vmatprep.subr.mxu0 0.0
      %10815 = vmatpush1.msra.mxu0 0.0
      %10816 = vmatprep.subr.mxu0 0.0
      %10817 = vmatpush1.msra.mxu0 0.0
      %10818 = vmatprep.subr.mxu0 0.0
      %10819 = vmatpush1.msra.mxu0 0.0
      %10820 = vmatprep.subr.mxu0 0.0
      %10821 = vmatpush1.msra.mxu0 0.0
      %10822 = vmatprep.subr.mxu0 0.0
      %10823 = vmatpush1.msra.mxu0 0.0
      %10824 = vmatprep.subr.mxu0 0.0
      %10825 = vmatpush1.msra.mxu0 0.0
      %10826 = vmatprep.subr.mxu0 0.0
      %10827 = vmatpush1.msra.mxu0 0.0
      %10828 = vmatprep.subr.mxu0 0.0
      %10829 = vmatpush1.msra.mxu0 0.0
      %10830 = vmatprep.subr.mxu0 0.0
      %10831 = vmatpush1.msra.mxu0 0.0
      %10832 = vmatprep.subr.mxu0 0.0
      %10833 = vmatpush1.msra.mxu0 0.0
      %10834 = vmatprep.subr.mxu0 0.0
      %10835 = vmatpush1.msra.mxu0 0.0
      %10836 = vmatprep.subr.mxu0 0.0
      %10837 = vmatpush1.msra.mxu0 0.0
      %10838 = vmatprep.subr.mxu0 0.0
      %10839 = vmatpush1.msra.mxu0 0.0
      %10840 = vmatprep.subr.mxu0 0.0
      %10841 = vmatpush1.msra.mxu0 0.0
      %10842 = vmatprep.subr.mxu0 0.0
      %10843 = vmatpush1.msra.mxu0 0.0
      %10844 = vmatprep.subr.mxu0 0.0
      %10845 = vmatpush1.msra.mxu0 0.0
      %10846 = vmatprep.subr.mxu0 0.0
      %10847 = vmatpush1.msra.mxu0 0.0
      %10848 = vmatprep.subr.mxu0 0.0
      %10849 = vmatpush1.msra.mxu0 0.0
      %10850 = vmatprep.subr.mxu0 0.0
      %10851 = vmatpush1.msra.mxu0 0.0
      %10852 = vmatprep.subr.mxu0 0.0
      %10853 = vmatpush1.msra.mxu0 0.0
      %10854 = vmatprep.subr.mxu0 0.0
      %10855 = vmatpush1.msra.mxu0 0.0
      %10856 = vmatprep.subr.mxu0 0.0
      %10857 = vmatpush1.msra.mxu0 0.0
      %10858 = vmatprep.mubr.f32.mxu0 0.0
      %v10859 = vand.u32 %v10785, 4294901760
      %v10860 = vsub.f32 %v10785, %v10859
      %v10861 = vand.u32 %v10860, 4294901760
      %v10862 = vsub.f32 %v10860, %v10861
      %v10863 = vand.u32 %v10862, 4294901760
      %10864 = vmatmul.mubr.f32.gmra.mrb[0].mxu0 %v10863
      %v10865 = vpop.f32.mrb[0].mxu0
      %v10866 = vadd.f32 0.0, %v10865
      %v10867 = vpop.f32.mrb[0].mxu0
      %10868 = vmatprep.mubr.f32.mxu0 0.0
      %v10869 = vand.u32 %v10788, 4294901760
      %v10870 = vsub.f32 %v10788, %v10869
      %v10871 = vand.u32 %v10870, 4294901760
      %v10872 = vsub.f32 %v10870, %v10871
      %v10873 = vand.u32 %v10872, 4294901760
      %10874 = vmatmul.mubr.f32.gmra.mrb[0].mxu0 %v10873
      %v10875 = vpop.f32.mrb[0].mxu0
      %v10876 = vadd.f32 0.0, %v10875
      %v10877 = vpop.f32.mrb[0].mxu0
      %10878 = vdwg.mxu0
      %10879 = vmatprep.subr.mxu0 0.0
      %v10880 = vand.u32 %v10780, 4294901760
      %v10881 = vsub.f32 %v10780, %v10880
      %v10882 = vand.u32 %v10881, 4294901760
      %v10883 = vsub.f32 %v10881, %v10882
      %v10884 = vand.u32 %v10883, 4294901760
      %10885 = vmatpush1.msra.mxu0 %v10884
      %10886 = vmatprep.subr.mxu0 0.0
      %v10887 = vand.u32 %v10781, 4294901760
      %v10888 = vsub.f32 %v10781, %v10887
      %v10889 = vand.u32 %v10888, 4294901760
      %v10890 = vsub.f32 %v10888, %v10889
      %v10891 = vand.u32 %v10890, 4294901760
      %10892 = vmatpush1.msra.mxu0 %v10891
      %10893 = vmatprep.subr.mxu0 0.0
      %v10894 = vand.u32 %v10782, 4294901760
      %v10895 = vsub.f32 %v10782, %v10894
      %v10896 = vand.u32 %v10895, 4294901760
      %v10897 = vsub.f32 %v10895, %v10896
      %v10898 = vand.u32 %v10897, 4294901760
      %10899 = vmatpush1.msra.mxu0 %v10898
      %10900 = vmatprep.subr.mxu0 0.0
      %v10901 = vand.u32 %v10783, 4294901760
      %v10902 = vsub.f32 %v10783, %v10901
      %v10903 = vand.u32 %v10902, 4294901760
      %v10904 = vsub.f32 %v10902, %v10903
      %v10905 = vand.u32 %v10904, 4294901760
      %10906 = vmatpush1.msra.mxu0 %v10905
      %10907 = vmatprep.subr.mxu0 0.0
      %10908 = vmatpush1.msra.mxu0 0.0
      %10909 = vmatprep.subr.mxu0 0.0
      %10910 = vmatpush1.msra.mxu0 0.0
      %10911 = vmatprep.subr.mxu0 0.0
      %10912 = vmatpush1.msra.mxu0 0.0
      %10913 = vmatprep.subr.mxu0 0.0
      %10914 = vmatpush1.msra.mxu0 0.0
      %10915 = vmatprep.subr.mxu0 0.0
      %10916 = vmatpush1.msra.mxu0 0.0
      %10917 = vmatprep.subr.mxu0 0.0
      %10918 = vmatpush1.msra.mxu0 0.0
      %10919 = vmatprep.subr.mxu0 0.0
      %10920 = vmatpush1.msra.mxu0 0.0
      %10921 = vmatprep.subr.mxu0 0.0
      %10922 = vmatpush1.msra.mxu0 0.0
      %10923 = vmatprep.subr.mxu0 0.0
      %10924 = vmatpush1.msra.mxu0 0.0
      %10925 = vmatprep.subr.mxu0 0.0
      %10926 = vmatpush1.msra.mxu0 0.0
      %10927 = vmatprep.subr.mxu0 0.0
      %10928 = vmatpush1.msra.mxu0 0.0
      %10929 = vmatprep.subr.mxu0 0.0
      %10930 = vmatpush1.msra.mxu0 0.0
      %10931 = vmatprep.subr.mxu0 0.0
      %10932 = vmatpush1.msra.mxu0 0.0
      %10933 = vmatprep.subr.mxu0 0.0
      %10934 = vmatpush1.msra.mxu0 0.0
      %10935 = vmatprep.subr.mxu0 0.0
      %10936 = vmatpush1.msra.mxu0 0.0
      %10937 = vmatprep.subr.mxu0 0.0
      %10938 = vmatpush1.msra.mxu0 0.0
      %10939 = vmatprep.subr.mxu0 0.0
      %10940 = vmatpush1.msra.mxu0 0.0
      %10941 = vmatprep.subr.mxu0 0.0
      %10942 = vmatpush1.msra.mxu0 0.0
      %10943 = vmatprep.subr.mxu0 0.0
      %10944 = vmatpush1.msra.mxu0 0.0
      %10945 = vmatprep.subr.mxu0 0.0
      %10946 = vmatpush1.msra.mxu0 0.0
      %10947 = vmatprep.subr.mxu0 0.0
      %10948 = vmatpush1.msra.mxu0 0.0
      %10949 = vmatprep.subr.mxu0 0.0
      %10950 = vmatpush1.msra.mxu0 0.0
      %10951 = vmatprep.subr.mxu0 0.0
      %10952 = vmatpush1.msra.mxu0 0.0
      %10953 = vmatprep.subr.mxu0 0.0
      %10954 = vmatpush1.msra.mxu0 0.0
      %10955 = vmatprep.subr.mxu0 0.0
      %10956 = vmatpush1.msra.mxu0 0.0
      %10957 = vmatprep.subr.mxu0 0.0
      %10958 = vmatpush1.msra.mxu0 0.0
      %10959 = vmatprep.subr.mxu0 0.0
      %10960 = vmatpush1.msra.mxu0 0.0
      %10961 = vmatprep.subr.mxu0 0.0
      %10962 = vmatpush1.msra.mxu0 0.0
      %10963 = vmatprep.mubr.f32.mxu0 0.0
      %v10964 = vand.u32 %v10785, 4294901760
      %10965 = vmatmul.mubr.f32.gmra.mrb[0].mxu0 %v10964
      %v10966 = vpop.f32.mrb[0].mxu0
      %v10967 = vadd.f32 %v10866, %v10966
      %v10968 = vpop.f32.mrb[0].mxu0
      %10969 = vmatprep.mubr.f32.mxu0 0.0
      %v10970 = vand.u32 %v10788, 4294901760
      %10971 = vmatmul.mubr.f32.gmra.mrb[0].mxu0 %v10970
      %v10972 = vpop.f32.mrb[0].mxu0
      %v10973 = vadd.f32 %v10876, %v10972
      %v10974 = vpop.f32.mrb[0].mxu0
      %10975 = vdwg.mxu0
      %10976 = vmatprep.subr.mxu0 0.0
      %v10977 = vand.u32 %v10780, 4294901760
      %v10978 = vsub.f32 %v10780, %v10977
      %10979 = vmatpush1.msra.mxu0 %v10978
      %10980 = vmatprep.subr.mxu0 0.0
      %v10981 = vand.u32 %v10781, 4294901760
      %v10982 = vsub.f32 %v10781, %v10981
      %10983 = vmatpush1.msra.mxu0 %v10982
      %10984 = vmatprep.subr.mxu0 0.0
      %v10985 = vand.u32 %v10782, 4294901760
      %v10986 = vsub.f32 %v10782, %v10985
      %10987 = vmatpush1.msra.mxu0 %v10986
      %10988 = vmatprep.subr.mxu0 0.0
      %v10989 = vand.u32 %v10783, 4294901760
      %v10990 = vsub.f32 %v10783, %v10989
      %10991 = vmatpush1.msra.mxu0 %v10990
      %10992 = vmatprep.subr.mxu0 0.0
      %10993 = vmatpush1.msra.mxu0 0.0
      %10994 = vmatprep.subr.mxu0 0.0
      %10995 = vmatpush1.msra.mxu0 0.0
      %10996 = vmatprep.subr.mxu0 0.0
      %10997 = vmatpush1.msra.mxu0 0.0
      %10998 = vmatprep.subr.mxu0 0.0
      %10999 = vmatpush1.msra.mxu0 0.0
      %11000 = vmatprep.subr.mxu0 0.0
      %11001 = vmatpush1.msra.mxu0 0.0
      %11002 = vmatprep.subr.mxu0 0.0
      %11003 = vmatpush1.msra.mxu0 0.0
      %11004 = vmatprep.subr.mxu0 0.0
      %11005 = vmatpush1.msra.mxu0 0.0
      %11006 = vmatprep.subr.mxu0 0.0
      %11007 = vmatpush1.msra.mxu0 0.0
      %11008 = vmatprep.subr.mxu0 0.0
      %11009 = vmatpush1.msra.mxu0 0.0
      %11010 = vmatprep.subr.mxu0 0.0
      %11011 = vmatpush1.msra.mxu0 0.0
      %11012 = vmatprep.subr.mxu0 0.0
      %11013 = vmatpush1.msra.mxu0 0.0
      %11014 = vmatprep.subr.mxu0 0.0
      %11015 = vmatpush1.msra.mxu0 0.0
      %11016 = vmatprep.subr.mxu0 0.0
      %11017 = vmatpush1.msra.mxu0 0.0
      %11018 = vmatprep.subr.mxu0 0.0
      %11019 = vmatpush1.msra.mxu0 0.0
      %11020 = vmatprep.subr.mxu0 0.0
      %11021 = vmatpush1.msra.mxu0 0.0
      %11022 = vmatprep.subr.mxu0 0.0
      %11023 = vmatpush1.msra.mxu0 0.0
      %11024 = vmatprep.subr.mxu0 0.0
      %11025 = vmatpush1.msra.mxu0 0.0
      %11026 = vmatprep.subr.mxu0 0.0
      %11027 = vmatpush1.msra.mxu0 0.0
      %11028 = vmatprep.subr.mxu0 0.0
      %11029 = vmatpush1.msra.mxu0 0.0
      %11030 = vmatprep.subr.mxu0 0.0
      %11031 = vmatpush1.msra.mxu0 0.0
      %11032 = vmatprep.subr.mxu0 0.0
      %11033 = vmatpush1.msra.mxu0 0.0
      %11034 = vmatprep.subr.mxu0 0.0
      %11035 = vmatpush1.msra.mxu0 0.0
      %11036 = vmatprep.subr.mxu0 0.0
      %11037 = vmatpush1.msra.mxu0 0.0
      %11038 = vmatprep.subr.mxu0 0.0
      %11039 = vmatpush1.msra.mxu0 0.0
      %11040 = vmatprep.subr.mxu0 0.0
      %11041 = vmatpush1.msra.mxu0 0.0
      %11042 = vmatprep.subr.mxu0 0.0
      %11043 = vmatpush1.msra.mxu0 0.0
      %11044 = vmatprep.subr.mxu0 0.0
      %11045 = vmatpush1.msra.mxu0 0.0
      %11046 = vmatprep.subr.mxu0 0.0
      %11047 = vmatpush1.msra.mxu0 0.0
      %11048 = vmatprep.mubr.f32.mxu0 0.0
      %v11049 = vand.u32 %v10785, 4294901760
      %v11050 = vsub.f32 %v10785, %v11049
      %11051 = vmatmul.mubr.f32.gmra.mrb[0].mxu0 %v11050
      %v11052 = vpop.f32.mrb[0].mxu0
      %v11053 = vadd.f32 %v10967, %v11052
      %v11054 = vpop.f32.mrb[0].mxu0
      %11055 = vmatprep.mubr.f32.mxu0 0.0
      %v11056 = vand.u32 %v10788, 4294901760
      %v11057 = vsub.f32 %v10788, %v11056
      %11058 = vmatmul.mubr.f32.gmra.mrb[0].mxu0 %v11057
      %v11059 = vpop.f32.mrb[0].mxu0
      %v11060 = vadd.f32 %v10973, %v11059
      %v11061 = vpop.f32.mrb[0].mxu0
      %11062 = vdwg.mxu0
      %11063 = vmatprep.subr.mxu0 0.0
      %v11064 = vand.u32 %v10780, 4294901760
      %11065 = vmatpush1.msra.mxu0 %v11064
      %11066 = vmatprep.subr.mxu0 0.0
      %v11067 = vand.u32 %v10781, 4294901760
      %11068 = vmatpush1.msra.mxu0 %v11067
      %11069 = vmatprep.subr.mxu0 0.0
      %v11070 = vand.u32 %v10782, 4294901760
      %11071 = vmatpush1.msra.mxu0 %v11070
      %11072 = vmatprep.subr.mxu0 0.0
      %v11073 = vand.u32 %v10783, 4294901760
      %11074 = vmatpush1.msra.mxu0 %v11073
      %11075 = vmatprep.subr.mxu0 0.0
      %11076 = vmatpush1.msra.mxu0 0.0
      %11077 = vmatprep.subr.mxu0 0.0
      %11078 = vmatpush1.msra.mxu0 0.0
      %11079 = vmatprep.subr.mxu0 0.0
      %11080 = vmatpush1.msra.mxu0 0.0
      %11081 = vmatprep.subr.mxu0 0.0
      %11082 = vmatpush1.msra.mxu0 0.0
      %11083 = vmatprep.subr.mxu0 0.0
      %11084 = vmatpush1.msra.mxu0 0.0
      %11085 = vmatprep.subr.mxu0 0.0
      %11086 = vmatpush1.msra.mxu0 0.0
      %11087 = vmatprep.subr.mxu0 0.0
      %11088 = vmatpush1.msra.mxu0 0.0
      %11089 = vmatprep.subr.mxu0 0.0
      %11090 = vmatpush1.msra.mxu0 0.0
      %11091 = vmatprep.subr.mxu0 0.0
      %11092 = vmatpush1.msra.mxu0 0.0
      %11093 = vmatprep.subr.mxu0 0.0
      %11094 = vmatpush1.msra.mxu0 0.0
      %11095 = vmatprep.subr.mxu0 0.0
      %11096 = vmatpush1.msra.mxu0 0.0
      %11097 = vmatprep.subr.mxu0 0.0
      %11098 = vmatpush1.msra.mxu0 0.0
      %11099 = vmatprep.subr.mxu0 0.0
      %11100 = vmatpush1.msra.mxu0 0.0
      %11101 = vmatprep.subr.mxu0 0.0
      %11102 = vmatpush1.msra.mxu0 0.0
      %11103 = vmatprep.subr.mxu0 0.0
      %11104 = vmatpush1.msra.mxu0 0.0
      %11105 = vmatprep.subr.mxu0 0.0
      %11106 = vmatpush1.msra.mxu0 0.0
      %11107 = vmatprep.subr.mxu0 0.0
      %11108 = vmatpush1.msra.mxu0 0.0
      %11109 = vmatprep.subr.mxu0 0.0
      %11110 = vmatpush1.msra.mxu0 0.0
      %11111 = vmatprep.subr.mxu0 0.0
      %11112 = vmatpush1.msra.mxu0 0.0
      %11113 = vmatprep.subr.mxu0 0.0
      %11114 = vmatpush1.msra.mxu0 0.0
      %11115 = vmatprep.subr.mxu0 0.0
      %11116 = vmatpush1.msra.mxu0 0.0
      %11117 = vmatprep.subr.mxu0 0.0
      %11118 = vmatpush1.msra.mxu0 0.0
      %11119 = vmatprep.subr.mxu0 0.0
      %11120 = vmatpush1.msra.mxu0 0.0
      %11121 = vmatprep.subr.mxu0 0.0
      %11122 = vmatpush1.msra.mxu0 0.0
      %11123 = vmatprep.subr.mxu0 0.0
      %11124 = vmatpush1.msra.mxu0 0.0
      %11125 = vmatprep.subr.mxu0 0.0
      %11126 = vmatpush1.msra.mxu0 0.0
      %11127 = vmatprep.subr.mxu0 0.0
      %11128 = vmatpush1.msra.mxu0 0.0
      %11129 = vmatprep.subr.mxu0 0.0
      %11130 = vmatpush1.msra.mxu0 0.0
      %11131 = vmatprep.mubr.f32.mxu0 0.0
      %v11132 = vand.u32 %v10785, 4294901760
      %v11133 = vsub.f32 %v10785, %v11132
      %v11134 = vand.u32 %v11133, 4294901760
      %11135 = vmatmul.mubr.f32.gmra.mrb[0].mxu0 %v11134
      %v11136 = vpop.f32.mrb[0].mxu0
      %v11137 = vadd.f32 %v11053, %v11136
      %v11138 = vpop.f32.mrb[0].mxu0
      %11139 = vmatprep.mubr.f32.mxu0 0.0
      %v11140 = vand.u32 %v10788, 4294901760
      %v11141 = vsub.f32 %v10788, %v11140
      %v11142 = vand.u32 %v11141, 4294901760
      %11143 = vmatmul.mubr.f32.gmra.mrb[0].mxu0 %v11142
      %v11144 = vpop.f32.mrb[0].mxu0
      %v11145 = vadd.f32 %v11060, %v11144
      %v11146 = vpop.f32.mrb[0].mxu0
      %11147 = vdwg.mxu0
      %11148 = vmatprep.subr.mxu0 0.0
      %v11149 = vand.u32 %v10780, 4294901760
      %v11150 = vsub.f32 %v10780, %v11149
      %v11151 = vand.u32 %v11150, 4294901760
      %11152 = vmatpush1.msra.mxu0 %v11151
      %11153 = vmatprep.subr.mxu0 0.0
      %v11154 = vand.u32 %v10781, 4294901760
      %v11155 = vsub.f32 %v10781, %v11154
      %v11156 = vand.u32 %v11155, 4294901760
      %11157 = vmatpush1.msra.mxu0 %v11156
      %11158 = vmatprep.subr.mxu0 0.0
      %v11159 = vand.u32 %v10782, 4294901760
      %v11160 = vsub.f32 %v10782, %v11159
      %v11161 = vand.u32 %v11160, 4294901760
      %11162 = vmatpush1.msra.mxu0 %v11161
      %11163 = vmatprep.subr.mxu0 0.0
      %v11164 = vand.u32 %v10783, 4294901760
      %v11165 = vsub.f32 %v10783, %v11164
      %v11166 = vand.u32 %v11165, 4294901760
      %11167 = vmatpush1.msra.mxu0 %v11166
      %11168 = vmatprep.subr.mxu0 0.0
      %11169 = vmatpush1.msra.mxu0 0.0
      %11170 = vmatprep.subr.mxu0 0.0
      %11171 = vmatpush1.msra.mxu0 0.0
      %11172 = vmatprep.subr.mxu0 0.0
      %11173 = vmatpush1.msra.mxu0 0.0
      %11174 = vmatprep.subr.mxu0 0.0
      %11175 = vmatpush1.msra.mxu0 0.0
      %11176 = vmatprep.subr.mxu0 0.0
      %11177 = vmatpush1.msra.mxu0 0.0
      %11178 = vmatprep.subr.mxu0 0.0
      %11179 = vmatpush1.msra.mxu0 0.0
      %11180 = vmatprep.subr.mxu0 0.0
      %11181 = vmatpush1.msra.mxu0 0.0
      %11182 = vmatprep.subr.mxu0 0.0
      %11183 = vmatpush1.msra.mxu0 0.0
      %11184 = vmatprep.subr.mxu0 0.0
      %11185 = vmatpush1.msra.mxu0 0.0
      %11186 = vmatprep.subr.mxu0 0.0
      %11187 = vmatpush1.msra.mxu0 0.0
      %11188 = vmatprep.subr.mxu0 0.0
      %11189 = vmatpush1.msra.mxu0 0.0
      %11190 = vmatprep.subr.mxu0 0.0
      %11191 = vmatpush1.msra.mxu0 0.0
      %11192 = vmatprep.subr.mxu0 0.0
      %11193 = vmatpush1.msra.mxu0 0.0
      %11194 = vmatprep.subr.mxu0 0.0
      %11195 = vmatpush1.msra.mxu0 0.0
      %11196 = vmatprep.subr.mxu0 0.0
      %11197 = vmatpush1.msra.mxu0 0.0
      %11198 = vmatprep.subr.mxu0 0.0
      %11199 = vmatpush1.msra.mxu0 0.0
      %11200 = vmatprep.subr.mxu0 0.0
      %11201 = vmatpush1.msra.mxu0 0.0
      %11202 = vmatprep.subr.mxu0 0.0
      %11203 = vmatpush1.msra.mxu0 0.0
      %11204 = vmatprep.subr.mxu0 0.0
      %11205 = vmatpush1.msra.mxu0 0.0
      %11206 = vmatprep.subr.mxu0 0.0
      %11207 = vmatpush1.msra.mxu0 0.0
      %11208 = vmatprep.subr.mxu0 0.0
      %11209 = vmatpush1.msra.mxu0 0.0
      %11210 = vmatprep.subr.mxu0 0.0
      %11211 = vmatpush1.msra.mxu0 0.0
      %11212 = vmatprep.subr.mxu0 0.0
      %11213 = vmatpush1.msra.mxu0 0.0
      %11214 = vmatprep.subr.mxu0 0.0
      %11215 = vmatpush1.msra.mxu0 0.0
      %11216 = vmatprep.subr.mxu0 0.0
      %11217 = vmatpush1.msra.mxu0 0.0
      %11218 = vmatprep.subr.mxu0 0.0
      %11219 = vmatpush1.msra.mxu0 0.0
      %11220 = vmatprep.subr.mxu0 0.0
      %11221 = vmatpush1.msra.mxu0 0.0
      %11222 = vmatprep.subr.mxu0 0.0
      %11223 = vmatpush1.msra.mxu0 0.0
      %11224 = vmatprep.mubr.f32.mxu0 0.0
      %v11225 = vand.u32 %v10785, 4294901760
      %11226 = vmatmul.mubr.f32.gmra.mrb[0].mxu0 %v11225
      %v11227 = vpop.f32.mrb[0].mxu0
      %v11228 = vadd.f32 %v11137, %v11227
      %v11229 = vpop.f32.mrb[0].mxu0
      %11230 = vmatprep.mubr.f32.mxu0 0.0
      %v11231 = vand.u32 %v10788, 4294901760
      %11232 = vmatmul.mubr.f32.gmra.mrb[0].mxu0 %v11231
      %v11233 = vpop.f32.mrb[0].mxu0
      %v11234 = vadd.f32 %v11145, %v11233
      %v11235 = vpop.f32.mrb[0].mxu0
      %11236 = vdwg.mxu0
      %11237 = vmatprep.subr.mxu0 0.0
      %v11238 = vand.u32 %v10780, 4294901760
      %11239 = vmatpush1.msra.mxu0 %v11238
      %11240 = vmatprep.subr.mxu0 0.0
      %v11241 = vand.u32 %v10781, 4294901760
      %11242 = vmatpush1.msra.mxu0 %v11241
      %11243 = vmatprep.subr.mxu0 0.0
      %v11244 = vand.u32 %v10782, 4294901760
      %11245 = vmatpush1.msra.mxu0 %v11244
      %11246 = vmatprep.subr.mxu0 0.0
      %v11247 = vand.u32 %v10783, 4294901760
      %11248 = vmatpush1.msra.mxu0 %v11247
      %11249 = vmatprep.subr.mxu0 0.0
      %11250 = vmatpush1.msra.mxu0 0.0
      %11251 = vmatprep.subr.mxu0 0.0
      %11252 = vmatpush1.msra.mxu0 0.0
      %11253 = vmatprep.subr.mxu0 0.0
      %11254 = vmatpush1.msra.mxu0 0.0
      %11255 = vmatprep.subr.mxu0 0.0
      %11256 = vmatpush1.msra.mxu0 0.0
      %11257 = vmatprep.subr.mxu0 0.0
      %11258 = vmatpush1.msra.mxu0 0.0
      %11259 = vmatprep.subr.mxu0 0.0
      %11260 = vmatpush1.msra.mxu0 0.0
      %11261 = vmatprep.subr.mxu0 0.0
      %11262 = vmatpush1.msra.mxu0 0.0
      %11263 = vmatprep.subr.mxu0 0.0
      %11264 = vmatpush1.msra.mxu0 0.0
      %11265 = vmatprep.subr.mxu0 0.0
      %11266 = vmatpush1.msra.mxu0 0.0
      %11267 = vmatprep.subr.mxu0 0.0
      %11268 = vmatpush1.msra.mxu0 0.0
      %11269 = vmatprep.subr.mxu0 0.0
      %11270 = vmatpush1.msra.mxu0 0.0
      %11271 = vmatprep.subr.mxu0 0.0
      %11272 = vmatpush1.msra.mxu0 0.0
      %11273 = vmatprep.subr.mxu0 0.0
      %11274 = vmatpush1.msra.mxu0 0.0
      %11275 = vmatprep.subr.mxu0 0.0
      %11276 = vmatpush1.msra.mxu0 0.0
      %11277 = vmatprep.subr.mxu0 0.0
      %11278 = vmatpush1.msra.mxu0 0.0
      %11279 = vmatprep.subr.mxu0 0.0
      %11280 = vmatpush1.msra.mxu0 0.0
      %11281 = vmatprep.subr.mxu0 0.0
      %11282 = vmatpush1.msra.mxu0 0.0
      %11283 = vmatprep.subr.mxu0 0.0
      %11284 = vmatpush1.msra.mxu0 0.0
      %11285 = vmatprep.subr.mxu0 0.0
      %11286 = vmatpush1.msra.mxu0 0.0
      %11287 = vmatprep.subr.mxu0 0.0
      %11288 = vmatpush1.msra.mxu0 0.0
      %11289 = vmatprep.subr.mxu0 0.0
      %11290 = vmatpush1.msra.mxu0 0.0
      %11291 = vmatprep.subr.mxu0 0.0
      %11292 = vmatpush1.msra.mxu0 0.0
      %11293 = vmatprep.subr.mxu0 0.0
      %11294 = vmatpush1.msra.mxu0 0.0
      %11295 = vmatprep.subr.mxu0 0.0
      %11296 = vmatpush1.msra.mxu0 0.0
      %11297 = vmatprep.subr.mxu0 0.0
      %11298 = vmatpush1.msra.mxu0 0.0
      %11299 = vmatprep.subr.mxu0 0.0
      %11300 = vmatpush1.msra.mxu0 0.0
      %11301 = vmatprep.subr.mxu0 0.0
      %11302 = vmatpush1.msra.mxu0 0.0
      %11303 = vmatprep.subr.mxu0 0.0
      %11304 = vmatpush1.msra.mxu0 0.0
      %11305 = vmatprep.mubr.f32.mxu0 0.0
      %v11306 = vand.u32 %v10785, 4294901760
      %11307 = vmatmul.mubr.f32.gmra.mrb[0].mxu0 %v11306
      %v11308 = vpop.f32.mrb[0].mxu0
      %v11309 = vadd.f32 %v11228, %v11308
      %v11310 = vpop.f32.mrb[0].mxu0
      %11311 = vmatprep.mubr.f32.mxu0 0.0
      %v11312 = vand.u32 %v10788, 4294901760
      %11313 = vmatmul.mubr.f32.gmra.mrb[0].mxu0 %v11312
      %v11314 = vpop.f32.mrb[0].mxu0
      %v11315 = vadd.f32 %v11234, %v11314
      %v11316 = vpop.f32.mrb[0].mxu0
      %11317 = vdwg.mxu0
      %v11318 = vadd.f32 %v10188, %v11309
      %v11319 = vadd.f32 %v10189, %v11315
      %v11320 = vsel %vm1039, %v11318, 0.0
      %v11321 = vsel %vm1039, %v11319, 0.0
      %v11322 = vadd.f32 %v11320, %v11321
      %v11323 = vrot.slane %v11322, 4
      %v11324 = vadd.f32 %v11322, %v11323
      %v11325 = vrot.slane %v11324, 2
      %v11326 = vadd.f32 %v11324, %v11325
      %v11327 = vrot.slane %v11326, 1
      %v11328 = vadd.f32 %v11326, %v11327
      %v11329 = vmul.f32 %v11328, 0.0625
      %v11330 = vsub.f32 %v11318, %v11329
      %v11331 = vsub.f32 %v11319, %v11329
      %v11332 = vmul.f32 %v11330, %v11330
      %v11333 = vmul.f32 %v11331, %v11331
      %v11334 = vsel %vm1039, %v11332, 0.0
      %v11335 = vsel %vm1039, %v11333, 0.0
      %v11336 = vadd.f32 %v11334, %v11335
      %v11337 = vrot.slane %v11336, 4
      %v11338 = vadd.f32 %v11336, %v11337
      %v11339 = vrot.slane %v11338, 2
      %v11340 = vadd.f32 %v11338, %v11339
      %v11341 = vrot.slane %v11340, 1
      %v11342 = vadd.f32 %v11340, %v11341
      %v11343 = vmul.f32 %v11342, 0.0625
      %v11344 = vadd.f32 %v11343, 1e-05
      %v11345 = vrsqrt.pop %v11344
      %v11346 = vmul.f32 %v225, %v11345
      %v11347 = vlaneseq
      %v11348 = vshrl.u32 %v11347, 7
      %v11349 = vsub.s32 3, %v11348
      %v11350 = vrot.slane %v11346, %v11349
      %v11351 = vmul.f32 %v11330, %v11350
      %v11352 = vmul.f32 %v11331, %v11350
      %v11353 = vlaneseq
      %v11354 = vshrl.u32 %v11353, 7
      %v11355 = vsub.s32 4, %v11354
      %v11356 = vrot.slane %v225, %v11355
      %v11357 = vadd.f32 %v11351, %v11356
      %v11358 = vadd.f32 %v11352, %v11356
      %vm11359 = vcmp.ge.f32.partialorder %v11357, 0.0
      %vm11360 = vcmp.ge.f32.partialorder %v11358, 0.0
      %v11361 = vlaneseq
      %v11362 = vshrl.u32 %v11361, 7
      %v11363 = vsub.s32 5, %v11362
      %v11364 = vrot.slane %v225, %v11363
      %v11365 = vmul.f32 %v11364, %v11357
      %v11366 = vmul.f32 %v11364, %v11358
      %v11367 = vsel %vm11359, %v11357, %v11365
      %v11368 = vsel %vm11360, %v11358, %v11366
      %11369 = vst.msk [vmem:[%s224] sm:$0xff] %vm1039, %v11367
      %11370 = vst.msk [vmem:[%s224 + $0x8] sm:$0xff] %vm1039, %v11368
      %p11371 = scmp.lt.s32.totalorder %s16, 1
      %s11372 = scalar_select %p11371, %s16, 1
      %s11373 = smul.addr %s11372, 2
      %s11374 = smul.addr %s11373, 8
      %s11375 = scalar_lea.vmem %s5, %s11374
      // Predicated region
      $region41: #{channel_encoder_sf12.1} parent=39 // pred_check
        %p11376 = pneg %p144
      $region42: #{channel_encoder_sf12.1} parent=39 // pred_check_branch
        %11378 = sbr.rel (%p11376) target = $region44
      $region43: #{channel_encoder_sf12.1} parent=39 // pred_region
        _
      $region44: #{channel_encoder_sf12.1} parent=39 // pred_fallthru
        _
    $region40: #{channel_encoder_sf12.1} parent=5 // pred_fallthru
      _
    %p11379 = scmp.le.s32.totalorder 2, %s11
    // Predicated region
    $region45: #{channel_encoder_sf12.1} parent=5 // pred_check
      %p11380 = pneg %p11379
    $region46: #{channel_encoder_sf12.1} parent=5 // pred_check_branch
      %11382 = sbr.rel (%p11380) target = $region48
    $region47: #{channel_encoder_sf12.1} parent=5 // pred_region
      %s11383 = ssub.s32 %s11, 2
      // Predicated region
      $region49: #{channel_encoder_sf12.1} parent=47 // pred_check
        %p11384 = pneg %p150
      $region50: #{channel_encoder_sf12.1} parent=47 // pred_check_branch
        %11386 = sbr.rel (%p11384) target = $region52
      $region51: #{channel_encoder_sf12.1} parent=47 // pred_region
        %p11387 = scmp.lt.s32.totalorder %s17, 1
        %s11388 = scalar_select %p11387, %s17, 1
        %s11389 = smul.addr %s11388, 2
        %s11390 = smul.addr %s11389, 8
        %s11391 = scalar_lea.vmem %s5, %s11390
      $region52: #{channel_encoder_sf12.1} parent=47 // pred_fallthru
        _
    $region48: #{channel_encoder_sf12.1} parent=5 // pred_fallthru
      _
  $region6: #{channel_encoder_sf12.1} parent=0 // loop_footer
    %s15 = sadd.s32 1, %s11
  $region7: #{channel_encoder_sf12.1} parent=0 // loop_footer_branch
    %10 = sbr.rel target = $region3
  $region8: #{channel_encoder_sf12.1} parent=0 // loop_exit
    _

</llo_original>
